<compile_context>
chip_gen: v7x
topology: tpu7x:2x2x1
jax: 0.10.0
libtpu: 0.0.40
codegen_flags: <defaults>
</compile_context>

<pallas_src>
import functools

import jax
import jax.numpy as jnp
from jax import lax
from jax.experimental import pallas as pl
from jax.experimental.pallas import tpu as pltpu

EPS = 1e-5


def _vmem_limit_bytes():
    """Generation-aware VMEM budget: ~3/4 of physical VMEM.

    => ~48 MiB on v7x (64 MiB/TC), ~96 MiB on v5e/v6e (128 MiB), leaving
    headroom for double buffers and compiler-internal scratch.
    """
    cap = 128 << 20
    try:
        info = pltpu.get_tpu_info()
        cap = int(getattr(info, "vmem_capacity_bytes", cap)) or cap
    except Exception:
        pass
    return (cap * 3) // 4


# --------------------------------------------------------------------------
# Kernel 1/2: 3x3 conv (stride 1, pad 1) on one batch element, with optional
# fused per-channel affine + ReLU on the input, plus per-tile BN statistics.
# --------------------------------------------------------------------------
def _conv3x3_stats_kernel(x_ref, w_ref, scale_ref, shift_ref,
                          y_ref, stats_ref, xpad,
                          *, apply_pre_act, compute_dtype):
    # x_ref    : (1, H, W, Cin)   input tile (one batch element), f32
    # w_ref    : (3, 3, Cin, Cout) conv weights (HWIO)
    # scale/shift_ref : (1, Cin)  folded BN affine (used when apply_pre_act)
    # y_ref    : (1, H, W, Cout)  conv output tile, f32
    # stats_ref: (1, 2, Cout)     per-tile [sum, sum-of-squares] over (H, W)
    # xpad     : (H+2, W+2, Cin)  VMEM halo staging buffer (f32)
    _, H, W, Cin = x_ref.shape
    Cout = w_ref.shape[3]

    x = x_ref[0]                                               # (H, W, Cin)
    if apply_pre_act:                                          # fused bn + relu
        x = jnp.maximum(x * scale_ref[...] + shift_ref[...], 0.0)

    # Stage the tile into a zero-haloed pad buffer: zero ONLY the four 1-pixel
    # border strips (scratch VMEM is not guaranteed zero), then the interior.
    xpad[0:1, :, :] = jnp.zeros((1, W + 2, Cin), jnp.float32)
    xpad[H + 1:H + 2, :, :] = jnp.zeros((1, W + 2, Cin), jnp.float32)
    xpad[:, 0:1, :] = jnp.zeros((H + 2, 1, Cin), jnp.float32)
    xpad[:, W + 1:W + 2, :] = jnp.zeros((H + 2, 1, Cin), jnp.float32)
    xpad[1:H + 1, 1:W + 1, :] = x

    # 3x3 conv = 9 shifted-window matmuls on the MXU, f32 accumulation.
    # Taps and weights are cast to compute_dtype (bf16 recommended on v6e/v7x)
    # right at the MXU input; accumulation stays f32.
    acc = None
    for ky in range(3):
        for kx in range(3):
            tap = xpad[ky:ky + H, kx:kx + W, :].reshape(H * W, Cin)
            contrib = jnp.dot(tap.astype(compute_dtype),
                              w_ref[ky, kx].astype(compute_dtype),
                              preferred_element_type=jnp.float32)
            acc = contrib if acc is None else acc + contrib    # first tap inits

    y_ref[0] = acc.reshape(H, W, Cout).astype(y_ref.dtype)

    # One-pass per-tile BN statistics (reduced across tiles in the wrapper).
    stats_ref[0, 0:1, :] = jnp.sum(acc, axis=0, keepdims=True)        # sum
    stats_ref[0, 1:2, :] = jnp.sum(acc * acc, axis=0, keepdims=True)  # sumsq


# --------------------------------------------------------------------------
# Kernel 3: fused bn2 (as scale/shift) + residual add + relu (pointwise).
# --------------------------------------------------------------------------
def _bn_add_relu_kernel(z_ref, x_ref, scale_ref, shift_ref, out_ref):
    out_ref[0] = jnp.maximum(
        z_ref[0] * scale_ref[...] + shift_ref[...] + x_ref[0], 0.0
    ).astype(out_ref.dtype)


# --------------------------------------------------------------------------
# pallas_call wrappers
# --------------------------------------------------------------------------
def _conv3x3_stats(x_nhwc, w_hwio, scale, shift, *, apply_pre_act,
                   compute_dtype, vmem_limit):
    N, H, W, Cin = x_nhwc.shape
    Cout = w_hwio.shape[-1]
    kernel = functools.partial(_conv3x3_stats_kernel,
                               apply_pre_act=apply_pre_act,
                               compute_dtype=compute_dtype)
    return pl.pallas_call(
        kernel,
        out_shape=(jax.ShapeDtypeStruct((N, H, W, Cout), jnp.float32),
                   jax.ShapeDtypeStruct((N, 2, Cout), jnp.float32)),
        grid=(N,),
        in_specs=[
            pl.BlockSpec((1, H, W, Cin), lambda n: (n, 0, 0, 0)),
            pl.BlockSpec((3, 3, Cin, Cout), lambda n: (0, 0, 0, 0)),
            pl.BlockSpec((1, Cin), lambda n: (0, 0)),
            pl.BlockSpec((1, Cin), lambda n: (0, 0)),
        ],
        out_specs=(
            pl.BlockSpec((1, H, W, Cout), lambda n: (n, 0, 0, 0)),
            pl.BlockSpec((1, 2, Cout), lambda n: (n, 0, 0)),
        ),
        scratch_shapes=[pltpu.VMEM((H + 2, W + 2, Cin), jnp.float32)],
        compiler_params=pltpu.CompilerParams(
            dimension_semantics=("parallel",),
            vmem_limit_bytes=vmem_limit),
    )(x_nhwc, w_hwio, scale, shift)


def _bn_add_relu(z_nhwc, x_nhwc, scale, shift, *, vmem_limit):
    N, H, W, C = z_nhwc.shape
    return pl.pallas_call(
        _bn_add_relu_kernel,
        out_shape=jax.ShapeDtypeStruct((N, H, W, C), jnp.float32),
        grid=(N,),
        in_specs=[
            pl.BlockSpec((1, H, W, C), lambda n: (n, 0, 0, 0)),
            pl.BlockSpec((1, H, W, C), lambda n: (n, 0, 0, 0)),
            pl.BlockSpec((1, C), lambda n: (0, 0)),
            pl.BlockSpec((1, C), lambda n: (0, 0)),
        ],
        out_specs=pl.BlockSpec((1, H, W, C), lambda n: (n, 0, 0, 0)),
        compiler_params=pltpu.CompilerParams(
            dimension_semantics=("parallel",),
            vmem_limit_bytes=vmem_limit),
    )(z_nhwc, x_nhwc, scale, shift)


def _bn_scale_shift(stats, gamma, beta, count):
    """Reduce per-tile [sum, sumsq] stats -> folded BN scale/shift (tiny)."""
    total = jnp.sum(stats, axis=0)                              # (2, C)
    mean = total[0] / count
    var = jnp.maximum(total[1] / count - mean * mean, 0.0)      # biased var
    scale = gamma * lax.rsqrt(var + EPS)
    shift = beta - mean * scale
    return scale.reshape(1, -1), shift.reshape(1, -1)


def basic_block_forward(x_nchw, w1, g1, b1, w2, g2, b2, *,
                        compute_dtype=jnp.float32):
    """x_nchw: (N, C, H, W) float32. Returns (N, C, H, W) float32.

    compute_dtype controls the MXU matmul-input dtype (accumulation is always
    f32); use jnp.bfloat16 to hit MXU peak on v5e/v6e/v7x when a small
    convolution accuracy loss is acceptable.
    """
    N, Cin, H, W = x_nchw.shape
    C = w1.shape[-1]
    assert Cin == C, "identity shortcut requires inplanes == planes"

    vmem_limit = _vmem_limit_bytes()

    # Glue: NCHW -> NHWC so channels sit on the lane axis.
    # TODO(synk): callers already holding NHWC activations can drop both
    # transposes; they exist only to match the PyTorch NCHW interface.
    x = jnp.transpose(x_nchw, (0, 2, 3, 1)).astype(jnp.float32)

    ones = jnp.ones((1, C), jnp.float32)
    zeros = jnp.zeros((1, C), jnp.float32)
    count = N * H * W

    # stage 1: conv1 + per-tile stats
    y1, st1 = _conv3x3_stats(x, w1, ones, zeros, apply_pre_act=False,
                             compute_dtype=compute_dtype, vmem_limit=vmem_limit)
    scale1, shift1 = _bn_scale_shift(st1, g1, b1, count)

    # stage 2: fused bn1 + relu + conv2 + per-tile stats
    z, st2 = _conv3x3_stats(y1, w2, scale1, shift1, apply_pre_act=True,
                            compute_dtype=compute_dtype, vmem_limit=vmem_limit)
    scale2, shift2 = _bn_scale_shift(st2, g2, b2, count)

    # stage 3: fused bn2 + residual add + relu
    out = _bn_add_relu(z, x, scale2, shift2, vmem_limit=vmem_limit)

    return jnp.transpose(out, (0, 3, 1, 2))


def _reference_forward(x_nchw, w1, g1, b1, w2, g2, b2):
    """Pure-JAX reference (NHWC conv via lax) for validation."""
    x = jnp.transpose(x_nchw, (0, 2, 3, 1))
    dn = lax.conv_dimension_numbers(x.shape, w1.shape, ("NHWC", "HWIO", "NHWC"))

    def bn(y, g, b):
        mean = jnp.mean(y, axis=(0, 1, 2), keepdims=True)
        var = jnp.mean((y - mean) ** 2, axis=(0, 1, 2), keepdims=True)
        return (y - mean) * lax.rsqrt(var + EPS) * g + b

    y = lax.conv_general_dilated(x, w1, (1, 1), [(1, 1), (1, 1)],
                                 dimension_numbers=dn)
    y = jnp.maximum(bn(y, g1, b1), 0.0)
    z = lax.conv_general_dilated(y, w2, (1, 1), [(1, 1), (1, 1)],
                                 dimension_numbers=dn)
    z = bn(z, g2, b2)
    out = jnp.maximum(z + x, 0.0)
    return jnp.transpose(out, (0, 3, 1, 2))


if __name__ == "__main__":
    # Small shapes consistent with BasicBlock(inplanes=4, planes=4, stride=1)
    N, C, H, W = 2, 4, 16, 16

    key = jax.random.PRNGKey(0)
    kx, kw1, kw2 = jax.random.split(key, 3)

    x = jax.random.normal(kx, (N, C, H, W), dtype=jnp.float32)
    # conv weights in HWIO layout (3, 3, Cin, Cout), bias=False
    w1 = jax.random.normal(kw1, (3, 3, C, C), dtype=jnp.float32) * 0.1
    w2 = jax.random.normal(kw2, (3, 3, C, C), dtype=jnp.float32) * 0.1
    # BatchNorm2d default init: weight=1, bias=0
    g1 = jnp.ones((C,), jnp.float32)
    b1 = jnp.zeros((C,), jnp.float32)
    g2 = jnp.ones((C,), jnp.float32)
    b2 = jnp.zeros((C,), jnp.float32)

    fwd = jax.jit(basic_block_forward, static_argnames=("compute_dtype",))
    ref = _reference_forward(x, w1, g1, b1, w2, g2, b2)

    # Exact-semantics (f32 MXU inputs) run, tight check.
    out = jax.block_until_ready(fwd(x, w1, g1, b1, w2, g2, b2))
    assert out.shape == (N, C, H, W)
    assert jnp.allclose(out, ref, atol=1e-3, rtol=1e-3), "f32 mismatch vs reference"

    # bf16 MXU-input path (recommended on v6e/v7x); loose sanity check only.
    out_bf16 = jax.block_until_ready(
        fwd(x, w1, g1, b1, w2, g2, b2, compute_dtype=jnp.bfloat16))
    assert jnp.allclose(out_bf16, ref, atol=1e-1, rtol=1e-1), "bf16 sanity mismatch"

    print("KERNEL_OK")
</pallas_src>

<mosaic_0001>
module attributes {stable_mosaic.version = 11 : i64} {
  func.func @_conv3x3_stats_kernel(%arg0: i32, %arg1: memref<1x16x16x4xf32, #tpu.memory_space<vmem>>, %arg2: memref<3x3x4x4xf32, #tpu.memory_space<vmem>>, %arg3: memref<1x4xf32, #tpu.memory_space<vmem>>, %arg4: memref<1x4xf32, #tpu.memory_space<vmem>>, %arg5: memref<1x16x16x4xf32, #tpu.memory_space<vmem>>, %arg6: memref<1x2x4xf32, #tpu.memory_space<vmem>>, %arg7: memref<18x18x4xf32, #tpu.memory_space<vmem>>) attributes {dimension_semantics = [#tpu.dimension_semantics<parallel>], iteration_bounds = array<i64: 2>, scalar_prefetch = 0 : i64, scratch_operands = 1 : i64, tpu.core_type = #tpu.core_type<tc>, window_params = [{transform_indices = @transform_0, window_bounds = array<i64: 1, 16, 16, 4>}, {pipeline_mode = #tpu.pipeline_mode<synchronous>, transform_indices = @transform_1, window_bounds = array<i64: 3, 3, 4, 4>}, {pipeline_mode = #tpu.pipeline_mode<synchronous>, transform_indices = @transform_2, window_bounds = array<i64: 1, 4>}, {pipeline_mode = #tpu.pipeline_mode<synchronous>, transform_indices = @transform_3, window_bounds = array<i64: 1, 4>}, {transform_indices = @transform_4, window_bounds = array<i64: 1, 16, 16, 4>}, {transform_indices = @transform_5, window_bounds = array<i64: 1, 2, 4>}]} {
    %c0 = arith.constant 0 : index
    %c0_0 = arith.constant 0 : index
    %c0_1 = arith.constant 0 : index
    %c0_2 = arith.constant 0 : index
    %0 = vector.load %arg1[%c0, %c0_0, %c0_1, %c0_2] : memref<1x16x16x4xf32, #tpu.memory_space<vmem>>, vector<1x16x16x4xf32>
    %1 = vector.shape_cast %0 : vector<1x16x16x4xf32> to vector<16x16x4xf32>
    %cst = arith.constant 0.000000e+00 : f32
    %2 = vector.broadcast %cst : f32 to vector<1x18x4xf32>
    %c0_3 = arith.constant 0 : index
    %c0_4 = arith.constant 0 : index
    %c0_5 = arith.constant 0 : index
    %3 = vector.load %arg7[%c0_3, %c0_4, %c0_5] : memref<18x18x4xf32, #tpu.memory_space<vmem>>, vector<1x18x4xf32>
    tpu.vector_store %arg7[%c0_3, %c0_4, %c0_5], %2 {strides = array<i32>} : memref<18x18x4xf32, #tpu.memory_space<vmem>>, vector<1x18x4xf32>,
    %cst_6 = arith.constant 0.000000e+00 : f32
    %4 = vector.broadcast %cst_6 : f32 to vector<1x18x4xf32>
    %c17 = arith.constant 17 : index
    %c0_7 = arith.constant 0 : index
    %c0_8 = arith.constant 0 : index
    %5 = vector.load %arg7[%c17, %c0_7, %c0_8] : memref<18x18x4xf32, #tpu.memory_space<vmem>>, vector<1x18x4xf32>
    tpu.vector_store %arg7[%c17, %c0_7, %c0_8], %4 {strides = array<i32>} : memref<18x18x4xf32, #tpu.memory_space<vmem>>, vector<1x18x4xf32>,
    %cst_9 = arith.constant 0.000000e+00 : f32
    %6 = vector.broadcast %cst_9 : f32 to vector<18x1x4xf32>
    %c0_10 = arith.constant 0 : index
    %c0_11 = arith.constant 0 : index
    %c0_12 = arith.constant 0 : index
    %7 = vector.load %arg7[%c0_10, %c0_11, %c0_12] : memref<18x18x4xf32, #tpu.memory_space<vmem>>, vector<18x1x4xf32>
    tpu.vector_store %arg7[%c0_10, %c0_11, %c0_12], %6 {strides = array<i32>} : memref<18x18x4xf32, #tpu.memory_space<vmem>>, vector<18x1x4xf32>,
    %cst_13 = arith.constant 0.000000e+00 : f32
    %8 = vector.broadcast %cst_13 : f32 to vector<18x1x4xf32>
    %c0_14 = arith.constant 0 : index
    %c17_15 = arith.constant 17 : index
    %c0_16 = arith.constant 0 : index
    %9 = vector.load %arg7[%c0_14, %c17_15, %c0_16] : memref<18x18x4xf32, #tpu.memory_space<vmem>>, vector<18x1x4xf32>
    tpu.vector_store %arg7[%c0_14, %c17_15, %c0_16], %8 {strides = array<i32>} : memref<18x18x4xf32, #tpu.memory_space<vmem>>, vector<18x1x4xf32>,
    %c1 = arith.constant 1 : index
    %c1_17 = arith.constant 1 : index
    %c0_18 = arith.constant 0 : index
    %10 = vector.load %arg7[%c1, %c1_17, %c0_18] : memref<18x18x4xf32, #tpu.memory_space<vmem>>, vector<16x16x4xf32>
    tpu.vector_store %arg7[%c1, %c1_17, %c0_18], %1 {strides = array<i32>} : memref<18x18x4xf32, #tpu.memory_space<vmem>>, vector<16x16x4xf32>,
    %c0_19 = arith.constant 0 : index
    %c0_20 = arith.constant 0 : index
    %c0_21 = arith.constant 0 : index
    %11 = vector.load %arg7[%c0_19, %c0_20, %c0_21] : memref<18x18x4xf32, #tpu.memory_space<vmem>>, vector<16x16x4xf32>
    %12 = vector.shape_cast %11 : vector<16x16x4xf32> to vector<256x4xf32>
    %c0_22 = arith.constant 0 : index
    %c0_23 = arith.constant 0 : index
    %c0_24 = arith.constant 0 : index
    %c0_25 = arith.constant 0 : index
    %13 = vector.load %arg2[%c0_22, %c0_23, %c0_24, %c0_25] : memref<3x3x4x4xf32, #tpu.memory_space<vmem>>, vector<1x1x4x4xf32>
    %14 = vector.shape_cast %13 : vector<1x1x4x4xf32> to vector<4x4xf32>
    %cst_26 = arith.constant dense<0.000000e+00> : vector<256x4xf32>
    %15 = tpu.matmul %12, %14, %cst_26 {dimension_numbers = #tpu.dot_dimension_numbers<[1], [0], [0], [1], [0, 0, 1, 1], [], []>} : vector<256x4xf32>, vector<4x4xf32>, vector<256x4xf32> -> vector<256x4xf32>
    %c0_27 = arith.constant 0 : index
    %c1_28 = arith.constant 1 : index
    %c0_29 = arith.constant 0 : index
    %16 = vector.load %arg7[%c0_27, %c1_28, %c0_29] : memref<18x18x4xf32, #tpu.memory_space<vmem>>, vector<16x16x4xf32>
    %17 = vector.shape_cast %16 : vector<16x16x4xf32> to vector<256x4xf32>
    %c0_30 = arith.constant 0 : index
    %c1_31 = arith.constant 1 : index
    %c0_32 = arith.constant 0 : index
    %c0_33 = arith.constant 0 : index
    %18 = vector.load %arg2[%c0_30, %c1_31, %c0_32, %c0_33] : memref<3x3x4x4xf32, #tpu.memory_space<vmem>>, vector<1x1x4x4xf32>
    %19 = vector.shape_cast %18 : vector<1x1x4x4xf32> to vector<4x4xf32>
    %cst_34 = arith.constant dense<0.000000e+00> : vector<256x4xf32>
    %20 = tpu.matmul %17, %19, %cst_34 {dimension_numbers = #tpu.dot_dimension_numbers<[1], [0], [0], [1], [0, 0, 1, 1], [], []>} : vector<256x4xf32>, vector<4x4xf32>, vector<256x4xf32> -> vector<256x4xf32>
    %21 = arith.addf %15, %20 : vector<256x4xf32>
    %c0_35 = arith.constant 0 : index
    %c2 = arith.constant 2 : index
    %c0_36 = arith.constant 0 : index
    %22 = vector.load %arg7[%c0_35, %c2, %c0_36] : memref<18x18x4xf32, #tpu.memory_space<vmem>>, vector<16x16x4xf32>
    %23 = vector.shape_cast %22 : vector<16x16x4xf32> to vector<256x4xf32>
    %c0_37 = arith.constant 0 : index
    %c2_38 = arith.constant 2 : index
    %c0_39 = arith.constant 0 : index
    %c0_40 = arith.constant 0 : index
    %24 = vector.load %arg2[%c0_37, %c2_38, %c0_39, %c0_40] : memref<3x3x4x4xf32, #tpu.memory_space<vmem>>, vector<1x1x4x4xf32>
    %25 = vector.shape_cast %24 : vector<1x1x4x4xf32> to vector<4x4xf32>
    %cst_41 = arith.constant dense<0.000000e+00> : vector<256x4xf32>
    %26 = tpu.matmul %23, %25, %cst_41 {dimension_numbers = #tpu.dot_dimension_numbers<[1], [0], [0], [1], [0, 0, 1, 1], [], []>} : vector<256x4xf32>, vector<4x4xf32>, vector<256x4xf32> -> vector<256x4xf32>
    %27 = arith.addf %21, %26 : vector<256x4xf32>
    %c1_42 = arith.constant 1 : index
    %c0_43 = arith.constant 0 : index
    %c0_44 = arith.constant 0 : index
    %28 = vector.load %arg7[%c1_42, %c0_43, %c0_44] : memref<18x18x4xf32, #tpu.memory_space<vmem>>, vector<16x16x4xf32>
    %29 = vector.shape_cast %28 : vector<16x16x4xf32> to vector<256x4xf32>
    %c1_45 = arith.constant 1 : index
    %c0_46 = arith.constant 0 : index
    %c0_47 = arith.constant 0 : index
    %c0_48 = arith.constant 0 : index
    %30 = vector.load %arg2[%c1_45, %c0_46, %c0_47, %c0_48] : memref<3x3x4x4xf32, #tpu.memory_space<vmem>>, vector<1x1x4x4xf32>
    %31 = vector.shape_cast %30 : vector<1x1x4x4xf32> to vector<4x4xf32>
    %cst_49 = arith.constant dense<0.000000e+00> : vector<256x4xf32>
    %32 = tpu.matmul %29, %31, %cst_49 {dimension_numbers = #tpu.dot_dimension_numbers<[1], [0], [0], [1], [0, 0, 1, 1], [], []>} : vector<256x4xf32>, vector<4x4xf32>, vector<256x4xf32> -> vector<256x4xf32>
    %33 = arith.addf %27, %32 : vector<256x4xf32>
    %c1_50 = arith.constant 1 : index
    %c1_51 = arith.constant 1 : index
    %c0_52 = arith.constant 0 : index
    %34 = vector.load %arg7[%c1_50, %c1_51, %c0_52] : memref<18x18x4xf32, #tpu.memory_space<vmem>>, vector<16x16x4xf32>
    %35 = vector.shape_cast %34 : vector<16x16x4xf32> to vector<256x4xf32>
    %c1_53 = arith.constant 1 : index
    %c1_54 = arith.constant 1 : index
    %c0_55 = arith.constant 0 : index
    %c0_56 = arith.constant 0 : index
    %36 = vector.load %arg2[%c1_53, %c1_54, %c0_55, %c0_56] : memref<3x3x4x4xf32, #tpu.memory_space<vmem>>, vector<1x1x4x4xf32>
    %37 = vector.shape_cast %36 : vector<1x1x4x4xf32> to vector<4x4xf32>
    %cst_57 = arith.constant dense<0.000000e+00> : vector<256x4xf32>
    %38 = tpu.matmul %35, %37, %cst_57 {dimension_numbers = #tpu.dot_dimension_numbers<[1], [0], [0], [1], [0, 0, 1, 1], [], []>} : vector<256x4xf32>, vector<4x4xf32>, vector<256x4xf32> -> vector<256x4xf32>
    %39 = arith.addf %33, %38 : vector<256x4xf32>
    %c1_58 = arith.constant 1 : index
    %c2_59 = arith.constant 2 : index
    %c0_60 = arith.constant 0 : index
    %40 = vector.load %arg7[%c1_58, %c2_59, %c0_60] : memref<18x18x4xf32, #tpu.memory_space<vmem>>, vector<16x16x4xf32>
    %41 = vector.shape_cast %40 : vector<16x16x4xf32> to vector<256x4xf32>
    %c1_61 = arith.constant 1 : index
    %c2_62 = arith.constant 2 : index
    %c0_63 = arith.constant 0 : index
    %c0_64 = arith.constant 0 : index
    %42 = vector.load %arg2[%c1_61, %c2_62, %c0_63, %c0_64] : memref<3x3x4x4xf32, #tpu.memory_space<vmem>>, vector<1x1x4x4xf32>
    %43 = vector.shape_cast %42 : vector<1x1x4x4xf32> to vector<4x4xf32>
    %cst_65 = arith.constant dense<0.000000e+00> : vector<256x4xf32>
    %44 = tpu.matmul %41, %43, %cst_65 {dimension_numbers = #tpu.dot_dimension_numbers<[1], [0], [0], [1], [0, 0, 1, 1], [], []>} : vector<256x4xf32>, vector<4x4xf32>, vector<256x4xf32> -> vector<256x4xf32>
    %45 = arith.addf %39, %44 : vector<256x4xf32>
    %c2_66 = arith.constant 2 : index
    %c0_67 = arith.constant 0 : index
    %c0_68 = arith.constant 0 : index
    %46 = vector.load %arg7[%c2_66, %c0_67, %c0_68] : memref<18x18x4xf32, #tpu.memory_space<vmem>>, vector<16x16x4xf32>
    %47 = vector.shape_cast %46 : vector<16x16x4xf32> to vector<256x4xf32>
    %c2_69 = arith.constant 2 : index
    %c0_70 = arith.constant 0 : index
    %c0_71 = arith.constant 0 : index
    %c0_72 = arith.constant 0 : index
    %48 = vector.load %arg2[%c2_69, %c0_70, %c0_71, %c0_72] : memref<3x3x4x4xf32, #tpu.memory_space<vmem>>, vector<1x1x4x4xf32>
    %49 = vector.shape_cast %48 : vector<1x1x4x4xf32> to vector<4x4xf32>
    %cst_73 = arith.constant dense<0.000000e+00> : vector<256x4xf32>
    %50 = tpu.matmul %47, %49, %cst_73 {dimension_numbers = #tpu.dot_dimension_numbers<[1], [0], [0], [1], [0, 0, 1, 1], [], []>} : vector<256x4xf32>, vector<4x4xf32>, vector<256x4xf32> -> vector<256x4xf32>
    %51 = arith.addf %45, %50 : vector<256x4xf32>
    %c2_74 = arith.constant 2 : index
    %c1_75 = arith.constant 1 : index
    %c0_76 = arith.constant 0 : index
    %52 = vector.load %arg7[%c2_74, %c1_75, %c0_76] : memref<18x18x4xf32, #tpu.memory_space<vmem>>, vector<16x16x4xf32>
    %53 = vector.shape_cast %52 : vector<16x16x4xf32> to vector<256x4xf32>
    %c2_77 = arith.constant 2 : index
    %c1_78 = arith.constant 1 : index
    %c0_79 = arith.constant 0 : index
    %c0_80 = arith.constant 0 : index
    %54 = vector.load %arg2[%c2_77, %c1_78, %c0_79, %c0_80] : memref<3x3x4x4xf32, #tpu.memory_space<vmem>>, vector<1x1x4x4xf32>
    %55 = vector.shape_cast %54 : vector<1x1x4x4xf32> to vector<4x4xf32>
    %cst_81 = arith.constant dense<0.000000e+00> : vector<256x4xf32>
    %56 = tpu.matmul %53, %55, %cst_81 {dimension_numbers = #tpu.dot_dimension_numbers<[1], [0], [0], [1], [0, 0, 1, 1], [], []>} : vector<256x4xf32>, vector<4x4xf32>, vector<256x4xf32> -> vector<256x4xf32>
    %57 = arith.addf %51, %56 : vector<256x4xf32>
    %c2_82 = arith.constant 2 : index
    %c2_83 = arith.constant 2 : index
    %c0_84 = arith.constant 0 : index
    %58 = vector.load %arg7[%c2_82, %c2_83, %c0_84] : memref<18x18x4xf32, #tpu.memory_space<vmem>>, vector<16x16x4xf32>
    %59 = vector.shape_cast %58 : vector<16x16x4xf32> to vector<256x4xf32>
    %c2_85 = arith.constant 2 : index
    %c2_86 = arith.constant 2 : index
    %c0_87 = arith.constant 0 : index
    %c0_88 = arith.constant 0 : index
    %60 = vector.load %arg2[%c2_85, %c2_86, %c0_87, %c0_88] : memref<3x3x4x4xf32, #tpu.memory_space<vmem>>, vector<1x1x4x4xf32>
    %61 = vector.shape_cast %60 : vector<1x1x4x4xf32> to vector<4x4xf32>
    %cst_89 = arith.constant dense<0.000000e+00> : vector<256x4xf32>
    %62 = tpu.matmul %59, %61, %cst_89 {dimension_numbers = #tpu.dot_dimension_numbers<[1], [0], [0], [1], [0, 0, 1, 1], [], []>} : vector<256x4xf32>, vector<4x4xf32>, vector<256x4xf32> -> vector<256x4xf32>
    %63 = arith.addf %57, %62 : vector<256x4xf32>
    %64 = vector.shape_cast %63 : vector<256x4xf32> to vector<16x16x4xf32>
    %c0_90 = arith.constant 0 : index
    %c0_91 = arith.constant 0 : index
    %c0_92 = arith.constant 0 : index
    %c0_93 = arith.constant 0 : index
    %65 = vector.load %arg5[%c0_90, %c0_91, %c0_92, %c0_93] : memref<1x16x16x4xf32, #tpu.memory_space<vmem>>, vector<1x16x16x4xf32>
    %66 = vector.shape_cast %65 : vector<1x16x16x4xf32> to vector<16x16x4xf32>
    %67 = vector.shape_cast %64 : vector<16x16x4xf32> to vector<1x16x16x4xf32>
    tpu.vector_store %arg5[%c0_90, %c0_91, %c0_92, %c0_93], %67 {strides = array<i32>} : memref<1x16x16x4xf32, #tpu.memory_space<vmem>>, vector<1x16x16x4xf32>,
    %cst_94 = arith.constant dense<0.000000e+00> : vector<4xf32>
    %68 = vector.multi_reduction <add>, %63, %cst_94 [0] : vector<256x4xf32> to vector<4xf32>
    %69 = vector.shape_cast %68 : vector<4xf32> to vector<1x4xf32>
    %c0_95 = arith.constant 0 : index
    %c0_96 = arith.constant 0 : index
    %c0_97 = arith.constant 0 : index
    %70 = vector.load %arg6[%c0_95, %c0_96, %c0_97] : memref<1x2x4xf32, #tpu.memory_space<vmem>>, vector<1x1x4xf32>
    %71 = vector.shape_cast %70 : vector<1x1x4xf32> to vector<1x4xf32>
    %72 = vector.shape_cast %69 : vector<1x4xf32> to vector<1x1x4xf32>
    tpu.vector_store %arg6[%c0_95, %c0_96, %c0_97], %72 {strides = array<i32>} : memref<1x2x4xf32, #tpu.memory_space<vmem>>, vector<1x1x4xf32>,
    %73 = arith.mulf %63, %63 : vector<256x4xf32>
    %cst_98 = arith.constant dense<0.000000e+00> : vector<4xf32>
    %74 = vector.multi_reduction <add>, %73, %cst_98 [0] : vector<256x4xf32> to vector<4xf32>
    %75 = vector.shape_cast %74 : vector<4xf32> to vector<1x4xf32>
    %c0_99 = arith.constant 0 : index
    %c1_100 = arith.constant 1 : index
    %c0_101 = arith.constant 0 : index
    %76 = vector.load %arg6[%c0_99, %c1_100, %c0_101] : memref<1x2x4xf32, #tpu.memory_space<vmem>>, vector<1x1x4xf32>
    %77 = vector.shape_cast %76 : vector<1x1x4xf32> to vector<1x4xf32>
    %78 = vector.shape_cast %75 : vector<1x4xf32> to vector<1x1x4xf32>
    tpu.vector_store %arg6[%c0_99, %c1_100, %c0_101], %78 {strides = array<i32>} : memref<1x2x4xf32, #tpu.memory_space<vmem>>, vector<1x1x4xf32>,
    return
  }
  func.func @transform_0(%arg0: i32) -> (i32, i32, i32, i32) {
    %c0_i32 = arith.constant 0 : i32
    %c0_i32_0 = arith.constant 0 : i32
    %c0_i32_1 = arith.constant 0 : i32
    %c0_i32_2 = arith.constant 0 : i32
    return %arg0, %c0_i32, %c0_i32_0, %c0_i32_1 : i32, i32, i32, i32
  }
  func.func @transform_1(%arg0: i32) -> (i32, i32, i32, i32) {
    %c0_i32 = arith.constant 0 : i32
    %c0_i32_0 = arith.constant 0 : i32
    %c0_i32_1 = arith.constant 0 : i32
    %c0_i32_2 = arith.constant 0 : i32
    %c0_i32_3 = arith.constant 0 : i32
    return %c0_i32, %c0_i32_0, %c0_i32_1, %c0_i32_2 : i32, i32, i32, i32
  }
  func.func @transform_2(%arg0: i32) -> (i32, i32) {
    %c0_i32 = arith.constant 0 : i32
    %c0_i32_0 = arith.constant 0 : i32
    %c0_i32_1 = arith.constant 0 : i32
    return %c0_i32, %c0_i32_0 : i32, i32
  }
  func.func @transform_3(%arg0: i32) -> (i32, i32) {
    %c0_i32 = arith.constant 0 : i32
    %c0_i32_0 = arith.constant 0 : i32
    %c0_i32_1 = arith.constant 0 : i32
    return %c0_i32, %c0_i32_0 : i32, i32
  }
  func.func @transform_4(%arg0: i32) -> (i32, i32, i32, i32) {
    %c0_i32 = arith.constant 0 : i32
    %c0_i32_0 = arith.constant 0 : i32
    %c0_i32_1 = arith.constant 0 : i32
    %c0_i32_2 = arith.constant 0 : i32
    return %arg0, %c0_i32, %c0_i32_0, %c0_i32_1 : i32, i32, i32, i32
  }
  func.func @transform_5(%arg0: i32) -> (i32, i32, i32) {
    %c0_i32 = arith.constant 0 : i32
    %c0_i32_0 = arith.constant 0 : i32
    %c0_i32_1 = arith.constant 0 : i32
    return %arg0, %c0_i32, %c0_i32_0 : i32, i32, i32
  }
}

module attributes {stable_mosaic.version = 11 : i64} {
  func.func @_conv3x3_stats_kernel(%arg0: i32, %arg1: memref<1x16x16x4xf32, #tpu.memory_space<vmem>>, %arg2: memref<3x3x4x4xf32, #tpu.memory_space<vmem>>, %arg3: memref<1x4xf32, #tpu.memory_space<vmem>>, %arg4: memref<1x4xf32, #tpu.memory_space<vmem>>, %arg5: memref<1x16x16x4xf32, #tpu.memory_space<vmem>>, %arg6: memref<1x2x4xf32, #tpu.memory_space<vmem>>, %arg7: memref<18x18x4xf32, #tpu.memory_space<vmem>>) attributes {dimension_semantics = [#tpu.dimension_semantics<parallel>], iteration_bounds = array<i64: 2>, scalar_prefetch = 0 : i64, scratch_operands = 1 : i64, tpu.core_type = #tpu.core_type<tc>, window_params = [{transform_indices = @transform_0, window_bounds = array<i64: 1, 16, 16, 4>}, {pipeline_mode = #tpu.pipeline_mode<synchronous>, transform_indices = @transform_1, window_bounds = array<i64: 3, 3, 4, 4>}, {pipeline_mode = #tpu.pipeline_mode<synchronous>, transform_indices = @transform_2, window_bounds = array<i64: 1, 4>}, {pipeline_mode = #tpu.pipeline_mode<synchronous>, transform_indices = @transform_3, window_bounds = array<i64: 1, 4>}, {transform_indices = @transform_4, window_bounds = array<i64: 1, 16, 16, 4>}, {transform_indices = @transform_5, window_bounds = array<i64: 1, 2, 4>}]} {
    %c0 = arith.constant 0 : index
    %c0_0 = arith.constant 0 : index
    %c0_1 = arith.constant 0 : index
    %c0_2 = arith.constant 0 : index
    %0 = vector.load %arg1[%c0, %c0_0, %c0_1, %c0_2] : memref<1x16x16x4xf32, #tpu.memory_space<vmem>>, vector<1x16x16x4xf32>
    %1 = vector.shape_cast %0 : vector<1x16x16x4xf32> to vector<16x16x4xf32>
    %c0_3 = arith.constant 0 : index
    %c0_4 = arith.constant 0 : index
    %2 = vector.load %arg3[%c0_3, %c0_4] : memref<1x4xf32, #tpu.memory_space<vmem>>, vector<1x4xf32>
    %3 = vector.shape_cast %2 : vector<1x4xf32> to vector<1x1x4xf32>
    %4 = vector.broadcast %3 : vector<1x1x4xf32> to vector<16x16x4xf32>
    %5 = arith.mulf %1, %4 : vector<16x16x4xf32>
    %c0_5 = arith.constant 0 : index
    %c0_6 = arith.constant 0 : index
    %6 = vector.load %arg4[%c0_5, %c0_6] : memref<1x4xf32, #tpu.memory_space<vmem>>, vector<1x4xf32>
    %7 = vector.shape_cast %6 : vector<1x4xf32> to vector<1x1x4xf32>
    %8 = vector.broadcast %7 : vector<1x1x4xf32> to vector<16x16x4xf32>
    %9 = arith.addf %5, %8 : vector<16x16x4xf32>
    %cst = arith.constant 0.000000e+00 : f32
    %10 = vector.broadcast %cst : f32 to vector<16x16x4xf32>
    %11 = arith.maximumf %9, %10 : vector<16x16x4xf32>
    %cst_7 = arith.constant 0.000000e+00 : f32
    %12 = vector.broadcast %cst_7 : f32 to vector<1x18x4xf32>
    %c0_8 = arith.constant 0 : index
    %c0_9 = arith.constant 0 : index
    %c0_10 = arith.constant 0 : index
    %13 = vector.load %arg7[%c0_8, %c0_9, %c0_10] : memref<18x18x4xf32, #tpu.memory_space<vmem>>, vector<1x18x4xf32>
    tpu.vector_store %arg7[%c0_8, %c0_9, %c0_10], %12 {strides = array<i32>} : memref<18x18x4xf32, #tpu.memory_space<vmem>>, vector<1x18x4xf32>,
    %cst_11 = arith.constant 0.000000e+00 : f32
    %14 = vector.broadcast %cst_11 : f32 to vector<1x18x4xf32>
    %c17 = arith.constant 17 : index
    %c0_12 = arith.constant 0 : index
    %c0_13 = arith.constant 0 : index
    %15 = vector.load %arg7[%c17, %c0_12, %c0_13] : memref<18x18x4xf32, #tpu.memory_space<vmem>>, vector<1x18x4xf32>
    tpu.vector_store %arg7[%c17, %c0_12, %c0_13], %14 {strides = array<i32>} : memref<18x18x4xf32, #tpu.memory_space<vmem>>, vector<1x18x4xf32>,
    %cst_14 = arith.constant 0.000000e+00 : f32
    %16 = vector.broadcast %cst_14 : f32 to vector<18x1x4xf32>
    %c0_15 = arith.constant 0 : index
    %c0_16 = arith.constant 0 : index
    %c0_17 = arith.constant 0 : index
    %17 = vector.load %arg7[%c0_15, %c0_16, %c0_17] : memref<18x18x4xf32, #tpu.memory_space<vmem>>, vector<18x1x4xf32>
    tpu.vector_store %arg7[%c0_15, %c0_16, %c0_17], %16 {strides = array<i32>} : memref<18x18x4xf32, #tpu.memory_space<vmem>>, vector<18x1x4xf32>,
    %cst_18 = arith.constant 0.000000e+00 : f32
    %18 = vector.broadcast %cst_18 : f32 to vector<18x1x4xf32>
    %c0_19 = arith.constant 0 : index
    %c17_20 = arith.constant 17 : index
    %c0_21 = arith.constant 0 : index
    %19 = vector.load %arg7[%c0_19, %c17_20, %c0_21] : memref<18x18x4xf32, #tpu.memory_space<vmem>>, vector<18x1x4xf32>
    tpu.vector_store %arg7[%c0_19, %c17_20, %c0_21], %18 {strides = array<i32>} : memref<18x18x4xf32, #tpu.memory_space<vmem>>, vector<18x1x4xf32>,
    %c1 = arith.constant 1 : index
    %c1_22 = arith.constant 1 : index
    %c0_23 = arith.constant 0 : index
    %20 = vector.load %arg7[%c1, %c1_22, %c0_23] : memref<18x18x4xf32, #tpu.memory_space<vmem>>, vector<16x16x4xf32>
    tpu.vector_store %arg7[%c1, %c1_22, %c0_23], %11 {strides = array<i32>} : memref<18x18x4xf32, #tpu.memory_space<vmem>>, vector<16x16x4xf32>,
    %c0_24 = arith.constant 0 : index
    %c0_25 = arith.constant 0 : index
    %c0_26 = arith.constant 0 : index
    %21 = vector.load %arg7[%c0_24, %c0_25, %c0_26] : memref<18x18x4xf32, #tpu.memory_space<vmem>>, vector<16x16x4xf32>
    %22 = vector.shape_cast %21 : vector<16x16x4xf32> to vector<256x4xf32>
    %c0_27 = arith.constant 0 : index
    %c0_28 = arith.constant 0 : index
    %c0_29 = arith.constant 0 : index
    %c0_30 = arith.constant 0 : index
    %23 = vector.load %arg2[%c0_27, %c0_28, %c0_29, %c0_30] : memref<3x3x4x4xf32, #tpu.memory_space<vmem>>, vector<1x1x4x4xf32>
    %24 = vector.shape_cast %23 : vector<1x1x4x4xf32> to vector<4x4xf32>
    %cst_31 = arith.constant dense<0.000000e+00> : vector<256x4xf32>
    %25 = tpu.matmul %22, %24, %cst_31 {dimension_numbers = #tpu.dot_dimension_numbers<[1], [0], [0], [1], [0, 0, 1, 1], [], []>} : vector<256x4xf32>, vector<4x4xf32>, vector<256x4xf32> -> vector<256x4xf32>
    %c0_32 = arith.constant 0 : index
    %c1_33 = arith.constant 1 : index
    %c0_34 = arith.constant 0 : index
    %26 = vector.load %arg7[%c0_32, %c1_33, %c0_34] : memref<18x18x4xf32, #tpu.memory_space<vmem>>, vector<16x16x4xf32>
    %27 = vector.shape_cast %26 : vector<16x16x4xf32> to vector<256x4xf32>
    %c0_35 = arith.constant 0 : index
    %c1_36 = arith.constant 1 : index
    %c0_37 = arith.constant 0 : index
    %c0_38 = arith.constant 0 : index
    %28 = vector.load %arg2[%c0_35, %c1_36, %c0_37, %c0_38] : memref<3x3x4x4xf32, #tpu.memory_space<vmem>>, vector<1x1x4x4xf32>
    %29 = vector.shape_cast %28 : vector<1x1x4x4xf32> to vector<4x4xf32>
    %cst_39 = arith.constant dense<0.000000e+00> : vector<256x4xf32>
    %30 = tpu.matmul %27, %29, %cst_39 {dimension_numbers = #tpu.dot_dimension_numbers<[1], [0], [0], [1], [0, 0, 1, 1], [], []>} : vector<256x4xf32>, vector<4x4xf32>, vector<256x4xf32> -> vector<256x4xf32>
    %31 = arith.addf %25, %30 : vector<256x4xf32>
    %c0_40 = arith.constant 0 : index
    %c2 = arith.constant 2 : index
    %c0_41 = arith.constant 0 : index
    %32 = vector.load %arg7[%c0_40, %c2, %c0_41] : memref<18x18x4xf32, #tpu.memory_space<vmem>>, vector<16x16x4xf32>
    %33 = vector.shape_cast %32 : vector<16x16x4xf32> to vector<256x4xf32>
    %c0_42 = arith.constant 0 : index
    %c2_43 = arith.constant 2 : index
    %c0_44 = arith.constant 0 : index
    %c0_45 = arith.constant 0 : index
    %34 = vector.load %arg2[%c0_42, %c2_43, %c0_44, %c0_45] : memref<3x3x4x4xf32, #tpu.memory_space<vmem>>, vector<1x1x4x4xf32>
    %35 = vector.shape_cast %34 : vector<1x1x4x4xf32> to vector<4x4xf32>
    %cst_46 = arith.constant dense<0.000000e+00> : vector<256x4xf32>
    %36 = tpu.matmul %33, %35, %cst_46 {dimension_numbers = #tpu.dot_dimension_numbers<[1], [0], [0], [1], [0, 0, 1, 1], [], []>} : vector<256x4xf32>, vector<4x4xf32>, vector<256x4xf32> -> vector<256x4xf32>
    %37 = arith.addf %31, %36 : vector<256x4xf32>
    %c1_47 = arith.constant 1 : index
    %c0_48 = arith.constant 0 : index
    %c0_49 = arith.constant 0 : index
    %38 = vector.load %arg7[%c1_47, %c0_48, %c0_49] : memref<18x18x4xf32, #tpu.memory_space<vmem>>, vector<16x16x4xf32>
    %39 = vector.shape_cast %38 : vector<16x16x4xf32> to vector<256x4xf32>
    %c1_50 = arith.constant 1 : index
    %c0_51 = arith.constant 0 : index
    %c0_52 = arith.constant 0 : index
    %c0_53 = arith.constant 0 : index
    %40 = vector.load %arg2[%c1_50, %c0_51, %c0_52, %c0_53] : memref<3x3x4x4xf32, #tpu.memory_space<vmem>>, vector<1x1x4x4xf32>
    %41 = vector.shape_cast %40 : vector<1x1x4x4xf32> to vector<4x4xf32>
    %cst_54 = arith.constant dense<0.000000e+00> : vector<256x4xf32>
    %42 = tpu.matmul %39, %41, %cst_54 {dimension_numbers = #tpu.dot_dimension_numbers<[1], [0], [0], [1], [0, 0, 1, 1], [], []>} : vector<256x4xf32>, vector<4x4xf32>, vector<256x4xf32> -> vector<256x4xf32>
    %43 = arith.addf %37, %42 : vector<256x4xf32>
    %c1_55 = arith.constant 1 : index
    %c1_56 = arith.constant 1 : index
    %c0_57 = arith.constant 0 : index
    %44 = vector.load %arg7[%c1_55, %c1_56, %c0_57] : memref<18x18x4xf32, #tpu.memory_space<vmem>>, vector<16x16x4xf32>
    %45 = vector.shape_cast %44 : vector<16x16x4xf32> to vector<256x4xf32>
    %c1_58 = arith.constant 1 : index
    %c1_59 = arith.constant 1 : index
    %c0_60 = arith.constant 0 : index
    %c0_61 = arith.constant 0 : index
    %46 = vector.load %arg2[%c1_58, %c1_59, %c0_60, %c0_61] : memref<3x3x4x4xf32, #tpu.memory_space<vmem>>, vector<1x1x4x4xf32>
    %47 = vector.shape_cast %46 : vector<1x1x4x4xf32> to vector<4x4xf32>
    %cst_62 = arith.constant dense<0.000000e+00> : vector<256x4xf32>
    %48 = tpu.matmul %45, %47, %cst_62 {dimension_numbers = #tpu.dot_dimension_numbers<[1], [0], [0], [1], [0, 0, 1, 1], [], []>} : vector<256x4xf32>, vector<4x4xf32>, vector<256x4xf32> -> vector<256x4xf32>
    %49 = arith.addf %43, %48 : vector<256x4xf32>
    %c1_63 = arith.constant 1 : index
    %c2_64 = arith.constant 2 : index
    %c0_65 = arith.constant 0 : index
    %50 = vector.load %arg7[%c1_63, %c2_64, %c0_65] : memref<18x18x4xf32, #tpu.memory_space<vmem>>, vector<16x16x4xf32>
    %51 = vector.shape_cast %50 : vector<16x16x4xf32> to vector<256x4xf32>
    %c1_66 = arith.constant 1 : index
    %c2_67 = arith.constant 2 : index
    %c0_68 = arith.constant 0 : index
    %c0_69 = arith.constant 0 : index
    %52 = vector.load %arg2[%c1_66, %c2_67, %c0_68, %c0_69] : memref<3x3x4x4xf32, #tpu.memory_space<vmem>>, vector<1x1x4x4xf32>
    %53 = vector.shape_cast %52 : vector<1x1x4x4xf32> to vector<4x4xf32>
    %cst_70 = arith.constant dense<0.000000e+00> : vector<256x4xf32>
    %54 = tpu.matmul %51, %53, %cst_70 {dimension_numbers = #tpu.dot_dimension_numbers<[1], [0], [0], [1], [0, 0, 1, 1], [], []>} : vector<256x4xf32>, vector<4x4xf32>, vector<256x4xf32> -> vector<256x4xf32>
    %55 = arith.addf %49, %54 : vector<256x4xf32>
    %c2_71 = arith.constant 2 : index
    %c0_72 = arith.constant 0 : index
    %c0_73 = arith.constant 0 : index
    %56 = vector.load %arg7[%c2_71, %c0_72, %c0_73] : memref<18x18x4xf32, #tpu.memory_space<vmem>>, vector<16x16x4xf32>
    %57 = vector.shape_cast %56 : vector<16x16x4xf32> to vector<256x4xf32>
    %c2_74 = arith.constant 2 : index
    %c0_75 = arith.constant 0 : index
    %c0_76 = arith.constant 0 : index
    %c0_77 = arith.constant 0 : index
    %58 = vector.load %arg2[%c2_74, %c0_75, %c0_76, %c0_77] : memref<3x3x4x4xf32, #tpu.memory_space<vmem>>, vector<1x1x4x4xf32>
    %59 = vector.shape_cast %58 : vector<1x1x4x4xf32> to vector<4x4xf32>
    %cst_78 = arith.constant dense<0.000000e+00> : vector<256x4xf32>
    %60 = tpu.matmul %57, %59, %cst_78 {dimension_numbers = #tpu.dot_dimension_numbers<[1], [0], [0], [1], [0, 0, 1, 1], [], []>} : vector<256x4xf32>, vector<4x4xf32>, vector<256x4xf32> -> vector<256x4xf32>
    %61 = arith.addf %55, %60 : vector<256x4xf32>
    %c2_79 = arith.constant 2 : index
    %c1_80 = arith.constant 1 : index
    %c0_81 = arith.constant 0 : index
    %62 = vector.load %arg7[%c2_79, %c1_80, %c0_81] : memref<18x18x4xf32, #tpu.memory_space<vmem>>, vector<16x16x4xf32>
    %63 = vector.shape_cast %62 : vector<16x16x4xf32> to vector<256x4xf32>
    %c2_82 = arith.constant 2 : index
    %c1_83 = arith.constant 1 : index
    %c0_84 = arith.constant 0 : index
    %c0_85 = arith.constant 0 : index
    %64 = vector.load %arg2[%c2_82, %c1_83, %c0_84, %c0_85] : memref<3x3x4x4xf32, #tpu.memory_space<vmem>>, vector<1x1x4x4xf32>
    %65 = vector.shape_cast %64 : vector<1x1x4x4xf32> to vector<4x4xf32>
    %cst_86 = arith.constant dense<0.000000e+00> : vector<256x4xf32>
    %66 = tpu.matmul %63, %65, %cst_86 {dimension_numbers = #tpu.dot_dimension_numbers<[1], [0], [0], [1], [0, 0, 1, 1], [], []>} : vector<256x4xf32>, vector<4x4xf32>, vector<256x4xf32> -> vector<256x4xf32>
    %67 = arith.addf %61, %66 : vector<256x4xf32>
    %c2_87 = arith.constant 2 : index
    %c2_88 = arith.constant 2 : index
    %c0_89 = arith.constant 0 : index
    %68 = vector.load %arg7[%c2_87, %c2_88, %c0_89] : memref<18x18x4xf32, #tpu.memory_space<vmem>>, vector<16x16x4xf32>
    %69 = vector.shape_cast %68 : vector<16x16x4xf32> to vector<256x4xf32>
    %c2_90 = arith.constant 2 : index
    %c2_91 = arith.constant 2 : index
    %c0_92 = arith.constant 0 : index
    %c0_93 = arith.constant 0 : index
    %70 = vector.load %arg2[%c2_90, %c2_91, %c0_92, %c0_93] : memref<3x3x4x4xf32, #tpu.memory_space<vmem>>, vector<1x1x4x4xf32>
    %71 = vector.shape_cast %70 : vector<1x1x4x4xf32> to vector<4x4xf32>
    %cst_94 = arith.constant dense<0.000000e+00> : vector<256x4xf32>
    %72 = tpu.matmul %69, %71, %cst_94 {dimension_numbers = #tpu.dot_dimension_numbers<[1], [0], [0], [1], [0, 0, 1, 1], [], []>} : vector<256x4xf32>, vector<4x4xf32>, vector<256x4xf32> -> vector<256x4xf32>
    %73 = arith.addf %67, %72 : vector<256x4xf32>
    %74 = vector.shape_cast %73 : vector<256x4xf32> to vector<16x16x4xf32>
    %c0_95 = arith.constant 0 : index
    %c0_96 = arith.constant 0 : index
    %c0_97 = arith.constant 0 : index
    %c0_98 = arith.constant 0 : index
    %75 = vector.load %arg5[%c0_95, %c0_96, %c0_97, %c0_98] : memref<1x16x16x4xf32, #tpu.memory_space<vmem>>, vector<1x16x16x4xf32>
    %76 = vector.shape_cast %75 : vector<1x16x16x4xf32> to vector<16x16x4xf32>
    %77 = vector.shape_cast %74 : vector<16x16x4xf32> to vector<1x16x16x4xf32>
    tpu.vector_store %arg5[%c0_95, %c0_96, %c0_97, %c0_98], %77 {strides = array<i32>} : memref<1x16x16x4xf32, #tpu.memory_space<vmem>>, vector<1x16x16x4xf32>,
    %cst_99 = arith.constant dense<0.000000e+00> : vector<4xf32>
    %78 = vector.multi_reduction <add>, %73, %cst_99 [0] : vector<256x4xf32> to vector<4xf32>
    %79 = vector.shape_cast %78 : vector<4xf32> to vector<1x4xf32>
    %c0_100 = arith.constant 0 : index
    %c0_101 = arith.constant 0 : index
    %c0_102 = arith.constant 0 : index
    %80 = vector.load %arg6[%c0_100, %c0_101, %c0_102] : memref<1x2x4xf32, #tpu.memory_space<vmem>>, vector<1x1x4xf32>
    %81 = vector.shape_cast %80 : vector<1x1x4xf32> to vector<1x4xf32>
    %82 = vector.shape_cast %79 : vector<1x4xf32> to vector<1x1x4xf32>
    tpu.vector_store %arg6[%c0_100, %c0_101, %c0_102], %82 {strides = array<i32>} : memref<1x2x4xf32, #tpu.memory_space<vmem>>, vector<1x1x4xf32>,
    %83 = arith.mulf %73, %73 : vector<256x4xf32>
    %cst_103 = arith.constant dense<0.000000e+00> : vector<4xf32>
    %84 = vector.multi_reduction <add>, %83, %cst_103 [0] : vector<256x4xf32> to vector<4xf32>
    %85 = vector.shape_cast %84 : vector<4xf32> to vector<1x4xf32>
    %c0_104 = arith.constant 0 : index
    %c1_105 = arith.constant 1 : index
    %c0_106 = arith.constant 0 : index
    %86 = vector.load %arg6[%c0_104, %c1_105, %c0_106] : memref<1x2x4xf32, #tpu.memory_space<vmem>>, vector<1x1x4xf32>
    %87 = vector.shape_cast %86 : vector<1x1x4xf32> to vector<1x4xf32>
    %88 = vector.shape_cast %85 : vector<1x4xf32> to vector<1x1x4xf32>
    tpu.vector_store %arg6[%c0_104, %c1_105, %c0_106], %88 {strides = array<i32>} : memref<1x2x4xf32, #tpu.memory_space<vmem>>, vector<1x1x4xf32>,
    return
  }
  func.func @transform_0(%arg0: i32) -> (i32, i32, i32, i32) {
    %c0_i32 = arith.constant 0 : i32
    %c0_i32_0 = arith.constant 0 : i32
    %c0_i32_1 = arith.constant 0 : i32
    %c0_i32_2 = arith.constant 0 : i32
    return %arg0, %c0_i32, %c0_i32_0, %c0_i32_1 : i32, i32, i32, i32
  }
  func.func @transform_1(%arg0: i32) -> (i32, i32, i32, i32) {
    %c0_i32 = arith.constant 0 : i32
    %c0_i32_0 = arith.constant 0 : i32
    %c0_i32_1 = arith.constant 0 : i32
    %c0_i32_2 = arith.constant 0 : i32
    %c0_i32_3 = arith.constant 0 : i32
    return %c0_i32, %c0_i32_0, %c0_i32_1, %c0_i32_2 : i32, i32, i32, i32
  }
  func.func @transform_2(%arg0: i32) -> (i32, i32) {
    %c0_i32 = arith.constant 0 : i32
    %c0_i32_0 = arith.constant 0 : i32
    %c0_i32_1 = arith.constant 0 : i32
    return %c0_i32, %c0_i32_0 : i32, i32
  }
  func.func @transform_3(%arg0: i32) -> (i32, i32) {
    %c0_i32 = arith.constant 0 : i32
    %c0_i32_0 = arith.constant 0 : i32
    %c0_i32_1 = arith.constant 0 : i32
    return %c0_i32, %c0_i32_0 : i32, i32
  }
  func.func @transform_4(%arg0: i32) -> (i32, i32, i32, i32) {
    %c0_i32 = arith.constant 0 : i32
    %c0_i32_0 = arith.constant 0 : i32
    %c0_i32_1 = arith.constant 0 : i32
    %c0_i32_2 = arith.constant 0 : i32
    return %arg0, %c0_i32, %c0_i32_0, %c0_i32_1 : i32, i32, i32, i32
  }
  func.func @transform_5(%arg0: i32) -> (i32, i32, i32) {
    %c0_i32 = arith.constant 0 : i32
    %c0_i32_0 = arith.constant 0 : i32
    %c0_i32_1 = arith.constant 0 : i32
    return %arg0, %c0_i32, %c0_i32_0 : i32, i32, i32
  }
}

module attributes {stable_mosaic.version = 11 : i64} {
  func.func @_bn_add_relu_kernel(%arg0: i32, %arg1: memref<1x16x16x4xf32, #tpu.memory_space<vmem>>, %arg2: memref<1x16x16x4xf32, #tpu.memory_space<vmem>>, %arg3: memref<1x4xf32, #tpu.memory_space<vmem>>, %arg4: memref<1x4xf32, #tpu.memory_space<vmem>>, %arg5: memref<1x16x16x4xf32, #tpu.memory_space<vmem>>) attributes {dimension_semantics = [#tpu.dimension_semantics<parallel>], iteration_bounds = array<i64: 2>, scalar_prefetch = 0 : i64, scratch_operands = 0 : i64, tpu.core_type = #tpu.core_type<tc>, window_params = [{transform_indices = @transform_0, window_bounds = array<i64: 1, 16, 16, 4>}, {transform_indices = @transform_1, window_bounds = array<i64: 1, 16, 16, 4>}, {pipeline_mode = #tpu.pipeline_mode<synchronous>, transform_indices = @transform_2, window_bounds = array<i64: 1, 4>}, {pipeline_mode = #tpu.pipeline_mode<synchronous>, transform_indices = @transform_3, window_bounds = array<i64: 1, 4>}, {transform_indices = @transform_4, window_bounds = array<i64: 1, 16, 16, 4>}]} {
    %c0 = arith.constant 0 : index
    %c0_0 = arith.constant 0 : index
    %c0_1 = arith.constant 0 : index
    %c0_2 = arith.constant 0 : index
    %0 = vector.load %arg1[%c0, %c0_0, %c0_1, %c0_2] : memref<1x16x16x4xf32, #tpu.memory_space<vmem>>, vector<1x16x16x4xf32>
    %1 = vector.shape_cast %0 : vector<1x16x16x4xf32> to vector<16x16x4xf32>
    %c0_3 = arith.constant 0 : index
    %c0_4 = arith.constant 0 : index
    %2 = vector.load %arg3[%c0_3, %c0_4] : memref<1x4xf32, #tpu.memory_space<vmem>>, vector<1x4xf32>
    %3 = vector.shape_cast %2 : vector<1x4xf32> to vector<1x1x4xf32>
    %4 = vector.broadcast %3 : vector<1x1x4xf32> to vector<16x16x4xf32>
    %5 = arith.mulf %1, %4 : vector<16x16x4xf32>
    %c0_5 = arith.constant 0 : index
    %c0_6 = arith.constant 0 : index
    %6 = vector.load %arg4[%c0_5, %c0_6] : memref<1x4xf32, #tpu.memory_space<vmem>>, vector<1x4xf32>
    %7 = vector.shape_cast %6 : vector<1x4xf32> to vector<1x1x4xf32>
    %8 = vector.broadcast %7 : vector<1x1x4xf32> to vector<16x16x4xf32>
    %9 = arith.addf %5, %8 : vector<16x16x4xf32>
    %c0_7 = arith.constant 0 : index
    %c0_8 = arith.constant 0 : index
    %c0_9 = arith.constant 0 : index
    %c0_10 = arith.constant 0 : index
    %10 = vector.load %arg2[%c0_7, %c0_8, %c0_9, %c0_10] : memref<1x16x16x4xf32, #tpu.memory_space<vmem>>, vector<1x16x16x4xf32>
    %11 = vector.shape_cast %10 : vector<1x16x16x4xf32> to vector<16x16x4xf32>
    %12 = arith.addf %9, %11 : vector<16x16x4xf32>
    %cst = arith.constant 0.000000e+00 : f32
    %13 = vector.broadcast %cst : f32 to vector<16x16x4xf32>
    %14 = arith.maximumf %12, %13 : vector<16x16x4xf32>
    %c0_11 = arith.constant 0 : index
    %c0_12 = arith.constant 0 : index
    %c0_13 = arith.constant 0 : index
    %c0_14 = arith.constant 0 : index
    %15 = vector.load %arg5[%c0_11, %c0_12, %c0_13, %c0_14] : memref<1x16x16x4xf32, #tpu.memory_space<vmem>>, vector<1x16x16x4xf32>
    %16 = vector.shape_cast %15 : vector<1x16x16x4xf32> to vector<16x16x4xf32>
    %17 = vector.shape_cast %14 : vector<16x16x4xf32> to vector<1x16x16x4xf32>
    tpu.vector_store %arg5[%c0_11, %c0_12, %c0_13, %c0_14], %17 {strides = array<i32>} : memref<1x16x16x4xf32, #tpu.memory_space<vmem>>, vector<1x16x16x4xf32>,
    return
  }
  func.func @transform_0(%arg0: i32) -> (i32, i32, i32, i32) {
    %c0_i32 = arith.constant 0 : i32
    %c0_i32_0 = arith.constant 0 : i32
    %c0_i32_1 = arith.constant 0 : i32
    %c0_i32_2 = arith.constant 0 : i32
    return %arg0, %c0_i32, %c0_i32_0, %c0_i32_1 : i32, i32, i32, i32
  }
  func.func @transform_1(%arg0: i32) -> (i32, i32, i32, i32) {
    %c0_i32 = arith.constant 0 : i32
    %c0_i32_0 = arith.constant 0 : i32
    %c0_i32_1 = arith.constant 0 : i32
    %c0_i32_2 = arith.constant 0 : i32
    return %arg0, %c0_i32, %c0_i32_0, %c0_i32_1 : i32, i32, i32, i32
  }
  func.func @transform_2(%arg0: i32) -> (i32, i32) {
    %c0_i32 = arith.constant 0 : i32
    %c0_i32_0 = arith.constant 0 : i32
    %c0_i32_1 = arith.constant 0 : i32
    return %c0_i32, %c0_i32_0 : i32, i32
  }
  func.func @transform_3(%arg0: i32) -> (i32, i32) {
    %c0_i32 = arith.constant 0 : i32
    %c0_i32_0 = arith.constant 0 : i32
    %c0_i32_1 = arith.constant 0 : i32
    return %c0_i32, %c0_i32_0 : i32, i32
  }
  func.func @transform_4(%arg0: i32) -> (i32, i32, i32, i32) {
    %c0_i32 = arith.constant 0 : i32
    %c0_i32_0 = arith.constant 0 : i32
    %c0_i32_1 = arith.constant 0 : i32
    %c0_i32_2 = arith.constant 0 : i32
    return %arg0, %c0_i32, %c0_i32_0, %c0_i32_1 : i32, i32, i32, i32
  }
}

</mosaic_0001>

<llo_original>
// kernel: basic_block_forward.5
$region0: #{basic_block_forward.5}
  #allocation0 [shape = 'u32[]', space=smem, size = 0x4, offset = 0x4, fixed_abs, tag = 'smem constant byte address 0x4 - core index']
  #allocation1 [shape = 'u32[144,128]{1,0:T(1,128)}', space=vmem, size = 0x12000, scoped, tag = 'internal scratch']
  %s0 = inlined_call_operand.hbm [shape: f32[2,16,16,4], index: 0, kind: input, shape index: {}]
  %s1 = inlined_call_operand.hbm [shape: f32[2,16,16,4], index: 1, kind: input, shape index: {}]
  %s2 = inlined_call_operand.hbm [shape: f32[1,4], index: 2, kind: input, shape index: {}]
  %s3 = inlined_call_operand.hbm [shape: f32[1,4], index: 3, kind: input, shape index: {}]
  %s4 = inlined_call_operand.hbm [shape: f32[2,16,16,4], index: 4, kind: output, shape index: {}]
  %s5 = sld [smem:[#allocation0]]
  $region65: #{basic_block_forward.5} parent=0
    _
  %s7 = ssub.s32 1, %s5
  %s8 = scalar_select 0, %s7, %s5
  $region1: #{basic_block_forward.5} parent=0
    #allocation2 [shape = 'u8[262144]{0}', space=vmem, size = 0x40000, scoped, tag = 'input window, operand 0']
    #allocation3 [shape = 's32[2]{0}', space=sflag, size = 0x8, scoped, tag = 'scoped memory for basic_block_forward.5']
    #allocation4 [shape = 's32[2]{0}', space=sflag, size = 0x8, scoped, tag = 'scoped memory for basic_block_forward.5']
    #allocation5 [shape = 'u8[262144]{0}', space=vmem, size = 0x40000, scoped, tag = 'input window, operand 1']
    #allocation6 [shape = 's32[2]{0}', space=sflag, size = 0x8, scoped, tag = 'scoped memory for basic_block_forward.5']
    #allocation7 [shape = 'u8[512]{0}', space=vmem, size = 0x400, scoped, tag = 'input window, operand 2, single buffered']
    #allocation8 [shape = 'u8[512]{0}', space=vmem, size = 0x400, scoped, tag = 'input window, operand 3, single buffered']
    #allocation9 [shape = 's32[1]{0}', space=sflag, size = 0x4, scoped, tag = 'scoped memory for basic_block_forward.5']
    #allocation10 [shape = 'u8[262144]{0}', space=vmem, size = 0x40000, scoped, tag = 'output window, operand 0']
    %9 = vsyncpa [#allocation3], 0
    %s10 = scalar_lea.sflag [#allocation3], 1
    %11 = vsyncpa %s10, 0
    %12 = vsyncpa [#allocation6], 0
    %s13 = scalar_lea.sflag [#allocation6], 1
    %14 = vsyncpa %s13, 0
    %15 = vsyncpa [#allocation9], 0
    %16 = vsyncpa [#allocation4], 0
    %s17 = scalar_lea.sflag [#allocation4], 1
    %18 = vsyncpa %s17, 0
    loop: start=0, step=1, limit=4
    $region2: #{basic_block_forward.5} parent=1 // loop_pre_header
      _
    $region3: #{basic_block_forward.5} parent=1 // loop_header
      %s20 = sphi 0, %s24
      %p21 = scmp.ge.s32.totalorder %s20, 4
      %s30 = sphi 0, %s32
      %s33 = sphi 0, %s30
      %s34 = sphi 0, %s33
      %s50 = sphi 0, %s34
      %s56 = sphi 0, %s58
      %s59 = sphi 0, %s56
      %s60 = sphi 0, %s59
      %s76 = sphi 0, %s60
      %s80 = sphi 0, %s80
      %s82 = sphi 0, %s80
      %s83 = sphi 0, %s82
      %s97 = sphi 0, %s83
      %s101 = sphi 0, %s101
      %s103 = sphi 0, %s101
      %s104 = sphi 0, %s103
      %s118 = sphi 0, %s104
      %s124 = sphi 0, %s126
      %s127 = sphi 0, %s124
      %s128 = sphi 0, %s127
      %s144 = sphi 0, %s128
    $region4: #{basic_block_forward.5} parent=1 // loop_header_branch
      %23 = sbr.rel (%p21) target = $region8
    $region5: #{basic_block_forward.5} parent=1 // loop_body
      %s25 = ssub.s32 %s20, 1
      %s26 = ssub.s32 %s20, 2
      %s27 = sadd.s32 %s20, 1
      %s28 = ssub.s32 %s20, %s27
      %p29 = scmp.eq.s32.totalorder %s28, 0
      %s31 = sadd.s32 %s30, 1
      %s32 = scalar_select %p29, %s30, %s31
      %p35 = pneg %p29
      %p36 = scmp.eq.s32.totalorder %s20, 1
      %p37 = por %p35, %p36
      %p38 = scmp.ne.s32.totalorder %s30, %s33
      %p39 = scmp.eq.s32.totalorder %s20, 0
      %p40 = por %p38, %p39
      %p41 = scmp.ne.s32.totalorder %s30, %s33
      %p42 = scmp.eq.s32.totalorder %s25, 1
      %p43 = por %p41, %p42
      %p44 = scmp.ne.s32.totalorder %s33, %s34
      %p45 = scmp.eq.s32.totalorder %s25, 0
      %p46 = por %p44, %p45
      %p47 = scmp.ne.s32.totalorder %s33, %s34
      %p48 = scmp.eq.s32.totalorder %s26, 1
      %p49 = por %p47, %p48
      %p51 = scmp.ne.s32.totalorder %s34, %s50
      %p52 = scmp.eq.s32.totalorder %s26, 0
      %p53 = por %p51, %p52
      %s54 = ssub.s32 %s20, %s27
      %p55 = scmp.eq.s32.totalorder %s54, 0
      %s57 = sadd.s32 %s56, 1
      %s58 = scalar_select %p55, %s56, %s57
      %p61 = pneg %p55
      %p62 = scmp.eq.s32.totalorder %s20, 1
      %p63 = por %p61, %p62
      %p64 = scmp.ne.s32.totalorder %s56, %s59
      %p65 = scmp.eq.s32.totalorder %s20, 0
      %p66 = por %p64, %p65
      %p67 = scmp.ne.s32.totalorder %s56, %s59
      %p68 = scmp.eq.s32.totalorder %s25, 1
      %p69 = por %p67, %p68
      %p70 = scmp.ne.s32.totalorder %s59, %s60
      %p71 = scmp.eq.s32.totalorder %s25, 0
      %p72 = por %p70, %p71
      %p73 = scmp.ne.s32.totalorder %s59, %s60
      %p74 = scmp.eq.s32.totalorder %s26, 1
      %p75 = por %p73, %p74
      %p77 = scmp.ne.s32.totalorder %s60, %s76
      %p78 = scmp.eq.s32.totalorder %s26, 0
      %p79 = por %p77, %p78
      %s81 = sadd.s32 %s80, 1
      %p84 = scmp.eq.s32.totalorder %s20, 1
      %p85 = scmp.ne.s32.totalorder %s80, %s82
      %p86 = scmp.eq.s32.totalorder %s20, 0
      %p87 = por %p85, %p86
      %p88 = scmp.ne.s32.totalorder %s80, %s82
      %p89 = scmp.eq.s32.totalorder %s25, 1
      %p90 = por %p88, %p89
      %p91 = scmp.ne.s32.totalorder %s82, %s83
      %p92 = scmp.eq.s32.totalorder %s25, 0
      %p93 = por %p91, %p92
      %p94 = scmp.ne.s32.totalorder %s82, %s83
      %p95 = scmp.eq.s32.totalorder %s26, 1
      %p96 = por %p94, %p95
      %p98 = scmp.ne.s32.totalorder %s83, %s97
      %p99 = scmp.eq.s32.totalorder %s26, 0
      %p100 = por %p98, %p99
      %s102 = sadd.s32 %s101, 1
      %p105 = scmp.eq.s32.totalorder %s20, 1
      %p106 = scmp.ne.s32.totalorder %s101, %s103
      %p107 = scmp.eq.s32.totalorder %s20, 0
      %p108 = por %p106, %p107
      %p109 = scmp.ne.s32.totalorder %s101, %s103
      %p110 = scmp.eq.s32.totalorder %s25, 1
      %p111 = por %p109, %p110
      %p112 = scmp.ne.s32.totalorder %s103, %s104
      %p113 = scmp.eq.s32.totalorder %s25, 0
      %p114 = por %p112, %p113
      %p115 = scmp.ne.s32.totalorder %s103, %s104
      %p116 = scmp.eq.s32.totalorder %s26, 1
      %p117 = por %p115, %p116
      %p119 = scmp.ne.s32.totalorder %s104, %s118
      %p120 = scmp.eq.s32.totalorder %s26, 0
      %p121 = por %p119, %p120
      %s122 = ssub.s32 %s20, %s27
      %p123 = scmp.eq.s32.totalorder %s122, 0
      %s125 = sadd.s32 %s124, 1
      %s126 = scalar_select %p123, %s124, %s125
      %p129 = pneg %p123
      %p130 = scmp.eq.s32.totalorder %s20, 1
      %p131 = por %p129, %p130
      %p132 = scmp.ne.s32.totalorder %s124, %s127
      %p133 = scmp.eq.s32.totalorder %s20, 0
      %p134 = por %p132, %p133
      %p135 = scmp.ne.s32.totalorder %s124, %s127
      %p136 = scmp.eq.s32.totalorder %s25, 1
      %p137 = por %p135, %p136
      %p138 = scmp.ne.s32.totalorder %s127, %s128
      %p139 = scmp.eq.s32.totalorder %s25, 0
      %p140 = por %p138, %p139
      %p141 = scmp.ne.s32.totalorder %s127, %s128
      %p142 = scmp.eq.s32.totalorder %s26, 1
      %p143 = por %p141, %p142
      %p145 = scmp.ne.s32.totalorder %s128, %s144
      %p146 = scmp.eq.s32.totalorder %s26, 0
      %p147 = por %p145, %p146
      %p148 = scmp.le.s32.totalorder 1, %s20
      %p149 = scmp.lt.s32.totalorder %s20, 3
      %p150 = pnand %p148, %p149
      %p151 = pneg %p150
      // Predicated region
      $region9: #{basic_block_forward.5} parent=5 // pred_check
        _
      $region10: #{basic_block_forward.5} parent=5 // pred_check_branch
        %153 = sbr.rel (%p150) target = $region12
      $region11: #{basic_block_forward.5} parent=5 // pred_region
        %s154 = ssub.s32 %s20, 1
        // Predicated region
        $region13: #{basic_block_forward.5} parent=11 // pred_check
          %p155 = pneg %p93
        $region14: #{basic_block_forward.5} parent=11 // pred_check_branch
          %157 = sbr.rel (%p155) target = $region16
        $region15: #{basic_block_forward.5} parent=11 // pred_region
          %s159 = ssub.s32 16, 16
          %160 = vsyncadd [#allocation6], %s159
          %s162 = sshll.u32 [#allocation7], 4
          %s163 = int_to_ptr.vmem [resolvable:$true] %s162
          %165 = dma.hbm_to_vmem [thread:$0]  %s2, 16, %s163, [#allocation6]
        $region16: #{basic_block_forward.5} parent=11 // pred_fallthru
          _
        // Predicated region
        $region17: #{basic_block_forward.5} parent=11 // pred_check
          %p166 = pneg %p114
        $region18: #{basic_block_forward.5} parent=11 // pred_check_branch
          %168 = sbr.rel (%p166) target = $region20
        $region19: #{basic_block_forward.5} parent=11 // pred_region
          %s170 = ssub.s32 16, 16
          %171 = vsyncadd [#allocation9], %s170
          %s173 = sshll.u32 [#allocation8], 4
          %s174 = int_to_ptr.vmem [resolvable:$true] %s173
          %176 = dma.hbm_to_vmem [thread:$0]  %s3, 16, %s174, [#allocation9]
        $region20: #{basic_block_forward.5} parent=11 // pred_fallthru
          _
      $region12: #{basic_block_forward.5} parent=5 // pred_fallthru
        _
      %p177 = scmp.lt.s32.totalorder %s20, 2
      // Predicated region
      $region21: #{basic_block_forward.5} parent=5 // pred_check
        %p178 = pneg %p177
      $region22: #{basic_block_forward.5} parent=5 // pred_check_branch
        %180 = sbr.rel (%p178) target = $region24
      $region23: #{basic_block_forward.5} parent=5 // pred_region
        // Predicated region
        $region25: #{basic_block_forward.5} parent=23 // pred_check
          %p181 = pneg %p40
        $region26: #{basic_block_forward.5} parent=23 // pred_check_branch
          %183 = sbr.rel (%p181) target = $region28
        $region27: #{basic_block_forward.5} parent=23 // pred_region
          %s184 = sand.u32 %s30, 1
          %s185 = scalar_lea.sflag [#allocation3], %s184
          %s186 = sand.u32 %s30, 1
          %s187 = smul.addr %s186, 256
          %s188 = scalar_lea.vmem [#allocation2], %s187
          %s190 = ssub.s32 4096, 4096
          %191 = vsyncadd %s185, %s190
          %s192 = smul.addr %s20, 32
          %s193 = smul.addr %s192, 128
          %s194 = scalar_lea.hbm %s0, %s193
          %s195 = sshll.u32 %s188, 4
          %s196 = int_to_ptr.vmem [resolvable:$true] %s195
          %201 = dma.hbm_to_vmem [thread:$0]  %s194, 4096, %s196, %s185, 128, 128, 8
        $region28: #{basic_block_forward.5} parent=23 // pred_fallthru
          _
        // Predicated region
        $region29: #{basic_block_forward.5} parent=23 // pred_check
          %p202 = pneg %p66
        $region30: #{basic_block_forward.5} parent=23 // pred_check_branch
          %204 = sbr.rel (%p202) target = $region32
        $region31: #{basic_block_forward.5} parent=23 // pred_region
          %s205 = sand.u32 %s20, 1
          %s206 = scalar_lea.sflag [#allocation6], %s205
          %s207 = sand.u32 %s56, 1
          %s208 = smul.addr %s207, 256
          %s209 = scalar_lea.vmem [#allocation5], %s208
          %s211 = ssub.s32 4096, 4096
          %212 = vsyncadd %s206, %s211
          %s213 = smul.addr %s20, 32
          %s214 = smul.addr %s213, 128
          %s215 = scalar_lea.hbm %s1, %s214
          %s216 = sshll.u32 %s209, 4
          %s217 = int_to_ptr.vmem [resolvable:$true] %s216
          %222 = dma.hbm_to_vmem [thread:$0]  %s215, 4096, %s217, %s206, 128, 128, 8
        $region32: #{basic_block_forward.5} parent=23 // pred_fallthru
          _
      $region24: #{basic_block_forward.5} parent=5 // pred_fallthru
        _
      %p223 = scmp.le.s32.totalorder 1, %s20
      %p224 = scmp.lt.s32.totalorder %s20, 3
      %p225 = pnand %p223, %p224
      %p226 = pneg %p225
      // Predicated region
      $region33: #{basic_block_forward.5} parent=5 // pred_check
        _
      $region34: #{basic_block_forward.5} parent=5 // pred_check_branch
        %228 = sbr.rel (%p225) target = $region36
      $region35: #{basic_block_forward.5} parent=5 // pred_region
        %s229 = ssub.s32 %s20, 1
        %s230 = sand.u32 %s33, 1
        %s231 = scalar_lea.sflag [#allocation3], %s230
        %s232 = sand.u32 %s33, 1
        %s233 = smul.addr %s232, 256
        %s234 = scalar_lea.vmem [#allocation2], %s233
        // Predicated region
        $region37: #{basic_block_forward.5} parent=35 // pred_check
          %p235 = pneg %p46
        $region38: #{basic_block_forward.5} parent=35 // pred_check_branch
          %237 = sbr.rel (%p235) target = $region40
        $region39: #{basic_block_forward.5} parent=35 // pred_region
          %238 = dma.done %s231, 4096
        $region40: #{basic_block_forward.5} parent=35 // pred_fallthru
          _
        %s239 = sand.u32 %s25, 1
        %s240 = scalar_lea.sflag [#allocation6], %s239
        %s241 = sand.u32 %s59, 1
        %s242 = smul.addr %s241, 256
        %s243 = scalar_lea.vmem [#allocation5], %s242
        // Predicated region
        $region41: #{basic_block_forward.5} parent=35 // pred_check
          %p244 = pneg %p72
        $region42: #{basic_block_forward.5} parent=35 // pred_check_branch
          %246 = sbr.rel (%p244) target = $region44
        $region43: #{basic_block_forward.5} parent=35 // pred_region
          %247 = dma.done %s240, 4096
        $region44: #{basic_block_forward.5} parent=35 // pred_fallthru
          _
        // Predicated region
        $region45: #{basic_block_forward.5} parent=35 // pred_check
          %p248 = pneg %p93
        $region46: #{basic_block_forward.5} parent=35 // pred_check_branch
          %250 = sbr.rel (%p248) target = $region48
        $region47: #{basic_block_forward.5} parent=35 // pred_region
          %251 = dma.done [#allocation6], 16
        $region48: #{basic_block_forward.5} parent=35 // pred_fallthru
          _
        // Predicated region
        $region49: #{basic_block_forward.5} parent=35 // pred_check
          %p252 = pneg %p114
        $region50: #{basic_block_forward.5} parent=35 // pred_check_branch
          %254 = sbr.rel (%p252) target = $region52
        $region51: #{basic_block_forward.5} parent=35 // pred_region
          %255 = dma.done [#allocation9], 16
        $region52: #{basic_block_forward.5} parent=35 // pred_fallthru
          _
        %s256 = sand.u32 %s33, 1
        %s257 = scalar_lea.sflag [#allocation3], %s256
        %s258 = sand.u32 %s33, 1
        %s259 = smul.addr %s258, 256
        %s260 = scalar_lea.vmem [#allocation2], %s259
        %p261 = pneg %p46
        %p262 = pneg %p43
        %s263 = sand.u32 %s25, 1
        %s264 = scalar_lea.sflag [#allocation6], %s263
        %s265 = sand.u32 %s59, 1
        %s266 = smul.addr %s265, 256
        %s267 = scalar_lea.vmem [#allocation5], %s266
        %p268 = pneg %p72
        %p269 = pneg %p69
        %p270 = pneg %p93
        %p271 = pneg %p90
        %p272 = pneg %p114
        %p273 = pneg %p111
        %p274 = pneg %p140
        %p275 = pneg %p137
        %s276 = sand.u32 %s127, 1
        %s277 = scalar_lea.sflag [#allocation4], %s276
        %s278 = sand.u32 %s127, 1
        %s279 = smul.addr %s278, 256
        %s280 = scalar_lea.vmem [#allocation10], %s279
        %v281 = vld [vmem:[%s234] sm:$0xff]
        %v282 = vld [vmem:[%s234 + $0x8] sm:$0xff]
        %v283 = vld [vmem:[%s234 + $0x10] sm:$0xff]
        %v284 = vld [vmem:[%s234 + $0x18] sm:$0xff]
        %v285 = vld [vmem:[%s234 + $0x20] sm:$0xff]
        %v286 = vld [vmem:[%s234 + $0x28] sm:$0xff]
        %v287 = vld [vmem:[%s234 + $0x30] sm:$0xff]
        %v288 = vld [vmem:[%s234 + $0x38] sm:$0xff]
        %v289 = vld [vmem:[%s234 + $0x40] sm:$0xff]
        %v290 = vld [vmem:[%s234 + $0x48] sm:$0xff]
        %v291 = vld [vmem:[%s234 + $0x50] sm:$0xff]
        %v292 = vld [vmem:[%s234 + $0x58] sm:$0xff]
        %v293 = vld [vmem:[%s234 + $0x60] sm:$0xff]
        %v294 = vld [vmem:[%s234 + $0x68] sm:$0xff]
        %v295 = vld [vmem:[%s234 + $0x70] sm:$0xff]
        %v296 = vld [vmem:[%s234 + $0x78] sm:$0xff]
        %v297 = vld [vmem:[%s234 + $0x80] sm:$0xff]
        %v298 = vld [vmem:[%s234 + $0x88] sm:$0xff]
        %v299 = vld [vmem:[%s234 + $0x90] sm:$0xff]
        %v300 = vld [vmem:[%s234 + $0x98] sm:$0xff]
        %v301 = vld [vmem:[%s234 + $0xa0] sm:$0xff]
        %v302 = vld [vmem:[%s234 + $0xa8] sm:$0xff]
        %v303 = vld [vmem:[%s234 + $0xb0] sm:$0xff]
        %v304 = vld [vmem:[%s234 + $0xb8] sm:$0xff]
        %v305 = vld [vmem:[%s234 + $0xc0] sm:$0xff]
        %v306 = vld [vmem:[%s234 + $0xc8] sm:$0xff]
        %v307 = vld [vmem:[%s234 + $0xd0] sm:$0xff]
        %v308 = vld [vmem:[%s234 + $0xd8] sm:$0xff]
        %v309 = vld [vmem:[%s234 + $0xe0] sm:$0xff]
        %v310 = vld [vmem:[%s234 + $0xe8] sm:$0xff]
        %v311 = vld [vmem:[%s234 + $0xf0] sm:$0xff]
        %v312 = vld [vmem:[%s234 + $0xf8] sm:$0xff]
        %v313 = vld [vmem:[#allocation7] sm:$0x1]
        %v315 = vlaneseq
        %v316 = vshrl.u32 %v315, 7
        %v317 = vsub.s32 0, %v316
        %v318 = vrot.slane %v313, %v317
        %v320 = vmul.f32 %v281, %v318
        %v321 = vmul.f32 %v282, %v318
        %v322 = vmul.f32 %v283, %v318
        %v323 = vmul.f32 %v284, %v318
        %v324 = vmul.f32 %v285, %v318
        %v325 = vmul.f32 %v286, %v318
        %v326 = vmul.f32 %v287, %v318
        %v327 = vmul.f32 %v288, %v318
        %v328 = vmul.f32 %v289, %v318
        %v329 = vmul.f32 %v290, %v318
        %v330 = vmul.f32 %v291, %v318
        %v331 = vmul.f32 %v292, %v318
        %v332 = vmul.f32 %v293, %v318
        %v333 = vmul.f32 %v294, %v318
        %v334 = vmul.f32 %v295, %v318
        %v335 = vmul.f32 %v296, %v318
        %v336 = vmul.f32 %v297, %v318
        %v337 = vmul.f32 %v298, %v318
        %v338 = vmul.f32 %v299, %v318
        %v339 = vmul.f32 %v300, %v318
        %v340 = vmul.f32 %v301, %v318
        %v341 = vmul.f32 %v302, %v318
        %v342 = vmul.f32 %v303, %v318
        %v343 = vmul.f32 %v304, %v318
        %v344 = vmul.f32 %v305, %v318
        %v345 = vmul.f32 %v306, %v318
        %v346 = vmul.f32 %v307, %v318
        %v347 = vmul.f32 %v308, %v318
        %v348 = vmul.f32 %v309, %v318
        %v349 = vmul.f32 %v310, %v318
        %v350 = vmul.f32 %v311, %v318
        %v351 = vmul.f32 %v312, %v318
        %v352 = vld [vmem:[#allocation8] sm:$0x1]
        %v354 = vlaneseq
        %v355 = vshrl.u32 %v354, 7
        %v356 = vsub.s32 0, %v355
        %v357 = vrot.slane %v352, %v356
        %v359 = vadd.f32 %v320, %v357
        %v360 = vadd.f32 %v321, %v357
        %v361 = vadd.f32 %v322, %v357
        %v362 = vadd.f32 %v323, %v357
        %v363 = vadd.f32 %v324, %v357
        %v364 = vadd.f32 %v325, %v357
        %v365 = vadd.f32 %v326, %v357
        %v366 = vadd.f32 %v327, %v357
        %v367 = vadd.f32 %v328, %v357
        %v368 = vadd.f32 %v329, %v357
        %v369 = vadd.f32 %v330, %v357
        %v370 = vadd.f32 %v331, %v357
        %v371 = vadd.f32 %v332, %v357
        %v372 = vadd.f32 %v333, %v357
        %v373 = vadd.f32 %v334, %v357
        %v374 = vadd.f32 %v335, %v357
        %v375 = vadd.f32 %v336, %v357
        %v376 = vadd.f32 %v337, %v357
        %v377 = vadd.f32 %v338, %v357
        %v378 = vadd.f32 %v339, %v357
        %v379 = vadd.f32 %v340, %v357
        %v380 = vadd.f32 %v341, %v357
        %v381 = vadd.f32 %v342, %v357
        %v382 = vadd.f32 %v343, %v357
        %v383 = vadd.f32 %v344, %v357
        %v384 = vadd.f32 %v345, %v357
        %v385 = vadd.f32 %v346, %v357
        %v386 = vadd.f32 %v347, %v357
        %v387 = vadd.f32 %v348, %v357
        %v388 = vadd.f32 %v349, %v357
        %v389 = vadd.f32 %v350, %v357
        %v390 = vadd.f32 %v351, %v357
        %v391 = vld [vmem:[%s243] sm:$0xff]
        %v392 = vld [vmem:[%s243 + $0x8] sm:$0xff]
        %v393 = vld [vmem:[%s243 + $0x10] sm:$0xff]
        %v394 = vld [vmem:[%s243 + $0x18] sm:$0xff]
        %v395 = vld [vmem:[%s243 + $0x20] sm:$0xff]
        %v396 = vld [vmem:[%s243 + $0x28] sm:$0xff]
        %v397 = vld [vmem:[%s243 + $0x30] sm:$0xff]
        %v398 = vld [vmem:[%s243 + $0x38] sm:$0xff]
        %v399 = vld [vmem:[%s243 + $0x40] sm:$0xff]
        %v400 = vld [vmem:[%s243 + $0x48] sm:$0xff]
        %v401 = vld [vmem:[%s243 + $0x50] sm:$0xff]
        %v402 = vld [vmem:[%s243 + $0x58] sm:$0xff]
        %v403 = vld [vmem:[%s243 + $0x60] sm:$0xff]
        %v404 = vld [vmem:[%s243 + $0x68] sm:$0xff]
        %v405 = vld [vmem:[%s243 + $0x70] sm:$0xff]
        %v406 = vld [vmem:[%s243 + $0x78] sm:$0xff]
        %v407 = vld [vmem:[%s243 + $0x80] sm:$0xff]
        %v408 = vld [vmem:[%s243 + $0x88] sm:$0xff]
        %v409 = vld [vmem:[%s243 + $0x90] sm:$0xff]
        %v410 = vld [vmem:[%s243 + $0x98] sm:$0xff]
        %v411 = vld [vmem:[%s243 + $0xa0] sm:$0xff]
        %v412 = vld [vmem:[%s243 + $0xa8] sm:$0xff]
        %v413 = vld [vmem:[%s243 + $0xb0] sm:$0xff]
        %v414 = vld [vmem:[%s243 + $0xb8] sm:$0xff]
        %v415 = vld [vmem:[%s243 + $0xc0] sm:$0xff]
        %v416 = vld [vmem:[%s243 + $0xc8] sm:$0xff]
        %v417 = vld [vmem:[%s243 + $0xd0] sm:$0xff]
        %v418 = vld [vmem:[%s243 + $0xd8] sm:$0xff]
        %v419 = vld [vmem:[%s243 + $0xe0] sm:$0xff]
        %v420 = vld [vmem:[%s243 + $0xe8] sm:$0xff]
        %v421 = vld [vmem:[%s243 + $0xf0] sm:$0xff]
        %v422 = vld [vmem:[%s243 + $0xf8] sm:$0xff]
        %v423 = vadd.f32 %v359, %v391
        %v424 = vadd.f32 %v360, %v392
        %v425 = vadd.f32 %v361, %v393
        %v426 = vadd.f32 %v362, %v394
        %v427 = vadd.f32 %v363, %v395
        %v428 = vadd.f32 %v364, %v396
        %v429 = vadd.f32 %v365, %v397
        %v430 = vadd.f32 %v366, %v398
        %v431 = vadd.f32 %v367, %v399
        %v432 = vadd.f32 %v368, %v400
        %v433 = vadd.f32 %v369, %v401
        %v434 = vadd.f32 %v370, %v402
        %v435 = vadd.f32 %v371, %v403
        %v436 = vadd.f32 %v372, %v404
        %v437 = vadd.f32 %v373, %v405
        %v438 = vadd.f32 %v374, %v406
        %v439 = vadd.f32 %v375, %v407
        %v440 = vadd.f32 %v376, %v408
        %v441 = vadd.f32 %v377, %v409
        %v442 = vadd.f32 %v378, %v410
        %v443 = vadd.f32 %v379, %v411
        %v444 = vadd.f32 %v380, %v412
        %v445 = vadd.f32 %v381, %v413
        %v446 = vadd.f32 %v382, %v414
        %v447 = vadd.f32 %v383, %v415
        %v448 = vadd.f32 %v384, %v416
        %v449 = vadd.f32 %v385, %v417
        %v450 = vadd.f32 %v386, %v418
        %v451 = vadd.f32 %v387, %v419
        %v452 = vadd.f32 %v388, %v420
        %v453 = vadd.f32 %v389, %v421
        %v454 = vadd.f32 %v390, %v422
        %v455 = vmax.f32 %v423, 0.0
        %v456 = vmax.f32 %v424, 0.0
        %v457 = vmax.f32 %v425, 0.0
        %v458 = vmax.f32 %v426, 0.0
        %v459 = vmax.f32 %v427, 0.0
        %v460 = vmax.f32 %v428, 0.0
        %v461 = vmax.f32 %v429, 0.0
        %v462 = vmax.f32 %v430, 0.0
        %v463 = vmax.f32 %v431, 0.0
        %v464 = vmax.f32 %v432, 0.0
        %v465 = vmax.f32 %v433, 0.0
        %v466 = vmax.f32 %v434, 0.0
        %v467 = vmax.f32 %v435, 0.0
        %v468 = vmax.f32 %v436, 0.0
        %v469 = vmax.f32 %v437, 0.0
        %v470 = vmax.f32 %v438, 0.0
        %v471 = vmax.f32 %v439, 0.0
        %v472 = vmax.f32 %v440, 0.0
        %v473 = vmax.f32 %v441, 0.0
        %v474 = vmax.f32 %v442, 0.0
        %v475 = vmax.f32 %v443, 0.0
        %v476 = vmax.f32 %v444, 0.0
        %v477 = vmax.f32 %v445, 0.0
        %v478 = vmax.f32 %v446, 0.0
        %v479 = vmax.f32 %v447, 0.0
        %v480 = vmax.f32 %v448, 0.0
        %v481 = vmax.f32 %v449, 0.0
        %v482 = vmax.f32 %v450, 0.0
        %v483 = vmax.f32 %v451, 0.0
        %v484 = vmax.f32 %v452, 0.0
        %v485 = vmax.f32 %v453, 0.0
        %v486 = vmax.f32 %v454, 0.0
        %vm487 = vcmask 31744
        %488 = vst.msk [vmem:[%s280] sm:$0xff] %vm487, %v455
        %489 = vst.msk [vmem:[%s280 + $0x8] sm:$0xff] %vm487, %v456
        %490 = vst.msk [vmem:[%s280 + $0x10] sm:$0xff] %vm487, %v457
        %491 = vst.msk [vmem:[%s280 + $0x18] sm:$0xff] %vm487, %v458
        %492 = vst.msk [vmem:[%s280 + $0x20] sm:$0xff] %vm487, %v459
        %493 = vst.msk [vmem:[%s280 + $0x28] sm:$0xff] %vm487, %v460
        %494 = vst.msk [vmem:[%s280 + $0x30] sm:$0xff] %vm487, %v461
        %495 = vst.msk [vmem:[%s280 + $0x38] sm:$0xff] %vm487, %v462
        %496 = vst.msk [vmem:[%s280 + $0x40] sm:$0xff] %vm487, %v463
        %497 = vst.msk [vmem:[%s280 + $0x48] sm:$0xff] %vm487, %v464
        %498 = vst.msk [vmem:[%s280 + $0x50] sm:$0xff] %vm487, %v465
        %499 = vst.msk [vmem:[%s280 + $0x58] sm:$0xff] %vm487, %v466
        %500 = vst.msk [vmem:[%s280 + $0x60] sm:$0xff] %vm487, %v467
        %501 = vst.msk [vmem:[%s280 + $0x68] sm:$0xff] %vm487, %v468
        %502 = vst.msk [vmem:[%s280 + $0x70] sm:$0xff] %vm487, %v469
        %503 = vst.msk [vmem:[%s280 + $0x78] sm:$0xff] %vm487, %v470
        %504 = vst.msk [vmem:[%s280 + $0x80] sm:$0xff] %vm487, %v471
        %505 = vst.msk [vmem:[%s280 + $0x88] sm:$0xff] %vm487, %v472
        %506 = vst.msk [vmem:[%s280 + $0x90] sm:$0xff] %vm487, %v473
        %507 = vst.msk [vmem:[%s280 + $0x98] sm:$0xff] %vm487, %v474
        %508 = vst.msk [vmem:[%s280 + $0xa0] sm:$0xff] %vm487, %v475
        %509 = vst.msk [vmem:[%s280 + $0xa8] sm:$0xff] %vm487, %v476
        %510 = vst.msk [vmem:[%s280 + $0xb0] sm:$0xff] %vm487, %v477
        %511 = vst.msk [vmem:[%s280 + $0xb8] sm:$0xff] %vm487, %v478
        %512 = vst.msk [vmem:[%s280 + $0xc0] sm:$0xff] %vm487, %v479
        %513 = vst.msk [vmem:[%s280 + $0xc8] sm:$0xff] %vm487, %v480
        %514 = vst.msk [vmem:[%s280 + $0xd0] sm:$0xff] %vm487, %v481
        %515 = vst.msk [vmem:[%s280 + $0xd8] sm:$0xff] %vm487, %v482
        %516 = vst.msk [vmem:[%s280 + $0xe0] sm:$0xff] %vm487, %v483
        %517 = vst.msk [vmem:[%s280 + $0xe8] sm:$0xff] %vm487, %v484
        %518 = vst.msk [vmem:[%s280 + $0xf0] sm:$0xff] %vm487, %v485
        %519 = vst.msk [vmem:[%s280 + $0xf8] sm:$0xff] %vm487, %v486
        %s520 = sand.u32 %s127, 1
        %s521 = scalar_lea.sflag [#allocation4], %s520
        %s522 = sand.u32 %s127, 1
        %s523 = smul.addr %s522, 256
        %s524 = scalar_lea.vmem [#allocation10], %s523
        // Predicated region
        $region53: #{basic_block_forward.5} parent=35 // pred_check
          %p525 = pneg %p137
        $region54: #{basic_block_forward.5} parent=35 // pred_check_branch
          %527 = sbr.rel (%p525) target = $region56
        $region55: #{basic_block_forward.5} parent=35 // pred_region
          %s529 = ssub.s32 4096, 4096
          %530 = vsyncadd %s521, %s529
          %s531 = smul.addr %s25, 32
          %s532 = smul.addr %s531, 128
          %s533 = scalar_lea.hbm %s4, %s532
          %s534 = sshll.u32 %s524, 4
          %s535 = int_to_ptr.vmem [resolvable:$true] %s534
          %540 = dma.vmem_to_hbm [thread:$0]  %s535, 4096, %s533, %s521, 128, 128, 8
        $region56: #{basic_block_forward.5} parent=35 // pred_fallthru
          _
      $region36: #{basic_block_forward.5} parent=5 // pred_fallthru
        _
      %p541 = scmp.le.s32.totalorder 2, %s20
      // Predicated region
      $region57: #{basic_block_forward.5} parent=5 // pred_check
        %p542 = pneg %p541
      $region58: #{basic_block_forward.5} parent=5 // pred_check_branch
        %544 = sbr.rel (%p542) target = $region60
      $region59: #{basic_block_forward.5} parent=5 // pred_region
        %s545 = ssub.s32 %s20, 2
        // Predicated region
        $region61: #{basic_block_forward.5} parent=59 // pred_check
          %p546 = pneg %p143
        $region62: #{basic_block_forward.5} parent=59 // pred_check_branch
          %548 = sbr.rel (%p546) target = $region64
        $region63: #{basic_block_forward.5} parent=59 // pred_region
          %s549 = sand.u32 %s128, 1
          %s550 = scalar_lea.sflag [#allocation4], %s549
          %s551 = sand.u32 %s128, 1
          %s552 = smul.addr %s551, 256
          %s553 = scalar_lea.vmem [#allocation10], %s552
          %554 = dma.done %s550, 4096
        $region64: #{basic_block_forward.5} parent=59 // pred_fallthru
          _
      $region60: #{basic_block_forward.5} parent=5 // pred_fallthru
        _
    $region6: #{basic_block_forward.5} parent=1 // loop_footer
      %s24 = sadd.s32 1, %s20
    $region7: #{basic_block_forward.5} parent=1 // loop_footer_branch
      %19 = sbr.rel target = $region3
    $region8: #{basic_block_forward.5} parent=1 // loop_exit
      _
    %555 = vsyncpa [#allocation3], 1
    %s556 = scalar_lea.sflag [#allocation3], 1
    %557 = vsyncpa %s556, 1
    %558 = vsyncpa [#allocation6], 1
    %s559 = scalar_lea.sflag [#allocation6], 1
    %560 = vsyncpa %s559, 1
    %561 = vsyncpa [#allocation9], 1
    %562 = vsyncpa [#allocation4], 1
    %s563 = scalar_lea.sflag [#allocation4], 1
    %564 = vsyncpa %s563, 1

// kernel: basic_block_forward.4
$region0: #{basic_block_forward.4}
  #allocation0 [shape = 'u32[]', space=smem, size = 0x4, offset = 0x4, fixed_abs, tag = 'smem constant byte address 0x4 - core index']
  #allocation1 [shape = 'u32[144,128]{1,0:T(1,128)}', space=vmem, size = 0x12000, scoped, tag = 'internal scratch']
  #allocation2 [shape = 'f32[18,18,4]{2,1,0:T(8,128)}', space=vmem, size = 0x36000, scoped, tag = 'scratch operand']
  %s0 = inlined_call_operand.hbm [shape: f32[2,16,16,4], index: 0, kind: input, shape index: {}]
  %s1 = inlined_call_operand.hbm [shape: f32[3,3,4,4], index: 1, kind: input, shape index: {}]
  %s2 = inlined_call_operand.hbm [shape: f32[1,4], index: 2, kind: input, shape index: {}]
  %s3 = inlined_call_operand.hbm [shape: f32[1,4], index: 3, kind: input, shape index: {}]
  %s4 = inlined_call_operand.hbm [shape: f32[2,16,16,4], index: 4, kind: output, shape index: {0}]
  %s5 = inlined_call_operand.hbm [shape: f32[2,2,4], index: 5, kind: output, shape index: {1}]
  %6 = xla_tuple %s4, %s5
  %s7 = sld [smem:[#allocation0]]
  $region73: #{basic_block_forward.4} parent=0
    _
  %s9 = ssub.s32 1, %s7
  %s10 = scalar_select 0, %s9, %s7
  $region1: #{basic_block_forward.4} parent=0
    #allocation3 [shape = 'u8[262144]{0}', space=vmem, size = 0x40000, scoped, tag = 'input window, operand 0']
    #allocation4 [shape = 's32[2]{0}', space=sflag, size = 0x8, scoped, tag = 'scoped memory for basic_block_forward.4']
    #allocation5 [shape = 's32[2]{0}', space=sflag, size = 0x8, scoped, tag = 'scoped memory for basic_block_forward.4']
    #allocation6 [shape = 'u8[18432]{0}', space=vmem, size = 0x4800, scoped, tag = 'input window, operand 1, single buffered']
    #allocation7 [shape = 's32[1]{0}', space=sflag, size = 0x4, scoped, tag = 'scoped memory for basic_block_forward.4']
    #allocation8 [shape = 'u8[512]{0}', space=vmem, size = 0x400, scoped, tag = 'input window, operand 2, single buffered']
    #allocation9 [shape = 'u8[512]{0}', space=vmem, size = 0x400, scoped, tag = 'input window, operand 3, single buffered']
    #allocation10 [shape = 's32[1]{0}', space=sflag, size = 0x4, scoped, tag = 'scoped memory for basic_block_forward.4']
    #allocation11 [shape = 'u8[262144]{0}', space=vmem, size = 0x40000, scoped, tag = 'output window, operand 0']
    #allocation12 [shape = 'u8[2048]{0}', space=vmem, size = 0x800, scoped, tag = 'output window, operand 1']
    #allocation13 [shape = 's32[2]{0}', space=sflag, size = 0x8, scoped, tag = 'scoped memory for basic_block_forward.4']
    %11 = vsyncpa [#allocation4], 0
    %s12 = scalar_lea.sflag [#allocation4], 1
    %13 = vsyncpa %s12, 0
    %14 = vsyncpa [#allocation7], 0
    %15 = vsyncpa [#allocation10], 0
    %16 = vsyncpa [#allocation5], 0
    %s17 = scalar_lea.sflag [#allocation5], 1
    %18 = vsyncpa %s17, 0
    %19 = vsyncpa [#allocation13], 0
    %s20 = scalar_lea.sflag [#allocation13], 1
    %21 = vsyncpa %s20, 0
    loop: start=0, step=1, limit=4
    $region2: #{basic_block_forward.4} parent=1 // loop_pre_header
      _
    $region3: #{basic_block_forward.4} parent=1 // loop_header
      %s23 = sphi 0, %s27
      %p24 = scmp.ge.s32.totalorder %s23, 4
      %s33 = sphi 0, %s35
      %s36 = sphi 0, %s33
      %s37 = sphi 0, %s36
      %s53 = sphi 0, %s37
      %s57 = sphi 0, %s57
      %s59 = sphi 0, %s57
      %s60 = sphi 0, %s59
      %s74 = sphi 0, %s60
      %s78 = sphi 0, %s78
      %s80 = sphi 0, %s78
      %s81 = sphi 0, %s80
      %s95 = sphi 0, %s81
      %s99 = sphi 0, %s99
      %s101 = sphi 0, %s99
      %s102 = sphi 0, %s101
      %s116 = sphi 0, %s102
      %s122 = sphi 0, %s124
      %s125 = sphi 0, %s122
      %s126 = sphi 0, %s125
      %s142 = sphi 0, %s126
      %s148 = sphi 0, %s150
      %s151 = sphi 0, %s148
      %s152 = sphi 0, %s151
      %s168 = sphi 0, %s152
    $region4: #{basic_block_forward.4} parent=1 // loop_header_branch
      %26 = sbr.rel (%p24) target = $region8
    $region5: #{basic_block_forward.4} parent=1 // loop_body
      %s28 = ssub.s32 %s23, 1
      %s29 = ssub.s32 %s23, 2
      %s30 = sadd.s32 %s23, 1
      %s31 = ssub.s32 %s23, %s30
      %p32 = scmp.eq.s32.totalorder %s31, 0
      %s34 = sadd.s32 %s33, 1
      %s35 = scalar_select %p32, %s33, %s34
      %p38 = pneg %p32
      %p39 = scmp.eq.s32.totalorder %s23, 1
      %p40 = por %p38, %p39
      %p41 = scmp.ne.s32.totalorder %s33, %s36
      %p42 = scmp.eq.s32.totalorder %s23, 0
      %p43 = por %p41, %p42
      %p44 = scmp.ne.s32.totalorder %s33, %s36
      %p45 = scmp.eq.s32.totalorder %s28, 1
      %p46 = por %p44, %p45
      %p47 = scmp.ne.s32.totalorder %s36, %s37
      %p48 = scmp.eq.s32.totalorder %s28, 0
      %p49 = por %p47, %p48
      %p50 = scmp.ne.s32.totalorder %s36, %s37
      %p51 = scmp.eq.s32.totalorder %s29, 1
      %p52 = por %p50, %p51
      %p54 = scmp.ne.s32.totalorder %s37, %s53
      %p55 = scmp.eq.s32.totalorder %s29, 0
      %p56 = por %p54, %p55
      %s58 = sadd.s32 %s57, 1
      %p61 = scmp.eq.s32.totalorder %s23, 1
      %p62 = scmp.ne.s32.totalorder %s57, %s59
      %p63 = scmp.eq.s32.totalorder %s23, 0
      %p64 = por %p62, %p63
      %p65 = scmp.ne.s32.totalorder %s57, %s59
      %p66 = scmp.eq.s32.totalorder %s28, 1
      %p67 = por %p65, %p66
      %p68 = scmp.ne.s32.totalorder %s59, %s60
      %p69 = scmp.eq.s32.totalorder %s28, 0
      %p70 = por %p68, %p69
      %p71 = scmp.ne.s32.totalorder %s59, %s60
      %p72 = scmp.eq.s32.totalorder %s29, 1
      %p73 = por %p71, %p72
      %p75 = scmp.ne.s32.totalorder %s60, %s74
      %p76 = scmp.eq.s32.totalorder %s29, 0
      %p77 = por %p75, %p76
      %s79 = sadd.s32 %s78, 1
      %p82 = scmp.eq.s32.totalorder %s23, 1
      %p83 = scmp.ne.s32.totalorder %s78, %s80
      %p84 = scmp.eq.s32.totalorder %s23, 0
      %p85 = por %p83, %p84
      %p86 = scmp.ne.s32.totalorder %s78, %s80
      %p87 = scmp.eq.s32.totalorder %s28, 1
      %p88 = por %p86, %p87
      %p89 = scmp.ne.s32.totalorder %s80, %s81
      %p90 = scmp.eq.s32.totalorder %s28, 0
      %p91 = por %p89, %p90
      %p92 = scmp.ne.s32.totalorder %s80, %s81
      %p93 = scmp.eq.s32.totalorder %s29, 1
      %p94 = por %p92, %p93
      %p96 = scmp.ne.s32.totalorder %s81, %s95
      %p97 = scmp.eq.s32.totalorder %s29, 0
      %p98 = por %p96, %p97
      %s100 = sadd.s32 %s99, 1
      %p103 = scmp.eq.s32.totalorder %s23, 1
      %p104 = scmp.ne.s32.totalorder %s99, %s101
      %p105 = scmp.eq.s32.totalorder %s23, 0
      %p106 = por %p104, %p105
      %p107 = scmp.ne.s32.totalorder %s99, %s101
      %p108 = scmp.eq.s32.totalorder %s28, 1
      %p109 = por %p107, %p108
      %p110 = scmp.ne.s32.totalorder %s101, %s102
      %p111 = scmp.eq.s32.totalorder %s28, 0
      %p112 = por %p110, %p111
      %p113 = scmp.ne.s32.totalorder %s101, %s102
      %p114 = scmp.eq.s32.totalorder %s29, 1
      %p115 = por %p113, %p114
      %p117 = scmp.ne.s32.totalorder %s102, %s116
      %p118 = scmp.eq.s32.totalorder %s29, 0
      %p119 = por %p117, %p118
      %s120 = ssub.s32 %s23, %s30
      %p121 = scmp.eq.s32.totalorder %s120, 0
      %s123 = sadd.s32 %s122, 1
      %s124 = scalar_select %p121, %s122, %s123
      %p127 = pneg %p121
      %p128 = scmp.eq.s32.totalorder %s23, 1
      %p129 = por %p127, %p128
      %p130 = scmp.ne.s32.totalorder %s122, %s125
      %p131 = scmp.eq.s32.totalorder %s23, 0
      %p132 = por %p130, %p131
      %p133 = scmp.ne.s32.totalorder %s122, %s125
      %p134 = scmp.eq.s32.totalorder %s28, 1
      %p135 = por %p133, %p134
      %p136 = scmp.ne.s32.totalorder %s125, %s126
      %p137 = scmp.eq.s32.totalorder %s28, 0
      %p138 = por %p136, %p137
      %p139 = scmp.ne.s32.totalorder %s125, %s126
      %p140 = scmp.eq.s32.totalorder %s29, 1
      %p141 = por %p139, %p140
      %p143 = scmp.ne.s32.totalorder %s126, %s142
      %p144 = scmp.eq.s32.totalorder %s29, 0
      %p145 = por %p143, %p144
      %s146 = ssub.s32 %s23, %s30
      %p147 = scmp.eq.s32.totalorder %s146, 0
      %s149 = sadd.s32 %s148, 1
      %s150 = scalar_select %p147, %s148, %s149
      %p153 = pneg %p147
      %p154 = scmp.eq.s32.totalorder %s23, 1
      %p155 = por %p153, %p154
      %p156 = scmp.ne.s32.totalorder %s148, %s151
      %p157 = scmp.eq.s32.totalorder %s23, 0
      %p158 = por %p156, %p157
      %p159 = scmp.ne.s32.totalorder %s148, %s151
      %p160 = scmp.eq.s32.totalorder %s28, 1
      %p161 = por %p159, %p160
      %p162 = scmp.ne.s32.totalorder %s151, %s152
      %p163 = scmp.eq.s32.totalorder %s28, 0
      %p164 = por %p162, %p163
      %p165 = scmp.ne.s32.totalorder %s151, %s152
      %p166 = scmp.eq.s32.totalorder %s29, 1
      %p167 = por %p165, %p166
      %p169 = scmp.ne.s32.totalorder %s152, %s168
      %p170 = scmp.eq.s32.totalorder %s29, 0
      %p171 = por %p169, %p170
      %p172 = scmp.le.s32.totalorder 1, %s23
      %p173 = scmp.lt.s32.totalorder %s23, 3
      %p174 = pnand %p172, %p173
      %p175 = pneg %p174
      // Predicated region
      $region9: #{basic_block_forward.4} parent=5 // pred_check
        _
      $region10: #{basic_block_forward.4} parent=5 // pred_check_branch
        %177 = sbr.rel (%p174) target = $region12
      $region11: #{basic_block_forward.4} parent=5 // pred_region
        %s178 = ssub.s32 %s23, 1
        // Predicated region
        $region13: #{basic_block_forward.4} parent=11 // pred_check
          %p179 = pneg %p70
        $region14: #{basic_block_forward.4} parent=11 // pred_check_branch
          %181 = sbr.rel (%p179) target = $region16
        $region15: #{basic_block_forward.4} parent=11 // pred_region
          %s183 = ssub.s32 576, 576
          %184 = vsyncadd [#allocation7], %s183
          %s185 = sshll.u32 [#allocation6], 4
          %s186 = int_to_ptr.vmem [resolvable:$true] %s185
          %191 = dma.hbm_to_vmem [thread:$0]  %s1, 576, %s186, [#allocation7], 64, 64, 4
        $region16: #{basic_block_forward.4} parent=11 // pred_fallthru
          _
        // Predicated region
        $region17: #{basic_block_forward.4} parent=11 // pred_check
          %p192 = pneg %p91
        $region18: #{basic_block_forward.4} parent=11 // pred_check_branch
          %194 = sbr.rel (%p192) target = $region20
        $region19: #{basic_block_forward.4} parent=11 // pred_region
          %s196 = ssub.s32 16, 16
          %197 = vsyncadd [#allocation7], %s196
          %s199 = sshll.u32 [#allocation8], 4
          %s200 = int_to_ptr.vmem [resolvable:$true] %s199
          %202 = dma.hbm_to_vmem [thread:$0]  %s2, 16, %s200, [#allocation7]
        $region20: #{basic_block_forward.4} parent=11 // pred_fallthru
          _
        // Predicated region
        $region21: #{basic_block_forward.4} parent=11 // pred_check
          %p203 = pneg %p112
        $region22: #{basic_block_forward.4} parent=11 // pred_check_branch
          %205 = sbr.rel (%p203) target = $region24
        $region23: #{basic_block_forward.4} parent=11 // pred_region
          %s207 = ssub.s32 16, 16
          %208 = vsyncadd [#allocation10], %s207
          %s210 = sshll.u32 [#allocation9], 4
          %s211 = int_to_ptr.vmem [resolvable:$true] %s210
          %213 = dma.hbm_to_vmem [thread:$0]  %s3, 16, %s211, [#allocation10]
        $region24: #{basic_block_forward.4} parent=11 // pred_fallthru
          _
      $region12: #{basic_block_forward.4} parent=5 // pred_fallthru
        _
      %p214 = scmp.lt.s32.totalorder %s23, 2
      // Predicated region
      $region25: #{basic_block_forward.4} parent=5 // pred_check
        %p215 = pneg %p214
      $region26: #{basic_block_forward.4} parent=5 // pred_check_branch
        %217 = sbr.rel (%p215) target = $region28
      $region27: #{basic_block_forward.4} parent=5 // pred_region
        // Predicated region
        $region29: #{basic_block_forward.4} parent=27 // pred_check
          %p218 = pneg %p43
        $region30: #{basic_block_forward.4} parent=27 // pred_check_branch
          %220 = sbr.rel (%p218) target = $region32
        $region31: #{basic_block_forward.4} parent=27 // pred_region
          %s221 = sand.u32 %s33, 1
          %s222 = scalar_lea.sflag [#allocation4], %s221
          %s223 = sand.u32 %s33, 1
          %s224 = smul.addr %s223, 256
          %s225 = scalar_lea.vmem [#allocation3], %s224
          %s227 = ssub.s32 4096, 4096
          %228 = vsyncadd %s222, %s227
          %s229 = smul.addr %s23, 32
          %s230 = smul.addr %s229, 128
          %s231 = scalar_lea.hbm %s0, %s230
          %s232 = sshll.u32 %s225, 4
          %s233 = int_to_ptr.vmem [resolvable:$true] %s232
          %238 = dma.hbm_to_vmem [thread:$0]  %s231, 4096, %s233, %s222, 128, 128, 8
        $region32: #{basic_block_forward.4} parent=27 // pred_fallthru
          _
      $region28: #{basic_block_forward.4} parent=5 // pred_fallthru
        _
      %p239 = scmp.le.s32.totalorder 1, %s23
      %p240 = scmp.lt.s32.totalorder %s23, 3
      %p241 = pnand %p239, %p240
      %p242 = pneg %p241
      // Predicated region
      $region33: #{basic_block_forward.4} parent=5 // pred_check
        _
      $region34: #{basic_block_forward.4} parent=5 // pred_check_branch
        %244 = sbr.rel (%p241) target = $region36
      $region35: #{basic_block_forward.4} parent=5 // pred_region
        %s245 = ssub.s32 %s23, 1
        %s246 = sand.u32 %s36, 1
        %s247 = scalar_lea.sflag [#allocation4], %s246
        %s248 = sand.u32 %s36, 1
        %s249 = smul.addr %s248, 256
        %s250 = scalar_lea.vmem [#allocation3], %s249
        // Predicated region
        $region37: #{basic_block_forward.4} parent=35 // pred_check
          %p251 = pneg %p49
        $region38: #{basic_block_forward.4} parent=35 // pred_check_branch
          %253 = sbr.rel (%p251) target = $region40
        $region39: #{basic_block_forward.4} parent=35 // pred_region
          %254 = dma.done %s247, 4096
        $region40: #{basic_block_forward.4} parent=35 // pred_fallthru
          _
        // Predicated region
        $region41: #{basic_block_forward.4} parent=35 // pred_check
          %p255 = pneg %p70
        $region42: #{basic_block_forward.4} parent=35 // pred_check_branch
          %257 = sbr.rel (%p255) target = $region44
        $region43: #{basic_block_forward.4} parent=35 // pred_region
          %258 = dma.done [#allocation7], 576
        $region44: #{basic_block_forward.4} parent=35 // pred_fallthru
          _
        // Predicated region
        $region45: #{basic_block_forward.4} parent=35 // pred_check
          %p259 = pneg %p91
        $region46: #{basic_block_forward.4} parent=35 // pred_check_branch
          %261 = sbr.rel (%p259) target = $region48
        $region47: #{basic_block_forward.4} parent=35 // pred_region
          %262 = dma.done [#allocation7], 16
        $region48: #{basic_block_forward.4} parent=35 // pred_fallthru
          _
        // Predicated region
        $region49: #{basic_block_forward.4} parent=35 // pred_check
          %p263 = pneg %p112
        $region50: #{basic_block_forward.4} parent=35 // pred_check_branch
          %265 = sbr.rel (%p263) target = $region52
        $region51: #{basic_block_forward.4} parent=35 // pred_region
          %266 = dma.done [#allocation10], 16
        $region52: #{basic_block_forward.4} parent=35 // pred_fallthru
          _
        %s267 = sand.u32 %s36, 1
        %s268 = scalar_lea.sflag [#allocation4], %s267
        %s269 = sand.u32 %s36, 1
        %s270 = smul.addr %s269, 256
        %s271 = scalar_lea.vmem [#allocation3], %s270
        %p272 = pneg %p49
        %p273 = pneg %p46
        %p274 = pneg %p70
        %p275 = pneg %p67
        %p276 = pneg %p91
        %p277 = pneg %p88
        %p278 = pneg %p112
        %p279 = pneg %p109
        %p280 = pneg %p138
        %p281 = pneg %p135
        %s282 = sand.u32 %s125, 1
        %s283 = scalar_lea.sflag [#allocation5], %s282
        %s284 = sand.u32 %s125, 1
        %s285 = smul.addr %s284, 256
        %s286 = scalar_lea.vmem [#allocation11], %s285
        %p287 = pneg %p164
        %p288 = pneg %p161
        %s289 = sand.u32 %s151, 1
        %s290 = scalar_lea.sflag [#allocation13], %s289
        %s291 = sand.u32 %s151, 1
        %s292 = smul.addr %s291, 2
        %s293 = scalar_lea.vmem [#allocation12], %s292
        %v294 = vld [vmem:[%s250] sm:$0xff]
        %v295 = vld [vmem:[%s250 + $0x8] sm:$0xff]
        %v296 = vld [vmem:[%s250 + $0x10] sm:$0xff]
        %v297 = vld [vmem:[%s250 + $0x18] sm:$0xff]
        %v298 = vld [vmem:[%s250 + $0x20] sm:$0xff]
        %v299 = vld [vmem:[%s250 + $0x28] sm:$0xff]
        %v300 = vld [vmem:[%s250 + $0x30] sm:$0xff]
        %v301 = vld [vmem:[%s250 + $0x38] sm:$0xff]
        %v302 = vld [vmem:[%s250 + $0x40] sm:$0xff]
        %v303 = vld [vmem:[%s250 + $0x48] sm:$0xff]
        %v304 = vld [vmem:[%s250 + $0x50] sm:$0xff]
        %v305 = vld [vmem:[%s250 + $0x58] sm:$0xff]
        %v306 = vld [vmem:[%s250 + $0x60] sm:$0xff]
        %v307 = vld [vmem:[%s250 + $0x68] sm:$0xff]
        %v308 = vld [vmem:[%s250 + $0x70] sm:$0xff]
        %v309 = vld [vmem:[%s250 + $0x78] sm:$0xff]
        %v310 = vld [vmem:[%s250 + $0x80] sm:$0xff]
        %v311 = vld [vmem:[%s250 + $0x88] sm:$0xff]
        %v312 = vld [vmem:[%s250 + $0x90] sm:$0xff]
        %v313 = vld [vmem:[%s250 + $0x98] sm:$0xff]
        %v314 = vld [vmem:[%s250 + $0xa0] sm:$0xff]
        %v315 = vld [vmem:[%s250 + $0xa8] sm:$0xff]
        %v316 = vld [vmem:[%s250 + $0xb0] sm:$0xff]
        %v317 = vld [vmem:[%s250 + $0xb8] sm:$0xff]
        %v318 = vld [vmem:[%s250 + $0xc0] sm:$0xff]
        %v319 = vld [vmem:[%s250 + $0xc8] sm:$0xff]
        %v320 = vld [vmem:[%s250 + $0xd0] sm:$0xff]
        %v321 = vld [vmem:[%s250 + $0xd8] sm:$0xff]
        %v322 = vld [vmem:[%s250 + $0xe0] sm:$0xff]
        %v323 = vld [vmem:[%s250 + $0xe8] sm:$0xff]
        %v324 = vld [vmem:[%s250 + $0xf0] sm:$0xff]
        %v325 = vld [vmem:[%s250 + $0xf8] sm:$0xff]
        %v326 = vld [vmem:[#allocation8] sm:$0x1]
        %v328 = vlaneseq
        %v329 = vshrl.u32 %v328, 7
        %v330 = vsub.s32 0, %v329
        %v331 = vrot.slane %v326, %v330
        %v333 = vmul.f32 %v294, %v331
        %v334 = vmul.f32 %v295, %v331
        %v335 = vmul.f32 %v296, %v331
        %v336 = vmul.f32 %v297, %v331
        %v337 = vmul.f32 %v298, %v331
        %v338 = vmul.f32 %v299, %v331
        %v339 = vmul.f32 %v300, %v331
        %v340 = vmul.f32 %v301, %v331
        %v341 = vmul.f32 %v302, %v331
        %v342 = vmul.f32 %v303, %v331
        %v343 = vmul.f32 %v304, %v331
        %v344 = vmul.f32 %v305, %v331
        %v345 = vmul.f32 %v306, %v331
        %v346 = vmul.f32 %v307, %v331
        %v347 = vmul.f32 %v308, %v331
        %v348 = vmul.f32 %v309, %v331
        %v349 = vmul.f32 %v310, %v331
        %v350 = vmul.f32 %v311, %v331
        %v351 = vmul.f32 %v312, %v331
        %v352 = vmul.f32 %v313, %v331
        %v353 = vmul.f32 %v314, %v331
        %v354 = vmul.f32 %v315, %v331
        %v355 = vmul.f32 %v316, %v331
        %v356 = vmul.f32 %v317, %v331
        %v357 = vmul.f32 %v318, %v331
        %v358 = vmul.f32 %v319, %v331
        %v359 = vmul.f32 %v320, %v331
        %v360 = vmul.f32 %v321, %v331
        %v361 = vmul.f32 %v322, %v331
        %v362 = vmul.f32 %v323, %v331
        %v363 = vmul.f32 %v324, %v331
        %v364 = vmul.f32 %v325, %v331
        %v365 = vld [vmem:[#allocation9] sm:$0x1]
        %v367 = vlaneseq
        %v368 = vshrl.u32 %v367, 7
        %v369 = vsub.s32 0, %v368
        %v370 = vrot.slane %v365, %v369
        %v372 = vadd.f32 %v333, %v370
        %v373 = vadd.f32 %v334, %v370
        %v374 = vadd.f32 %v335, %v370
        %v375 = vadd.f32 %v336, %v370
        %v376 = vadd.f32 %v337, %v370
        %v377 = vadd.f32 %v338, %v370
        %v378 = vadd.f32 %v339, %v370
        %v379 = vadd.f32 %v340, %v370
        %v380 = vadd.f32 %v341, %v370
        %v381 = vadd.f32 %v342, %v370
        %v382 = vadd.f32 %v343, %v370
        %v383 = vadd.f32 %v344, %v370
        %v384 = vadd.f32 %v345, %v370
        %v385 = vadd.f32 %v346, %v370
        %v386 = vadd.f32 %v347, %v370
        %v387 = vadd.f32 %v348, %v370
        %v388 = vadd.f32 %v349, %v370
        %v389 = vadd.f32 %v350, %v370
        %v390 = vadd.f32 %v351, %v370
        %v391 = vadd.f32 %v352, %v370
        %v392 = vadd.f32 %v353, %v370
        %v393 = vadd.f32 %v354, %v370
        %v394 = vadd.f32 %v355, %v370
        %v395 = vadd.f32 %v356, %v370
        %v396 = vadd.f32 %v357, %v370
        %v397 = vadd.f32 %v358, %v370
        %v398 = vadd.f32 %v359, %v370
        %v399 = vadd.f32 %v360, %v370
        %v400 = vadd.f32 %v361, %v370
        %v401 = vadd.f32 %v362, %v370
        %v402 = vadd.f32 %v363, %v370
        %v403 = vadd.f32 %v364, %v370
        %v404 = vmax.f32 %v372, 0.0
        %v405 = vmax.f32 %v373, 0.0
        %v406 = vmax.f32 %v374, 0.0
        %v407 = vmax.f32 %v375, 0.0
        %v408 = vmax.f32 %v376, 0.0
        %v409 = vmax.f32 %v377, 0.0
        %v410 = vmax.f32 %v378, 0.0
        %v411 = vmax.f32 %v379, 0.0
        %v412 = vmax.f32 %v380, 0.0
        %v413 = vmax.f32 %v381, 0.0
        %v414 = vmax.f32 %v382, 0.0
        %v415 = vmax.f32 %v383, 0.0
        %v416 = vmax.f32 %v384, 0.0
        %v417 = vmax.f32 %v385, 0.0
        %v418 = vmax.f32 %v386, 0.0
        %v419 = vmax.f32 %v387, 0.0
        %v420 = vmax.f32 %v388, 0.0
        %v421 = vmax.f32 %v389, 0.0
        %v422 = vmax.f32 %v390, 0.0
        %v423 = vmax.f32 %v391, 0.0
        %v424 = vmax.f32 %v392, 0.0
        %v425 = vmax.f32 %v393, 0.0
        %v426 = vmax.f32 %v394, 0.0
        %v427 = vmax.f32 %v395, 0.0
        %v428 = vmax.f32 %v396, 0.0
        %v429 = vmax.f32 %v397, 0.0
        %v430 = vmax.f32 %v398, 0.0
        %v431 = vmax.f32 %v399, 0.0
        %v432 = vmax.f32 %v400, 0.0
        %v433 = vmax.f32 %v401, 0.0
        %v434 = vmax.f32 %v402, 0.0
        %v435 = vmax.f32 %v403, 0.0
        %vm436 = vcmask 31744
        %437 = vst.msk [vmem:[#allocation2] sm:$0xff] %vm436, 0.0
        %438 = vst.msk [vmem:[#allocation2 + $0x8] sm:$0xff] %vm436, 0.0
        %vm439 = vcmask 25600
        %440 = vst.msk [vmem:[#allocation2 + $0x10] sm:$0x3] %vm439, 0.0
        %s441 = scalar_lea.vmem [#allocation2], 408
        %442 = vst.msk [vmem:[%s441] sm:$0xff] %vm436, 0.0
        %443 = vst.msk [vmem:[%s441 + $0x8] sm:$0xff] %vm436, 0.0
        %444 = vst.msk [vmem:[%s441 + $0x10] sm:$0x3] %vm439, 0.0
        %vm445 = vcmask 24576
        %446 = vst.msk [vmem:[#allocation2] sm:$0x1] %vm445, 0.0
        %447 = vst.msk [vmem:[#allocation2 + $0x18] sm:$0x1] %vm445, 0.0
        %448 = vst.msk [vmem:[#allocation2 + $0x30] sm:$0x1] %vm445, 0.0
        %449 = vst.msk [vmem:[#allocation2 + $0x48] sm:$0x1] %vm445, 0.0
        %450 = vst.msk [vmem:[#allocation2 + $0x60] sm:$0x1] %vm445, 0.0
        %451 = vst.msk [vmem:[#allocation2 + $0x78] sm:$0x1] %vm445, 0.0
        %452 = vst.msk [vmem:[#allocation2 + $0x90] sm:$0x1] %vm445, 0.0
        %453 = vst.msk [vmem:[#allocation2 + $0xa8] sm:$0x1] %vm445, 0.0
        %454 = vst.msk [vmem:[#allocation2 + $0xc0] sm:$0x1] %vm445, 0.0
        %455 = vst.msk [vmem:[#allocation2 + $0xd8] sm:$0x1] %vm445, 0.0
        %456 = vst.msk [vmem:[#allocation2 + $0xf0] sm:$0x1] %vm445, 0.0
        %457 = vst.msk [vmem:[#allocation2 + $0x108] sm:$0x1] %vm445, 0.0
        %458 = vst.msk [vmem:[#allocation2 + $0x120] sm:$0x1] %vm445, 0.0
        %459 = vst.msk [vmem:[#allocation2 + $0x138] sm:$0x1] %vm445, 0.0
        %460 = vst.msk [vmem:[#allocation2 + $0x150] sm:$0x1] %vm445, 0.0
        %461 = vst.msk [vmem:[#allocation2 + $0x168] sm:$0x1] %vm445, 0.0
        %462 = vst.msk [vmem:[#allocation2 + $0x180] sm:$0x1] %vm445, 0.0
        %463 = vst.msk [vmem:[#allocation2 + $0x198] sm:$0x1] %vm445, 0.0
        %464 = vst.msk [vmem:[#allocation2 + $0x11] sm:$0x1] %vm445, 0.0
        %465 = vst.msk [vmem:[#allocation2 + $0x29] sm:$0x1] %vm445, 0.0
        %466 = vst.msk [vmem:[#allocation2 + $0x41] sm:$0x1] %vm445, 0.0
        %467 = vst.msk [vmem:[#allocation2 + $0x59] sm:$0x1] %vm445, 0.0
        %468 = vst.msk [vmem:[#allocation2 + $0x71] sm:$0x1] %vm445, 0.0
        %469 = vst.msk [vmem:[#allocation2 + $0x89] sm:$0x1] %vm445, 0.0
        %470 = vst.msk [vmem:[#allocation2 + $0xa1] sm:$0x1] %vm445, 0.0
        %471 = vst.msk [vmem:[#allocation2 + $0xb9] sm:$0x1] %vm445, 0.0
        %472 = vst.msk [vmem:[#allocation2 + $0xd1] sm:$0x1] %vm445, 0.0
        %473 = vst.msk [vmem:[#allocation2 + $0xe9] sm:$0x1] %vm445, 0.0
        %474 = vst.msk [vmem:[#allocation2 + $0x101] sm:$0x1] %vm445, 0.0
        %475 = vst.msk [vmem:[#allocation2 + $0x119] sm:$0x1] %vm445, 0.0
        %476 = vst.msk [vmem:[#allocation2 + $0x131] sm:$0x1] %vm445, 0.0
        %477 = vst.msk [vmem:[#allocation2 + $0x149] sm:$0x1] %vm445, 0.0
        %478 = vst.msk [vmem:[#allocation2 + $0x161] sm:$0x1] %vm445, 0.0
        %479 = vst.msk [vmem:[#allocation2 + $0x179] sm:$0x1] %vm445, 0.0
        %480 = vst.msk [vmem:[#allocation2 + $0x191] sm:$0x1] %vm445, 0.0
        %481 = vst.msk [vmem:[#allocation2 + $0x1a9] sm:$0x1] %vm445, 0.0
        %s482 = scalar_lea.vmem [#allocation2], 24
        %483 = vst.msk [vmem:[%s482 + $0x1] sm:$0xff] %vm436, %v404
        %484 = vst.msk [vmem:[%s482 + $0x9] sm:$0xff] %vm436, %v405
        %485 = vst.msk [vmem:[%s482 + $0x19] sm:$0xff] %vm436, %v406
        %486 = vst.msk [vmem:[%s482 + $0x21] sm:$0xff] %vm436, %v407
        %487 = vst.msk [vmem:[%s482 + $0x31] sm:$0xff] %vm436, %v408
        %488 = vst.msk [vmem:[%s482 + $0x39] sm:$0xff] %vm436, %v409
        %489 = vst.msk [vmem:[%s482 + $0x49] sm:$0xff] %vm436, %v410
        %490 = vst.msk [vmem:[%s482 + $0x51] sm:$0xff] %vm436, %v411
        %491 = vst.msk [vmem:[%s482 + $0x61] sm:$0xff] %vm436, %v412
        %492 = vst.msk [vmem:[%s482 + $0x69] sm:$0xff] %vm436, %v413
        %493 = vst.msk [vmem:[%s482 + $0x79] sm:$0xff] %vm436, %v414
        %494 = vst.msk [vmem:[%s482 + $0x81] sm:$0xff] %vm436, %v415
        %495 = vst.msk [vmem:[%s482 + $0x91] sm:$0xff] %vm436, %v416
        %496 = vst.msk [vmem:[%s482 + $0x99] sm:$0xff] %vm436, %v417
        %497 = vst.msk [vmem:[%s482 + $0xa9] sm:$0xff] %vm436, %v418
        %498 = vst.msk [vmem:[%s482 + $0xb1] sm:$0xff] %vm436, %v419
        %499 = vst.msk [vmem:[%s482 + $0xc1] sm:$0xff] %vm436, %v420
        %500 = vst.msk [vmem:[%s482 + $0xc9] sm:$0xff] %vm436, %v421
        %501 = vst.msk [vmem:[%s482 + $0xd9] sm:$0xff] %vm436, %v422
        %502 = vst.msk [vmem:[%s482 + $0xe1] sm:$0xff] %vm436, %v423
        %503 = vst.msk [vmem:[%s482 + $0xf1] sm:$0xff] %vm436, %v424
        %504 = vst.msk [vmem:[%s482 + $0xf9] sm:$0xff] %vm436, %v425
        %505 = vst.msk [vmem:[%s482 + $0x109] sm:$0xff] %vm436, %v426
        %506 = vst.msk [vmem:[%s482 + $0x111] sm:$0xff] %vm436, %v427
        %507 = vst.msk [vmem:[%s482 + $0x121] sm:$0xff] %vm436, %v428
        %508 = vst.msk [vmem:[%s482 + $0x129] sm:$0xff] %vm436, %v429
        %509 = vst.msk [vmem:[%s482 + $0x139] sm:$0xff] %vm436, %v430
        %510 = vst.msk [vmem:[%s482 + $0x141] sm:$0xff] %vm436, %v431
        %511 = vst.msk [vmem:[%s482 + $0x151] sm:$0xff] %vm436, %v432
        %512 = vst.msk [vmem:[%s482 + $0x159] sm:$0xff] %vm436, %v433
        %513 = vst.msk [vmem:[%s482 + $0x169] sm:$0xff] %vm436, %v434
        %514 = vst.msk [vmem:[%s482 + $0x171] sm:$0xff] %vm436, %v435
        %v515 = vld [vmem:[#allocation2] sm:$0xff]
        %v516 = vld [vmem:[#allocation2 + $0x8] sm:$0xff]
        %v517 = vld [vmem:[#allocation2 + $0x18] sm:$0xff]
        %v518 = vld [vmem:[#allocation2 + $0x20] sm:$0xff]
        %v519 = vld [vmem:[#allocation2 + $0x30] sm:$0xff]
        %v520 = vld [vmem:[#allocation2 + $0x38] sm:$0xff]
        %v521 = vld [vmem:[#allocation2 + $0x48] sm:$0xff]
        %v522 = vld [vmem:[#allocation2 + $0x50] sm:$0xff]
        %v523 = vld [vmem:[#allocation2 + $0x60] sm:$0xff]
        %v524 = vld [vmem:[#allocation2 + $0x68] sm:$0xff]
        %v525 = vld [vmem:[#allocation2 + $0x78] sm:$0xff]
        %v526 = vld [vmem:[#allocation2 + $0x80] sm:$0xff]
        %v527 = vld [vmem:[#allocation2 + $0x90] sm:$0xff]
        %v528 = vld [vmem:[#allocation2 + $0x98] sm:$0xff]
        %v529 = vld [vmem:[#allocation2 + $0xa8] sm:$0xff]
        %v530 = vld [vmem:[#allocation2 + $0xb0] sm:$0xff]
        %v531 = vld [vmem:[#allocation2 + $0xc0] sm:$0xff]
        %v532 = vld [vmem:[#allocation2 + $0xc8] sm:$0xff]
        %v533 = vld [vmem:[#allocation2 + $0xd8] sm:$0xff]
        %v534 = vld [vmem:[#allocation2 + $0xe0] sm:$0xff]
        %v535 = vld [vmem:[#allocation2 + $0xf0] sm:$0xff]
        %v536 = vld [vmem:[#allocation2 + $0xf8] sm:$0xff]
        %v537 = vld [vmem:[#allocation2 + $0x108] sm:$0xff]
        %v538 = vld [vmem:[#allocation2 + $0x110] sm:$0xff]
        %v539 = vld [vmem:[#allocation2 + $0x120] sm:$0xff]
        %v540 = vld [vmem:[#allocation2 + $0x128] sm:$0xff]
        %v541 = vld [vmem:[#allocation2 + $0x138] sm:$0xff]
        %v542 = vld [vmem:[#allocation2 + $0x140] sm:$0xff]
        %v543 = vld [vmem:[#allocation2 + $0x150] sm:$0xff]
        %v544 = vld [vmem:[#allocation2 + $0x158] sm:$0xff]
        %v545 = vld [vmem:[#allocation2 + $0x168] sm:$0xff]
        %v546 = vld [vmem:[#allocation2 + $0x170] sm:$0xff]
        %v547 = vld [vmem:[#allocation6] sm:$0xf]
        %v548 = vld [vmem:[#allocation2 + $0x1] sm:$0xff]
        %v549 = vld [vmem:[#allocation2 + $0x9] sm:$0xff]
        %v550 = vld [vmem:[#allocation2 + $0x19] sm:$0xff]
        %v551 = vld [vmem:[#allocation2 + $0x21] sm:$0xff]
        %v552 = vld [vmem:[#allocation2 + $0x31] sm:$0xff]
        %v553 = vld [vmem:[#allocation2 + $0x39] sm:$0xff]
        %v554 = vld [vmem:[#allocation2 + $0x49] sm:$0xff]
        %v555 = vld [vmem:[#allocation2 + $0x51] sm:$0xff]
        %v556 = vld [vmem:[#allocation2 + $0x61] sm:$0xff]
        %v557 = vld [vmem:[#allocation2 + $0x69] sm:$0xff]
        %v558 = vld [vmem:[#allocation2 + $0x79] sm:$0xff]
        %v559 = vld [vmem:[#allocation2 + $0x81] sm:$0xff]
        %v560 = vld [vmem:[#allocation2 + $0x91] sm:$0xff]
        %v561 = vld [vmem:[#allocation2 + $0x99] sm:$0xff]
        %v562 = vld [vmem:[#allocation2 + $0xa9] sm:$0xff]
        %v563 = vld [vmem:[#allocation2 + $0xb1] sm:$0xff]
        %v564 = vld [vmem:[#allocation2 + $0xc1] sm:$0xff]
        %v565 = vld [vmem:[#allocation2 + $0xc9] sm:$0xff]
        %v566 = vld [vmem:[#allocation2 + $0xd9] sm:$0xff]
        %v567 = vld [vmem:[#allocation2 + $0xe1] sm:$0xff]
        %v568 = vld [vmem:[#allocation2 + $0xf1] sm:$0xff]
        %v569 = vld [vmem:[#allocation2 + $0xf9] sm:$0xff]
        %v570 = vld [vmem:[#allocation2 + $0x109] sm:$0xff]
        %v571 = vld [vmem:[#allocation2 + $0x111] sm:$0xff]
        %v572 = vld [vmem:[#allocation2 + $0x121] sm:$0xff]
        %v573 = vld [vmem:[#allocation2 + $0x129] sm:$0xff]
        %v574 = vld [vmem:[#allocation2 + $0x139] sm:$0xff]
        %v575 = vld [vmem:[#allocation2 + $0x141] sm:$0xff]
        %v576 = vld [vmem:[#allocation2 + $0x151] sm:$0xff]
        %v577 = vld [vmem:[#allocation2 + $0x159] sm:$0xff]
        %v578 = vld [vmem:[#allocation2 + $0x169] sm:$0xff]
        %v579 = vld [vmem:[#allocation2 + $0x171] sm:$0xff]
        %s580 = scalar_lea.vmem [#allocation6], 4
        %v581 = vld [vmem:[%s580] sm:$0xf]
        %v583 = vsel %vm436, %v548, 0
        %v586 = vsel %vm436, %v549, 0
        %v589 = vsel %vm436, %v550, 0
        %v592 = vsel %vm436, %v551, 0
        %v595 = vsel %vm436, %v552, 0
        %v598 = vsel %vm436, %v553, 0
        %v601 = vsel %vm436, %v554, 0
        %v604 = vsel %vm436, %v555, 0
        %v607 = vsel %vm436, %v556, 0
        %v610 = vsel %vm436, %v557, 0
        %v613 = vsel %vm436, %v558, 0
        %v616 = vsel %vm436, %v559, 0
        %v619 = vsel %vm436, %v560, 0
        %v622 = vsel %vm436, %v561, 0
        %v625 = vsel %vm436, %v562, 0
        %v628 = vsel %vm436, %v563, 0
        %v631 = vsel %vm436, %v564, 0
        %v634 = vsel %vm436, %v565, 0
        %v637 = vsel %vm436, %v566, 0
        %v640 = vsel %vm436, %v567, 0
        %v643 = vsel %vm436, %v568, 0
        %v646 = vsel %vm436, %v569, 0
        %v649 = vsel %vm436, %v570, 0
        %v652 = vsel %vm436, %v571, 0
        %v655 = vsel %vm436, %v572, 0
        %v658 = vsel %vm436, %v573, 0
        %v661 = vsel %vm436, %v574, 0
        %v664 = vsel %vm436, %v575, 0
        %v667 = vsel %vm436, %v576, 0
        %v670 = vsel %vm436, %v577, 0
        %v673 = vsel %vm436, %v578, 0
        %v676 = vsel %vm436, %v579, 0
        %vm678 = vcmask 1043456
        %v680 = vsel %vm678, %v581, 0
        %682 = vmatprep.subr.mxu0 0.0
        %683 = vmatpush1.msra.mxu0 %v680
        %684 = vmatprep.subr.mxu0 0.0
        %685 = vmatpush1.msra.mxu0 0.0
        %686 = vmatprep.subr.mxu0 0.0
        %687 = vmatpush1.msra.mxu0 0.0
        %688 = vmatprep.subr.mxu0 0.0
        %689 = vmatpush1.msra.mxu0 0.0
        %690 = vmatprep.subr.mxu0 0.0
        %691 = vmatpush1.msra.mxu0 0.0
        %692 = vmatprep.subr.mxu0 0.0
        %693 = vmatpush1.msra.mxu0 0.0
        %694 = vmatprep.subr.mxu0 0.0
        %695 = vmatpush1.msra.mxu0 0.0
        %696 = vmatprep.subr.mxu0 0.0
        %697 = vmatpush1.msra.mxu0 0.0
        %698 = vmatprep.subr.mxu0 0.0
        %699 = vmatpush1.msra.mxu0 0.0
        %700 = vmatprep.subr.mxu0 0.0
        %701 = vmatpush1.msra.mxu0 0.0
        %702 = vmatprep.subr.mxu0 0.0
        %703 = vmatpush1.msra.mxu0 0.0
        %704 = vmatprep.subr.mxu0 0.0
        %705 = vmatpush1.msra.mxu0 0.0
        %706 = vmatprep.subr.mxu0 0.0
        %707 = vmatpush1.msra.mxu0 0.0
        %708 = vmatprep.subr.mxu0 0.0
        %709 = vmatpush1.msra.mxu0 0.0
        %710 = vmatprep.subr.mxu0 0.0
        %711 = vmatpush1.msra.mxu0 0.0
        %712 = vmatprep.subr.mxu0 0.0
        %713 = vmatpush1.msra.mxu0 0.0
        %714 = vmatprep.subr.mxu0 0.0
        %715 = vmatpush1.msra.mxu0 0.0
        %716 = vmatprep.subr.mxu0 0.0
        %717 = vmatpush1.msra.mxu0 0.0
        %718 = vmatprep.subr.mxu0 0.0
        %719 = vmatpush1.msra.mxu0 0.0
        %720 = vmatprep.subr.mxu0 0.0
        %721 = vmatpush1.msra.mxu0 0.0
        %722 = vmatprep.subr.mxu0 0.0
        %723 = vmatpush1.msra.mxu0 0.0
        %724 = vmatprep.subr.mxu0 0.0
        %725 = vmatpush1.msra.mxu0 0.0
        %726 = vmatprep.subr.mxu0 0.0
        %727 = vmatpush1.msra.mxu0 0.0
        %728 = vmatprep.subr.mxu0 0.0
        %729 = vmatpush1.msra.mxu0 0.0
        %730 = vmatprep.subr.mxu0 0.0
        %731 = vmatpush1.msra.mxu0 0.0
        %732 = vmatprep.subr.mxu0 0.0
        %733 = vmatpush1.msra.mxu0 0.0
        %734 = vmatprep.subr.mxu0 0.0
        %735 = vmatpush1.msra.mxu0 0.0
        %736 = vmatprep.subr.mxu0 0.0
        %737 = vmatpush1.msra.mxu0 0.0
        %738 = vmatprep.subr.mxu0 0.0
        %739 = vmatpush1.msra.mxu0 0.0
        %740 = vmatprep.subr.mxu0 0.0
        %741 = vmatpush1.msra.mxu0 0.0
        %742 = vmatprep.subr.mxu0 0.0
        %743 = vmatpush1.msra.mxu0 0.0
        %744 = vmatprep.subr.mxu0 0.0
        %745 = vmatpush1.msra.mxu0 0.0
        %746 = vmatprep.mubr.f32.mxu0 0.0
        %747 = vmatmul.mubr.f32.gmra.mrb[0].mxu0 %v583
        %v748 = vpop.f32.mrb[0].mxu0
        %v749 = vadd.f32 0.0, %v748
        %v750 = vpop.f32.mrb[0].mxu0
        %751 = vmatprep.mubr.f32.mxu0 0.0
        %752 = vmatmul.mubr.f32.gmra.mrb[0].mxu0 %v586
        %v753 = vpop.f32.mrb[0].mxu0
        %v754 = vadd.f32 0.0, %v753
        %v755 = vpop.f32.mrb[0].mxu0
        %756 = vmatprep.mubr.f32.mxu0 0.0
        %757 = vmatmul.mubr.f32.gmra.mrb[0].mxu0 %v589
        %v758 = vpop.f32.mrb[0].mxu0
        %v759 = vadd.f32 0.0, %v758
        %v760 = vpop.f32.mrb[0].mxu0
        %761 = vmatprep.mubr.f32.mxu0 0.0
        %762 = vmatmul.mubr.f32.gmra.mrb[0].mxu0 %v592
        %v763 = vpop.f32.mrb[0].mxu0
        %v764 = vadd.f32 0.0, %v763
        %v765 = vpop.f32.mrb[0].mxu0
        %766 = vmatprep.mubr.f32.mxu0 0.0
        %767 = vmatmul.mubr.f32.gmra.mrb[0].mxu0 %v595
        %v768 = vpop.f32.mrb[0].mxu0
        %v769 = vadd.f32 0.0, %v768
        %v770 = vpop.f32.mrb[0].mxu0
        %771 = vmatprep.mubr.f32.mxu0 0.0
        %772 = vmatmul.mubr.f32.gmra.mrb[0].mxu0 %v598
        %v773 = vpop.f32.mrb[0].mxu0
        %v774 = vadd.f32 0.0, %v773
        %v775 = vpop.f32.mrb[0].mxu0
        %776 = vmatprep.mubr.f32.mxu0 0.0
        %777 = vmatmul.mubr.f32.gmra.mrb[0].mxu0 %v601
        %v778 = vpop.f32.mrb[0].mxu0
        %v779 = vadd.f32 0.0, %v778
        %v780 = vpop.f32.mrb[0].mxu0
        %781 = vmatprep.mubr.f32.mxu0 0.0
        %782 = vmatmul.mubr.f32.gmra.mrb[0].mxu0 %v604
        %v783 = vpop.f32.mrb[0].mxu0
        %v784 = vadd.f32 0.0, %v783
        %v785 = vpop.f32.mrb[0].mxu0
        %786 = vmatprep.mubr.f32.mxu0 0.0
        %787 = vmatmul.mubr.f32.gmra.mrb[0].mxu0 %v607
        %v788 = vpop.f32.mrb[0].mxu0
        %v789 = vadd.f32 0.0, %v788
        %v790 = vpop.f32.mrb[0].mxu0
        %791 = vmatprep.mubr.f32.mxu0 0.0
        %792 = vmatmul.mubr.f32.gmra.mrb[0].mxu0 %v610
        %v793 = vpop.f32.mrb[0].mxu0
        %v794 = vadd.f32 0.0, %v793
        %v795 = vpop.f32.mrb[0].mxu0
        %796 = vmatprep.mubr.f32.mxu0 0.0
        %797 = vmatmul.mubr.f32.gmra.mrb[0].mxu0 %v613
        %v798 = vpop.f32.mrb[0].mxu0
        %v799 = vadd.f32 0.0, %v798
        %v800 = vpop.f32.mrb[0].mxu0
        %801 = vmatprep.mubr.f32.mxu0 0.0
        %802 = vmatmul.mubr.f32.gmra.mrb[0].mxu0 %v616
        %v803 = vpop.f32.mrb[0].mxu0
        %v804 = vadd.f32 0.0, %v803
        %v805 = vpop.f32.mrb[0].mxu0
        %806 = vmatprep.mubr.f32.mxu0 0.0
        %807 = vmatmul.mubr.f32.gmra.mrb[0].mxu0 %v619
        %v808 = vpop.f32.mrb[0].mxu0
        %v809 = vadd.f32 0.0, %v808
        %v810 = vpop.f32.mrb[0].mxu0
        %811 = vmatprep.mubr.f32.mxu0 0.0
        %812 = vmatmul.mubr.f32.gmra.mrb[0].mxu0 %v622
        %v813 = vpop.f32.mrb[0].mxu0
        %v814 = vadd.f32 0.0, %v813
        %v815 = vpop.f32.mrb[0].mxu0
        %816 = vmatprep.mubr.f32.mxu0 0.0
        %817 = vmatmul.mubr.f32.gmra.mrb[0].mxu0 %v625
        %v818 = vpop.f32.mrb[0].mxu0
        %v819 = vadd.f32 0.0, %v818
        %v820 = vpop.f32.mrb[0].mxu0
        %821 = vmatprep.mubr.f32.mxu0 0.0
        %822 = vmatmul.mubr.f32.gmra.mrb[0].mxu0 %v628
        %v823 = vpop.f32.mrb[0].mxu0
        %v824 = vadd.f32 0.0, %v823
        %v825 = vpop.f32.mrb[0].mxu0
        %826 = vmatprep.mubr.f32.mxu0 0.0
        %827 = vmatmul.mubr.f32.gmra.mrb[0].mxu0 %v631
        %v828 = vpop.f32.mrb[0].mxu0
        %v829 = vadd.f32 0.0, %v828
        %v830 = vpop.f32.mrb[0].mxu0
        %831 = vmatprep.mubr.f32.mxu0 0.0
        %832 = vmatmul.mubr.f32.gmra.mrb[0].mxu0 %v634
        %v833 = vpop.f32.mrb[0].mxu0
        %v834 = vadd.f32 0.0, %v833
        %v835 = vpop.f32.mrb[0].mxu0
        %836 = vmatprep.mubr.f32.mxu0 0.0
        %837 = vmatmul.mubr.f32.gmra.mrb[0].mxu0 %v637
        %v838 = vpop.f32.mrb[0].mxu0
        %v839 = vadd.f32 0.0, %v838
        %v840 = vpop.f32.mrb[0].mxu0
        %841 = vmatprep.mubr.f32.mxu0 0.0
        %842 = vmatmul.mubr.f32.gmra.mrb[0].mxu0 %v640
        %v843 = vpop.f32.mrb[0].mxu0
        %v844 = vadd.f32 0.0, %v843
        %v845 = vpop.f32.mrb[0].mxu0
        %846 = vmatprep.mubr.f32.mxu0 0.0
        %847 = vmatmul.mubr.f32.gmra.mrb[0].mxu0 %v643
        %v848 = vpop.f32.mrb[0].mxu0
        %v849 = vadd.f32 0.0, %v848
        %v850 = vpop.f32.mrb[0].mxu0
        %851 = vmatprep.mubr.f32.mxu0 0.0
        %852 = vmatmul.mubr.f32.gmra.mrb[0].mxu0 %v646
        %v853 = vpop.f32.mrb[0].mxu0
        %v854 = vadd.f32 0.0, %v853
        %v855 = vpop.f32.mrb[0].mxu0
        %856 = vmatprep.mubr.f32.mxu0 0.0
        %857 = vmatmul.mubr.f32.gmra.mrb[0].mxu0 %v649
        %v858 = vpop.f32.mrb[0].mxu0
        %v859 = vadd.f32 0.0, %v858
        %v860 = vpop.f32.mrb[0].mxu0
        %861 = vmatprep.mubr.f32.mxu0 0.0
        %862 = vmatmul.mubr.f32.gmra.mrb[0].mxu0 %v652
        %v863 = vpop.f32.mrb[0].mxu0
        %v864 = vadd.f32 0.0, %v863
        %v865 = vpop.f32.mrb[0].mxu0
        %866 = vmatprep.mubr.f32.mxu0 0.0
        %867 = vmatmul.mubr.f32.gmra.mrb[0].mxu0 %v655
        %v868 = vpop.f32.mrb[0].mxu0
        %v869 = vadd.f32 0.0, %v868
        %v870 = vpop.f32.mrb[0].mxu0
        %871 = vmatprep.mubr.f32.mxu0 0.0
        %872 = vmatmul.mubr.f32.gmra.mrb[0].mxu0 %v658
        %v873 = vpop.f32.mrb[0].mxu0
        %v874 = vadd.f32 0.0, %v873
        %v875 = vpop.f32.mrb[0].mxu0
        %876 = vmatprep.mubr.f32.mxu0 0.0
        %877 = vmatmul.mubr.f32.gmra.mrb[0].mxu0 %v661
        %v878 = vpop.f32.mrb[0].mxu0
        %v879 = vadd.f32 0.0, %v878
        %v880 = vpop.f32.mrb[0].mxu0
        %881 = vmatprep.mubr.f32.mxu0 0.0
        %882 = vmatmul.mubr.f32.gmra.mrb[0].mxu0 %v664
        %v883 = vpop.f32.mrb[0].mxu0
        %v884 = vadd.f32 0.0, %v883
        %v885 = vpop.f32.mrb[0].mxu0
        %886 = vmatprep.mubr.f32.mxu0 0.0
        %887 = vmatmul.mubr.f32.gmra.mrb[0].mxu0 %v667
        %v888 = vpop.f32.mrb[0].mxu0
        %v889 = vadd.f32 0.0, %v888
        %v890 = vpop.f32.mrb[0].mxu0
        %891 = vmatprep.mubr.f32.mxu0 0.0
        %892 = vmatmul.mubr.f32.gmra.mrb[0].mxu0 %v670
        %v893 = vpop.f32.mrb[0].mxu0
        %v894 = vadd.f32 0.0, %v893
        %v895 = vpop.f32.mrb[0].mxu0
        %896 = vmatprep.mubr.f32.mxu0 0.0
        %897 = vmatmul.mubr.f32.gmra.mrb[0].mxu0 %v673
        %v898 = vpop.f32.mrb[0].mxu0
        %v899 = vadd.f32 0.0, %v898
        %v900 = vpop.f32.mrb[0].mxu0
        %901 = vmatprep.mubr.f32.mxu0 0.0
        %902 = vmatmul.mubr.f32.gmra.mrb[0].mxu0 %v676
        %v903 = vpop.f32.mrb[0].mxu0
        %v904 = vadd.f32 0.0, %v903
        %v905 = vpop.f32.mrb[0].mxu0
        %906 = vdwg.mxu0
        %v908 = vsel %vm436, %v515, 0
        %v911 = vsel %vm436, %v516, 0
        %v914 = vsel %vm436, %v517, 0
        %v917 = vsel %vm436, %v518, 0
        %v920 = vsel %vm436, %v519, 0
        %v923 = vsel %vm436, %v520, 0
        %v926 = vsel %vm436, %v521, 0
        %v929 = vsel %vm436, %v522, 0
        %v932 = vsel %vm436, %v523, 0
        %v935 = vsel %vm436, %v524, 0
        %v938 = vsel %vm436, %v525, 0
        %v941 = vsel %vm436, %v526, 0
        %v944 = vsel %vm436, %v527, 0
        %v947 = vsel %vm436, %v528, 0
        %v950 = vsel %vm436, %v529, 0
        %v953 = vsel %vm436, %v530, 0
        %v956 = vsel %vm436, %v531, 0
        %v959 = vsel %vm436, %v532, 0
        %v962 = vsel %vm436, %v533, 0
        %v965 = vsel %vm436, %v534, 0
        %v968 = vsel %vm436, %v535, 0
        %v971 = vsel %vm436, %v536, 0
        %v974 = vsel %vm436, %v537, 0
        %v977 = vsel %vm436, %v538, 0
        %v980 = vsel %vm436, %v539, 0
        %v983 = vsel %vm436, %v540, 0
        %v986 = vsel %vm436, %v541, 0
        %v989 = vsel %vm436, %v542, 0
        %v992 = vsel %vm436, %v543, 0
        %v995 = vsel %vm436, %v544, 0
        %v998 = vsel %vm436, %v545, 0
        %v1001 = vsel %vm436, %v546, 0
        %v1004 = vsel %vm678, %v547, 0
        %1006 = vmatprep.subr.mxu0 0.0
        %1007 = vmatpush1.msra.mxu0 %v1004
        %1008 = vmatprep.subr.mxu0 0.0
        %1009 = vmatpush1.msra.mxu0 0.0
        %1010 = vmatprep.subr.mxu0 0.0
        %1011 = vmatpush1.msra.mxu0 0.0
        %1012 = vmatprep.subr.mxu0 0.0
        %1013 = vmatpush1.msra.mxu0 0.0
        %1014 = vmatprep.subr.mxu0 0.0
        %1015 = vmatpush1.msra.mxu0 0.0
        %1016 = vmatprep.subr.mxu0 0.0
        %1017 = vmatpush1.msra.mxu0 0.0
        %1018 = vmatprep.subr.mxu0 0.0
        %1019 = vmatpush1.msra.mxu0 0.0
        %1020 = vmatprep.subr.mxu0 0.0
        %1021 = vmatpush1.msra.mxu0 0.0
        %1022 = vmatprep.subr.mxu0 0.0
        %1023 = vmatpush1.msra.mxu0 0.0
        %1024 = vmatprep.subr.mxu0 0.0
        %1025 = vmatpush1.msra.mxu0 0.0
        %1026 = vmatprep.subr.mxu0 0.0
        %1027 = vmatpush1.msra.mxu0 0.0
        %1028 = vmatprep.subr.mxu0 0.0
        %1029 = vmatpush1.msra.mxu0 0.0
        %1030 = vmatprep.subr.mxu0 0.0
        %1031 = vmatpush1.msra.mxu0 0.0
        %1032 = vmatprep.subr.mxu0 0.0
        %1033 = vmatpush1.msra.mxu0 0.0
        %1034 = vmatprep.subr.mxu0 0.0
        %1035 = vmatpush1.msra.mxu0 0.0
        %1036 = vmatprep.subr.mxu0 0.0
        %1037 = vmatpush1.msra.mxu0 0.0
        %1038 = vmatprep.subr.mxu0 0.0
        %1039 = vmatpush1.msra.mxu0 0.0
        %1040 = vmatprep.subr.mxu0 0.0
        %1041 = vmatpush1.msra.mxu0 0.0
        %1042 = vmatprep.subr.mxu0 0.0
        %1043 = vmatpush1.msra.mxu0 0.0
        %1044 = vmatprep.subr.mxu0 0.0
        %1045 = vmatpush1.msra.mxu0 0.0
        %1046 = vmatprep.subr.mxu0 0.0
        %1047 = vmatpush1.msra.mxu0 0.0
        %1048 = vmatprep.subr.mxu0 0.0
        %1049 = vmatpush1.msra.mxu0 0.0
        %1050 = vmatprep.subr.mxu0 0.0
        %1051 = vmatpush1.msra.mxu0 0.0
        %1052 = vmatprep.subr.mxu0 0.0
        %1053 = vmatpush1.msra.mxu0 0.0
        %1054 = vmatprep.subr.mxu0 0.0
        %1055 = vmatpush1.msra.mxu0 0.0
        %1056 = vmatprep.subr.mxu0 0.0
        %1057 = vmatpush1.msra.mxu0 0.0
        %1058 = vmatprep.subr.mxu0 0.0
        %1059 = vmatpush1.msra.mxu0 0.0
        %1060 = vmatprep.subr.mxu0 0.0
        %1061 = vmatpush1.msra.mxu0 0.0
        %1062 = vmatprep.subr.mxu0 0.0
        %1063 = vmatpush1.msra.mxu0 0.0
        %1064 = vmatprep.subr.mxu0 0.0
        %1065 = vmatpush1.msra.mxu0 0.0
        %1066 = vmatprep.subr.mxu0 0.0
        %1067 = vmatpush1.msra.mxu0 0.0
        %1068 = vmatprep.subr.mxu0 0.0
        %1069 = vmatpush1.msra.mxu0 0.0
        %1070 = vmatprep.mubr.f32.mxu0 0.0
        %1071 = vmatmul.mubr.f32.gmra.mrb[0].mxu0 %v908
        %v1072 = vpop.f32.mrb[0].mxu0
        %v1073 = vadd.f32 %v749, %v1072
        %v1074 = vpop.f32.mrb[0].mxu0
        %1075 = vmatprep.mubr.f32.mxu0 0.0
        %1076 = vmatmul.mubr.f32.gmra.mrb[0].mxu0 %v911
        %v1077 = vpop.f32.mrb[0].mxu0
        %v1078 = vadd.f32 %v754, %v1077
        %v1079 = vpop.f32.mrb[0].mxu0
        %1080 = vmatprep.mubr.f32.mxu0 0.0
        %1081 = vmatmul.mubr.f32.gmra.mrb[0].mxu0 %v914
        %v1082 = vpop.f32.mrb[0].mxu0
        %v1083 = vadd.f32 %v759, %v1082
        %v1084 = vpop.f32.mrb[0].mxu0
        %1085 = vmatprep.mubr.f32.mxu0 0.0
        %1086 = vmatmul.mubr.f32.gmra.mrb[0].mxu0 %v917
        %v1087 = vpop.f32.mrb[0].mxu0
        %v1088 = vadd.f32 %v764, %v1087
        %v1089 = vpop.f32.mrb[0].mxu0
        %1090 = vmatprep.mubr.f32.mxu0 0.0
        %1091 = vmatmul.mubr.f32.gmra.mrb[0].mxu0 %v920
        %v1092 = vpop.f32.mrb[0].mxu0
        %v1093 = vadd.f32 %v769, %v1092
        %v1094 = vpop.f32.mrb[0].mxu0
        %1095 = vmatprep.mubr.f32.mxu0 0.0
        %1096 = vmatmul.mubr.f32.gmra.mrb[0].mxu0 %v923
        %v1097 = vpop.f32.mrb[0].mxu0
        %v1098 = vadd.f32 %v774, %v1097
        %v1099 = vpop.f32.mrb[0].mxu0
        %1100 = vmatprep.mubr.f32.mxu0 0.0
        %1101 = vmatmul.mubr.f32.gmra.mrb[0].mxu0 %v926
        %v1102 = vpop.f32.mrb[0].mxu0
        %v1103 = vadd.f32 %v779, %v1102
        %v1104 = vpop.f32.mrb[0].mxu0
        %1105 = vmatprep.mubr.f32.mxu0 0.0
        %1106 = vmatmul.mubr.f32.gmra.mrb[0].mxu0 %v929
        %v1107 = vpop.f32.mrb[0].mxu0
        %v1108 = vadd.f32 %v784, %v1107
        %v1109 = vpop.f32.mrb[0].mxu0
        %1110 = vmatprep.mubr.f32.mxu0 0.0
        %1111 = vmatmul.mubr.f32.gmra.mrb[0].mxu0 %v932
        %v1112 = vpop.f32.mrb[0].mxu0
        %v1113 = vadd.f32 %v789, %v1112
        %v1114 = vpop.f32.mrb[0].mxu0
        %1115 = vmatprep.mubr.f32.mxu0 0.0
        %1116 = vmatmul.mubr.f32.gmra.mrb[0].mxu0 %v935
        %v1117 = vpop.f32.mrb[0].mxu0
        %v1118 = vadd.f32 %v794, %v1117
        %v1119 = vpop.f32.mrb[0].mxu0
        %1120 = vmatprep.mubr.f32.mxu0 0.0
        %1121 = vmatmul.mubr.f32.gmra.mrb[0].mxu0 %v938
        %v1122 = vpop.f32.mrb[0].mxu0
        %v1123 = vadd.f32 %v799, %v1122
        %v1124 = vpop.f32.mrb[0].mxu0
        %1125 = vmatprep.mubr.f32.mxu0 0.0
        %1126 = vmatmul.mubr.f32.gmra.mrb[0].mxu0 %v941
        %v1127 = vpop.f32.mrb[0].mxu0
        %v1128 = vadd.f32 %v804, %v1127
        %v1129 = vpop.f32.mrb[0].mxu0
        %1130 = vmatprep.mubr.f32.mxu0 0.0
        %1131 = vmatmul.mubr.f32.gmra.mrb[0].mxu0 %v944
        %v1132 = vpop.f32.mrb[0].mxu0
        %v1133 = vadd.f32 %v809, %v1132
        %v1134 = vpop.f32.mrb[0].mxu0
        %1135 = vmatprep.mubr.f32.mxu0 0.0
        %1136 = vmatmul.mubr.f32.gmra.mrb[0].mxu0 %v947
        %v1137 = vpop.f32.mrb[0].mxu0
        %v1138 = vadd.f32 %v814, %v1137
        %v1139 = vpop.f32.mrb[0].mxu0
        %1140 = vmatprep.mubr.f32.mxu0 0.0
        %1141 = vmatmul.mubr.f32.gmra.mrb[0].mxu0 %v950
        %v1142 = vpop.f32.mrb[0].mxu0
        %v1143 = vadd.f32 %v819, %v1142
        %v1144 = vpop.f32.mrb[0].mxu0
        %1145 = vmatprep.mubr.f32.mxu0 0.0
        %1146 = vmatmul.mubr.f32.gmra.mrb[0].mxu0 %v953
        %v1147 = vpop.f32.mrb[0].mxu0
        %v1148 = vadd.f32 %v824, %v1147
        %v1149 = vpop.f32.mrb[0].mxu0
        %1150 = vmatprep.mubr.f32.mxu0 0.0
        %1151 = vmatmul.mubr.f32.gmra.mrb[0].mxu0 %v956
        %v1152 = vpop.f32.mrb[0].mxu0
        %v1153 = vadd.f32 %v829, %v1152
        %v1154 = vpop.f32.mrb[0].mxu0
        %1155 = vmatprep.mubr.f32.mxu0 0.0
        %1156 = vmatmul.mubr.f32.gmra.mrb[0].mxu0 %v959
        %v1157 = vpop.f32.mrb[0].mxu0
        %v1158 = vadd.f32 %v834, %v1157
        %v1159 = vpop.f32.mrb[0].mxu0
        %1160 = vmatprep.mubr.f32.mxu0 0.0
        %1161 = vmatmul.mubr.f32.gmra.mrb[0].mxu0 %v962
        %v1162 = vpop.f32.mrb[0].mxu0
        %v1163 = vadd.f32 %v839, %v1162
        %v1164 = vpop.f32.mrb[0].mxu0
        %1165 = vmatprep.mubr.f32.mxu0 0.0
        %1166 = vmatmul.mubr.f32.gmra.mrb[0].mxu0 %v965
        %v1167 = vpop.f32.mrb[0].mxu0
        %v1168 = vadd.f32 %v844, %v1167
        %v1169 = vpop.f32.mrb[0].mxu0
        %1170 = vmatprep.mubr.f32.mxu0 0.0
        %1171 = vmatmul.mubr.f32.gmra.mrb[0].mxu0 %v968
        %v1172 = vpop.f32.mrb[0].mxu0
        %v1173 = vadd.f32 %v849, %v1172
        %v1174 = vpop.f32.mrb[0].mxu0
        %1175 = vmatprep.mubr.f32.mxu0 0.0
        %1176 = vmatmul.mubr.f32.gmra.mrb[0].mxu0 %v971
        %v1177 = vpop.f32.mrb[0].mxu0
        %v1178 = vadd.f32 %v854, %v1177
        %v1179 = vpop.f32.mrb[0].mxu0
        %1180 = vmatprep.mubr.f32.mxu0 0.0
        %1181 = vmatmul.mubr.f32.gmra.mrb[0].mxu0 %v974
        %v1182 = vpop.f32.mrb[0].mxu0
        %v1183 = vadd.f32 %v859, %v1182
        %v1184 = vpop.f32.mrb[0].mxu0
        %1185 = vmatprep.mubr.f32.mxu0 0.0
        %1186 = vmatmul.mubr.f32.gmra.mrb[0].mxu0 %v977
        %v1187 = vpop.f32.mrb[0].mxu0
        %v1188 = vadd.f32 %v864, %v1187
        %v1189 = vpop.f32.mrb[0].mxu0
        %1190 = vmatprep.mubr.f32.mxu0 0.0
        %1191 = vmatmul.mubr.f32.gmra.mrb[0].mxu0 %v980
        %v1192 = vpop.f32.mrb[0].mxu0
        %v1193 = vadd.f32 %v869, %v1192
        %v1194 = vpop.f32.mrb[0].mxu0
        %1195 = vmatprep.mubr.f32.mxu0 0.0
        %1196 = vmatmul.mubr.f32.gmra.mrb[0].mxu0 %v983
        %v1197 = vpop.f32.mrb[0].mxu0
        %v1198 = vadd.f32 %v874, %v1197
        %v1199 = vpop.f32.mrb[0].mxu0
        %1200 = vmatprep.mubr.f32.mxu0 0.0
        %1201 = vmatmul.mubr.f32.gmra.mrb[0].mxu0 %v986
        %v1202 = vpop.f32.mrb[0].mxu0
        %v1203 = vadd.f32 %v879, %v1202
        %v1204 = vpop.f32.mrb[0].mxu0
        %1205 = vmatprep.mubr.f32.mxu0 0.0
        %1206 = vmatmul.mubr.f32.gmra.mrb[0].mxu0 %v989
        %v1207 = vpop.f32.mrb[0].mxu0
        %v1208 = vadd.f32 %v884, %v1207
        %v1209 = vpop.f32.mrb[0].mxu0
        %1210 = vmatprep.mubr.f32.mxu0 0.0
        %1211 = vmatmul.mubr.f32.gmra.mrb[0].mxu0 %v992
        %v1212 = vpop.f32.mrb[0].mxu0
        %v1213 = vadd.f32 %v889, %v1212
        %v1214 = vpop.f32.mrb[0].mxu0
        %1215 = vmatprep.mubr.f32.mxu0 0.0
        %1216 = vmatmul.mubr.f32.gmra.mrb[0].mxu0 %v995
        %v1217 = vpop.f32.mrb[0].mxu0
        %v1218 = vadd.f32 %v894, %v1217
        %v1219 = vpop.f32.mrb[0].mxu0
        %1220 = vmatprep.mubr.f32.mxu0 0.0
        %1221 = vmatmul.mubr.f32.gmra.mrb[0].mxu0 %v998
        %v1222 = vpop.f32.mrb[0].mxu0
        %v1223 = vadd.f32 %v899, %v1222
        %v1224 = vpop.f32.mrb[0].mxu0
        %1225 = vmatprep.mubr.f32.mxu0 0.0
        %1226 = vmatmul.mubr.f32.gmra.mrb[0].mxu0 %v1001
        %v1227 = vpop.f32.mrb[0].mxu0
        %v1228 = vadd.f32 %v904, %v1227
        %v1229 = vpop.f32.mrb[0].mxu0
        %1230 = vdwg.mxu0
        %v1231 = vld [vmem:[#allocation2 + $0x2] sm:$0xff]
        %v1232 = vld [vmem:[#allocation2 + $0xa] sm:$0xff]
        %v1233 = vld [vmem:[#allocation2 + $0x1a] sm:$0xff]
        %v1234 = vld [vmem:[#allocation2 + $0x22] sm:$0xff]
        %v1235 = vld [vmem:[#allocation2 + $0x32] sm:$0xff]
        %v1236 = vld [vmem:[#allocation2 + $0x3a] sm:$0xff]
        %v1237 = vld [vmem:[#allocation2 + $0x4a] sm:$0xff]
        %v1238 = vld [vmem:[#allocation2 + $0x52] sm:$0xff]
        %v1239 = vld [vmem:[#allocation2 + $0x62] sm:$0xff]
        %v1240 = vld [vmem:[#allocation2 + $0x6a] sm:$0xff]
        %v1241 = vld [vmem:[#allocation2 + $0x7a] sm:$0xff]
        %v1242 = vld [vmem:[#allocation2 + $0x82] sm:$0xff]
        %v1243 = vld [vmem:[#allocation2 + $0x92] sm:$0xff]
        %v1244 = vld [vmem:[#allocation2 + $0x9a] sm:$0xff]
        %v1245 = vld [vmem:[#allocation2 + $0xaa] sm:$0xff]
        %v1246 = vld [vmem:[#allocation2 + $0xb2] sm:$0xff]
        %v1247 = vld [vmem:[#allocation2 + $0xc2] sm:$0xff]
        %v1248 = vld [vmem:[#allocation2 + $0xca] sm:$0xff]
        %v1249 = vld [vmem:[#allocation2 + $0xda] sm:$0xff]
        %v1250 = vld [vmem:[#allocation2 + $0xe2] sm:$0xff]
        %v1251 = vld [vmem:[#allocation2 + $0xf2] sm:$0xff]
        %v1252 = vld [vmem:[#allocation2 + $0xfa] sm:$0xff]
        %v1253 = vld [vmem:[#allocation2 + $0x10a] sm:$0xff]
        %v1254 = vld [vmem:[#allocation2 + $0x112] sm:$0xff]
        %v1255 = vld [vmem:[#allocation2 + $0x122] sm:$0xff]
        %v1256 = vld [vmem:[#allocation2 + $0x12a] sm:$0xff]
        %v1257 = vld [vmem:[#allocation2 + $0x13a] sm:$0xff]
        %v1258 = vld [vmem:[#allocation2 + $0x142] sm:$0xff]
        %v1259 = vld [vmem:[#allocation2 + $0x152] sm:$0xff]
        %v1260 = vld [vmem:[#allocation2 + $0x15a] sm:$0xff]
        %v1261 = vld [vmem:[#allocation2 + $0x16a] sm:$0xff]
        %v1262 = vld [vmem:[#allocation2 + $0x172] sm:$0xff]
        %s1263 = scalar_lea.vmem [#allocation6], 8
        %v1264 = vld [vmem:[%s1263] sm:$0xf]
        %v1266 = vsel %vm436, %v1231, 0
        %v1269 = vsel %vm436, %v1232, 0
        %v1272 = vsel %vm436, %v1233, 0
        %v1275 = vsel %vm436, %v1234, 0
        %v1278 = vsel %vm436, %v1235, 0
        %v1281 = vsel %vm436, %v1236, 0
        %v1284 = vsel %vm436, %v1237, 0
        %v1287 = vsel %vm436, %v1238, 0
        %v1290 = vsel %vm436, %v1239, 0
        %v1293 = vsel %vm436, %v1240, 0
        %v1296 = vsel %vm436, %v1241, 0
        %v1299 = vsel %vm436, %v1242, 0
        %v1302 = vsel %vm436, %v1243, 0
        %v1305 = vsel %vm436, %v1244, 0
        %v1308 = vsel %vm436, %v1245, 0
        %v1311 = vsel %vm436, %v1246, 0
        %v1314 = vsel %vm436, %v1247, 0
        %v1317 = vsel %vm436, %v1248, 0
        %v1320 = vsel %vm436, %v1249, 0
        %v1323 = vsel %vm436, %v1250, 0
        %v1326 = vsel %vm436, %v1251, 0
        %v1329 = vsel %vm436, %v1252, 0
        %v1332 = vsel %vm436, %v1253, 0
        %v1335 = vsel %vm436, %v1254, 0
        %v1338 = vsel %vm436, %v1255, 0
        %v1341 = vsel %vm436, %v1256, 0
        %v1344 = vsel %vm436, %v1257, 0
        %v1347 = vsel %vm436, %v1258, 0
        %v1350 = vsel %vm436, %v1259, 0
        %v1353 = vsel %vm436, %v1260, 0
        %v1356 = vsel %vm436, %v1261, 0
        %v1359 = vsel %vm436, %v1262, 0
        %v1362 = vsel %vm678, %v1264, 0
        %1364 = vmatprep.subr.mxu0 0.0
        %1365 = vmatpush1.msra.mxu0 %v1362
        %1366 = vmatprep.subr.mxu0 0.0
        %1367 = vmatpush1.msra.mxu0 0.0
        %1368 = vmatprep.subr.mxu0 0.0
        %1369 = vmatpush1.msra.mxu0 0.0
        %1370 = vmatprep.subr.mxu0 0.0
        %1371 = vmatpush1.msra.mxu0 0.0
        %1372 = vmatprep.subr.mxu0 0.0
        %1373 = vmatpush1.msra.mxu0 0.0
        %1374 = vmatprep.subr.mxu0 0.0
        %1375 = vmatpush1.msra.mxu0 0.0
        %1376 = vmatprep.subr.mxu0 0.0
        %1377 = vmatpush1.msra.mxu0 0.0
        %1378 = vmatprep.subr.mxu0 0.0
        %1379 = vmatpush1.msra.mxu0 0.0
        %1380 = vmatprep.subr.mxu0 0.0
        %1381 = vmatpush1.msra.mxu0 0.0
        %1382 = vmatprep.subr.mxu0 0.0
        %1383 = vmatpush1.msra.mxu0 0.0
        %1384 = vmatprep.subr.mxu0 0.0
        %1385 = vmatpush1.msra.mxu0 0.0
        %1386 = vmatprep.subr.mxu0 0.0
        %1387 = vmatpush1.msra.mxu0 0.0
        %1388 = vmatprep.subr.mxu0 0.0
        %1389 = vmatpush1.msra.mxu0 0.0
        %1390 = vmatprep.subr.mxu0 0.0
        %1391 = vmatpush1.msra.mxu0 0.0
        %1392 = vmatprep.subr.mxu0 0.0
        %1393 = vmatpush1.msra.mxu0 0.0
        %1394 = vmatprep.subr.mxu0 0.0
        %1395 = vmatpush1.msra.mxu0 0.0
        %1396 = vmatprep.subr.mxu0 0.0
        %1397 = vmatpush1.msra.mxu0 0.0
        %1398 = vmatprep.subr.mxu0 0.0
        %1399 = vmatpush1.msra.mxu0 0.0
        %1400 = vmatprep.subr.mxu0 0.0
        %1401 = vmatpush1.msra.mxu0 0.0
        %1402 = vmatprep.subr.mxu0 0.0
        %1403 = vmatpush1.msra.mxu0 0.0
        %1404 = vmatprep.subr.mxu0 0.0
        %1405 = vmatpush1.msra.mxu0 0.0
        %1406 = vmatprep.subr.mxu0 0.0
        %1407 = vmatpush1.msra.mxu0 0.0
        %1408 = vmatprep.subr.mxu0 0.0
        %1409 = vmatpush1.msra.mxu0 0.0
        %1410 = vmatprep.subr.mxu0 0.0
        %1411 = vmatpush1.msra.mxu0 0.0
        %1412 = vmatprep.subr.mxu0 0.0
        %1413 = vmatpush1.msra.mxu0 0.0
        %1414 = vmatprep.subr.mxu0 0.0
        %1415 = vmatpush1.msra.mxu0 0.0
        %1416 = vmatprep.subr.mxu0 0.0
        %1417 = vmatpush1.msra.mxu0 0.0
        %1418 = vmatprep.subr.mxu0 0.0
        %1419 = vmatpush1.msra.mxu0 0.0
        %1420 = vmatprep.subr.mxu0 0.0
        %1421 = vmatpush1.msra.mxu0 0.0
        %1422 = vmatprep.subr.mxu0 0.0
        %1423 = vmatpush1.msra.mxu0 0.0
        %1424 = vmatprep.subr.mxu0 0.0
        %1425 = vmatpush1.msra.mxu0 0.0
        %1426 = vmatprep.subr.mxu0 0.0
        %1427 = vmatpush1.msra.mxu0 0.0
        %1428 = vmatprep.mubr.f32.mxu0 0.0
        %1429 = vmatmul.mubr.f32.gmra.mrb[0].mxu0 %v1266
        %v1430 = vpop.f32.mrb[0].mxu0
        %v1431 = vadd.f32 0.0, %v1430
        %v1432 = vpop.f32.mrb[0].mxu0
        %1433 = vmatprep.mubr.f32.mxu0 0.0
        %1434 = vmatmul.mubr.f32.gmra.mrb[0].mxu0 %v1269
        %v1435 = vpop.f32.mrb[0].mxu0
        %v1436 = vadd.f32 0.0, %v1435
        %v1437 = vpop.f32.mrb[0].mxu0
        %1438 = vmatprep.mubr.f32.mxu0 0.0
        %1439 = vmatmul.mubr.f32.gmra.mrb[0].mxu0 %v1272
        %v1440 = vpop.f32.mrb[0].mxu0
        %v1441 = vadd.f32 0.0, %v1440
        %v1442 = vpop.f32.mrb[0].mxu0
        %1443 = vmatprep.mubr.f32.mxu0 0.0
        %1444 = vmatmul.mubr.f32.gmra.mrb[0].mxu0 %v1275
        %v1445 = vpop.f32.mrb[0].mxu0
        %v1446 = vadd.f32 0.0, %v1445
        %v1447 = vpop.f32.mrb[0].mxu0
        %1448 = vmatprep.mubr.f32.mxu0 0.0
        %1449 = vmatmul.mubr.f32.gmra.mrb[0].mxu0 %v1278
        %v1450 = vpop.f32.mrb[0].mxu0
        %v1451 = vadd.f32 0.0, %v1450
        %v1452 = vpop.f32.mrb[0].mxu0
        %1453 = vmatprep.mubr.f32.mxu0 0.0
        %1454 = vmatmul.mubr.f32.gmra.mrb[0].mxu0 %v1281
        %v1455 = vpop.f32.mrb[0].mxu0
        %v1456 = vadd.f32 0.0, %v1455
        %v1457 = vpop.f32.mrb[0].mxu0
        %1458 = vmatprep.mubr.f32.mxu0 0.0
        %1459 = vmatmul.mubr.f32.gmra.mrb[0].mxu0 %v1284
        %v1460 = vpop.f32.mrb[0].mxu0
        %v1461 = vadd.f32 0.0, %v1460
        %v1462 = vpop.f32.mrb[0].mxu0
        %1463 = vmatprep.mubr.f32.mxu0 0.0
        %1464 = vmatmul.mubr.f32.gmra.mrb[0].mxu0 %v1287
        %v1465 = vpop.f32.mrb[0].mxu0
        %v1466 = vadd.f32 0.0, %v1465
        %v1467 = vpop.f32.mrb[0].mxu0
        %1468 = vmatprep.mubr.f32.mxu0 0.0
        %1469 = vmatmul.mubr.f32.gmra.mrb[0].mxu0 %v1290
        %v1470 = vpop.f32.mrb[0].mxu0
        %v1471 = vadd.f32 0.0, %v1470
        %v1472 = vpop.f32.mrb[0].mxu0
        %1473 = vmatprep.mubr.f32.mxu0 0.0
        %1474 = vmatmul.mubr.f32.gmra.mrb[0].mxu0 %v1293
        %v1475 = vpop.f32.mrb[0].mxu0
        %v1476 = vadd.f32 0.0, %v1475
        %v1477 = vpop.f32.mrb[0].mxu0
        %1478 = vmatprep.mubr.f32.mxu0 0.0
        %1479 = vmatmul.mubr.f32.gmra.mrb[0].mxu0 %v1296
        %v1480 = vpop.f32.mrb[0].mxu0
        %v1481 = vadd.f32 0.0, %v1480
        %v1482 = vpop.f32.mrb[0].mxu0
        %1483 = vmatprep.mubr.f32.mxu0 0.0
        %1484 = vmatmul.mubr.f32.gmra.mrb[0].mxu0 %v1299
        %v1485 = vpop.f32.mrb[0].mxu0
        %v1486 = vadd.f32 0.0, %v1485
        %v1487 = vpop.f32.mrb[0].mxu0
        %1488 = vmatprep.mubr.f32.mxu0 0.0
        %1489 = vmatmul.mubr.f32.gmra.mrb[0].mxu0 %v1302
        %v1490 = vpop.f32.mrb[0].mxu0
        %v1491 = vadd.f32 0.0, %v1490
        %v1492 = vpop.f32.mrb[0].mxu0
        %1493 = vmatprep.mubr.f32.mxu0 0.0
        %1494 = vmatmul.mubr.f32.gmra.mrb[0].mxu0 %v1305
        %v1495 = vpop.f32.mrb[0].mxu0
        %v1496 = vadd.f32 0.0, %v1495
        %v1497 = vpop.f32.mrb[0].mxu0
        %1498 = vmatprep.mubr.f32.mxu0 0.0
        %1499 = vmatmul.mubr.f32.gmra.mrb[0].mxu0 %v1308
        %v1500 = vpop.f32.mrb[0].mxu0
        %v1501 = vadd.f32 0.0, %v1500
        %v1502 = vpop.f32.mrb[0].mxu0
        %1503 = vmatprep.mubr.f32.mxu0 0.0
        %1504 = vmatmul.mubr.f32.gmra.mrb[0].mxu0 %v1311
        %v1505 = vpop.f32.mrb[0].mxu0
        %v1506 = vadd.f32 0.0, %v1505
        %v1507 = vpop.f32.mrb[0].mxu0
        %1508 = vmatprep.mubr.f32.mxu0 0.0
        %1509 = vmatmul.mubr.f32.gmra.mrb[0].mxu0 %v1314
        %v1510 = vpop.f32.mrb[0].mxu0
        %v1511 = vadd.f32 0.0, %v1510
        %v1512 = vpop.f32.mrb[0].mxu0
        %1513 = vmatprep.mubr.f32.mxu0 0.0
        %1514 = vmatmul.mubr.f32.gmra.mrb[0].mxu0 %v1317
        %v1515 = vpop.f32.mrb[0].mxu0
        %v1516 = vadd.f32 0.0, %v1515
        %v1517 = vpop.f32.mrb[0].mxu0
        %1518 = vmatprep.mubr.f32.mxu0 0.0
        %1519 = vmatmul.mubr.f32.gmra.mrb[0].mxu0 %v1320
        %v1520 = vpop.f32.mrb[0].mxu0
        %v1521 = vadd.f32 0.0, %v1520
        %v1522 = vpop.f32.mrb[0].mxu0
        %1523 = vmatprep.mubr.f32.mxu0 0.0
        %1524 = vmatmul.mubr.f32.gmra.mrb[0].mxu0 %v1323
        %v1525 = vpop.f32.mrb[0].mxu0
        %v1526 = vadd.f32 0.0, %v1525
        %v1527 = vpop.f32.mrb[0].mxu0
        %1528 = vmatprep.mubr.f32.mxu0 0.0
        %1529 = vmatmul.mubr.f32.gmra.mrb[0].mxu0 %v1326
        %v1530 = vpop.f32.mrb[0].mxu0
        %v1531 = vadd.f32 0.0, %v1530
        %v1532 = vpop.f32.mrb[0].mxu0
        %1533 = vmatprep.mubr.f32.mxu0 0.0
        %1534 = vmatmul.mubr.f32.gmra.mrb[0].mxu0 %v1329
        %v1535 = vpop.f32.mrb[0].mxu0
        %v1536 = vadd.f32 0.0, %v1535
        %v1537 = vpop.f32.mrb[0].mxu0
        %1538 = vmatprep.mubr.f32.mxu0 0.0
        %1539 = vmatmul.mubr.f32.gmra.mrb[0].mxu0 %v1332
        %v1540 = vpop.f32.mrb[0].mxu0
        %v1541 = vadd.f32 0.0, %v1540
        %v1542 = vpop.f32.mrb[0].mxu0
        %1543 = vmatprep.mubr.f32.mxu0 0.0
        %1544 = vmatmul.mubr.f32.gmra.mrb[0].mxu0 %v1335
        %v1545 = vpop.f32.mrb[0].mxu0
        %v1546 = vadd.f32 0.0, %v1545
        %v1547 = vpop.f32.mrb[0].mxu0
        %1548 = vmatprep.mubr.f32.mxu0 0.0
        %1549 = vmatmul.mubr.f32.gmra.mrb[0].mxu0 %v1338
        %v1550 = vpop.f32.mrb[0].mxu0
        %v1551 = vadd.f32 0.0, %v1550
        %v1552 = vpop.f32.mrb[0].mxu0
        %1553 = vmatprep.mubr.f32.mxu0 0.0
        %1554 = vmatmul.mubr.f32.gmra.mrb[0].mxu0 %v1341
        %v1555 = vpop.f32.mrb[0].mxu0
        %v1556 = vadd.f32 0.0, %v1555
        %v1557 = vpop.f32.mrb[0].mxu0
        %1558 = vmatprep.mubr.f32.mxu0 0.0
        %1559 = vmatmul.mubr.f32.gmra.mrb[0].mxu0 %v1344
        %v1560 = vpop.f32.mrb[0].mxu0
        %v1561 = vadd.f32 0.0, %v1560
        %v1562 = vpop.f32.mrb[0].mxu0
        %1563 = vmatprep.mubr.f32.mxu0 0.0
        %1564 = vmatmul.mubr.f32.gmra.mrb[0].mxu0 %v1347
        %v1565 = vpop.f32.mrb[0].mxu0
        %v1566 = vadd.f32 0.0, %v1565
        %v1567 = vpop.f32.mrb[0].mxu0
        %1568 = vmatprep.mubr.f32.mxu0 0.0
        %1569 = vmatmul.mubr.f32.gmra.mrb[0].mxu0 %v1350
        %v1570 = vpop.f32.mrb[0].mxu0
        %v1571 = vadd.f32 0.0, %v1570
        %v1572 = vpop.f32.mrb[0].mxu0
        %1573 = vmatprep.mubr.f32.mxu0 0.0
        %1574 = vmatmul.mubr.f32.gmra.mrb[0].mxu0 %v1353
        %v1575 = vpop.f32.mrb[0].mxu0
        %v1576 = vadd.f32 0.0, %v1575
        %v1577 = vpop.f32.mrb[0].mxu0
        %1578 = vmatprep.mubr.f32.mxu0 0.0
        %1579 = vmatmul.mubr.f32.gmra.mrb[0].mxu0 %v1356
        %v1580 = vpop.f32.mrb[0].mxu0
        %v1581 = vadd.f32 0.0, %v1580
        %v1582 = vpop.f32.mrb[0].mxu0
        %1583 = vmatprep.mubr.f32.mxu0 0.0
        %1584 = vmatmul.mubr.f32.gmra.mrb[0].mxu0 %v1359
        %v1585 = vpop.f32.mrb[0].mxu0
        %v1586 = vadd.f32 0.0, %v1585
        %v1587 = vpop.f32.mrb[0].mxu0
        %1588 = vdwg.mxu0
        %v1589 = vadd.f32 %v1073, %v1431
        %v1590 = vadd.f32 %v1078, %v1436
        %v1591 = vadd.f32 %v1083, %v1441
        %v1592 = vadd.f32 %v1088, %v1446
        %v1593 = vadd.f32 %v1093, %v1451
        %v1594 = vadd.f32 %v1098, %v1456
        %v1595 = vadd.f32 %v1103, %v1461
        %v1596 = vadd.f32 %v1108, %v1466
        %v1597 = vadd.f32 %v1113, %v1471
        %v1598 = vadd.f32 %v1118, %v1476
        %v1599 = vadd.f32 %v1123, %v1481
        %v1600 = vadd.f32 %v1128, %v1486
        %v1601 = vadd.f32 %v1133, %v1491
        %v1602 = vadd.f32 %v1138, %v1496
        %v1603 = vadd.f32 %v1143, %v1501
        %v1604 = vadd.f32 %v1148, %v1506
        %v1605 = vadd.f32 %v1153, %v1511
        %v1606 = vadd.f32 %v1158, %v1516
        %v1607 = vadd.f32 %v1163, %v1521
        %v1608 = vadd.f32 %v1168, %v1526
        %v1609 = vadd.f32 %v1173, %v1531
        %v1610 = vadd.f32 %v1178, %v1536
        %v1611 = vadd.f32 %v1183, %v1541
        %v1612 = vadd.f32 %v1188, %v1546
        %v1613 = vadd.f32 %v1193, %v1551
        %v1614 = vadd.f32 %v1198, %v1556
        %v1615 = vadd.f32 %v1203, %v1561
        %v1616 = vadd.f32 %v1208, %v1566
        %v1617 = vadd.f32 %v1213, %v1571
        %v1618 = vadd.f32 %v1218, %v1576
        %v1619 = vadd.f32 %v1223, %v1581
        %v1620 = vadd.f32 %v1228, %v1586
        %v1621 = vld [vmem:[%s482] sm:$0xff]
        %v1622 = vld [vmem:[%s482 + $0x8] sm:$0xff]
        %v1623 = vld [vmem:[%s482 + $0x18] sm:$0xff]
        %v1624 = vld [vmem:[%s482 + $0x20] sm:$0xff]
        %v1625 = vld [vmem:[%s482 + $0x30] sm:$0xff]
        %v1626 = vld [vmem:[%s482 + $0x38] sm:$0xff]
        %v1627 = vld [vmem:[%s482 + $0x48] sm:$0xff]
        %v1628 = vld [vmem:[%s482 + $0x50] sm:$0xff]
        %v1629 = vld [vmem:[%s482 + $0x60] sm:$0xff]
        %v1630 = vld [vmem:[%s482 + $0x68] sm:$0xff]
        %v1631 = vld [vmem:[%s482 + $0x78] sm:$0xff]
        %v1632 = vld [vmem:[%s482 + $0x80] sm:$0xff]
        %v1633 = vld [vmem:[%s482 + $0x90] sm:$0xff]
        %v1634 = vld [vmem:[%s482 + $0x98] sm:$0xff]
        %v1635 = vld [vmem:[%s482 + $0xa8] sm:$0xff]
        %v1636 = vld [vmem:[%s482 + $0xb0] sm:$0xff]
        %v1637 = vld [vmem:[%s482 + $0xc0] sm:$0xff]
        %v1638 = vld [vmem:[%s482 + $0xc8] sm:$0xff]
        %v1639 = vld [vmem:[%s482 + $0xd8] sm:$0xff]
        %v1640 = vld [vmem:[%s482 + $0xe0] sm:$0xff]
        %v1641 = vld [vmem:[%s482 + $0xf0] sm:$0xff]
        %v1642 = vld [vmem:[%s482 + $0xf8] sm:$0xff]
        %v1643 = vld [vmem:[%s482 + $0x108] sm:$0xff]
        %v1644 = vld [vmem:[%s482 + $0x110] sm:$0xff]
        %v1645 = vld [vmem:[%s482 + $0x120] sm:$0xff]
        %v1646 = vld [vmem:[%s482 + $0x128] sm:$0xff]
        %v1647 = vld [vmem:[%s482 + $0x138] sm:$0xff]
        %v1648 = vld [vmem:[%s482 + $0x140] sm:$0xff]
        %v1649 = vld [vmem:[%s482 + $0x150] sm:$0xff]
        %v1650 = vld [vmem:[%s482 + $0x158] sm:$0xff]
        %v1651 = vld [vmem:[%s482 + $0x168] sm:$0xff]
        %v1652 = vld [vmem:[%s482 + $0x170] sm:$0xff]
        %s1653 = scalar_lea.vmem [#allocation6], 12
        %v1654 = vld [vmem:[%s1653] sm:$0xf]
        %v1656 = vsel %vm436, %v1621, 0
        %v1659 = vsel %vm436, %v1622, 0
        %v1662 = vsel %vm436, %v1623, 0
        %v1665 = vsel %vm436, %v1624, 0
        %v1668 = vsel %vm436, %v1625, 0
        %v1671 = vsel %vm436, %v1626, 0
        %v1674 = vsel %vm436, %v1627, 0
        %v1677 = vsel %vm436, %v1628, 0
        %v1680 = vsel %vm436, %v1629, 0
        %v1683 = vsel %vm436, %v1630, 0
        %v1686 = vsel %vm436, %v1631, 0
        %v1689 = vsel %vm436, %v1632, 0
        %v1692 = vsel %vm436, %v1633, 0
        %v1695 = vsel %vm436, %v1634, 0
        %v1698 = vsel %vm436, %v1635, 0
        %v1701 = vsel %vm436, %v1636, 0
        %v1704 = vsel %vm436, %v1637, 0
        %v1707 = vsel %vm436, %v1638, 0
        %v1710 = vsel %vm436, %v1639, 0
        %v1713 = vsel %vm436, %v1640, 0
        %v1716 = vsel %vm436, %v1641, 0
        %v1719 = vsel %vm436, %v1642, 0
        %v1722 = vsel %vm436, %v1643, 0
        %v1725 = vsel %vm436, %v1644, 0
        %v1728 = vsel %vm436, %v1645, 0
        %v1731 = vsel %vm436, %v1646, 0
        %v1734 = vsel %vm436, %v1647, 0
        %v1737 = vsel %vm436, %v1648, 0
        %v1740 = vsel %vm436, %v1649, 0
        %v1743 = vsel %vm436, %v1650, 0
        %v1746 = vsel %vm436, %v1651, 0
        %v1749 = vsel %vm436, %v1652, 0
        %v1752 = vsel %vm678, %v1654, 0
        %1754 = vmatprep.subr.mxu0 0.0
        %1755 = vmatpush1.msra.mxu0 %v1752
        %1756 = vmatprep.subr.mxu0 0.0
        %1757 = vmatpush1.msra.mxu0 0.0
        %1758 = vmatprep.subr.mxu0 0.0
        %1759 = vmatpush1.msra.mxu0 0.0
        %1760 = vmatprep.subr.mxu0 0.0
        %1761 = vmatpush1.msra.mxu0 0.0
        %1762 = vmatprep.subr.mxu0 0.0
        %1763 = vmatpush1.msra.mxu0 0.0
        %1764 = vmatprep.subr.mxu0 0.0
        %1765 = vmatpush1.msra.mxu0 0.0
        %1766 = vmatprep.subr.mxu0 0.0
        %1767 = vmatpush1.msra.mxu0 0.0
        %1768 = vmatprep.subr.mxu0 0.0
        %1769 = vmatpush1.msra.mxu0 0.0
        %1770 = vmatprep.subr.mxu0 0.0
        %1771 = vmatpush1.msra.mxu0 0.0
        %1772 = vmatprep.subr.mxu0 0.0
        %1773 = vmatpush1.msra.mxu0 0.0
        %1774 = vmatprep.subr.mxu0 0.0
        %1775 = vmatpush1.msra.mxu0 0.0
        %1776 = vmatprep.subr.mxu0 0.0
        %1777 = vmatpush1.msra.mxu0 0.0
        %1778 = vmatprep.subr.mxu0 0.0
        %1779 = vmatpush1.msra.mxu0 0.0
        %1780 = vmatprep.subr.mxu0 0.0
        %1781 = vmatpush1.msra.mxu0 0.0
        %1782 = vmatprep.subr.mxu0 0.0
        %1783 = vmatpush1.msra.mxu0 0.0
        %1784 = vmatprep.subr.mxu0 0.0
        %1785 = vmatpush1.msra.mxu0 0.0
        %1786 = vmatprep.subr.mxu0 0.0
        %1787 = vmatpush1.msra.mxu0 0.0
        %1788 = vmatprep.subr.mxu0 0.0
        %1789 = vmatpush1.msra.mxu0 0.0
        %1790 = vmatprep.subr.mxu0 0.0
        %1791 = vmatpush1.msra.mxu0 0.0
        %1792 = vmatprep.subr.mxu0 0.0
        %1793 = vmatpush1.msra.mxu0 0.0
        %1794 = vmatprep.subr.mxu0 0.0
        %1795 = vmatpush1.msra.mxu0 0.0
        %1796 = vmatprep.subr.mxu0 0.0
        %1797 = vmatpush1.msra.mxu0 0.0
        %1798 = vmatprep.subr.mxu0 0.0
        %1799 = vmatpush1.msra.mxu0 0.0
        %1800 = vmatprep.subr.mxu0 0.0
        %1801 = vmatpush1.msra.mxu0 0.0
        %1802 = vmatprep.subr.mxu0 0.0
        %1803 = vmatpush1.msra.mxu0 0.0
        %1804 = vmatprep.subr.mxu0 0.0
        %1805 = vmatpush1.msra.mxu0 0.0
        %1806 = vmatprep.subr.mxu0 0.0
        %1807 = vmatpush1.msra.mxu0 0.0
        %1808 = vmatprep.subr.mxu0 0.0
        %1809 = vmatpush1.msra.mxu0 0.0
        %1810 = vmatprep.subr.mxu0 0.0
        %1811 = vmatpush1.msra.mxu0 0.0
        %1812 = vmatprep.subr.mxu0 0.0
        %1813 = vmatpush1.msra.mxu0 0.0
        %1814 = vmatprep.subr.mxu0 0.0
        %1815 = vmatpush1.msra.mxu0 0.0
        %1816 = vmatprep.subr.mxu0 0.0
        %1817 = vmatpush1.msra.mxu0 0.0
        %1818 = vmatprep.mubr.f32.mxu0 0.0
        %1819 = vmatmul.mubr.f32.gmra.mrb[0].mxu0 %v1656
        %v1820 = vpop.f32.mrb[0].mxu0
        %v1821 = vadd.f32 0.0, %v1820
        %v1822 = vpop.f32.mrb[0].mxu0
        %1823 = vmatprep.mubr.f32.mxu0 0.0
        %1824 = vmatmul.mubr.f32.gmra.mrb[0].mxu0 %v1659
        %v1825 = vpop.f32.mrb[0].mxu0
        %v1826 = vadd.f32 0.0, %v1825
        %v1827 = vpop.f32.mrb[0].mxu0
        %1828 = vmatprep.mubr.f32.mxu0 0.0
        %1829 = vmatmul.mubr.f32.gmra.mrb[0].mxu0 %v1662
        %v1830 = vpop.f32.mrb[0].mxu0
        %v1831 = vadd.f32 0.0, %v1830
        %v1832 = vpop.f32.mrb[0].mxu0
        %1833 = vmatprep.mubr.f32.mxu0 0.0
        %1834 = vmatmul.mubr.f32.gmra.mrb[0].mxu0 %v1665
        %v1835 = vpop.f32.mrb[0].mxu0
        %v1836 = vadd.f32 0.0, %v1835
        %v1837 = vpop.f32.mrb[0].mxu0
        %1838 = vmatprep.mubr.f32.mxu0 0.0
        %1839 = vmatmul.mubr.f32.gmra.mrb[0].mxu0 %v1668
        %v1840 = vpop.f32.mrb[0].mxu0
        %v1841 = vadd.f32 0.0, %v1840
        %v1842 = vpop.f32.mrb[0].mxu0
        %1843 = vmatprep.mubr.f32.mxu0 0.0
        %1844 = vmatmul.mubr.f32.gmra.mrb[0].mxu0 %v1671
        %v1845 = vpop.f32.mrb[0].mxu0
        %v1846 = vadd.f32 0.0, %v1845
        %v1847 = vpop.f32.mrb[0].mxu0
        %1848 = vmatprep.mubr.f32.mxu0 0.0
        %1849 = vmatmul.mubr.f32.gmra.mrb[0].mxu0 %v1674
        %v1850 = vpop.f32.mrb[0].mxu0
        %v1851 = vadd.f32 0.0, %v1850
        %v1852 = vpop.f32.mrb[0].mxu0
        %1853 = vmatprep.mubr.f32.mxu0 0.0
        %1854 = vmatmul.mubr.f32.gmra.mrb[0].mxu0 %v1677
        %v1855 = vpop.f32.mrb[0].mxu0
        %v1856 = vadd.f32 0.0, %v1855
        %v1857 = vpop.f32.mrb[0].mxu0
        %1858 = vmatprep.mubr.f32.mxu0 0.0
        %1859 = vmatmul.mubr.f32.gmra.mrb[0].mxu0 %v1680
        %v1860 = vpop.f32.mrb[0].mxu0
        %v1861 = vadd.f32 0.0, %v1860
        %v1862 = vpop.f32.mrb[0].mxu0
        %1863 = vmatprep.mubr.f32.mxu0 0.0
        %1864 = vmatmul.mubr.f32.gmra.mrb[0].mxu0 %v1683
        %v1865 = vpop.f32.mrb[0].mxu0
        %v1866 = vadd.f32 0.0, %v1865
        %v1867 = vpop.f32.mrb[0].mxu0
        %1868 = vmatprep.mubr.f32.mxu0 0.0
        %1869 = vmatmul.mubr.f32.gmra.mrb[0].mxu0 %v1686
        %v1870 = vpop.f32.mrb[0].mxu0
        %v1871 = vadd.f32 0.0, %v1870
        %v1872 = vpop.f32.mrb[0].mxu0
        %1873 = vmatprep.mubr.f32.mxu0 0.0
        %1874 = vmatmul.mubr.f32.gmra.mrb[0].mxu0 %v1689
        %v1875 = vpop.f32.mrb[0].mxu0
        %v1876 = vadd.f32 0.0, %v1875
        %v1877 = vpop.f32.mrb[0].mxu0
        %1878 = vmatprep.mubr.f32.mxu0 0.0
        %1879 = vmatmul.mubr.f32.gmra.mrb[0].mxu0 %v1692
        %v1880 = vpop.f32.mrb[0].mxu0
        %v1881 = vadd.f32 0.0, %v1880
        %v1882 = vpop.f32.mrb[0].mxu0
        %1883 = vmatprep.mubr.f32.mxu0 0.0
        %1884 = vmatmul.mubr.f32.gmra.mrb[0].mxu0 %v1695
        %v1885 = vpop.f32.mrb[0].mxu0
        %v1886 = vadd.f32 0.0, %v1885
        %v1887 = vpop.f32.mrb[0].mxu0
        %1888 = vmatprep.mubr.f32.mxu0 0.0
        %1889 = vmatmul.mubr.f32.gmra.mrb[0].mxu0 %v1698
        %v1890 = vpop.f32.mrb[0].mxu0
        %v1891 = vadd.f32 0.0, %v1890
        %v1892 = vpop.f32.mrb[0].mxu0
        %1893 = vmatprep.mubr.f32.mxu0 0.0
        %1894 = vmatmul.mubr.f32.gmra.mrb[0].mxu0 %v1701
        %v1895 = vpop.f32.mrb[0].mxu0
        %v1896 = vadd.f32 0.0, %v1895
        %v1897 = vpop.f32.mrb[0].mxu0
        %1898 = vmatprep.mubr.f32.mxu0 0.0
        %1899 = vmatmul.mubr.f32.gmra.mrb[0].mxu0 %v1704
        %v1900 = vpop.f32.mrb[0].mxu0
        %v1901 = vadd.f32 0.0, %v1900
        %v1902 = vpop.f32.mrb[0].mxu0
        %1903 = vmatprep.mubr.f32.mxu0 0.0
        %1904 = vmatmul.mubr.f32.gmra.mrb[0].mxu0 %v1707
        %v1905 = vpop.f32.mrb[0].mxu0
        %v1906 = vadd.f32 0.0, %v1905
        %v1907 = vpop.f32.mrb[0].mxu0
        %1908 = vmatprep.mubr.f32.mxu0 0.0
        %1909 = vmatmul.mubr.f32.gmra.mrb[0].mxu0 %v1710
        %v1910 = vpop.f32.mrb[0].mxu0
        %v1911 = vadd.f32 0.0, %v1910
        %v1912 = vpop.f32.mrb[0].mxu0
        %1913 = vmatprep.mubr.f32.mxu0 0.0
        %1914 = vmatmul.mubr.f32.gmra.mrb[0].mxu0 %v1713
        %v1915 = vpop.f32.mrb[0].mxu0
        %v1916 = vadd.f32 0.0, %v1915
        %v1917 = vpop.f32.mrb[0].mxu0
        %1918 = vmatprep.mubr.f32.mxu0 0.0
        %1919 = vmatmul.mubr.f32.gmra.mrb[0].mxu0 %v1716
        %v1920 = vpop.f32.mrb[0].mxu0
        %v1921 = vadd.f32 0.0, %v1920
        %v1922 = vpop.f32.mrb[0].mxu0
        %1923 = vmatprep.mubr.f32.mxu0 0.0
        %1924 = vmatmul.mubr.f32.gmra.mrb[0].mxu0 %v1719
        %v1925 = vpop.f32.mrb[0].mxu0
        %v1926 = vadd.f32 0.0, %v1925
        %v1927 = vpop.f32.mrb[0].mxu0
        %1928 = vmatprep.mubr.f32.mxu0 0.0
        %1929 = vmatmul.mubr.f32.gmra.mrb[0].mxu0 %v1722
        %v1930 = vpop.f32.mrb[0].mxu0
        %v1931 = vadd.f32 0.0, %v1930
        %v1932 = vpop.f32.mrb[0].mxu0
        %1933 = vmatprep.mubr.f32.mxu0 0.0
        %1934 = vmatmul.mubr.f32.gmra.mrb[0].mxu0 %v1725
        %v1935 = vpop.f32.mrb[0].mxu0
        %v1936 = vadd.f32 0.0, %v1935
        %v1937 = vpop.f32.mrb[0].mxu0
        %1938 = vmatprep.mubr.f32.mxu0 0.0
        %1939 = vmatmul.mubr.f32.gmra.mrb[0].mxu0 %v1728
        %v1940 = vpop.f32.mrb[0].mxu0
        %v1941 = vadd.f32 0.0, %v1940
        %v1942 = vpop.f32.mrb[0].mxu0
        %1943 = vmatprep.mubr.f32.mxu0 0.0
        %1944 = vmatmul.mubr.f32.gmra.mrb[0].mxu0 %v1731
        %v1945 = vpop.f32.mrb[0].mxu0
        %v1946 = vadd.f32 0.0, %v1945
        %v1947 = vpop.f32.mrb[0].mxu0
        %1948 = vmatprep.mubr.f32.mxu0 0.0
        %1949 = vmatmul.mubr.f32.gmra.mrb[0].mxu0 %v1734
        %v1950 = vpop.f32.mrb[0].mxu0
        %v1951 = vadd.f32 0.0, %v1950
        %v1952 = vpop.f32.mrb[0].mxu0
        %1953 = vmatprep.mubr.f32.mxu0 0.0
        %1954 = vmatmul.mubr.f32.gmra.mrb[0].mxu0 %v1737
        %v1955 = vpop.f32.mrb[0].mxu0
        %v1956 = vadd.f32 0.0, %v1955
        %v1957 = vpop.f32.mrb[0].mxu0
        %1958 = vmatprep.mubr.f32.mxu0 0.0
        %1959 = vmatmul.mubr.f32.gmra.mrb[0].mxu0 %v1740
        %v1960 = vpop.f32.mrb[0].mxu0
        %v1961 = vadd.f32 0.0, %v1960
        %v1962 = vpop.f32.mrb[0].mxu0
        %1963 = vmatprep.mubr.f32.mxu0 0.0
        %1964 = vmatmul.mubr.f32.gmra.mrb[0].mxu0 %v1743
        %v1965 = vpop.f32.mrb[0].mxu0
        %v1966 = vadd.f32 0.0, %v1965
        %v1967 = vpop.f32.mrb[0].mxu0
        %1968 = vmatprep.mubr.f32.mxu0 0.0
        %1969 = vmatmul.mubr.f32.gmra.mrb[0].mxu0 %v1746
        %v1970 = vpop.f32.mrb[0].mxu0
        %v1971 = vadd.f32 0.0, %v1970
        %v1972 = vpop.f32.mrb[0].mxu0
        %1973 = vmatprep.mubr.f32.mxu0 0.0
        %1974 = vmatmul.mubr.f32.gmra.mrb[0].mxu0 %v1749
        %v1975 = vpop.f32.mrb[0].mxu0
        %v1976 = vadd.f32 0.0, %v1975
        %v1977 = vpop.f32.mrb[0].mxu0
        %1978 = vdwg.mxu0
        %v1979 = vadd.f32 %v1589, %v1821
        %v1980 = vadd.f32 %v1590, %v1826
        %v1981 = vadd.f32 %v1591, %v1831
        %v1982 = vadd.f32 %v1592, %v1836
        %v1983 = vadd.f32 %v1593, %v1841
        %v1984 = vadd.f32 %v1594, %v1846
        %v1985 = vadd.f32 %v1595, %v1851
        %v1986 = vadd.f32 %v1596, %v1856
        %v1987 = vadd.f32 %v1597, %v1861
        %v1988 = vadd.f32 %v1598, %v1866
        %v1989 = vadd.f32 %v1599, %v1871
        %v1990 = vadd.f32 %v1600, %v1876
        %v1991 = vadd.f32 %v1601, %v1881
        %v1992 = vadd.f32 %v1602, %v1886
        %v1993 = vadd.f32 %v1603, %v1891
        %v1994 = vadd.f32 %v1604, %v1896
        %v1995 = vadd.f32 %v1605, %v1901
        %v1996 = vadd.f32 %v1606, %v1906
        %v1997 = vadd.f32 %v1607, %v1911
        %v1998 = vadd.f32 %v1608, %v1916
        %v1999 = vadd.f32 %v1609, %v1921
        %v2000 = vadd.f32 %v1610, %v1926
        %v2001 = vadd.f32 %v1611, %v1931
        %v2002 = vadd.f32 %v1612, %v1936
        %v2003 = vadd.f32 %v1613, %v1941
        %v2004 = vadd.f32 %v1614, %v1946
        %v2005 = vadd.f32 %v1615, %v1951
        %v2006 = vadd.f32 %v1616, %v1956
        %v2007 = vadd.f32 %v1617, %v1961
        %v2008 = vadd.f32 %v1618, %v1966
        %v2009 = vadd.f32 %v1619, %v1971
        %v2010 = vadd.f32 %v1620, %v1976
        %v2011 = vld [vmem:[%s482 + $0x1] sm:$0xff]
        %v2012 = vld [vmem:[%s482 + $0x9] sm:$0xff]
        %v2013 = vld [vmem:[%s482 + $0x19] sm:$0xff]
        %v2014 = vld [vmem:[%s482 + $0x21] sm:$0xff]
        %v2015 = vld [vmem:[%s482 + $0x31] sm:$0xff]
        %v2016 = vld [vmem:[%s482 + $0x39] sm:$0xff]
        %v2017 = vld [vmem:[%s482 + $0x49] sm:$0xff]
        %v2018 = vld [vmem:[%s482 + $0x51] sm:$0xff]
        %v2019 = vld [vmem:[%s482 + $0x61] sm:$0xff]
        %v2020 = vld [vmem:[%s482 + $0x69] sm:$0xff]
        %v2021 = vld [vmem:[%s482 + $0x79] sm:$0xff]
        %v2022 = vld [vmem:[%s482 + $0x81] sm:$0xff]
        %v2023 = vld [vmem:[%s482 + $0x91] sm:$0xff]
        %v2024 = vld [vmem:[%s482 + $0x99] sm:$0xff]
        %v2025 = vld [vmem:[%s482 + $0xa9] sm:$0xff]
        %v2026 = vld [vmem:[%s482 + $0xb1] sm:$0xff]
        %v2027 = vld [vmem:[%s482 + $0xc1] sm:$0xff]
        %v2028 = vld [vmem:[%s482 + $0xc9] sm:$0xff]
        %v2029 = vld [vmem:[%s482 + $0xd9] sm:$0xff]
        %v2030 = vld [vmem:[%s482 + $0xe1] sm:$0xff]
        %v2031 = vld [vmem:[%s482 + $0xf1] sm:$0xff]
        %v2032 = vld [vmem:[%s482 + $0xf9] sm:$0xff]
        %v2033 = vld [vmem:[%s482 + $0x109] sm:$0xff]
        %v2034 = vld [vmem:[%s482 + $0x111] sm:$0xff]
        %v2035 = vld [vmem:[%s482 + $0x121] sm:$0xff]
        %v2036 = vld [vmem:[%s482 + $0x129] sm:$0xff]
        %v2037 = vld [vmem:[%s482 + $0x139] sm:$0xff]
        %v2038 = vld [vmem:[%s482 + $0x141] sm:$0xff]
        %v2039 = vld [vmem:[%s482 + $0x151] sm:$0xff]
        %v2040 = vld [vmem:[%s482 + $0x159] sm:$0xff]
        %v2041 = vld [vmem:[%s482 + $0x169] sm:$0xff]
        %v2042 = vld [vmem:[%s482 + $0x171] sm:$0xff]
        %s2043 = scalar_lea.vmem [#allocation6], 16
        %v2044 = vld [vmem:[%s2043] sm:$0xf]
        %v2046 = vsel %vm436, %v2011, 0
        %v2049 = vsel %vm436, %v2012, 0
        %v2052 = vsel %vm436, %v2013, 0
        %v2055 = vsel %vm436, %v2014, 0
        %v2058 = vsel %vm436, %v2015, 0
        %v2061 = vsel %vm436, %v2016, 0
        %v2064 = vsel %vm436, %v2017, 0
        %v2067 = vsel %vm436, %v2018, 0
        %v2070 = vsel %vm436, %v2019, 0
        %v2073 = vsel %vm436, %v2020, 0
        %v2076 = vsel %vm436, %v2021, 0
        %v2079 = vsel %vm436, %v2022, 0
        %v2082 = vsel %vm436, %v2023, 0
        %v2085 = vsel %vm436, %v2024, 0
        %v2088 = vsel %vm436, %v2025, 0
        %v2091 = vsel %vm436, %v2026, 0
        %v2094 = vsel %vm436, %v2027, 0
        %v2097 = vsel %vm436, %v2028, 0
        %v2100 = vsel %vm436, %v2029, 0
        %v2103 = vsel %vm436, %v2030, 0
        %v2106 = vsel %vm436, %v2031, 0
        %v2109 = vsel %vm436, %v2032, 0
        %v2112 = vsel %vm436, %v2033, 0
        %v2115 = vsel %vm436, %v2034, 0
        %v2118 = vsel %vm436, %v2035, 0
        %v2121 = vsel %vm436, %v2036, 0
        %v2124 = vsel %vm436, %v2037, 0
        %v2127 = vsel %vm436, %v2038, 0
        %v2130 = vsel %vm436, %v2039, 0
        %v2133 = vsel %vm436, %v2040, 0
        %v2136 = vsel %vm436, %v2041, 0
        %v2139 = vsel %vm436, %v2042, 0
        %v2142 = vsel %vm678, %v2044, 0
        %2144 = vmatprep.subr.mxu0 0.0
        %2145 = vmatpush1.msra.mxu0 %v2142
        %2146 = vmatprep.subr.mxu0 0.0
        %2147 = vmatpush1.msra.mxu0 0.0
        %2148 = vmatprep.subr.mxu0 0.0
        %2149 = vmatpush1.msra.mxu0 0.0
        %2150 = vmatprep.subr.mxu0 0.0
        %2151 = vmatpush1.msra.mxu0 0.0
        %2152 = vmatprep.subr.mxu0 0.0
        %2153 = vmatpush1.msra.mxu0 0.0
        %2154 = vmatprep.subr.mxu0 0.0
        %2155 = vmatpush1.msra.mxu0 0.0
        %2156 = vmatprep.subr.mxu0 0.0
        %2157 = vmatpush1.msra.mxu0 0.0
        %2158 = vmatprep.subr.mxu0 0.0
        %2159 = vmatpush1.msra.mxu0 0.0
        %2160 = vmatprep.subr.mxu0 0.0
        %2161 = vmatpush1.msra.mxu0 0.0
        %2162 = vmatprep.subr.mxu0 0.0
        %2163 = vmatpush1.msra.mxu0 0.0
        %2164 = vmatprep.subr.mxu0 0.0
        %2165 = vmatpush1.msra.mxu0 0.0
        %2166 = vmatprep.subr.mxu0 0.0
        %2167 = vmatpush1.msra.mxu0 0.0
        %2168 = vmatprep.subr.mxu0 0.0
        %2169 = vmatpush1.msra.mxu0 0.0
        %2170 = vmatprep.subr.mxu0 0.0
        %2171 = vmatpush1.msra.mxu0 0.0
        %2172 = vmatprep.subr.mxu0 0.0
        %2173 = vmatpush1.msra.mxu0 0.0
        %2174 = vmatprep.subr.mxu0 0.0
        %2175 = vmatpush1.msra.mxu0 0.0
        %2176 = vmatprep.subr.mxu0 0.0
        %2177 = vmatpush1.msra.mxu0 0.0
        %2178 = vmatprep.subr.mxu0 0.0
        %2179 = vmatpush1.msra.mxu0 0.0
        %2180 = vmatprep.subr.mxu0 0.0
        %2181 = vmatpush1.msra.mxu0 0.0
        %2182 = vmatprep.subr.mxu0 0.0
        %2183 = vmatpush1.msra.mxu0 0.0
        %2184 = vmatprep.subr.mxu0 0.0
        %2185 = vmatpush1.msra.mxu0 0.0
        %2186 = vmatprep.subr.mxu0 0.0
        %2187 = vmatpush1.msra.mxu0 0.0
        %2188 = vmatprep.subr.mxu0 0.0
        %2189 = vmatpush1.msra.mxu0 0.0
        %2190 = vmatprep.subr.mxu0 0.0
        %2191 = vmatpush1.msra.mxu0 0.0
        %2192 = vmatprep.subr.mxu0 0.0
        %2193 = vmatpush1.msra.mxu0 0.0
        %2194 = vmatprep.subr.mxu0 0.0
        %2195 = vmatpush1.msra.mxu0 0.0
        %2196 = vmatprep.subr.mxu0 0.0
        %2197 = vmatpush1.msra.mxu0 0.0
        %2198 = vmatprep.subr.mxu0 0.0
        %2199 = vmatpush1.msra.mxu0 0.0
        %2200 = vmatprep.subr.mxu0 0.0
        %2201 = vmatpush1.msra.mxu0 0.0
        %2202 = vmatprep.subr.mxu0 0.0
        %2203 = vmatpush1.msra.mxu0 0.0
        %2204 = vmatprep.subr.mxu0 0.0
        %2205 = vmatpush1.msra.mxu0 0.0
        %2206 = vmatprep.subr.mxu0 0.0
        %2207 = vmatpush1.msra.mxu0 0.0
        %2208 = vmatprep.mubr.f32.mxu0 0.0
        %2209 = vmatmul.mubr.f32.gmra.mrb[0].mxu0 %v2046
        %v2210 = vpop.f32.mrb[0].mxu0
        %v2211 = vadd.f32 0.0, %v2210
        %v2212 = vpop.f32.mrb[0].mxu0
        %2213 = vmatprep.mubr.f32.mxu0 0.0
        %2214 = vmatmul.mubr.f32.gmra.mrb[0].mxu0 %v2049
        %v2215 = vpop.f32.mrb[0].mxu0
        %v2216 = vadd.f32 0.0, %v2215
        %v2217 = vpop.f32.mrb[0].mxu0
        %2218 = vmatprep.mubr.f32.mxu0 0.0
        %2219 = vmatmul.mubr.f32.gmra.mrb[0].mxu0 %v2052
        %v2220 = vpop.f32.mrb[0].mxu0
        %v2221 = vadd.f32 0.0, %v2220
        %v2222 = vpop.f32.mrb[0].mxu0
        %2223 = vmatprep.mubr.f32.mxu0 0.0
        %2224 = vmatmul.mubr.f32.gmra.mrb[0].mxu0 %v2055
        %v2225 = vpop.f32.mrb[0].mxu0
        %v2226 = vadd.f32 0.0, %v2225
        %v2227 = vpop.f32.mrb[0].mxu0
        %2228 = vmatprep.mubr.f32.mxu0 0.0
        %2229 = vmatmul.mubr.f32.gmra.mrb[0].mxu0 %v2058
        %v2230 = vpop.f32.mrb[0].mxu0
        %v2231 = vadd.f32 0.0, %v2230
        %v2232 = vpop.f32.mrb[0].mxu0
        %2233 = vmatprep.mubr.f32.mxu0 0.0
        %2234 = vmatmul.mubr.f32.gmra.mrb[0].mxu0 %v2061
        %v2235 = vpop.f32.mrb[0].mxu0
        %v2236 = vadd.f32 0.0, %v2235
        %v2237 = vpop.f32.mrb[0].mxu0
        %2238 = vmatprep.mubr.f32.mxu0 0.0
        %2239 = vmatmul.mubr.f32.gmra.mrb[0].mxu0 %v2064
        %v2240 = vpop.f32.mrb[0].mxu0
        %v2241 = vadd.f32 0.0, %v2240
        %v2242 = vpop.f32.mrb[0].mxu0
        %2243 = vmatprep.mubr.f32.mxu0 0.0
        %2244 = vmatmul.mubr.f32.gmra.mrb[0].mxu0 %v2067
        %v2245 = vpop.f32.mrb[0].mxu0
        %v2246 = vadd.f32 0.0, %v2245
        %v2247 = vpop.f32.mrb[0].mxu0
        %2248 = vmatprep.mubr.f32.mxu0 0.0
        %2249 = vmatmul.mubr.f32.gmra.mrb[0].mxu0 %v2070
        %v2250 = vpop.f32.mrb[0].mxu0
        %v2251 = vadd.f32 0.0, %v2250
        %v2252 = vpop.f32.mrb[0].mxu0
        %2253 = vmatprep.mubr.f32.mxu0 0.0
        %2254 = vmatmul.mubr.f32.gmra.mrb[0].mxu0 %v2073
        %v2255 = vpop.f32.mrb[0].mxu0
        %v2256 = vadd.f32 0.0, %v2255
        %v2257 = vpop.f32.mrb[0].mxu0
        %2258 = vmatprep.mubr.f32.mxu0 0.0
        %2259 = vmatmul.mubr.f32.gmra.mrb[0].mxu0 %v2076
        %v2260 = vpop.f32.mrb[0].mxu0
        %v2261 = vadd.f32 0.0, %v2260
        %v2262 = vpop.f32.mrb[0].mxu0
        %2263 = vmatprep.mubr.f32.mxu0 0.0
        %2264 = vmatmul.mubr.f32.gmra.mrb[0].mxu0 %v2079
        %v2265 = vpop.f32.mrb[0].mxu0
        %v2266 = vadd.f32 0.0, %v2265
        %v2267 = vpop.f32.mrb[0].mxu0
        %2268 = vmatprep.mubr.f32.mxu0 0.0
        %2269 = vmatmul.mubr.f32.gmra.mrb[0].mxu0 %v2082
        %v2270 = vpop.f32.mrb[0].mxu0
        %v2271 = vadd.f32 0.0, %v2270
        %v2272 = vpop.f32.mrb[0].mxu0
        %2273 = vmatprep.mubr.f32.mxu0 0.0
        %2274 = vmatmul.mubr.f32.gmra.mrb[0].mxu0 %v2085
        %v2275 = vpop.f32.mrb[0].mxu0
        %v2276 = vadd.f32 0.0, %v2275
        %v2277 = vpop.f32.mrb[0].mxu0
        %2278 = vmatprep.mubr.f32.mxu0 0.0
        %2279 = vmatmul.mubr.f32.gmra.mrb[0].mxu0 %v2088
        %v2280 = vpop.f32.mrb[0].mxu0
        %v2281 = vadd.f32 0.0, %v2280
        %v2282 = vpop.f32.mrb[0].mxu0
        %2283 = vmatprep.mubr.f32.mxu0 0.0
        %2284 = vmatmul.mubr.f32.gmra.mrb[0].mxu0 %v2091
        %v2285 = vpop.f32.mrb[0].mxu0
        %v2286 = vadd.f32 0.0, %v2285
        %v2287 = vpop.f32.mrb[0].mxu0
        %2288 = vmatprep.mubr.f32.mxu0 0.0
        %2289 = vmatmul.mubr.f32.gmra.mrb[0].mxu0 %v2094
        %v2290 = vpop.f32.mrb[0].mxu0
        %v2291 = vadd.f32 0.0, %v2290
        %v2292 = vpop.f32.mrb[0].mxu0
        %2293 = vmatprep.mubr.f32.mxu0 0.0
        %2294 = vmatmul.mubr.f32.gmra.mrb[0].mxu0 %v2097
        %v2295 = vpop.f32.mrb[0].mxu0
        %v2296 = vadd.f32 0.0, %v2295
        %v2297 = vpop.f32.mrb[0].mxu0
        %2298 = vmatprep.mubr.f32.mxu0 0.0
        %2299 = vmatmul.mubr.f32.gmra.mrb[0].mxu0 %v2100
        %v2300 = vpop.f32.mrb[0].mxu0
        %v2301 = vadd.f32 0.0, %v2300
        %v2302 = vpop.f32.mrb[0].mxu0
        %2303 = vmatprep.mubr.f32.mxu0 0.0
        %2304 = vmatmul.mubr.f32.gmra.mrb[0].mxu0 %v2103
        %v2305 = vpop.f32.mrb[0].mxu0
        %v2306 = vadd.f32 0.0, %v2305
        %v2307 = vpop.f32.mrb[0].mxu0
        %2308 = vmatprep.mubr.f32.mxu0 0.0
        %2309 = vmatmul.mubr.f32.gmra.mrb[0].mxu0 %v2106
        %v2310 = vpop.f32.mrb[0].mxu0
        %v2311 = vadd.f32 0.0, %v2310
        %v2312 = vpop.f32.mrb[0].mxu0
        %2313 = vmatprep.mubr.f32.mxu0 0.0
        %2314 = vmatmul.mubr.f32.gmra.mrb[0].mxu0 %v2109
        %v2315 = vpop.f32.mrb[0].mxu0
        %v2316 = vadd.f32 0.0, %v2315
        %v2317 = vpop.f32.mrb[0].mxu0
        %2318 = vmatprep.mubr.f32.mxu0 0.0
        %2319 = vmatmul.mubr.f32.gmra.mrb[0].mxu0 %v2112
        %v2320 = vpop.f32.mrb[0].mxu0
        %v2321 = vadd.f32 0.0, %v2320
        %v2322 = vpop.f32.mrb[0].mxu0
        %2323 = vmatprep.mubr.f32.mxu0 0.0
        %2324 = vmatmul.mubr.f32.gmra.mrb[0].mxu0 %v2115
        %v2325 = vpop.f32.mrb[0].mxu0
        %v2326 = vadd.f32 0.0, %v2325
        %v2327 = vpop.f32.mrb[0].mxu0
        %2328 = vmatprep.mubr.f32.mxu0 0.0
        %2329 = vmatmul.mubr.f32.gmra.mrb[0].mxu0 %v2118
        %v2330 = vpop.f32.mrb[0].mxu0
        %v2331 = vadd.f32 0.0, %v2330
        %v2332 = vpop.f32.mrb[0].mxu0
        %2333 = vmatprep.mubr.f32.mxu0 0.0
        %2334 = vmatmul.mubr.f32.gmra.mrb[0].mxu0 %v2121
        %v2335 = vpop.f32.mrb[0].mxu0
        %v2336 = vadd.f32 0.0, %v2335
        %v2337 = vpop.f32.mrb[0].mxu0
        %2338 = vmatprep.mubr.f32.mxu0 0.0
        %2339 = vmatmul.mubr.f32.gmra.mrb[0].mxu0 %v2124
        %v2340 = vpop.f32.mrb[0].mxu0
        %v2341 = vadd.f32 0.0, %v2340
        %v2342 = vpop.f32.mrb[0].mxu0
        %2343 = vmatprep.mubr.f32.mxu0 0.0
        %2344 = vmatmul.mubr.f32.gmra.mrb[0].mxu0 %v2127
        %v2345 = vpop.f32.mrb[0].mxu0
        %v2346 = vadd.f32 0.0, %v2345
        %v2347 = vpop.f32.mrb[0].mxu0
        %2348 = vmatprep.mubr.f32.mxu0 0.0
        %2349 = vmatmul.mubr.f32.gmra.mrb[0].mxu0 %v2130
        %v2350 = vpop.f32.mrb[0].mxu0
        %v2351 = vadd.f32 0.0, %v2350
        %v2352 = vpop.f32.mrb[0].mxu0
        %2353 = vmatprep.mubr.f32.mxu0 0.0
        %2354 = vmatmul.mubr.f32.gmra.mrb[0].mxu0 %v2133
        %v2355 = vpop.f32.mrb[0].mxu0
        %v2356 = vadd.f32 0.0, %v2355
        %v2357 = vpop.f32.mrb[0].mxu0
        %2358 = vmatprep.mubr.f32.mxu0 0.0
        %2359 = vmatmul.mubr.f32.gmra.mrb[0].mxu0 %v2136
        %v2360 = vpop.f32.mrb[0].mxu0
        %v2361 = vadd.f32 0.0, %v2360
        %v2362 = vpop.f32.mrb[0].mxu0
        %2363 = vmatprep.mubr.f32.mxu0 0.0
        %2364 = vmatmul.mubr.f32.gmra.mrb[0].mxu0 %v2139
        %v2365 = vpop.f32.mrb[0].mxu0
        %v2366 = vadd.f32 0.0, %v2365
        %v2367 = vpop.f32.mrb[0].mxu0
        %2368 = vdwg.mxu0
        %v2369 = vadd.f32 %v1979, %v2211
        %v2370 = vadd.f32 %v1980, %v2216
        %v2371 = vadd.f32 %v1981, %v2221
        %v2372 = vadd.f32 %v1982, %v2226
        %v2373 = vadd.f32 %v1983, %v2231
        %v2374 = vadd.f32 %v1984, %v2236
        %v2375 = vadd.f32 %v1985, %v2241
        %v2376 = vadd.f32 %v1986, %v2246
        %v2377 = vadd.f32 %v1987, %v2251
        %v2378 = vadd.f32 %v1988, %v2256
        %v2379 = vadd.f32 %v1989, %v2261
        %v2380 = vadd.f32 %v1990, %v2266
        %v2381 = vadd.f32 %v1991, %v2271
        %v2382 = vadd.f32 %v1992, %v2276
        %v2383 = vadd.f32 %v1993, %v2281
        %v2384 = vadd.f32 %v1994, %v2286
        %v2385 = vadd.f32 %v1995, %v2291
        %v2386 = vadd.f32 %v1996, %v2296
        %v2387 = vadd.f32 %v1997, %v2301
        %v2388 = vadd.f32 %v1998, %v2306
        %v2389 = vadd.f32 %v1999, %v2311
        %v2390 = vadd.f32 %v2000, %v2316
        %v2391 = vadd.f32 %v2001, %v2321
        %v2392 = vadd.f32 %v2002, %v2326
        %v2393 = vadd.f32 %v2003, %v2331
        %v2394 = vadd.f32 %v2004, %v2336
        %v2395 = vadd.f32 %v2005, %v2341
        %v2396 = vadd.f32 %v2006, %v2346
        %v2397 = vadd.f32 %v2007, %v2351
        %v2398 = vadd.f32 %v2008, %v2356
        %v2399 = vadd.f32 %v2009, %v2361
        %v2400 = vadd.f32 %v2010, %v2366
        %v2401 = vld [vmem:[%s482 + $0x2] sm:$0xff]
        %v2402 = vld [vmem:[%s482 + $0xa] sm:$0xff]
        %v2403 = vld [vmem:[%s482 + $0x1a] sm:$0xff]
        %v2404 = vld [vmem:[%s482 + $0x22] sm:$0xff]
        %v2405 = vld [vmem:[%s482 + $0x32] sm:$0xff]
        %v2406 = vld [vmem:[%s482 + $0x3a] sm:$0xff]
        %v2407 = vld [vmem:[%s482 + $0x4a] sm:$0xff]
        %v2408 = vld [vmem:[%s482 + $0x52] sm:$0xff]
        %v2409 = vld [vmem:[%s482 + $0x62] sm:$0xff]
        %v2410 = vld [vmem:[%s482 + $0x6a] sm:$0xff]
        %v2411 = vld [vmem:[%s482 + $0x7a] sm:$0xff]
        %v2412 = vld [vmem:[%s482 + $0x82] sm:$0xff]
        %v2413 = vld [vmem:[%s482 + $0x92] sm:$0xff]
        %v2414 = vld [vmem:[%s482 + $0x9a] sm:$0xff]
        %v2415 = vld [vmem:[%s482 + $0xaa] sm:$0xff]
        %v2416 = vld [vmem:[%s482 + $0xb2] sm:$0xff]
        %v2417 = vld [vmem:[%s482 + $0xc2] sm:$0xff]
        %v2418 = vld [vmem:[%s482 + $0xca] sm:$0xff]
        %v2419 = vld [vmem:[%s482 + $0xda] sm:$0xff]
        %v2420 = vld [vmem:[%s482 + $0xe2] sm:$0xff]
        %v2421 = vld [vmem:[%s482 + $0xf2] sm:$0xff]
        %v2422 = vld [vmem:[%s482 + $0xfa] sm:$0xff]
        %v2423 = vld [vmem:[%s482 + $0x10a] sm:$0xff]
        %v2424 = vld [vmem:[%s482 + $0x112] sm:$0xff]
        %v2425 = vld [vmem:[%s482 + $0x122] sm:$0xff]
        %v2426 = vld [vmem:[%s482 + $0x12a] sm:$0xff]
        %v2427 = vld [vmem:[%s482 + $0x13a] sm:$0xff]
        %v2428 = vld [vmem:[%s482 + $0x142] sm:$0xff]
        %v2429 = vld [vmem:[%s482 + $0x152] sm:$0xff]
        %v2430 = vld [vmem:[%s482 + $0x15a] sm:$0xff]
        %v2431 = vld [vmem:[%s482 + $0x16a] sm:$0xff]
        %v2432 = vld [vmem:[%s482 + $0x172] sm:$0xff]
        %s2433 = scalar_lea.vmem [#allocation6], 20
        %v2434 = vld [vmem:[%s2433] sm:$0xf]
        %v2436 = vsel %vm436, %v2401, 0
        %v2439 = vsel %vm436, %v2402, 0
        %v2442 = vsel %vm436, %v2403, 0
        %v2445 = vsel %vm436, %v2404, 0
        %v2448 = vsel %vm436, %v2405, 0
        %v2451 = vsel %vm436, %v2406, 0
        %v2454 = vsel %vm436, %v2407, 0
        %v2457 = vsel %vm436, %v2408, 0
        %v2460 = vsel %vm436, %v2409, 0
        %v2463 = vsel %vm436, %v2410, 0
        %v2466 = vsel %vm436, %v2411, 0
        %v2469 = vsel %vm436, %v2412, 0
        %v2472 = vsel %vm436, %v2413, 0
        %v2475 = vsel %vm436, %v2414, 0
        %v2478 = vsel %vm436, %v2415, 0
        %v2481 = vsel %vm436, %v2416, 0
        %v2484 = vsel %vm436, %v2417, 0
        %v2487 = vsel %vm436, %v2418, 0
        %v2490 = vsel %vm436, %v2419, 0
        %v2493 = vsel %vm436, %v2420, 0
        %v2496 = vsel %vm436, %v2421, 0
        %v2499 = vsel %vm436, %v2422, 0
        %v2502 = vsel %vm436, %v2423, 0
        %v2505 = vsel %vm436, %v2424, 0
        %v2508 = vsel %vm436, %v2425, 0
        %v2511 = vsel %vm436, %v2426, 0
        %v2514 = vsel %vm436, %v2427, 0
        %v2517 = vsel %vm436, %v2428, 0
        %v2520 = vsel %vm436, %v2429, 0
        %v2523 = vsel %vm436, %v2430, 0
        %v2526 = vsel %vm436, %v2431, 0
        %v2529 = vsel %vm436, %v2432, 0
        %v2532 = vsel %vm678, %v2434, 0
        %2534 = vmatprep.subr.mxu0 0.0
        %2535 = vmatpush1.msra.mxu0 %v2532
        %2536 = vmatprep.subr.mxu0 0.0
        %2537 = vmatpush1.msra.mxu0 0.0
        %2538 = vmatprep.subr.mxu0 0.0
        %2539 = vmatpush1.msra.mxu0 0.0
        %2540 = vmatprep.subr.mxu0 0.0
        %2541 = vmatpush1.msra.mxu0 0.0
        %2542 = vmatprep.subr.mxu0 0.0
        %2543 = vmatpush1.msra.mxu0 0.0
        %2544 = vmatprep.subr.mxu0 0.0
        %2545 = vmatpush1.msra.mxu0 0.0
        %2546 = vmatprep.subr.mxu0 0.0
        %2547 = vmatpush1.msra.mxu0 0.0
        %2548 = vmatprep.subr.mxu0 0.0
        %2549 = vmatpush1.msra.mxu0 0.0
        %2550 = vmatprep.subr.mxu0 0.0
        %2551 = vmatpush1.msra.mxu0 0.0
        %2552 = vmatprep.subr.mxu0 0.0
        %2553 = vmatpush1.msra.mxu0 0.0
        %2554 = vmatprep.subr.mxu0 0.0
        %2555 = vmatpush1.msra.mxu0 0.0
        %2556 = vmatprep.subr.mxu0 0.0
        %2557 = vmatpush1.msra.mxu0 0.0
        %2558 = vmatprep.subr.mxu0 0.0
        %2559 = vmatpush1.msra.mxu0 0.0
        %2560 = vmatprep.subr.mxu0 0.0
        %2561 = vmatpush1.msra.mxu0 0.0
        %2562 = vmatprep.subr.mxu0 0.0
        %2563 = vmatpush1.msra.mxu0 0.0
        %2564 = vmatprep.subr.mxu0 0.0
        %2565 = vmatpush1.msra.mxu0 0.0
        %2566 = vmatprep.subr.mxu0 0.0
        %2567 = vmatpush1.msra.mxu0 0.0
        %2568 = vmatprep.subr.mxu0 0.0
        %2569 = vmatpush1.msra.mxu0 0.0
        %2570 = vmatprep.subr.mxu0 0.0
        %2571 = vmatpush1.msra.mxu0 0.0
        %2572 = vmatprep.subr.mxu0 0.0
        %2573 = vmatpush1.msra.mxu0 0.0
        %2574 = vmatprep.subr.mxu0 0.0
        %2575 = vmatpush1.msra.mxu0 0.0
        %2576 = vmatprep.subr.mxu0 0.0
        %2577 = vmatpush1.msra.mxu0 0.0
        %2578 = vmatprep.subr.mxu0 0.0
        %2579 = vmatpush1.msra.mxu0 0.0
        %2580 = vmatprep.subr.mxu0 0.0
        %2581 = vmatpush1.msra.mxu0 0.0
        %2582 = vmatprep.subr.mxu0 0.0
        %2583 = vmatpush1.msra.mxu0 0.0
        %2584 = vmatprep.subr.mxu0 0.0
        %2585 = vmatpush1.msra.mxu0 0.0
        %2586 = vmatprep.subr.mxu0 0.0
        %2587 = vmatpush1.msra.mxu0 0.0
        %2588 = vmatprep.subr.mxu0 0.0
        %2589 = vmatpush1.msra.mxu0 0.0
        %2590 = vmatprep.subr.mxu0 0.0
        %2591 = vmatpush1.msra.mxu0 0.0
        %2592 = vmatprep.subr.mxu0 0.0
        %2593 = vmatpush1.msra.mxu0 0.0
        %2594 = vmatprep.subr.mxu0 0.0
        %2595 = vmatpush1.msra.mxu0 0.0
        %2596 = vmatprep.subr.mxu0 0.0
        %2597 = vmatpush1.msra.mxu0 0.0
        %2598 = vmatprep.mubr.f32.mxu0 0.0
        %2599 = vmatmul.mubr.f32.gmra.mrb[0].mxu0 %v2436
        %v2600 = vpop.f32.mrb[0].mxu0
        %v2601 = vadd.f32 0.0, %v2600
        %v2602 = vpop.f32.mrb[0].mxu0
        %2603 = vmatprep.mubr.f32.mxu0 0.0
        %2604 = vmatmul.mubr.f32.gmra.mrb[0].mxu0 %v2439
        %v2605 = vpop.f32.mrb[0].mxu0
        %v2606 = vadd.f32 0.0, %v2605
        %v2607 = vpop.f32.mrb[0].mxu0
        %2608 = vmatprep.mubr.f32.mxu0 0.0
        %2609 = vmatmul.mubr.f32.gmra.mrb[0].mxu0 %v2442
        %v2610 = vpop.f32.mrb[0].mxu0
        %v2611 = vadd.f32 0.0, %v2610
        %v2612 = vpop.f32.mrb[0].mxu0
        %2613 = vmatprep.mubr.f32.mxu0 0.0
        %2614 = vmatmul.mubr.f32.gmra.mrb[0].mxu0 %v2445
        %v2615 = vpop.f32.mrb[0].mxu0
        %v2616 = vadd.f32 0.0, %v2615
        %v2617 = vpop.f32.mrb[0].mxu0
        %2618 = vmatprep.mubr.f32.mxu0 0.0
        %2619 = vmatmul.mubr.f32.gmra.mrb[0].mxu0 %v2448
        %v2620 = vpop.f32.mrb[0].mxu0
        %v2621 = vadd.f32 0.0, %v2620
        %v2622 = vpop.f32.mrb[0].mxu0
        %2623 = vmatprep.mubr.f32.mxu0 0.0
        %2624 = vmatmul.mubr.f32.gmra.mrb[0].mxu0 %v2451
        %v2625 = vpop.f32.mrb[0].mxu0
        %v2626 = vadd.f32 0.0, %v2625
        %v2627 = vpop.f32.mrb[0].mxu0
        %2628 = vmatprep.mubr.f32.mxu0 0.0
        %2629 = vmatmul.mubr.f32.gmra.mrb[0].mxu0 %v2454
        %v2630 = vpop.f32.mrb[0].mxu0
        %v2631 = vadd.f32 0.0, %v2630
        %v2632 = vpop.f32.mrb[0].mxu0
        %2633 = vmatprep.mubr.f32.mxu0 0.0
        %2634 = vmatmul.mubr.f32.gmra.mrb[0].mxu0 %v2457
        %v2635 = vpop.f32.mrb[0].mxu0
        %v2636 = vadd.f32 0.0, %v2635
        %v2637 = vpop.f32.mrb[0].mxu0
        %2638 = vmatprep.mubr.f32.mxu0 0.0
        %2639 = vmatmul.mubr.f32.gmra.mrb[0].mxu0 %v2460
        %v2640 = vpop.f32.mrb[0].mxu0
        %v2641 = vadd.f32 0.0, %v2640
        %v2642 = vpop.f32.mrb[0].mxu0
        %2643 = vmatprep.mubr.f32.mxu0 0.0
        %2644 = vmatmul.mubr.f32.gmra.mrb[0].mxu0 %v2463
        %v2645 = vpop.f32.mrb[0].mxu0
        %v2646 = vadd.f32 0.0, %v2645
        %v2647 = vpop.f32.mrb[0].mxu0
        %2648 = vmatprep.mubr.f32.mxu0 0.0
        %2649 = vmatmul.mubr.f32.gmra.mrb[0].mxu0 %v2466
        %v2650 = vpop.f32.mrb[0].mxu0
        %v2651 = vadd.f32 0.0, %v2650
        %v2652 = vpop.f32.mrb[0].mxu0
        %2653 = vmatprep.mubr.f32.mxu0 0.0
        %2654 = vmatmul.mubr.f32.gmra.mrb[0].mxu0 %v2469
        %v2655 = vpop.f32.mrb[0].mxu0
        %v2656 = vadd.f32 0.0, %v2655
        %v2657 = vpop.f32.mrb[0].mxu0
        %2658 = vmatprep.mubr.f32.mxu0 0.0
        %2659 = vmatmul.mubr.f32.gmra.mrb[0].mxu0 %v2472
        %v2660 = vpop.f32.mrb[0].mxu0
        %v2661 = vadd.f32 0.0, %v2660
        %v2662 = vpop.f32.mrb[0].mxu0
        %2663 = vmatprep.mubr.f32.mxu0 0.0
        %2664 = vmatmul.mubr.f32.gmra.mrb[0].mxu0 %v2475
        %v2665 = vpop.f32.mrb[0].mxu0
        %v2666 = vadd.f32 0.0, %v2665
        %v2667 = vpop.f32.mrb[0].mxu0
        %2668 = vmatprep.mubr.f32.mxu0 0.0
        %2669 = vmatmul.mubr.f32.gmra.mrb[0].mxu0 %v2478
        %v2670 = vpop.f32.mrb[0].mxu0
        %v2671 = vadd.f32 0.0, %v2670
        %v2672 = vpop.f32.mrb[0].mxu0
        %2673 = vmatprep.mubr.f32.mxu0 0.0
        %2674 = vmatmul.mubr.f32.gmra.mrb[0].mxu0 %v2481
        %v2675 = vpop.f32.mrb[0].mxu0
        %v2676 = vadd.f32 0.0, %v2675
        %v2677 = vpop.f32.mrb[0].mxu0
        %2678 = vmatprep.mubr.f32.mxu0 0.0
        %2679 = vmatmul.mubr.f32.gmra.mrb[0].mxu0 %v2484
        %v2680 = vpop.f32.mrb[0].mxu0
        %v2681 = vadd.f32 0.0, %v2680
        %v2682 = vpop.f32.mrb[0].mxu0
        %2683 = vmatprep.mubr.f32.mxu0 0.0
        %2684 = vmatmul.mubr.f32.gmra.mrb[0].mxu0 %v2487
        %v2685 = vpop.f32.mrb[0].mxu0
        %v2686 = vadd.f32 0.0, %v2685
        %v2687 = vpop.f32.mrb[0].mxu0
        %2688 = vmatprep.mubr.f32.mxu0 0.0
        %2689 = vmatmul.mubr.f32.gmra.mrb[0].mxu0 %v2490
        %v2690 = vpop.f32.mrb[0].mxu0
        %v2691 = vadd.f32 0.0, %v2690
        %v2692 = vpop.f32.mrb[0].mxu0
        %2693 = vmatprep.mubr.f32.mxu0 0.0
        %2694 = vmatmul.mubr.f32.gmra.mrb[0].mxu0 %v2493
        %v2695 = vpop.f32.mrb[0].mxu0
        %v2696 = vadd.f32 0.0, %v2695
        %v2697 = vpop.f32.mrb[0].mxu0
        %2698 = vmatprep.mubr.f32.mxu0 0.0
        %2699 = vmatmul.mubr.f32.gmra.mrb[0].mxu0 %v2496
        %v2700 = vpop.f32.mrb[0].mxu0
        %v2701 = vadd.f32 0.0, %v2700
        %v2702 = vpop.f32.mrb[0].mxu0
        %2703 = vmatprep.mubr.f32.mxu0 0.0
        %2704 = vmatmul.mubr.f32.gmra.mrb[0].mxu0 %v2499
        %v2705 = vpop.f32.mrb[0].mxu0
        %v2706 = vadd.f32 0.0, %v2705
        %v2707 = vpop.f32.mrb[0].mxu0
        %2708 = vmatprep.mubr.f32.mxu0 0.0
        %2709 = vmatmul.mubr.f32.gmra.mrb[0].mxu0 %v2502
        %v2710 = vpop.f32.mrb[0].mxu0
        %v2711 = vadd.f32 0.0, %v2710
        %v2712 = vpop.f32.mrb[0].mxu0
        %2713 = vmatprep.mubr.f32.mxu0 0.0
        %2714 = vmatmul.mubr.f32.gmra.mrb[0].mxu0 %v2505
        %v2715 = vpop.f32.mrb[0].mxu0
        %v2716 = vadd.f32 0.0, %v2715
        %v2717 = vpop.f32.mrb[0].mxu0
        %2718 = vmatprep.mubr.f32.mxu0 0.0
        %2719 = vmatmul.mubr.f32.gmra.mrb[0].mxu0 %v2508
        %v2720 = vpop.f32.mrb[0].mxu0
        %v2721 = vadd.f32 0.0, %v2720
        %v2722 = vpop.f32.mrb[0].mxu0
        %2723 = vmatprep.mubr.f32.mxu0 0.0
        %2724 = vmatmul.mubr.f32.gmra.mrb[0].mxu0 %v2511
        %v2725 = vpop.f32.mrb[0].mxu0
        %v2726 = vadd.f32 0.0, %v2725
        %v2727 = vpop.f32.mrb[0].mxu0
        %2728 = vmatprep.mubr.f32.mxu0 0.0
        %2729 = vmatmul.mubr.f32.gmra.mrb[0].mxu0 %v2514
        %v2730 = vpop.f32.mrb[0].mxu0
        %v2731 = vadd.f32 0.0, %v2730
        %v2732 = vpop.f32.mrb[0].mxu0
        %2733 = vmatprep.mubr.f32.mxu0 0.0
        %2734 = vmatmul.mubr.f32.gmra.mrb[0].mxu0 %v2517
        %v2735 = vpop.f32.mrb[0].mxu0
        %v2736 = vadd.f32 0.0, %v2735
        %v2737 = vpop.f32.mrb[0].mxu0
        %2738 = vmatprep.mubr.f32.mxu0 0.0
        %2739 = vmatmul.mubr.f32.gmra.mrb[0].mxu0 %v2520
        %v2740 = vpop.f32.mrb[0].mxu0
        %v2741 = vadd.f32 0.0, %v2740
        %v2742 = vpop.f32.mrb[0].mxu0
        %2743 = vmatprep.mubr.f32.mxu0 0.0
        %2744 = vmatmul.mubr.f32.gmra.mrb[0].mxu0 %v2523
        %v2745 = vpop.f32.mrb[0].mxu0
        %v2746 = vadd.f32 0.0, %v2745
        %v2747 = vpop.f32.mrb[0].mxu0
        %2748 = vmatprep.mubr.f32.mxu0 0.0
        %2749 = vmatmul.mubr.f32.gmra.mrb[0].mxu0 %v2526
        %v2750 = vpop.f32.mrb[0].mxu0
        %v2751 = vadd.f32 0.0, %v2750
        %v2752 = vpop.f32.mrb[0].mxu0
        %2753 = vmatprep.mubr.f32.mxu0 0.0
        %2754 = vmatmul.mubr.f32.gmra.mrb[0].mxu0 %v2529
        %v2755 = vpop.f32.mrb[0].mxu0
        %v2756 = vadd.f32 0.0, %v2755
        %v2757 = vpop.f32.mrb[0].mxu0
        %2758 = vdwg.mxu0
        %v2759 = vadd.f32 %v2369, %v2601
        %v2760 = vadd.f32 %v2370, %v2606
        %v2761 = vadd.f32 %v2371, %v2611
        %v2762 = vadd.f32 %v2372, %v2616
        %v2763 = vadd.f32 %v2373, %v2621
        %v2764 = vadd.f32 %v2374, %v2626
        %v2765 = vadd.f32 %v2375, %v2631
        %v2766 = vadd.f32 %v2376, %v2636
        %v2767 = vadd.f32 %v2377, %v2641
        %v2768 = vadd.f32 %v2378, %v2646
        %v2769 = vadd.f32 %v2379, %v2651
        %v2770 = vadd.f32 %v2380, %v2656
        %v2771 = vadd.f32 %v2381, %v2661
        %v2772 = vadd.f32 %v2382, %v2666
        %v2773 = vadd.f32 %v2383, %v2671
        %v2774 = vadd.f32 %v2384, %v2676
        %v2775 = vadd.f32 %v2385, %v2681
        %v2776 = vadd.f32 %v2386, %v2686
        %v2777 = vadd.f32 %v2387, %v2691
        %v2778 = vadd.f32 %v2388, %v2696
        %v2779 = vadd.f32 %v2389, %v2701
        %v2780 = vadd.f32 %v2390, %v2706
        %v2781 = vadd.f32 %v2391, %v2711
        %v2782 = vadd.f32 %v2392, %v2716
        %v2783 = vadd.f32 %v2393, %v2721
        %v2784 = vadd.f32 %v2394, %v2726
        %v2785 = vadd.f32 %v2395, %v2731
        %v2786 = vadd.f32 %v2396, %v2736
        %v2787 = vadd.f32 %v2397, %v2741
        %v2788 = vadd.f32 %v2398, %v2746
        %v2789 = vadd.f32 %v2399, %v2751
        %v2790 = vadd.f32 %v2400, %v2756
        %s2791 = scalar_lea.vmem [#allocation2], 48
        %v2792 = vld [vmem:[%s2791] sm:$0xff]
        %v2793 = vld [vmem:[%s2791 + $0x8] sm:$0xff]
        %v2794 = vld [vmem:[%s2791 + $0x18] sm:$0xff]
        %v2795 = vld [vmem:[%s2791 + $0x20] sm:$0xff]
        %v2796 = vld [vmem:[%s2791 + $0x30] sm:$0xff]
        %v2797 = vld [vmem:[%s2791 + $0x38] sm:$0xff]
        %v2798 = vld [vmem:[%s2791 + $0x48] sm:$0xff]
        %v2799 = vld [vmem:[%s2791 + $0x50] sm:$0xff]
        %v2800 = vld [vmem:[%s2791 + $0x60] sm:$0xff]
        %v2801 = vld [vmem:[%s2791 + $0x68] sm:$0xff]
        %v2802 = vld [vmem:[%s2791 + $0x78] sm:$0xff]
        %v2803 = vld [vmem:[%s2791 + $0x80] sm:$0xff]
        %v2804 = vld [vmem:[%s2791 + $0x90] sm:$0xff]
        %v2805 = vld [vmem:[%s2791 + $0x98] sm:$0xff]
        %v2806 = vld [vmem:[%s2791 + $0xa8] sm:$0xff]
        %v2807 = vld [vmem:[%s2791 + $0xb0] sm:$0xff]
        %v2808 = vld [vmem:[%s2791 + $0xc0] sm:$0xff]
        %v2809 = vld [vmem:[%s2791 + $0xc8] sm:$0xff]
        %v2810 = vld [vmem:[%s2791 + $0xd8] sm:$0xff]
        %v2811 = vld [vmem:[%s2791 + $0xe0] sm:$0xff]
        %v2812 = vld [vmem:[%s2791 + $0xf0] sm:$0xff]
        %v2813 = vld [vmem:[%s2791 + $0xf8] sm:$0xff]
        %v2814 = vld [vmem:[%s2791 + $0x108] sm:$0xff]
        %v2815 = vld [vmem:[%s2791 + $0x110] sm:$0xff]
        %v2816 = vld [vmem:[%s2791 + $0x120] sm:$0xff]
        %v2817 = vld [vmem:[%s2791 + $0x128] sm:$0xff]
        %v2818 = vld [vmem:[%s2791 + $0x138] sm:$0xff]
        %v2819 = vld [vmem:[%s2791 + $0x140] sm:$0xff]
        %v2820 = vld [vmem:[%s2791 + $0x150] sm:$0xff]
        %v2821 = vld [vmem:[%s2791 + $0x158] sm:$0xff]
        %v2822 = vld [vmem:[%s2791 + $0x168] sm:$0xff]
        %v2823 = vld [vmem:[%s2791 + $0x170] sm:$0xff]
        %s2824 = scalar_lea.vmem [#allocation6], 24
        %v2825 = vld [vmem:[%s2824] sm:$0xf]
        %v2827 = vsel %vm436, %v2792, 0
        %v2830 = vsel %vm436, %v2793, 0
        %v2833 = vsel %vm436, %v2794, 0
        %v2836 = vsel %vm436, %v2795, 0
        %v2839 = vsel %vm436, %v2796, 0
        %v2842 = vsel %vm436, %v2797, 0
        %v2845 = vsel %vm436, %v2798, 0
        %v2848 = vsel %vm436, %v2799, 0
        %v2851 = vsel %vm436, %v2800, 0
        %v2854 = vsel %vm436, %v2801, 0
        %v2857 = vsel %vm436, %v2802, 0
        %v2860 = vsel %vm436, %v2803, 0
        %v2863 = vsel %vm436, %v2804, 0
        %v2866 = vsel %vm436, %v2805, 0
        %v2869 = vsel %vm436, %v2806, 0
        %v2872 = vsel %vm436, %v2807, 0
        %v2875 = vsel %vm436, %v2808, 0
        %v2878 = vsel %vm436, %v2809, 0
        %v2881 = vsel %vm436, %v2810, 0
        %v2884 = vsel %vm436, %v2811, 0
        %v2887 = vsel %vm436, %v2812, 0
        %v2890 = vsel %vm436, %v2813, 0
        %v2893 = vsel %vm436, %v2814, 0
        %v2896 = vsel %vm436, %v2815, 0
        %v2899 = vsel %vm436, %v2816, 0
        %v2902 = vsel %vm436, %v2817, 0
        %v2905 = vsel %vm436, %v2818, 0
        %v2908 = vsel %vm436, %v2819, 0
        %v2911 = vsel %vm436, %v2820, 0
        %v2914 = vsel %vm436, %v2821, 0
        %v2917 = vsel %vm436, %v2822, 0
        %v2920 = vsel %vm436, %v2823, 0
        %v2923 = vsel %vm678, %v2825, 0
        %2925 = vmatprep.subr.mxu0 0.0
        %2926 = vmatpush1.msra.mxu0 %v2923
        %2927 = vmatprep.subr.mxu0 0.0
        %2928 = vmatpush1.msra.mxu0 0.0
        %2929 = vmatprep.subr.mxu0 0.0
        %2930 = vmatpush1.msra.mxu0 0.0
        %2931 = vmatprep.subr.mxu0 0.0
        %2932 = vmatpush1.msra.mxu0 0.0
        %2933 = vmatprep.subr.mxu0 0.0
        %2934 = vmatpush1.msra.mxu0 0.0
        %2935 = vmatprep.subr.mxu0 0.0
        %2936 = vmatpush1.msra.mxu0 0.0
        %2937 = vmatprep.subr.mxu0 0.0
        %2938 = vmatpush1.msra.mxu0 0.0
        %2939 = vmatprep.subr.mxu0 0.0
        %2940 = vmatpush1.msra.mxu0 0.0
        %2941 = vmatprep.subr.mxu0 0.0
        %2942 = vmatpush1.msra.mxu0 0.0
        %2943 = vmatprep.subr.mxu0 0.0
        %2944 = vmatpush1.msra.mxu0 0.0
        %2945 = vmatprep.subr.mxu0 0.0
        %2946 = vmatpush1.msra.mxu0 0.0
        %2947 = vmatprep.subr.mxu0 0.0
        %2948 = vmatpush1.msra.mxu0 0.0
        %2949 = vmatprep.subr.mxu0 0.0
        %2950 = vmatpush1.msra.mxu0 0.0
        %2951 = vmatprep.subr.mxu0 0.0
        %2952 = vmatpush1.msra.mxu0 0.0
        %2953 = vmatprep.subr.mxu0 0.0
        %2954 = vmatpush1.msra.mxu0 0.0
        %2955 = vmatprep.subr.mxu0 0.0
        %2956 = vmatpush1.msra.mxu0 0.0
        %2957 = vmatprep.subr.mxu0 0.0
        %2958 = vmatpush1.msra.mxu0 0.0
        %2959 = vmatprep.subr.mxu0 0.0
        %2960 = vmatpush1.msra.mxu0 0.0
        %2961 = vmatprep.subr.mxu0 0.0
        %2962 = vmatpush1.msra.mxu0 0.0
        %2963 = vmatprep.subr.mxu0 0.0
        %2964 = vmatpush1.msra.mxu0 0.0
        %2965 = vmatprep.subr.mxu0 0.0
        %2966 = vmatpush1.msra.mxu0 0.0
        %2967 = vmatprep.subr.mxu0 0.0
        %2968 = vmatpush1.msra.mxu0 0.0
        %2969 = vmatprep.subr.mxu0 0.0
        %2970 = vmatpush1.msra.mxu0 0.0
        %2971 = vmatprep.subr.mxu0 0.0
        %2972 = vmatpush1.msra.mxu0 0.0
        %2973 = vmatprep.subr.mxu0 0.0
        %2974 = vmatpush1.msra.mxu0 0.0
        %2975 = vmatprep.subr.mxu0 0.0
        %2976 = vmatpush1.msra.mxu0 0.0
        %2977 = vmatprep.subr.mxu0 0.0
        %2978 = vmatpush1.msra.mxu0 0.0
        %2979 = vmatprep.subr.mxu0 0.0
        %2980 = vmatpush1.msra.mxu0 0.0
        %2981 = vmatprep.subr.mxu0 0.0
        %2982 = vmatpush1.msra.mxu0 0.0
        %2983 = vmatprep.subr.mxu0 0.0
        %2984 = vmatpush1.msra.mxu0 0.0
        %2985 = vmatprep.subr.mxu0 0.0
        %2986 = vmatpush1.msra.mxu0 0.0
        %2987 = vmatprep.subr.mxu0 0.0
        %2988 = vmatpush1.msra.mxu0 0.0
        %2989 = vmatprep.mubr.f32.mxu0 0.0
        %2990 = vmatmul.mubr.f32.gmra.mrb[0].mxu0 %v2827
        %v2991 = vpop.f32.mrb[0].mxu0
        %v2992 = vadd.f32 0.0, %v2991
        %v2993 = vpop.f32.mrb[0].mxu0
        %2994 = vmatprep.mubr.f32.mxu0 0.0
        %2995 = vmatmul.mubr.f32.gmra.mrb[0].mxu0 %v2830
        %v2996 = vpop.f32.mrb[0].mxu0
        %v2997 = vadd.f32 0.0, %v2996
        %v2998 = vpop.f32.mrb[0].mxu0
        %2999 = vmatprep.mubr.f32.mxu0 0.0
        %3000 = vmatmul.mubr.f32.gmra.mrb[0].mxu0 %v2833
        %v3001 = vpop.f32.mrb[0].mxu0
        %v3002 = vadd.f32 0.0, %v3001
        %v3003 = vpop.f32.mrb[0].mxu0
        %3004 = vmatprep.mubr.f32.mxu0 0.0
        %3005 = vmatmul.mubr.f32.gmra.mrb[0].mxu0 %v2836
        %v3006 = vpop.f32.mrb[0].mxu0
        %v3007 = vadd.f32 0.0, %v3006
        %v3008 = vpop.f32.mrb[0].mxu0
        %3009 = vmatprep.mubr.f32.mxu0 0.0
        %3010 = vmatmul.mubr.f32.gmra.mrb[0].mxu0 %v2839
        %v3011 = vpop.f32.mrb[0].mxu0
        %v3012 = vadd.f32 0.0, %v3011
        %v3013 = vpop.f32.mrb[0].mxu0
        %3014 = vmatprep.mubr.f32.mxu0 0.0
        %3015 = vmatmul.mubr.f32.gmra.mrb[0].mxu0 %v2842
        %v3016 = vpop.f32.mrb[0].mxu0
        %v3017 = vadd.f32 0.0, %v3016
        %v3018 = vpop.f32.mrb[0].mxu0
        %3019 = vmatprep.mubr.f32.mxu0 0.0
        %3020 = vmatmul.mubr.f32.gmra.mrb[0].mxu0 %v2845
        %v3021 = vpop.f32.mrb[0].mxu0
        %v3022 = vadd.f32 0.0, %v3021
        %v3023 = vpop.f32.mrb[0].mxu0
        %3024 = vmatprep.mubr.f32.mxu0 0.0
        %3025 = vmatmul.mubr.f32.gmra.mrb[0].mxu0 %v2848
        %v3026 = vpop.f32.mrb[0].mxu0
        %v3027 = vadd.f32 0.0, %v3026
        %v3028 = vpop.f32.mrb[0].mxu0
        %3029 = vmatprep.mubr.f32.mxu0 0.0
        %3030 = vmatmul.mubr.f32.gmra.mrb[0].mxu0 %v2851
        %v3031 = vpop.f32.mrb[0].mxu0
        %v3032 = vadd.f32 0.0, %v3031
        %v3033 = vpop.f32.mrb[0].mxu0
        %3034 = vmatprep.mubr.f32.mxu0 0.0
        %3035 = vmatmul.mubr.f32.gmra.mrb[0].mxu0 %v2854
        %v3036 = vpop.f32.mrb[0].mxu0
        %v3037 = vadd.f32 0.0, %v3036
        %v3038 = vpop.f32.mrb[0].mxu0
        %3039 = vmatprep.mubr.f32.mxu0 0.0
        %3040 = vmatmul.mubr.f32.gmra.mrb[0].mxu0 %v2857
        %v3041 = vpop.f32.mrb[0].mxu0
        %v3042 = vadd.f32 0.0, %v3041
        %v3043 = vpop.f32.mrb[0].mxu0
        %3044 = vmatprep.mubr.f32.mxu0 0.0
        %3045 = vmatmul.mubr.f32.gmra.mrb[0].mxu0 %v2860
        %v3046 = vpop.f32.mrb[0].mxu0
        %v3047 = vadd.f32 0.0, %v3046
        %v3048 = vpop.f32.mrb[0].mxu0
        %3049 = vmatprep.mubr.f32.mxu0 0.0
        %3050 = vmatmul.mubr.f32.gmra.mrb[0].mxu0 %v2863
        %v3051 = vpop.f32.mrb[0].mxu0
        %v3052 = vadd.f32 0.0, %v3051
        %v3053 = vpop.f32.mrb[0].mxu0
        %3054 = vmatprep.mubr.f32.mxu0 0.0
        %3055 = vmatmul.mubr.f32.gmra.mrb[0].mxu0 %v2866
        %v3056 = vpop.f32.mrb[0].mxu0
        %v3057 = vadd.f32 0.0, %v3056
        %v3058 = vpop.f32.mrb[0].mxu0
        %3059 = vmatprep.mubr.f32.mxu0 0.0
        %3060 = vmatmul.mubr.f32.gmra.mrb[0].mxu0 %v2869
        %v3061 = vpop.f32.mrb[0].mxu0
        %v3062 = vadd.f32 0.0, %v3061
        %v3063 = vpop.f32.mrb[0].mxu0
        %3064 = vmatprep.mubr.f32.mxu0 0.0
        %3065 = vmatmul.mubr.f32.gmra.mrb[0].mxu0 %v2872
        %v3066 = vpop.f32.mrb[0].mxu0
        %v3067 = vadd.f32 0.0, %v3066
        %v3068 = vpop.f32.mrb[0].mxu0
        %3069 = vmatprep.mubr.f32.mxu0 0.0
        %3070 = vmatmul.mubr.f32.gmra.mrb[0].mxu0 %v2875
        %v3071 = vpop.f32.mrb[0].mxu0
        %v3072 = vadd.f32 0.0, %v3071
        %v3073 = vpop.f32.mrb[0].mxu0
        %3074 = vmatprep.mubr.f32.mxu0 0.0
        %3075 = vmatmul.mubr.f32.gmra.mrb[0].mxu0 %v2878
        %v3076 = vpop.f32.mrb[0].mxu0
        %v3077 = vadd.f32 0.0, %v3076
        %v3078 = vpop.f32.mrb[0].mxu0
        %3079 = vmatprep.mubr.f32.mxu0 0.0
        %3080 = vmatmul.mubr.f32.gmra.mrb[0].mxu0 %v2881
        %v3081 = vpop.f32.mrb[0].mxu0
        %v3082 = vadd.f32 0.0, %v3081
        %v3083 = vpop.f32.mrb[0].mxu0
        %3084 = vmatprep.mubr.f32.mxu0 0.0
        %3085 = vmatmul.mubr.f32.gmra.mrb[0].mxu0 %v2884
        %v3086 = vpop.f32.mrb[0].mxu0
        %v3087 = vadd.f32 0.0, %v3086
        %v3088 = vpop.f32.mrb[0].mxu0
        %3089 = vmatprep.mubr.f32.mxu0 0.0
        %3090 = vmatmul.mubr.f32.gmra.mrb[0].mxu0 %v2887
        %v3091 = vpop.f32.mrb[0].mxu0
        %v3092 = vadd.f32 0.0, %v3091
        %v3093 = vpop.f32.mrb[0].mxu0
        %3094 = vmatprep.mubr.f32.mxu0 0.0
        %3095 = vmatmul.mubr.f32.gmra.mrb[0].mxu0 %v2890
        %v3096 = vpop.f32.mrb[0].mxu0
        %v3097 = vadd.f32 0.0, %v3096
        %v3098 = vpop.f32.mrb[0].mxu0
        %3099 = vmatprep.mubr.f32.mxu0 0.0
        %3100 = vmatmul.mubr.f32.gmra.mrb[0].mxu0 %v2893
        %v3101 = vpop.f32.mrb[0].mxu0
        %v3102 = vadd.f32 0.0, %v3101
        %v3103 = vpop.f32.mrb[0].mxu0
        %3104 = vmatprep.mubr.f32.mxu0 0.0
        %3105 = vmatmul.mubr.f32.gmra.mrb[0].mxu0 %v2896
        %v3106 = vpop.f32.mrb[0].mxu0
        %v3107 = vadd.f32 0.0, %v3106
        %v3108 = vpop.f32.mrb[0].mxu0
        %3109 = vmatprep.mubr.f32.mxu0 0.0
        %3110 = vmatmul.mubr.f32.gmra.mrb[0].mxu0 %v2899
        %v3111 = vpop.f32.mrb[0].mxu0
        %v3112 = vadd.f32 0.0, %v3111
        %v3113 = vpop.f32.mrb[0].mxu0
        %3114 = vmatprep.mubr.f32.mxu0 0.0
        %3115 = vmatmul.mubr.f32.gmra.mrb[0].mxu0 %v2902
        %v3116 = vpop.f32.mrb[0].mxu0
        %v3117 = vadd.f32 0.0, %v3116
        %v3118 = vpop.f32.mrb[0].mxu0
        %3119 = vmatprep.mubr.f32.mxu0 0.0
        %3120 = vmatmul.mubr.f32.gmra.mrb[0].mxu0 %v2905
        %v3121 = vpop.f32.mrb[0].mxu0
        %v3122 = vadd.f32 0.0, %v3121
        %v3123 = vpop.f32.mrb[0].mxu0
        %3124 = vmatprep.mubr.f32.mxu0 0.0
        %3125 = vmatmul.mubr.f32.gmra.mrb[0].mxu0 %v2908
        %v3126 = vpop.f32.mrb[0].mxu0
        %v3127 = vadd.f32 0.0, %v3126
        %v3128 = vpop.f32.mrb[0].mxu0
        %3129 = vmatprep.mubr.f32.mxu0 0.0
        %3130 = vmatmul.mubr.f32.gmra.mrb[0].mxu0 %v2911
        %v3131 = vpop.f32.mrb[0].mxu0
        %v3132 = vadd.f32 0.0, %v3131
        %v3133 = vpop.f32.mrb[0].mxu0
        %3134 = vmatprep.mubr.f32.mxu0 0.0
        %3135 = vmatmul.mubr.f32.gmra.mrb[0].mxu0 %v2914
        %v3136 = vpop.f32.mrb[0].mxu0
        %v3137 = vadd.f32 0.0, %v3136
        %v3138 = vpop.f32.mrb[0].mxu0
        %3139 = vmatprep.mubr.f32.mxu0 0.0
        %3140 = vmatmul.mubr.f32.gmra.mrb[0].mxu0 %v2917
        %v3141 = vpop.f32.mrb[0].mxu0
        %v3142 = vadd.f32 0.0, %v3141
        %v3143 = vpop.f32.mrb[0].mxu0
        %3144 = vmatprep.mubr.f32.mxu0 0.0
        %3145 = vmatmul.mubr.f32.gmra.mrb[0].mxu0 %v2920
        %v3146 = vpop.f32.mrb[0].mxu0
        %v3147 = vadd.f32 0.0, %v3146
        %v3148 = vpop.f32.mrb[0].mxu0
        %3149 = vdwg.mxu0
        %v3150 = vadd.f32 %v2759, %v2992
        %v3151 = vadd.f32 %v2760, %v2997
        %v3152 = vadd.f32 %v2761, %v3002
        %v3153 = vadd.f32 %v2762, %v3007
        %v3154 = vadd.f32 %v2763, %v3012
        %v3155 = vadd.f32 %v2764, %v3017
        %v3156 = vadd.f32 %v2765, %v3022
        %v3157 = vadd.f32 %v2766, %v3027
        %v3158 = vadd.f32 %v2767, %v3032
        %v3159 = vadd.f32 %v2768, %v3037
        %v3160 = vadd.f32 %v2769, %v3042
        %v3161 = vadd.f32 %v2770, %v3047
        %v3162 = vadd.f32 %v2771, %v3052
        %v3163 = vadd.f32 %v2772, %v3057
        %v3164 = vadd.f32 %v2773, %v3062
        %v3165 = vadd.f32 %v2774, %v3067
        %v3166 = vadd.f32 %v2775, %v3072
        %v3167 = vadd.f32 %v2776, %v3077
        %v3168 = vadd.f32 %v2777, %v3082
        %v3169 = vadd.f32 %v2778, %v3087
        %v3170 = vadd.f32 %v2779, %v3092
        %v3171 = vadd.f32 %v2780, %v3097
        %v3172 = vadd.f32 %v2781, %v3102
        %v3173 = vadd.f32 %v2782, %v3107
        %v3174 = vadd.f32 %v2783, %v3112
        %v3175 = vadd.f32 %v2784, %v3117
        %v3176 = vadd.f32 %v2785, %v3122
        %v3177 = vadd.f32 %v2786, %v3127
        %v3178 = vadd.f32 %v2787, %v3132
        %v3179 = vadd.f32 %v2788, %v3137
        %v3180 = vadd.f32 %v2789, %v3142
        %v3181 = vadd.f32 %v2790, %v3147
        %v3182 = vld [vmem:[%s2791 + $0x1] sm:$0xff]
        %v3183 = vld [vmem:[%s2791 + $0x9] sm:$0xff]
        %v3184 = vld [vmem:[%s2791 + $0x19] sm:$0xff]
        %v3185 = vld [vmem:[%s2791 + $0x21] sm:$0xff]
        %v3186 = vld [vmem:[%s2791 + $0x31] sm:$0xff]
        %v3187 = vld [vmem:[%s2791 + $0x39] sm:$0xff]
        %v3188 = vld [vmem:[%s2791 + $0x49] sm:$0xff]
        %v3189 = vld [vmem:[%s2791 + $0x51] sm:$0xff]
        %v3190 = vld [vmem:[%s2791 + $0x61] sm:$0xff]
        %v3191 = vld [vmem:[%s2791 + $0x69] sm:$0xff]
        %v3192 = vld [vmem:[%s2791 + $0x79] sm:$0xff]
        %v3193 = vld [vmem:[%s2791 + $0x81] sm:$0xff]
        %v3194 = vld [vmem:[%s2791 + $0x91] sm:$0xff]
        %v3195 = vld [vmem:[%s2791 + $0x99] sm:$0xff]
        %v3196 = vld [vmem:[%s2791 + $0xa9] sm:$0xff]
        %v3197 = vld [vmem:[%s2791 + $0xb1] sm:$0xff]
        %v3198 = vld [vmem:[%s2791 + $0xc1] sm:$0xff]
        %v3199 = vld [vmem:[%s2791 + $0xc9] sm:$0xff]
        %v3200 = vld [vmem:[%s2791 + $0xd9] sm:$0xff]
        %v3201 = vld [vmem:[%s2791 + $0xe1] sm:$0xff]
        %v3202 = vld [vmem:[%s2791 + $0xf1] sm:$0xff]
        %v3203 = vld [vmem:[%s2791 + $0xf9] sm:$0xff]
        %v3204 = vld [vmem:[%s2791 + $0x109] sm:$0xff]
        %v3205 = vld [vmem:[%s2791 + $0x111] sm:$0xff]
        %v3206 = vld [vmem:[%s2791 + $0x121] sm:$0xff]
        %v3207 = vld [vmem:[%s2791 + $0x129] sm:$0xff]
        %v3208 = vld [vmem:[%s2791 + $0x139] sm:$0xff]
        %v3209 = vld [vmem:[%s2791 + $0x141] sm:$0xff]
        %v3210 = vld [vmem:[%s2791 + $0x151] sm:$0xff]
        %v3211 = vld [vmem:[%s2791 + $0x159] sm:$0xff]
        %v3212 = vld [vmem:[%s2791 + $0x169] sm:$0xff]
        %v3213 = vld [vmem:[%s2791 + $0x171] sm:$0xff]
        %s3214 = scalar_lea.vmem [#allocation6], 28
        %v3215 = vld [vmem:[%s3214] sm:$0xf]
        %v3217 = vsel %vm436, %v3182, 0
        %v3220 = vsel %vm436, %v3183, 0
        %v3223 = vsel %vm436, %v3184, 0
        %v3226 = vsel %vm436, %v3185, 0
        %v3229 = vsel %vm436, %v3186, 0
        %v3232 = vsel %vm436, %v3187, 0
        %v3235 = vsel %vm436, %v3188, 0
        %v3238 = vsel %vm436, %v3189, 0
        %v3241 = vsel %vm436, %v3190, 0
        %v3244 = vsel %vm436, %v3191, 0
        %v3247 = vsel %vm436, %v3192, 0
        %v3250 = vsel %vm436, %v3193, 0
        %v3253 = vsel %vm436, %v3194, 0
        %v3256 = vsel %vm436, %v3195, 0
        %v3259 = vsel %vm436, %v3196, 0
        %v3262 = vsel %vm436, %v3197, 0
        %v3265 = vsel %vm436, %v3198, 0
        %v3268 = vsel %vm436, %v3199, 0
        %v3271 = vsel %vm436, %v3200, 0
        %v3274 = vsel %vm436, %v3201, 0
        %v3277 = vsel %vm436, %v3202, 0
        %v3280 = vsel %vm436, %v3203, 0
        %v3283 = vsel %vm436, %v3204, 0
        %v3286 = vsel %vm436, %v3205, 0
        %v3289 = vsel %vm436, %v3206, 0
        %v3292 = vsel %vm436, %v3207, 0
        %v3295 = vsel %vm436, %v3208, 0
        %v3298 = vsel %vm436, %v3209, 0
        %v3301 = vsel %vm436, %v3210, 0
        %v3304 = vsel %vm436, %v3211, 0
        %v3307 = vsel %vm436, %v3212, 0
        %v3310 = vsel %vm436, %v3213, 0
        %v3313 = vsel %vm678, %v3215, 0
        %3315 = vmatprep.subr.mxu0 0.0
        %3316 = vmatpush1.msra.mxu0 %v3313
        %3317 = vmatprep.subr.mxu0 0.0
        %3318 = vmatpush1.msra.mxu0 0.0
        %3319 = vmatprep.subr.mxu0 0.0
        %3320 = vmatpush1.msra.mxu0 0.0
        %3321 = vmatprep.subr.mxu0 0.0
        %3322 = vmatpush1.msra.mxu0 0.0
        %3323 = vmatprep.subr.mxu0 0.0
        %3324 = vmatpush1.msra.mxu0 0.0
        %3325 = vmatprep.subr.mxu0 0.0
        %3326 = vmatpush1.msra.mxu0 0.0
        %3327 = vmatprep.subr.mxu0 0.0
        %3328 = vmatpush1.msra.mxu0 0.0
        %3329 = vmatprep.subr.mxu0 0.0
        %3330 = vmatpush1.msra.mxu0 0.0
        %3331 = vmatprep.subr.mxu0 0.0
        %3332 = vmatpush1.msra.mxu0 0.0
        %3333 = vmatprep.subr.mxu0 0.0
        %3334 = vmatpush1.msra.mxu0 0.0
        %3335 = vmatprep.subr.mxu0 0.0
        %3336 = vmatpush1.msra.mxu0 0.0
        %3337 = vmatprep.subr.mxu0 0.0
        %3338 = vmatpush1.msra.mxu0 0.0
        %3339 = vmatprep.subr.mxu0 0.0
        %3340 = vmatpush1.msra.mxu0 0.0
        %3341 = vmatprep.subr.mxu0 0.0
        %3342 = vmatpush1.msra.mxu0 0.0
        %3343 = vmatprep.subr.mxu0 0.0
        %3344 = vmatpush1.msra.mxu0 0.0
        %3345 = vmatprep.subr.mxu0 0.0
        %3346 = vmatpush1.msra.mxu0 0.0
        %3347 = vmatprep.subr.mxu0 0.0
        %3348 = vmatpush1.msra.mxu0 0.0
        %3349 = vmatprep.subr.mxu0 0.0
        %3350 = vmatpush1.msra.mxu0 0.0
        %3351 = vmatprep.subr.mxu0 0.0
        %3352 = vmatpush1.msra.mxu0 0.0
        %3353 = vmatprep.subr.mxu0 0.0
        %3354 = vmatpush1.msra.mxu0 0.0
        %3355 = vmatprep.subr.mxu0 0.0
        %3356 = vmatpush1.msra.mxu0 0.0
        %3357 = vmatprep.subr.mxu0 0.0
        %3358 = vmatpush1.msra.mxu0 0.0
        %3359 = vmatprep.subr.mxu0 0.0
        %3360 = vmatpush1.msra.mxu0 0.0
        %3361 = vmatprep.subr.mxu0 0.0
        %3362 = vmatpush1.msra.mxu0 0.0
        %3363 = vmatprep.subr.mxu0 0.0
        %3364 = vmatpush1.msra.mxu0 0.0
        %3365 = vmatprep.subr.mxu0 0.0
        %3366 = vmatpush1.msra.mxu0 0.0
        %3367 = vmatprep.subr.mxu0 0.0
        %3368 = vmatpush1.msra.mxu0 0.0
        %3369 = vmatprep.subr.mxu0 0.0
        %3370 = vmatpush1.msra.mxu0 0.0
        %3371 = vmatprep.subr.mxu0 0.0
        %3372 = vmatpush1.msra.mxu0 0.0
        %3373 = vmatprep.subr.mxu0 0.0
        %3374 = vmatpush1.msra.mxu0 0.0
        %3375 = vmatprep.subr.mxu0 0.0
        %3376 = vmatpush1.msra.mxu0 0.0
        %3377 = vmatprep.subr.mxu0 0.0
        %3378 = vmatpush1.msra.mxu0 0.0
        %3379 = vmatprep.mubr.f32.mxu0 0.0
        %3380 = vmatmul.mubr.f32.gmra.mrb[0].mxu0 %v3217
        %v3381 = vpop.f32.mrb[0].mxu0
        %v3382 = vadd.f32 0.0, %v3381
        %v3383 = vpop.f32.mrb[0].mxu0
        %3384 = vmatprep.mubr.f32.mxu0 0.0
        %3385 = vmatmul.mubr.f32.gmra.mrb[0].mxu0 %v3220
        %v3386 = vpop.f32.mrb[0].mxu0
        %v3387 = vadd.f32 0.0, %v3386
        %v3388 = vpop.f32.mrb[0].mxu0
        %3389 = vmatprep.mubr.f32.mxu0 0.0
        %3390 = vmatmul.mubr.f32.gmra.mrb[0].mxu0 %v3223
        %v3391 = vpop.f32.mrb[0].mxu0
        %v3392 = vadd.f32 0.0, %v3391
        %v3393 = vpop.f32.mrb[0].mxu0
        %3394 = vmatprep.mubr.f32.mxu0 0.0
        %3395 = vmatmul.mubr.f32.gmra.mrb[0].mxu0 %v3226
        %v3396 = vpop.f32.mrb[0].mxu0
        %v3397 = vadd.f32 0.0, %v3396
        %v3398 = vpop.f32.mrb[0].mxu0
        %3399 = vmatprep.mubr.f32.mxu0 0.0
        %3400 = vmatmul.mubr.f32.gmra.mrb[0].mxu0 %v3229
        %v3401 = vpop.f32.mrb[0].mxu0
        %v3402 = vadd.f32 0.0, %v3401
        %v3403 = vpop.f32.mrb[0].mxu0
        %3404 = vmatprep.mubr.f32.mxu0 0.0
        %3405 = vmatmul.mubr.f32.gmra.mrb[0].mxu0 %v3232
        %v3406 = vpop.f32.mrb[0].mxu0
        %v3407 = vadd.f32 0.0, %v3406
        %v3408 = vpop.f32.mrb[0].mxu0
        %3409 = vmatprep.mubr.f32.mxu0 0.0
        %3410 = vmatmul.mubr.f32.gmra.mrb[0].mxu0 %v3235
        %v3411 = vpop.f32.mrb[0].mxu0
        %v3412 = vadd.f32 0.0, %v3411
        %v3413 = vpop.f32.mrb[0].mxu0
        %3414 = vmatprep.mubr.f32.mxu0 0.0
        %3415 = vmatmul.mubr.f32.gmra.mrb[0].mxu0 %v3238
        %v3416 = vpop.f32.mrb[0].mxu0
        %v3417 = vadd.f32 0.0, %v3416
        %v3418 = vpop.f32.mrb[0].mxu0
        %3419 = vmatprep.mubr.f32.mxu0 0.0
        %3420 = vmatmul.mubr.f32.gmra.mrb[0].mxu0 %v3241
        %v3421 = vpop.f32.mrb[0].mxu0
        %v3422 = vadd.f32 0.0, %v3421
        %v3423 = vpop.f32.mrb[0].mxu0
        %3424 = vmatprep.mubr.f32.mxu0 0.0
        %3425 = vmatmul.mubr.f32.gmra.mrb[0].mxu0 %v3244
        %v3426 = vpop.f32.mrb[0].mxu0
        %v3427 = vadd.f32 0.0, %v3426
        %v3428 = vpop.f32.mrb[0].mxu0
        %3429 = vmatprep.mubr.f32.mxu0 0.0
        %3430 = vmatmul.mubr.f32.gmra.mrb[0].mxu0 %v3247
        %v3431 = vpop.f32.mrb[0].mxu0
        %v3432 = vadd.f32 0.0, %v3431
        %v3433 = vpop.f32.mrb[0].mxu0
        %3434 = vmatprep.mubr.f32.mxu0 0.0
        %3435 = vmatmul.mubr.f32.gmra.mrb[0].mxu0 %v3250
        %v3436 = vpop.f32.mrb[0].mxu0
        %v3437 = vadd.f32 0.0, %v3436
        %v3438 = vpop.f32.mrb[0].mxu0
        %3439 = vmatprep.mubr.f32.mxu0 0.0
        %3440 = vmatmul.mubr.f32.gmra.mrb[0].mxu0 %v3253
        %v3441 = vpop.f32.mrb[0].mxu0
        %v3442 = vadd.f32 0.0, %v3441
        %v3443 = vpop.f32.mrb[0].mxu0
        %3444 = vmatprep.mubr.f32.mxu0 0.0
        %3445 = vmatmul.mubr.f32.gmra.mrb[0].mxu0 %v3256
        %v3446 = vpop.f32.mrb[0].mxu0
        %v3447 = vadd.f32 0.0, %v3446
        %v3448 = vpop.f32.mrb[0].mxu0
        %3449 = vmatprep.mubr.f32.mxu0 0.0
        %3450 = vmatmul.mubr.f32.gmra.mrb[0].mxu0 %v3259
        %v3451 = vpop.f32.mrb[0].mxu0
        %v3452 = vadd.f32 0.0, %v3451
        %v3453 = vpop.f32.mrb[0].mxu0
        %3454 = vmatprep.mubr.f32.mxu0 0.0
        %3455 = vmatmul.mubr.f32.gmra.mrb[0].mxu0 %v3262
        %v3456 = vpop.f32.mrb[0].mxu0
        %v3457 = vadd.f32 0.0, %v3456
        %v3458 = vpop.f32.mrb[0].mxu0
        %3459 = vmatprep.mubr.f32.mxu0 0.0
        %3460 = vmatmul.mubr.f32.gmra.mrb[0].mxu0 %v3265
        %v3461 = vpop.f32.mrb[0].mxu0
        %v3462 = vadd.f32 0.0, %v3461
        %v3463 = vpop.f32.mrb[0].mxu0
        %3464 = vmatprep.mubr.f32.mxu0 0.0
        %3465 = vmatmul.mubr.f32.gmra.mrb[0].mxu0 %v3268
        %v3466 = vpop.f32.mrb[0].mxu0
        %v3467 = vadd.f32 0.0, %v3466
        %v3468 = vpop.f32.mrb[0].mxu0
        %3469 = vmatprep.mubr.f32.mxu0 0.0
        %3470 = vmatmul.mubr.f32.gmra.mrb[0].mxu0 %v3271
        %v3471 = vpop.f32.mrb[0].mxu0
        %v3472 = vadd.f32 0.0, %v3471
        %v3473 = vpop.f32.mrb[0].mxu0
        %3474 = vmatprep.mubr.f32.mxu0 0.0
        %3475 = vmatmul.mubr.f32.gmra.mrb[0].mxu0 %v3274
        %v3476 = vpop.f32.mrb[0].mxu0
        %v3477 = vadd.f32 0.0, %v3476
        %v3478 = vpop.f32.mrb[0].mxu0
        %3479 = vmatprep.mubr.f32.mxu0 0.0
        %3480 = vmatmul.mubr.f32.gmra.mrb[0].mxu0 %v3277
        %v3481 = vpop.f32.mrb[0].mxu0
        %v3482 = vadd.f32 0.0, %v3481
        %v3483 = vpop.f32.mrb[0].mxu0
        %3484 = vmatprep.mubr.f32.mxu0 0.0
        %3485 = vmatmul.mubr.f32.gmra.mrb[0].mxu0 %v3280
        %v3486 = vpop.f32.mrb[0].mxu0
        %v3487 = vadd.f32 0.0, %v3486
        %v3488 = vpop.f32.mrb[0].mxu0
        %3489 = vmatprep.mubr.f32.mxu0 0.0
        %3490 = vmatmul.mubr.f32.gmra.mrb[0].mxu0 %v3283
        %v3491 = vpop.f32.mrb[0].mxu0
        %v3492 = vadd.f32 0.0, %v3491
        %v3493 = vpop.f32.mrb[0].mxu0
        %3494 = vmatprep.mubr.f32.mxu0 0.0
        %3495 = vmatmul.mubr.f32.gmra.mrb[0].mxu0 %v3286
        %v3496 = vpop.f32.mrb[0].mxu0
        %v3497 = vadd.f32 0.0, %v3496
        %v3498 = vpop.f32.mrb[0].mxu0
        %3499 = vmatprep.mubr.f32.mxu0 0.0
        %3500 = vmatmul.mubr.f32.gmra.mrb[0].mxu0 %v3289
        %v3501 = vpop.f32.mrb[0].mxu0
        %v3502 = vadd.f32 0.0, %v3501
        %v3503 = vpop.f32.mrb[0].mxu0
        %3504 = vmatprep.mubr.f32.mxu0 0.0
        %3505 = vmatmul.mubr.f32.gmra.mrb[0].mxu0 %v3292
        %v3506 = vpop.f32.mrb[0].mxu0
        %v3507 = vadd.f32 0.0, %v3506
        %v3508 = vpop.f32.mrb[0].mxu0
        %3509 = vmatprep.mubr.f32.mxu0 0.0
        %3510 = vmatmul.mubr.f32.gmra.mrb[0].mxu0 %v3295
        %v3511 = vpop.f32.mrb[0].mxu0
        %v3512 = vadd.f32 0.0, %v3511
        %v3513 = vpop.f32.mrb[0].mxu0
        %3514 = vmatprep.mubr.f32.mxu0 0.0
        %3515 = vmatmul.mubr.f32.gmra.mrb[0].mxu0 %v3298
        %v3516 = vpop.f32.mrb[0].mxu0
        %v3517 = vadd.f32 0.0, %v3516
        %v3518 = vpop.f32.mrb[0].mxu0
        %3519 = vmatprep.mubr.f32.mxu0 0.0
        %3520 = vmatmul.mubr.f32.gmra.mrb[0].mxu0 %v3301
        %v3521 = vpop.f32.mrb[0].mxu0
        %v3522 = vadd.f32 0.0, %v3521
        %v3523 = vpop.f32.mrb[0].mxu0
        %3524 = vmatprep.mubr.f32.mxu0 0.0
        %3525 = vmatmul.mubr.f32.gmra.mrb[0].mxu0 %v3304
        %v3526 = vpop.f32.mrb[0].mxu0
        %v3527 = vadd.f32 0.0, %v3526
        %v3528 = vpop.f32.mrb[0].mxu0
        %3529 = vmatprep.mubr.f32.mxu0 0.0
        %3530 = vmatmul.mubr.f32.gmra.mrb[0].mxu0 %v3307
        %v3531 = vpop.f32.mrb[0].mxu0
        %v3532 = vadd.f32 0.0, %v3531
        %v3533 = vpop.f32.mrb[0].mxu0
        %3534 = vmatprep.mubr.f32.mxu0 0.0
        %3535 = vmatmul.mubr.f32.gmra.mrb[0].mxu0 %v3310
        %v3536 = vpop.f32.mrb[0].mxu0
        %v3537 = vadd.f32 0.0, %v3536
        %v3538 = vpop.f32.mrb[0].mxu0
        %3539 = vdwg.mxu0
        %v3540 = vadd.f32 %v3150, %v3382
        %v3541 = vadd.f32 %v3151, %v3387
        %v3542 = vadd.f32 %v3152, %v3392
        %v3543 = vadd.f32 %v3153, %v3397
        %v3544 = vadd.f32 %v3154, %v3402
        %v3545 = vadd.f32 %v3155, %v3407
        %v3546 = vadd.f32 %v3156, %v3412
        %v3547 = vadd.f32 %v3157, %v3417
        %v3548 = vadd.f32 %v3158, %v3422
        %v3549 = vadd.f32 %v3159, %v3427
        %v3550 = vadd.f32 %v3160, %v3432
        %v3551 = vadd.f32 %v3161, %v3437
        %v3552 = vadd.f32 %v3162, %v3442
        %v3553 = vadd.f32 %v3163, %v3447
        %v3554 = vadd.f32 %v3164, %v3452
        %v3555 = vadd.f32 %v3165, %v3457
        %v3556 = vadd.f32 %v3166, %v3462
        %v3557 = vadd.f32 %v3167, %v3467
        %v3558 = vadd.f32 %v3168, %v3472
        %v3559 = vadd.f32 %v3169, %v3477
        %v3560 = vadd.f32 %v3170, %v3482
        %v3561 = vadd.f32 %v3171, %v3487
        %v3562 = vadd.f32 %v3172, %v3492
        %v3563 = vadd.f32 %v3173, %v3497
        %v3564 = vadd.f32 %v3174, %v3502
        %v3565 = vadd.f32 %v3175, %v3507
        %v3566 = vadd.f32 %v3176, %v3512
        %v3567 = vadd.f32 %v3177, %v3517
        %v3568 = vadd.f32 %v3178, %v3522
        %v3569 = vadd.f32 %v3179, %v3527
        %v3570 = vadd.f32 %v3180, %v3532
        %v3571 = vadd.f32 %v3181, %v3537
        %v3572 = vld [vmem:[%s2791 + $0x2] sm:$0xff]
        %v3573 = vld [vmem:[%s2791 + $0xa] sm:$0xff]
        %v3574 = vld [vmem:[%s2791 + $0x1a] sm:$0xff]
        %v3575 = vld [vmem:[%s2791 + $0x22] sm:$0xff]
        %v3576 = vld [vmem:[%s2791 + $0x32] sm:$0xff]
        %v3577 = vld [vmem:[%s2791 + $0x3a] sm:$0xff]
        %v3578 = vld [vmem:[%s2791 + $0x4a] sm:$0xff]
        %v3579 = vld [vmem:[%s2791 + $0x52] sm:$0xff]
        %v3580 = vld [vmem:[%s2791 + $0x62] sm:$0xff]
        %v3581 = vld [vmem:[%s2791 + $0x6a] sm:$0xff]
        %v3582 = vld [vmem:[%s2791 + $0x7a] sm:$0xff]
        %v3583 = vld [vmem:[%s2791 + $0x82] sm:$0xff]
        %v3584 = vld [vmem:[%s2791 + $0x92] sm:$0xff]
        %v3585 = vld [vmem:[%s2791 + $0x9a] sm:$0xff]
        %v3586 = vld [vmem:[%s2791 + $0xaa] sm:$0xff]
        %v3587 = vld [vmem:[%s2791 + $0xb2] sm:$0xff]
        %v3588 = vld [vmem:[%s2791 + $0xc2] sm:$0xff]
        %v3589 = vld [vmem:[%s2791 + $0xca] sm:$0xff]
        %v3590 = vld [vmem:[%s2791 + $0xda] sm:$0xff]
        %v3591 = vld [vmem:[%s2791 + $0xe2] sm:$0xff]
        %v3592 = vld [vmem:[%s2791 + $0xf2] sm:$0xff]
        %v3593 = vld [vmem:[%s2791 + $0xfa] sm:$0xff]
        %v3594 = vld [vmem:[%s2791 + $0x10a] sm:$0xff]
        %v3595 = vld [vmem:[%s2791 + $0x112] sm:$0xff]
        %v3596 = vld [vmem:[%s2791 + $0x122] sm:$0xff]
        %v3597 = vld [vmem:[%s2791 + $0x12a] sm:$0xff]
        %v3598 = vld [vmem:[%s2791 + $0x13a] sm:$0xff]
        %v3599 = vld [vmem:[%s2791 + $0x142] sm:$0xff]
        %v3600 = vld [vmem:[%s2791 + $0x152] sm:$0xff]
        %v3601 = vld [vmem:[%s2791 + $0x15a] sm:$0xff]
        %v3602 = vld [vmem:[%s2791 + $0x16a] sm:$0xff]
        %v3603 = vld [vmem:[%s2791 + $0x172] sm:$0xff]
        %s3604 = scalar_lea.vmem [#allocation6], 32
        %v3605 = vld [vmem:[%s3604] sm:$0xf]
        %v3607 = vsel %vm436, %v3572, 0
        %v3610 = vsel %vm436, %v3573, 0
        %v3613 = vsel %vm436, %v3574, 0
        %v3616 = vsel %vm436, %v3575, 0
        %v3619 = vsel %vm436, %v3576, 0
        %v3622 = vsel %vm436, %v3577, 0
        %v3625 = vsel %vm436, %v3578, 0
        %v3628 = vsel %vm436, %v3579, 0
        %v3631 = vsel %vm436, %v3580, 0
        %v3634 = vsel %vm436, %v3581, 0
        %v3637 = vsel %vm436, %v3582, 0
        %v3640 = vsel %vm436, %v3583, 0
        %v3643 = vsel %vm436, %v3584, 0
        %v3646 = vsel %vm436, %v3585, 0
        %v3649 = vsel %vm436, %v3586, 0
        %v3652 = vsel %vm436, %v3587, 0
        %v3655 = vsel %vm436, %v3588, 0
        %v3658 = vsel %vm436, %v3589, 0
        %v3661 = vsel %vm436, %v3590, 0
        %v3664 = vsel %vm436, %v3591, 0
        %v3667 = vsel %vm436, %v3592, 0
        %v3670 = vsel %vm436, %v3593, 0
        %v3673 = vsel %vm436, %v3594, 0
        %v3676 = vsel %vm436, %v3595, 0
        %v3679 = vsel %vm436, %v3596, 0
        %v3682 = vsel %vm436, %v3597, 0
        %v3685 = vsel %vm436, %v3598, 0
        %v3688 = vsel %vm436, %v3599, 0
        %v3691 = vsel %vm436, %v3600, 0
        %v3694 = vsel %vm436, %v3601, 0
        %v3697 = vsel %vm436, %v3602, 0
        %v3700 = vsel %vm436, %v3603, 0
        %v3703 = vsel %vm678, %v3605, 0
        %3705 = vmatprep.subr.mxu0 0.0
        %3706 = vmatpush1.msra.mxu0 %v3703
        %3707 = vmatprep.subr.mxu0 0.0
        %3708 = vmatpush1.msra.mxu0 0.0
        %3709 = vmatprep.subr.mxu0 0.0
        %3710 = vmatpush1.msra.mxu0 0.0
        %3711 = vmatprep.subr.mxu0 0.0
        %3712 = vmatpush1.msra.mxu0 0.0
        %3713 = vmatprep.subr.mxu0 0.0
        %3714 = vmatpush1.msra.mxu0 0.0
        %3715 = vmatprep.subr.mxu0 0.0
        %3716 = vmatpush1.msra.mxu0 0.0
        %3717 = vmatprep.subr.mxu0 0.0
        %3718 = vmatpush1.msra.mxu0 0.0
        %3719 = vmatprep.subr.mxu0 0.0
        %3720 = vmatpush1.msra.mxu0 0.0
        %3721 = vmatprep.subr.mxu0 0.0
        %3722 = vmatpush1.msra.mxu0 0.0
        %3723 = vmatprep.subr.mxu0 0.0
        %3724 = vmatpush1.msra.mxu0 0.0
        %3725 = vmatprep.subr.mxu0 0.0
        %3726 = vmatpush1.msra.mxu0 0.0
        %3727 = vmatprep.subr.mxu0 0.0
        %3728 = vmatpush1.msra.mxu0 0.0
        %3729 = vmatprep.subr.mxu0 0.0
        %3730 = vmatpush1.msra.mxu0 0.0
        %3731 = vmatprep.subr.mxu0 0.0
        %3732 = vmatpush1.msra.mxu0 0.0
        %3733 = vmatprep.subr.mxu0 0.0
        %3734 = vmatpush1.msra.mxu0 0.0
        %3735 = vmatprep.subr.mxu0 0.0
        %3736 = vmatpush1.msra.mxu0 0.0
        %3737 = vmatprep.subr.mxu0 0.0
        %3738 = vmatpush1.msra.mxu0 0.0
        %3739 = vmatprep.subr.mxu0 0.0
        %3740 = vmatpush1.msra.mxu0 0.0
        %3741 = vmatprep.subr.mxu0 0.0
        %3742 = vmatpush1.msra.mxu0 0.0
        %3743 = vmatprep.subr.mxu0 0.0
        %3744 = vmatpush1.msra.mxu0 0.0
        %3745 = vmatprep.subr.mxu0 0.0
        %3746 = vmatpush1.msra.mxu0 0.0
        %3747 = vmatprep.subr.mxu0 0.0
        %3748 = vmatpush1.msra.mxu0 0.0
        %3749 = vmatprep.subr.mxu0 0.0
        %3750 = vmatpush1.msra.mxu0 0.0
        %3751 = vmatprep.subr.mxu0 0.0
        %3752 = vmatpush1.msra.mxu0 0.0
        %3753 = vmatprep.subr.mxu0 0.0
        %3754 = vmatpush1.msra.mxu0 0.0
        %3755 = vmatprep.subr.mxu0 0.0
        %3756 = vmatpush1.msra.mxu0 0.0
        %3757 = vmatprep.subr.mxu0 0.0
        %3758 = vmatpush1.msra.mxu0 0.0
        %3759 = vmatprep.subr.mxu0 0.0
        %3760 = vmatpush1.msra.mxu0 0.0
        %3761 = vmatprep.subr.mxu0 0.0
        %3762 = vmatpush1.msra.mxu0 0.0
        %3763 = vmatprep.subr.mxu0 0.0
        %3764 = vmatpush1.msra.mxu0 0.0
        %3765 = vmatprep.subr.mxu0 0.0
        %3766 = vmatpush1.msra.mxu0 0.0
        %3767 = vmatprep.subr.mxu0 0.0
        %3768 = vmatpush1.msra.mxu0 0.0
        %3769 = vmatprep.mubr.f32.mxu0 0.0
        %3770 = vmatmul.mubr.f32.gmra.mrb[0].mxu0 %v3607
        %v3771 = vpop.f32.mrb[0].mxu0
        %v3772 = vadd.f32 0.0, %v3771
        %v3773 = vpop.f32.mrb[0].mxu0
        %3774 = vmatprep.mubr.f32.mxu0 0.0
        %3775 = vmatmul.mubr.f32.gmra.mrb[0].mxu0 %v3610
        %v3776 = vpop.f32.mrb[0].mxu0
        %v3777 = vadd.f32 0.0, %v3776
        %v3778 = vpop.f32.mrb[0].mxu0
        %3779 = vmatprep.mubr.f32.mxu0 0.0
        %3780 = vmatmul.mubr.f32.gmra.mrb[0].mxu0 %v3613
        %v3781 = vpop.f32.mrb[0].mxu0
        %v3782 = vadd.f32 0.0, %v3781
        %v3783 = vpop.f32.mrb[0].mxu0
        %3784 = vmatprep.mubr.f32.mxu0 0.0
        %3785 = vmatmul.mubr.f32.gmra.mrb[0].mxu0 %v3616
        %v3786 = vpop.f32.mrb[0].mxu0
        %v3787 = vadd.f32 0.0, %v3786
        %v3788 = vpop.f32.mrb[0].mxu0
        %3789 = vmatprep.mubr.f32.mxu0 0.0
        %3790 = vmatmul.mubr.f32.gmra.mrb[0].mxu0 %v3619
        %v3791 = vpop.f32.mrb[0].mxu0
        %v3792 = vadd.f32 0.0, %v3791
        %v3793 = vpop.f32.mrb[0].mxu0
        %3794 = vmatprep.mubr.f32.mxu0 0.0
        %3795 = vmatmul.mubr.f32.gmra.mrb[0].mxu0 %v3622
        %v3796 = vpop.f32.mrb[0].mxu0
        %v3797 = vadd.f32 0.0, %v3796
        %v3798 = vpop.f32.mrb[0].mxu0
        %3799 = vmatprep.mubr.f32.mxu0 0.0
        %3800 = vmatmul.mubr.f32.gmra.mrb[0].mxu0 %v3625
        %v3801 = vpop.f32.mrb[0].mxu0
        %v3802 = vadd.f32 0.0, %v3801
        %v3803 = vpop.f32.mrb[0].mxu0
        %3804 = vmatprep.mubr.f32.mxu0 0.0
        %3805 = vmatmul.mubr.f32.gmra.mrb[0].mxu0 %v3628
        %v3806 = vpop.f32.mrb[0].mxu0
        %v3807 = vadd.f32 0.0, %v3806
        %v3808 = vpop.f32.mrb[0].mxu0
        %3809 = vmatprep.mubr.f32.mxu0 0.0
        %3810 = vmatmul.mubr.f32.gmra.mrb[0].mxu0 %v3631
        %v3811 = vpop.f32.mrb[0].mxu0
        %v3812 = vadd.f32 0.0, %v3811
        %v3813 = vpop.f32.mrb[0].mxu0
        %3814 = vmatprep.mubr.f32.mxu0 0.0
        %3815 = vmatmul.mubr.f32.gmra.mrb[0].mxu0 %v3634
        %v3816 = vpop.f32.mrb[0].mxu0
        %v3817 = vadd.f32 0.0, %v3816
        %v3818 = vpop.f32.mrb[0].mxu0
        %3819 = vmatprep.mubr.f32.mxu0 0.0
        %3820 = vmatmul.mubr.f32.gmra.mrb[0].mxu0 %v3637
        %v3821 = vpop.f32.mrb[0].mxu0
        %v3822 = vadd.f32 0.0, %v3821
        %v3823 = vpop.f32.mrb[0].mxu0
        %3824 = vmatprep.mubr.f32.mxu0 0.0
        %3825 = vmatmul.mubr.f32.gmra.mrb[0].mxu0 %v3640
        %v3826 = vpop.f32.mrb[0].mxu0
        %v3827 = vadd.f32 0.0, %v3826
        %v3828 = vpop.f32.mrb[0].mxu0
        %3829 = vmatprep.mubr.f32.mxu0 0.0
        %3830 = vmatmul.mubr.f32.gmra.mrb[0].mxu0 %v3643
        %v3831 = vpop.f32.mrb[0].mxu0
        %v3832 = vadd.f32 0.0, %v3831
        %v3833 = vpop.f32.mrb[0].mxu0
        %3834 = vmatprep.mubr.f32.mxu0 0.0
        %3835 = vmatmul.mubr.f32.gmra.mrb[0].mxu0 %v3646
        %v3836 = vpop.f32.mrb[0].mxu0
        %v3837 = vadd.f32 0.0, %v3836
        %v3838 = vpop.f32.mrb[0].mxu0
        %3839 = vmatprep.mubr.f32.mxu0 0.0
        %3840 = vmatmul.mubr.f32.gmra.mrb[0].mxu0 %v3649
        %v3841 = vpop.f32.mrb[0].mxu0
        %v3842 = vadd.f32 0.0, %v3841
        %v3843 = vpop.f32.mrb[0].mxu0
        %3844 = vmatprep.mubr.f32.mxu0 0.0
        %3845 = vmatmul.mubr.f32.gmra.mrb[0].mxu0 %v3652
        %v3846 = vpop.f32.mrb[0].mxu0
        %v3847 = vadd.f32 0.0, %v3846
        %v3848 = vpop.f32.mrb[0].mxu0
        %3849 = vmatprep.mubr.f32.mxu0 0.0
        %3850 = vmatmul.mubr.f32.gmra.mrb[0].mxu0 %v3655
        %v3851 = vpop.f32.mrb[0].mxu0
        %v3852 = vadd.f32 0.0, %v3851
        %v3853 = vpop.f32.mrb[0].mxu0
        %3854 = vmatprep.mubr.f32.mxu0 0.0
        %3855 = vmatmul.mubr.f32.gmra.mrb[0].mxu0 %v3658
        %v3856 = vpop.f32.mrb[0].mxu0
        %v3857 = vadd.f32 0.0, %v3856
        %v3858 = vpop.f32.mrb[0].mxu0
        %3859 = vmatprep.mubr.f32.mxu0 0.0
        %3860 = vmatmul.mubr.f32.gmra.mrb[0].mxu0 %v3661
        %v3861 = vpop.f32.mrb[0].mxu0
        %v3862 = vadd.f32 0.0, %v3861
        %v3863 = vpop.f32.mrb[0].mxu0
        %3864 = vmatprep.mubr.f32.mxu0 0.0
        %3865 = vmatmul.mubr.f32.gmra.mrb[0].mxu0 %v3664
        %v3866 = vpop.f32.mrb[0].mxu0
        %v3867 = vadd.f32 0.0, %v3866
        %v3868 = vpop.f32.mrb[0].mxu0
        %3869 = vmatprep.mubr.f32.mxu0 0.0
        %3870 = vmatmul.mubr.f32.gmra.mrb[0].mxu0 %v3667
        %v3871 = vpop.f32.mrb[0].mxu0
        %v3872 = vadd.f32 0.0, %v3871
        %v3873 = vpop.f32.mrb[0].mxu0
        %3874 = vmatprep.mubr.f32.mxu0 0.0
        %3875 = vmatmul.mubr.f32.gmra.mrb[0].mxu0 %v3670
        %v3876 = vpop.f32.mrb[0].mxu0
        %v3877 = vadd.f32 0.0, %v3876
        %v3878 = vpop.f32.mrb[0].mxu0
        %3879 = vmatprep.mubr.f32.mxu0 0.0
        %3880 = vmatmul.mubr.f32.gmra.mrb[0].mxu0 %v3673
        %v3881 = vpop.f32.mrb[0].mxu0
        %v3882 = vadd.f32 0.0, %v3881
        %v3883 = vpop.f32.mrb[0].mxu0
        %3884 = vmatprep.mubr.f32.mxu0 0.0
        %3885 = vmatmul.mubr.f32.gmra.mrb[0].mxu0 %v3676
        %v3886 = vpop.f32.mrb[0].mxu0
        %v3887 = vadd.f32 0.0, %v3886
        %v3888 = vpop.f32.mrb[0].mxu0
        %3889 = vmatprep.mubr.f32.mxu0 0.0
        %3890 = vmatmul.mubr.f32.gmra.mrb[0].mxu0 %v3679
        %v3891 = vpop.f32.mrb[0].mxu0
        %v3892 = vadd.f32 0.0, %v3891
        %v3893 = vpop.f32.mrb[0].mxu0
        %3894 = vmatprep.mubr.f32.mxu0 0.0
        %3895 = vmatmul.mubr.f32.gmra.mrb[0].mxu0 %v3682
        %v3896 = vpop.f32.mrb[0].mxu0
        %v3897 = vadd.f32 0.0, %v3896
        %v3898 = vpop.f32.mrb[0].mxu0
        %3899 = vmatprep.mubr.f32.mxu0 0.0
        %3900 = vmatmul.mubr.f32.gmra.mrb[0].mxu0 %v3685
        %v3901 = vpop.f32.mrb[0].mxu0
        %v3902 = vadd.f32 0.0, %v3901
        %v3903 = vpop.f32.mrb[0].mxu0
        %3904 = vmatprep.mubr.f32.mxu0 0.0
        %3905 = vmatmul.mubr.f32.gmra.mrb[0].mxu0 %v3688
        %v3906 = vpop.f32.mrb[0].mxu0
        %v3907 = vadd.f32 0.0, %v3906
        %v3908 = vpop.f32.mrb[0].mxu0
        %3909 = vmatprep.mubr.f32.mxu0 0.0
        %3910 = vmatmul.mubr.f32.gmra.mrb[0].mxu0 %v3691
        %v3911 = vpop.f32.mrb[0].mxu0
        %v3912 = vadd.f32 0.0, %v3911
        %v3913 = vpop.f32.mrb[0].mxu0
        %3914 = vmatprep.mubr.f32.mxu0 0.0
        %3915 = vmatmul.mubr.f32.gmra.mrb[0].mxu0 %v3694
        %v3916 = vpop.f32.mrb[0].mxu0
        %v3917 = vadd.f32 0.0, %v3916
        %v3918 = vpop.f32.mrb[0].mxu0
        %3919 = vmatprep.mubr.f32.mxu0 0.0
        %3920 = vmatmul.mubr.f32.gmra.mrb[0].mxu0 %v3697
        %v3921 = vpop.f32.mrb[0].mxu0
        %v3922 = vadd.f32 0.0, %v3921
        %v3923 = vpop.f32.mrb[0].mxu0
        %3924 = vmatprep.mubr.f32.mxu0 0.0
        %3925 = vmatmul.mubr.f32.gmra.mrb[0].mxu0 %v3700
        %v3926 = vpop.f32.mrb[0].mxu0
        %v3927 = vadd.f32 0.0, %v3926
        %v3928 = vpop.f32.mrb[0].mxu0
        %3929 = vdwg.mxu0
        %v3930 = vadd.f32 %v3540, %v3772
        %v3931 = vadd.f32 %v3541, %v3777
        %v3932 = vadd.f32 %v3542, %v3782
        %v3933 = vadd.f32 %v3543, %v3787
        %v3934 = vadd.f32 %v3544, %v3792
        %v3935 = vadd.f32 %v3545, %v3797
        %v3936 = vadd.f32 %v3546, %v3802
        %v3937 = vadd.f32 %v3547, %v3807
        %v3938 = vadd.f32 %v3548, %v3812
        %v3939 = vadd.f32 %v3549, %v3817
        %v3940 = vadd.f32 %v3550, %v3822
        %v3941 = vadd.f32 %v3551, %v3827
        %v3942 = vadd.f32 %v3552, %v3832
        %v3943 = vadd.f32 %v3553, %v3837
        %v3944 = vadd.f32 %v3554, %v3842
        %v3945 = vadd.f32 %v3555, %v3847
        %v3946 = vadd.f32 %v3556, %v3852
        %v3947 = vadd.f32 %v3557, %v3857
        %v3948 = vadd.f32 %v3558, %v3862
        %v3949 = vadd.f32 %v3559, %v3867
        %v3950 = vadd.f32 %v3560, %v3872
        %v3951 = vadd.f32 %v3561, %v3877
        %v3952 = vadd.f32 %v3562, %v3882
        %v3953 = vadd.f32 %v3563, %v3887
        %v3954 = vadd.f32 %v3564, %v3892
        %v3955 = vadd.f32 %v3565, %v3897
        %v3956 = vadd.f32 %v3566, %v3902
        %v3957 = vadd.f32 %v3567, %v3907
        %v3958 = vadd.f32 %v3568, %v3912
        %v3959 = vadd.f32 %v3569, %v3917
        %v3960 = vadd.f32 %v3570, %v3922
        %v3961 = vadd.f32 %v3571, %v3927
        %3962 = vst.msk [vmem:[%s286] sm:$0xff] %vm436, %v3930
        %3963 = vst.msk [vmem:[%s286 + $0x8] sm:$0xff] %vm436, %v3931
        %3964 = vst.msk [vmem:[%s286 + $0x10] sm:$0xff] %vm436, %v3932
        %3965 = vst.msk [vmem:[%s286 + $0x18] sm:$0xff] %vm436, %v3933
        %3966 = vst.msk [vmem:[%s286 + $0x20] sm:$0xff] %vm436, %v3934
        %3967 = vst.msk [vmem:[%s286 + $0x28] sm:$0xff] %vm436, %v3935
        %3968 = vst.msk [vmem:[%s286 + $0x30] sm:$0xff] %vm436, %v3936
        %3969 = vst.msk [vmem:[%s286 + $0x38] sm:$0xff] %vm436, %v3937
        %3970 = vst.msk [vmem:[%s286 + $0x40] sm:$0xff] %vm436, %v3938
        %3971 = vst.msk [vmem:[%s286 + $0x48] sm:$0xff] %vm436, %v3939
        %3972 = vst.msk [vmem:[%s286 + $0x50] sm:$0xff] %vm436, %v3940
        %3973 = vst.msk [vmem:[%s286 + $0x58] sm:$0xff] %vm436, %v3941
        %3974 = vst.msk [vmem:[%s286 + $0x60] sm:$0xff] %vm436, %v3942
        %3975 = vst.msk [vmem:[%s286 + $0x68] sm:$0xff] %vm436, %v3943
        %3976 = vst.msk [vmem:[%s286 + $0x70] sm:$0xff] %vm436, %v3944
        %3977 = vst.msk [vmem:[%s286 + $0x78] sm:$0xff] %vm436, %v3945
        %3978 = vst.msk [vmem:[%s286 + $0x80] sm:$0xff] %vm436, %v3946
        %3979 = vst.msk [vmem:[%s286 + $0x88] sm:$0xff] %vm436, %v3947
        %3980 = vst.msk [vmem:[%s286 + $0x90] sm:$0xff] %vm436, %v3948
        %3981 = vst.msk [vmem:[%s286 + $0x98] sm:$0xff] %vm436, %v3949
        %3982 = vst.msk [vmem:[%s286 + $0xa0] sm:$0xff] %vm436, %v3950
        %3983 = vst.msk [vmem:[%s286 + $0xa8] sm:$0xff] %vm436, %v3951
        %3984 = vst.msk [vmem:[%s286 + $0xb0] sm:$0xff] %vm436, %v3952
        %3985 = vst.msk [vmem:[%s286 + $0xb8] sm:$0xff] %vm436, %v3953
        %3986 = vst.msk [vmem:[%s286 + $0xc0] sm:$0xff] %vm436, %v3954
        %3987 = vst.msk [vmem:[%s286 + $0xc8] sm:$0xff] %vm436, %v3955
        %3988 = vst.msk [vmem:[%s286 + $0xd0] sm:$0xff] %vm436, %v3956
        %3989 = vst.msk [vmem:[%s286 + $0xd8] sm:$0xff] %vm436, %v3957
        %3990 = vst.msk [vmem:[%s286 + $0xe0] sm:$0xff] %vm436, %v3958
        %3991 = vst.msk [vmem:[%s286 + $0xe8] sm:$0xff] %vm436, %v3959
        %3992 = vst.msk [vmem:[%s286 + $0xf0] sm:$0xff] %vm436, %v3960
        %3993 = vst.msk [vmem:[%s286 + $0xf8] sm:$0xff] %vm436, %v3961
        %v3994 = vsel %vm436, %v3930, 0.0
        %v3995 = vsel %vm436, %v3931, 0.0
        %v3996 = vadd.f32 %v3994, %v3995
        %v3997 = vsel %vm436, %v3932, 0.0
        %v3998 = vadd.f32 %v3996, %v3997
        %v3999 = vsel %vm436, %v3933, 0.0
        %v4000 = vadd.f32 %v3998, %v3999
        %v4001 = vsel %vm436, %v3934, 0.0
        %v4002 = vadd.f32 %v4000, %v4001
        %v4003 = vsel %vm436, %v3935, 0.0
        %v4004 = vadd.f32 %v4002, %v4003
        %v4005 = vsel %vm436, %v3936, 0.0
        %v4006 = vadd.f32 %v4004, %v4005
        %v4007 = vsel %vm436, %v3937, 0.0
        %v4008 = vadd.f32 %v4006, %v4007
        %v4009 = vsel %vm436, %v3938, 0.0
        %v4010 = vadd.f32 %v4008, %v4009
        %v4011 = vsel %vm436, %v3939, 0.0
        %v4012 = vadd.f32 %v4010, %v4011
        %v4013 = vsel %vm436, %v3940, 0.0
        %v4014 = vadd.f32 %v4012, %v4013
        %v4015 = vsel %vm436, %v3941, 0.0
        %v4016 = vadd.f32 %v4014, %v4015
        %v4017 = vsel %vm436, %v3942, 0.0
        %v4018 = vadd.f32 %v4016, %v4017
        %v4019 = vsel %vm436, %v3943, 0.0
        %v4020 = vadd.f32 %v4018, %v4019
        %v4021 = vsel %vm436, %v3944, 0.0
        %v4022 = vadd.f32 %v4020, %v4021
        %v4023 = vsel %vm436, %v3945, 0.0
        %v4024 = vadd.f32 %v4022, %v4023
        %v4025 = vsel %vm436, %v3946, 0.0
        %v4026 = vadd.f32 %v4024, %v4025
        %v4027 = vsel %vm436, %v3947, 0.0
        %v4028 = vadd.f32 %v4026, %v4027
        %v4029 = vsel %vm436, %v3948, 0.0
        %v4030 = vadd.f32 %v4028, %v4029
        %v4031 = vsel %vm436, %v3949, 0.0
        %v4032 = vadd.f32 %v4030, %v4031
        %v4033 = vsel %vm436, %v3950, 0.0
        %v4034 = vadd.f32 %v4032, %v4033
        %v4035 = vsel %vm436, %v3951, 0.0
        %v4036 = vadd.f32 %v4034, %v4035
        %v4037 = vsel %vm436, %v3952, 0.0
        %v4038 = vadd.f32 %v4036, %v4037
        %v4039 = vsel %vm436, %v3953, 0.0
        %v4040 = vadd.f32 %v4038, %v4039
        %v4041 = vsel %vm436, %v3954, 0.0
        %v4042 = vadd.f32 %v4040, %v4041
        %v4043 = vsel %vm436, %v3955, 0.0
        %v4044 = vadd.f32 %v4042, %v4043
        %v4045 = vsel %vm436, %v3956, 0.0
        %v4046 = vadd.f32 %v4044, %v4045
        %v4047 = vsel %vm436, %v3957, 0.0
        %v4048 = vadd.f32 %v4046, %v4047
        %v4049 = vsel %vm436, %v3958, 0.0
        %v4050 = vadd.f32 %v4048, %v4049
        %v4051 = vsel %vm436, %v3959, 0.0
        %v4052 = vadd.f32 %v4050, %v4051
        %v4053 = vsel %vm436, %v3960, 0.0
        %v4054 = vadd.f32 %v4052, %v4053
        %v4055 = vsel %vm436, %v3961, 0.0
        %v4056 = vadd.f32 %v4054, %v4055
        %v4057 = vrot.slane %v4056, 4
        %v4058 = vadd.f32 %v4056, %v4057
        %v4059 = vrot.slane %v4058, 2
        %v4060 = vadd.f32 %v4058, %v4059
        %v4061 = vrot.slane %v4060, 1
        %v4062 = vadd.f32 %v4060, %v4061
        %4063 = vst.msk [vmem:[%s293] sm:$0x1] %vm445, %v4062
        %v4064 = vmul.f32 %v3930, %v3930
        %v4065 = vmul.f32 %v3931, %v3931
        %v4066 = vmul.f32 %v3932, %v3932
        %v4067 = vmul.f32 %v3933, %v3933
        %v4068 = vmul.f32 %v3934, %v3934
        %v4069 = vmul.f32 %v3935, %v3935
        %v4070 = vmul.f32 %v3936, %v3936
        %v4071 = vmul.f32 %v3937, %v3937
        %v4072 = vmul.f32 %v3938, %v3938
        %v4073 = vmul.f32 %v3939, %v3939
        %v4074 = vmul.f32 %v3940, %v3940
        %v4075 = vmul.f32 %v3941, %v3941
        %v4076 = vmul.f32 %v3942, %v3942
        %v4077 = vmul.f32 %v3943, %v3943
        %v4078 = vmul.f32 %v3944, %v3944
        %v4079 = vmul.f32 %v3945, %v3945
        %v4080 = vmul.f32 %v3946, %v3946
        %v4081 = vmul.f32 %v3947, %v3947
        %v4082 = vmul.f32 %v3948, %v3948
        %v4083 = vmul.f32 %v3949, %v3949
        %v4084 = vmul.f32 %v3950, %v3950
        %v4085 = vmul.f32 %v3951, %v3951
        %v4086 = vmul.f32 %v3952, %v3952
        %v4087 = vmul.f32 %v3953, %v3953
        %v4088 = vmul.f32 %v3954, %v3954
        %v4089 = vmul.f32 %v3955, %v3955
        %v4090 = vmul.f32 %v3956, %v3956
        %v4091 = vmul.f32 %v3957, %v3957
        %v4092 = vmul.f32 %v3958, %v3958
        %v4093 = vmul.f32 %v3959, %v3959
        %v4094 = vmul.f32 %v3960, %v3960
        %v4095 = vmul.f32 %v3961, %v3961
        %v4096 = vsel %vm436, %v4064, 0.0
        %v4097 = vsel %vm436, %v4065, 0.0
        %v4098 = vadd.f32 %v4096, %v4097
        %v4099 = vsel %vm436, %v4066, 0.0
        %v4100 = vadd.f32 %v4098, %v4099
        %v4101 = vsel %vm436, %v4067, 0.0
        %v4102 = vadd.f32 %v4100, %v4101
        %v4103 = vsel %vm436, %v4068, 0.0
        %v4104 = vadd.f32 %v4102, %v4103
        %v4105 = vsel %vm436, %v4069, 0.0
        %v4106 = vadd.f32 %v4104, %v4105
        %v4107 = vsel %vm436, %v4070, 0.0
        %v4108 = vadd.f32 %v4106, %v4107
        %v4109 = vsel %vm436, %v4071, 0.0
        %v4110 = vadd.f32 %v4108, %v4109
        %v4111 = vsel %vm436, %v4072, 0.0
        %v4112 = vadd.f32 %v4110, %v4111
        %v4113 = vsel %vm436, %v4073, 0.0
        %v4114 = vadd.f32 %v4112, %v4113
        %v4115 = vsel %vm436, %v4074, 0.0
        %v4116 = vadd.f32 %v4114, %v4115
        %v4117 = vsel %vm436, %v4075, 0.0
        %v4118 = vadd.f32 %v4116, %v4117
        %v4119 = vsel %vm436, %v4076, 0.0
        %v4120 = vadd.f32 %v4118, %v4119
        %v4121 = vsel %vm436, %v4077, 0.0
        %v4122 = vadd.f32 %v4120, %v4121
        %v4123 = vsel %vm436, %v4078, 0.0
        %v4124 = vadd.f32 %v4122, %v4123
        %v4125 = vsel %vm436, %v4079, 0.0
        %v4126 = vadd.f32 %v4124, %v4125
        %v4127 = vsel %vm436, %v4080, 0.0
        %v4128 = vadd.f32 %v4126, %v4127
        %v4129 = vsel %vm436, %v4081, 0.0
        %v4130 = vadd.f32 %v4128, %v4129
        %v4131 = vsel %vm436, %v4082, 0.0
        %v4132 = vadd.f32 %v4130, %v4131
        %v4133 = vsel %vm436, %v4083, 0.0
        %v4134 = vadd.f32 %v4132, %v4133
        %v4135 = vsel %vm436, %v4084, 0.0
        %v4136 = vadd.f32 %v4134, %v4135
        %v4137 = vsel %vm436, %v4085, 0.0
        %v4138 = vadd.f32 %v4136, %v4137
        %v4139 = vsel %vm436, %v4086, 0.0
        %v4140 = vadd.f32 %v4138, %v4139
        %v4141 = vsel %vm436, %v4087, 0.0
        %v4142 = vadd.f32 %v4140, %v4141
        %v4143 = vsel %vm436, %v4088, 0.0
        %v4144 = vadd.f32 %v4142, %v4143
        %v4145 = vsel %vm436, %v4089, 0.0
        %v4146 = vadd.f32 %v4144, %v4145
        %v4147 = vsel %vm436, %v4090, 0.0
        %v4148 = vadd.f32 %v4146, %v4147
        %v4149 = vsel %vm436, %v4091, 0.0
        %v4150 = vadd.f32 %v4148, %v4149
        %v4151 = vsel %vm436, %v4092, 0.0
        %v4152 = vadd.f32 %v4150, %v4151
        %v4153 = vsel %vm436, %v4093, 0.0
        %v4154 = vadd.f32 %v4152, %v4153
        %v4155 = vsel %vm436, %v4094, 0.0
        %v4156 = vadd.f32 %v4154, %v4155
        %v4157 = vsel %vm436, %v4095, 0.0
        %v4158 = vadd.f32 %v4156, %v4157
        %v4159 = vrot.slane %v4158, 4
        %v4160 = vadd.f32 %v4158, %v4159
        %v4161 = vrot.slane %v4160, 2
        %v4162 = vadd.f32 %v4160, %v4161
        %v4163 = vrot.slane %v4162, 1
        %v4164 = vadd.f32 %v4162, %v4163
        %4165 = vst.msk [vmem:[%s293 + $0x1] sm:$0x1] %vm445, %v4164
        %s4166 = sand.u32 %s125, 1
        %s4167 = scalar_lea.sflag [#allocation5], %s4166
        %s4168 = sand.u32 %s125, 1
        %s4169 = smul.addr %s4168, 256
        %s4170 = scalar_lea.vmem [#allocation11], %s4169
        %s4171 = sand.u32 %s151, 1
        %s4172 = scalar_lea.sflag [#allocation13], %s4171
        %s4173 = sand.u32 %s151, 1
        %s4174 = smul.addr %s4173, 2
        %s4175 = scalar_lea.vmem [#allocation12], %s4174
        // Predicated region
        $region53: #{basic_block_forward.4} parent=35 // pred_check
          %p4176 = pneg %p135
        $region54: #{basic_block_forward.4} parent=35 // pred_check_branch
          %4178 = sbr.rel (%p4176) target = $region56
        $region55: #{basic_block_forward.4} parent=35 // pred_region
          %s4180 = ssub.s32 4096, 4096
          %4181 = vsyncadd %s4167, %s4180
          %s4182 = smul.addr %s28, 32
          %s4183 = smul.addr %s4182, 128
          %s4184 = scalar_lea.hbm %s4, %s4183
          %s4185 = sshll.u32 %s4170, 4
          %s4186 = int_to_ptr.vmem [resolvable:$true] %s4185
          %4191 = dma.vmem_to_hbm [thread:$0]  %s4186, 4096, %s4184, %s4167, 128, 128, 8
        $region56: #{basic_block_forward.4} parent=35 // pred_fallthru
          _
        // Predicated region
        $region57: #{basic_block_forward.4} parent=35 // pred_check
          %p4192 = pneg %p161
        $region58: #{basic_block_forward.4} parent=35 // pred_check_branch
          %4194 = sbr.rel (%p4192) target = $region60
        $region59: #{basic_block_forward.4} parent=35 // pred_region
          %s4196 = ssub.s32 32, 32
          %4197 = vsyncadd %s4172, %s4196
          %s4198 = smul.addr %s28, 32
          %s4199 = scalar_lea.hbm %s5, %s4198
          %s4201 = sshll.u32 %s4175, 4
          %s4202 = int_to_ptr.vmem [resolvable:$true] %s4201
          %4204 = dma.vmem_to_hbm [thread:$0]  %s4202, 32, %s4199, %s4172
        $region60: #{basic_block_forward.4} parent=35 // pred_fallthru
          _
      $region36: #{basic_block_forward.4} parent=5 // pred_fallthru
        _
      %p4205 = scmp.le.s32.totalorder 2, %s23
      // Predicated region
      $region61: #{basic_block_forward.4} parent=5 // pred_check
        %p4206 = pneg %p4205
      $region62: #{basic_block_forward.4} parent=5 // pred_check_branch
        %4208 = sbr.rel (%p4206) target = $region64
      $region63: #{basic_block_forward.4} parent=5 // pred_region
        %s4209 = ssub.s32 %s23, 2
        // Predicated region
        $region65: #{basic_block_forward.4} parent=63 // pred_check
          %p4210 = pneg %p141
        $region66: #{basic_block_forward.4} parent=63 // pred_check_branch
          %4212 = sbr.rel (%p4210) target = $region68
        $region67: #{basic_block_forward.4} parent=63 // pred_region
          %s4213 = sand.u32 %s126, 1
          %s4214 = scalar_lea.sflag [#allocation5], %s4213
          %s4215 = sand.u32 %s126, 1
          %s4216 = smul.addr %s4215, 256
          %s4217 = scalar_lea.vmem [#allocation11], %s4216
          %4218 = dma.done %s4214, 4096
        $region68: #{basic_block_forward.4} parent=63 // pred_fallthru
          _
        // Predicated region
        $region69: #{basic_block_forward.4} parent=63 // pred_check
          %p4219 = pneg %p167
        $region70: #{basic_block_forward.4} parent=63 // pred_check_branch
          %4221 = sbr.rel (%p4219) target = $region72
        $region71: #{basic_block_forward.4} parent=63 // pred_region
          %s4222 = sand.u32 %s152, 1
          %s4223 = scalar_lea.sflag [#allocation13], %s4222
          %s4224 = sand.u32 %s152, 1
          %s4225 = smul.addr %s4224, 2
          %s4226 = scalar_lea.vmem [#allocation12], %s4225
          %4227 = dma.done %s4223, 32
        $region72: #{basic_block_forward.4} parent=63 // pred_fallthru
          _
      $region64: #{basic_block_forward.4} parent=5 // pred_fallthru
        _
    $region6: #{basic_block_forward.4} parent=1 // loop_footer
      %s27 = sadd.s32 1, %s23
    $region7: #{basic_block_forward.4} parent=1 // loop_footer_branch
      %22 = sbr.rel target = $region3
    $region8: #{basic_block_forward.4} parent=1 // loop_exit
      _
    %4228 = vsyncpa [#allocation4], 1
    %s4229 = scalar_lea.sflag [#allocation4], 1
    %4230 = vsyncpa %s4229, 1
    %4231 = vsyncpa [#allocation7], 1
    %4232 = vsyncpa [#allocation10], 1
    %4233 = vsyncpa [#allocation5], 1
    %s4234 = scalar_lea.sflag [#allocation5], 1
    %4235 = vsyncpa %s4234, 1
    %4236 = vsyncpa [#allocation13], 1
    %s4237 = scalar_lea.sflag [#allocation13], 1
    %4238 = vsyncpa %s4237, 1

// kernel: basic_block_forward.3
$region0: #{basic_block_forward.3}
  #allocation0 [shape = 'u32[]', space=smem, size = 0x4, offset = 0x4, fixed_abs, tag = 'smem constant byte address 0x4 - core index']
  #allocation1 [shape = 'u32[144,128]{1,0:T(1,128)}', space=vmem, size = 0x12000, scoped, tag = 'internal scratch']
  #allocation2 [shape = 'f32[18,18,4]{2,1,0:T(8,128)}', space=vmem, size = 0x36000, scoped, tag = 'scratch operand']
  %s0 = inlined_call_operand.hbm [shape: f32[2,16,16,4], index: 0, kind: input, shape index: {}]
  %s1 = inlined_call_operand.hbm [shape: f32[3,3,4,4], index: 1, kind: input, shape index: {}]
  %s2 = inlined_call_operand.hbm [shape: f32[1,4], index: 2, kind: input, shape index: {}]
  %s3 = inlined_call_operand.hbm [shape: f32[1,4], index: 3, kind: input, shape index: {}]
  %s4 = inlined_call_operand.hbm [shape: f32[2,16,16,4], index: 4, kind: output, shape index: {0}]
  %s5 = inlined_call_operand.hbm [shape: f32[2,2,4], index: 5, kind: output, shape index: {1}]
  %6 = xla_tuple %s4, %s5
  %s7 = sld [smem:[#allocation0]]
  $region73: #{basic_block_forward.3} parent=0
    _
  %s9 = ssub.s32 1, %s7
  %s10 = scalar_select 0, %s9, %s7
  $region1: #{basic_block_forward.3} parent=0
    #allocation3 [shape = 'u8[262144]{0}', space=vmem, size = 0x40000, scoped, tag = 'input window, operand 0']
    #allocation4 [shape = 's32[2]{0}', space=sflag, size = 0x8, scoped, tag = 'scoped memory for basic_block_forward.3']
    #allocation5 [shape = 's32[2]{0}', space=sflag, size = 0x8, scoped, tag = 'scoped memory for basic_block_forward.3']
    #allocation6 [shape = 'u8[18432]{0}', space=vmem, size = 0x4800, scoped, tag = 'input window, operand 1, single buffered']
    #allocation7 [shape = 's32[1]{0}', space=sflag, size = 0x4, scoped, tag = 'scoped memory for basic_block_forward.3']
    #allocation8 [shape = 'u8[512]{0}', space=vmem, size = 0x400, scoped, tag = 'input window, operand 2, single buffered']
    #allocation9 [shape = 'u8[512]{0}', space=vmem, size = 0x400, scoped, tag = 'input window, operand 3, single buffered']
    #allocation10 [shape = 's32[1]{0}', space=sflag, size = 0x4, scoped, tag = 'scoped memory for basic_block_forward.3']
    #allocation11 [shape = 'u8[262144]{0}', space=vmem, size = 0x40000, scoped, tag = 'output window, operand 0']
    #allocation12 [shape = 'u8[2048]{0}', space=vmem, size = 0x800, scoped, tag = 'output window, operand 1']
    #allocation13 [shape = 's32[2]{0}', space=sflag, size = 0x8, scoped, tag = 'scoped memory for basic_block_forward.3']
    %11 = vsyncpa [#allocation4], 0
    %s12 = scalar_lea.sflag [#allocation4], 1
    %13 = vsyncpa %s12, 0
    %14 = vsyncpa [#allocation7], 0
    %15 = vsyncpa [#allocation10], 0
    %16 = vsyncpa [#allocation5], 0
    %s17 = scalar_lea.sflag [#allocation5], 1
    %18 = vsyncpa %s17, 0
    %19 = vsyncpa [#allocation13], 0
    %s20 = scalar_lea.sflag [#allocation13], 1
    %21 = vsyncpa %s20, 0
    loop: start=0, step=1, limit=4
    $region2: #{basic_block_forward.3} parent=1 // loop_pre_header
      _
    $region3: #{basic_block_forward.3} parent=1 // loop_header
      %s23 = sphi 0, %s27
      %p24 = scmp.ge.s32.totalorder %s23, 4
      %s33 = sphi 0, %s35
      %s36 = sphi 0, %s33
      %s37 = sphi 0, %s36
      %s53 = sphi 0, %s37
      %s57 = sphi 0, %s57
      %s59 = sphi 0, %s57
      %s60 = sphi 0, %s59
      %s74 = sphi 0, %s60
      %s78 = sphi 0, %s78
      %s80 = sphi 0, %s78
      %s81 = sphi 0, %s80
      %s95 = sphi 0, %s81
      %s99 = sphi 0, %s99
      %s101 = sphi 0, %s99
      %s102 = sphi 0, %s101
      %s116 = sphi 0, %s102
      %s122 = sphi 0, %s124
      %s125 = sphi 0, %s122
      %s126 = sphi 0, %s125
      %s142 = sphi 0, %s126
      %s148 = sphi 0, %s150
      %s151 = sphi 0, %s148
      %s152 = sphi 0, %s151
      %s168 = sphi 0, %s152
    $region4: #{basic_block_forward.3} parent=1 // loop_header_branch
      %26 = sbr.rel (%p24) target = $region8
    $region5: #{basic_block_forward.3} parent=1 // loop_body
      %s28 = ssub.s32 %s23, 1
      %s29 = ssub.s32 %s23, 2
      %s30 = sadd.s32 %s23, 1
      %s31 = ssub.s32 %s23, %s30
      %p32 = scmp.eq.s32.totalorder %s31, 0
      %s34 = sadd.s32 %s33, 1
      %s35 = scalar_select %p32, %s33, %s34
      %p38 = pneg %p32
      %p39 = scmp.eq.s32.totalorder %s23, 1
      %p40 = por %p38, %p39
      %p41 = scmp.ne.s32.totalorder %s33, %s36
      %p42 = scmp.eq.s32.totalorder %s23, 0
      %p43 = por %p41, %p42
      %p44 = scmp.ne.s32.totalorder %s33, %s36
      %p45 = scmp.eq.s32.totalorder %s28, 1
      %p46 = por %p44, %p45
      %p47 = scmp.ne.s32.totalorder %s36, %s37
      %p48 = scmp.eq.s32.totalorder %s28, 0
      %p49 = por %p47, %p48
      %p50 = scmp.ne.s32.totalorder %s36, %s37
      %p51 = scmp.eq.s32.totalorder %s29, 1
      %p52 = por %p50, %p51
      %p54 = scmp.ne.s32.totalorder %s37, %s53
      %p55 = scmp.eq.s32.totalorder %s29, 0
      %p56 = por %p54, %p55
      %s58 = sadd.s32 %s57, 1
      %p61 = scmp.eq.s32.totalorder %s23, 1
      %p62 = scmp.ne.s32.totalorder %s57, %s59
      %p63 = scmp.eq.s32.totalorder %s23, 0
      %p64 = por %p62, %p63
      %p65 = scmp.ne.s32.totalorder %s57, %s59
      %p66 = scmp.eq.s32.totalorder %s28, 1
      %p67 = por %p65, %p66
      %p68 = scmp.ne.s32.totalorder %s59, %s60
      %p69 = scmp.eq.s32.totalorder %s28, 0
      %p70 = por %p68, %p69
      %p71 = scmp.ne.s32.totalorder %s59, %s60
      %p72 = scmp.eq.s32.totalorder %s29, 1
      %p73 = por %p71, %p72
      %p75 = scmp.ne.s32.totalorder %s60, %s74
      %p76 = scmp.eq.s32.totalorder %s29, 0
      %p77 = por %p75, %p76
      %s79 = sadd.s32 %s78, 1
      %p82 = scmp.eq.s32.totalorder %s23, 1
      %p83 = scmp.ne.s32.totalorder %s78, %s80
      %p84 = scmp.eq.s32.totalorder %s23, 0
      %p85 = por %p83, %p84
      %p86 = scmp.ne.s32.totalorder %s78, %s80
      %p87 = scmp.eq.s32.totalorder %s28, 1
      %p88 = por %p86, %p87
      %p89 = scmp.ne.s32.totalorder %s80, %s81
      %p90 = scmp.eq.s32.totalorder %s28, 0
      %p91 = por %p89, %p90
      %p92 = scmp.ne.s32.totalorder %s80, %s81
      %p93 = scmp.eq.s32.totalorder %s29, 1
      %p94 = por %p92, %p93
      %p96 = scmp.ne.s32.totalorder %s81, %s95
      %p97 = scmp.eq.s32.totalorder %s29, 0
      %p98 = por %p96, %p97
      %s100 = sadd.s32 %s99, 1
      %p103 = scmp.eq.s32.totalorder %s23, 1
      %p104 = scmp.ne.s32.totalorder %s99, %s101
      %p105 = scmp.eq.s32.totalorder %s23, 0
      %p106 = por %p104, %p105
      %p107 = scmp.ne.s32.totalorder %s99, %s101
      %p108 = scmp.eq.s32.totalorder %s28, 1
      %p109 = por %p107, %p108
      %p110 = scmp.ne.s32.totalorder %s101, %s102
      %p111 = scmp.eq.s32.totalorder %s28, 0
      %p112 = por %p110, %p111
      %p113 = scmp.ne.s32.totalorder %s101, %s102
      %p114 = scmp.eq.s32.totalorder %s29, 1
      %p115 = por %p113, %p114
      %p117 = scmp.ne.s32.totalorder %s102, %s116
      %p118 = scmp.eq.s32.totalorder %s29, 0
      %p119 = por %p117, %p118
      %s120 = ssub.s32 %s23, %s30
      %p121 = scmp.eq.s32.totalorder %s120, 0
      %s123 = sadd.s32 %s122, 1
      %s124 = scalar_select %p121, %s122, %s123
      %p127 = pneg %p121
      %p128 = scmp.eq.s32.totalorder %s23, 1
      %p129 = por %p127, %p128
      %p130 = scmp.ne.s32.totalorder %s122, %s125
      %p131 = scmp.eq.s32.totalorder %s23, 0
      %p132 = por %p130, %p131
      %p133 = scmp.ne.s32.totalorder %s122, %s125
      %p134 = scmp.eq.s32.totalorder %s28, 1
      %p135 = por %p133, %p134
      %p136 = scmp.ne.s32.totalorder %s125, %s126
      %p137 = scmp.eq.s32.totalorder %s28, 0
      %p138 = por %p136, %p137
      %p139 = scmp.ne.s32.totalorder %s125, %s126
      %p140 = scmp.eq.s32.totalorder %s29, 1
      %p141 = por %p139, %p140
      %p143 = scmp.ne.s32.totalorder %s126, %s142
      %p144 = scmp.eq.s32.totalorder %s29, 0
      %p145 = por %p143, %p144
      %s146 = ssub.s32 %s23, %s30
      %p147 = scmp.eq.s32.totalorder %s146, 0
      %s149 = sadd.s32 %s148, 1
      %s150 = scalar_select %p147, %s148, %s149
      %p153 = pneg %p147
      %p154 = scmp.eq.s32.totalorder %s23, 1
      %p155 = por %p153, %p154
      %p156 = scmp.ne.s32.totalorder %s148, %s151
      %p157 = scmp.eq.s32.totalorder %s23, 0
      %p158 = por %p156, %p157
      %p159 = scmp.ne.s32.totalorder %s148, %s151
      %p160 = scmp.eq.s32.totalorder %s28, 1
      %p161 = por %p159, %p160
      %p162 = scmp.ne.s32.totalorder %s151, %s152
      %p163 = scmp.eq.s32.totalorder %s28, 0
      %p164 = por %p162, %p163
      %p165 = scmp.ne.s32.totalorder %s151, %s152
      %p166 = scmp.eq.s32.totalorder %s29, 1
      %p167 = por %p165, %p166
      %p169 = scmp.ne.s32.totalorder %s152, %s168
      %p170 = scmp.eq.s32.totalorder %s29, 0
      %p171 = por %p169, %p170
      %p172 = scmp.le.s32.totalorder 1, %s23
      %p173 = scmp.lt.s32.totalorder %s23, 3
      %p174 = pnand %p172, %p173
      %p175 = pneg %p174
      // Predicated region
      $region9: #{basic_block_forward.3} parent=5 // pred_check
        _
      $region10: #{basic_block_forward.3} parent=5 // pred_check_branch
        %177 = sbr.rel (%p174) target = $region12
      $region11: #{basic_block_forward.3} parent=5 // pred_region
        %s178 = ssub.s32 %s23, 1
        // Predicated region
        $region13: #{basic_block_forward.3} parent=11 // pred_check
          %p179 = pneg %p70
        $region14: #{basic_block_forward.3} parent=11 // pred_check_branch
          %181 = sbr.rel (%p179) target = $region16
        $region15: #{basic_block_forward.3} parent=11 // pred_region
          %s183 = ssub.s32 576, 576
          %184 = vsyncadd [#allocation7], %s183
          %s185 = sshll.u32 [#allocation6], 4
          %s186 = int_to_ptr.vmem [resolvable:$true] %s185
          %191 = dma.hbm_to_vmem [thread:$0]  %s1, 576, %s186, [#allocation7], 64, 64, 4
        $region16: #{basic_block_forward.3} parent=11 // pred_fallthru
          _
        // Predicated region
        $region17: #{basic_block_forward.3} parent=11 // pred_check
          %p192 = pneg %p91
        $region18: #{basic_block_forward.3} parent=11 // pred_check_branch
          %194 = sbr.rel (%p192) target = $region20
        $region19: #{basic_block_forward.3} parent=11 // pred_region
          %s196 = ssub.s32 16, 16
          %197 = vsyncadd [#allocation7], %s196
          %s199 = sshll.u32 [#allocation8], 4
          %s200 = int_to_ptr.vmem [resolvable:$true] %s199
          %202 = dma.hbm_to_vmem [thread:$0]  %s2, 16, %s200, [#allocation7]
        $region20: #{basic_block_forward.3} parent=11 // pred_fallthru
          _
        // Predicated region
        $region21: #{basic_block_forward.3} parent=11 // pred_check
          %p203 = pneg %p112
        $region22: #{basic_block_forward.3} parent=11 // pred_check_branch
          %205 = sbr.rel (%p203) target = $region24
        $region23: #{basic_block_forward.3} parent=11 // pred_region
          %s207 = ssub.s32 16, 16
          %208 = vsyncadd [#allocation10], %s207
          %s210 = sshll.u32 [#allocation9], 4
          %s211 = int_to_ptr.vmem [resolvable:$true] %s210
          %213 = dma.hbm_to_vmem [thread:$0]  %s3, 16, %s211, [#allocation10]
        $region24: #{basic_block_forward.3} parent=11 // pred_fallthru
          _
      $region12: #{basic_block_forward.3} parent=5 // pred_fallthru
        _
      %p214 = scmp.lt.s32.totalorder %s23, 2
      // Predicated region
      $region25: #{basic_block_forward.3} parent=5 // pred_check
        %p215 = pneg %p214
      $region26: #{basic_block_forward.3} parent=5 // pred_check_branch
        %217 = sbr.rel (%p215) target = $region28
      $region27: #{basic_block_forward.3} parent=5 // pred_region
        // Predicated region
        $region29: #{basic_block_forward.3} parent=27 // pred_check
          %p218 = pneg %p43
        $region30: #{basic_block_forward.3} parent=27 // pred_check_branch
          %220 = sbr.rel (%p218) target = $region32
        $region31: #{basic_block_forward.3} parent=27 // pred_region
          %s221 = sand.u32 %s33, 1
          %s222 = scalar_lea.sflag [#allocation4], %s221
          %s223 = sand.u32 %s33, 1
          %s224 = smul.addr %s223, 256
          %s225 = scalar_lea.vmem [#allocation3], %s224
          %s227 = ssub.s32 4096, 4096
          %228 = vsyncadd %s222, %s227
          %s229 = smul.addr %s23, 32
          %s230 = smul.addr %s229, 128
          %s231 = scalar_lea.hbm %s0, %s230
          %s232 = sshll.u32 %s225, 4
          %s233 = int_to_ptr.vmem [resolvable:$true] %s232
          %238 = dma.hbm_to_vmem [thread:$0]  %s231, 4096, %s233, %s222, 128, 128, 8
        $region32: #{basic_block_forward.3} parent=27 // pred_fallthru
          _
      $region28: #{basic_block_forward.3} parent=5 // pred_fallthru
        _
      %p239 = scmp.le.s32.totalorder 1, %s23
      %p240 = scmp.lt.s32.totalorder %s23, 3
      %p241 = pnand %p239, %p240
      %p242 = pneg %p241
      // Predicated region
      $region33: #{basic_block_forward.3} parent=5 // pred_check
        _
      $region34: #{basic_block_forward.3} parent=5 // pred_check_branch
        %244 = sbr.rel (%p241) target = $region36
      $region35: #{basic_block_forward.3} parent=5 // pred_region
        %s245 = ssub.s32 %s23, 1
        %s246 = sand.u32 %s36, 1
        %s247 = scalar_lea.sflag [#allocation4], %s246
        %s248 = sand.u32 %s36, 1
        %s249 = smul.addr %s248, 256
        %s250 = scalar_lea.vmem [#allocation3], %s249
        // Predicated region
        $region37: #{basic_block_forward.3} parent=35 // pred_check
          %p251 = pneg %p49
        $region38: #{basic_block_forward.3} parent=35 // pred_check_branch
          %253 = sbr.rel (%p251) target = $region40
        $region39: #{basic_block_forward.3} parent=35 // pred_region
          %254 = dma.done %s247, 4096
        $region40: #{basic_block_forward.3} parent=35 // pred_fallthru
          _
        // Predicated region
        $region41: #{basic_block_forward.3} parent=35 // pred_check
          %p255 = pneg %p70
        $region42: #{basic_block_forward.3} parent=35 // pred_check_branch
          %257 = sbr.rel (%p255) target = $region44
        $region43: #{basic_block_forward.3} parent=35 // pred_region
          %258 = dma.done [#allocation7], 576
        $region44: #{basic_block_forward.3} parent=35 // pred_fallthru
          _
        // Predicated region
        $region45: #{basic_block_forward.3} parent=35 // pred_check
          %p259 = pneg %p91
        $region46: #{basic_block_forward.3} parent=35 // pred_check_branch
          %261 = sbr.rel (%p259) target = $region48
        $region47: #{basic_block_forward.3} parent=35 // pred_region
          %262 = dma.done [#allocation7], 16
        $region48: #{basic_block_forward.3} parent=35 // pred_fallthru
          _
        // Predicated region
        $region49: #{basic_block_forward.3} parent=35 // pred_check
          %p263 = pneg %p112
        $region50: #{basic_block_forward.3} parent=35 // pred_check_branch
          %265 = sbr.rel (%p263) target = $region52
        $region51: #{basic_block_forward.3} parent=35 // pred_region
          %266 = dma.done [#allocation10], 16
        $region52: #{basic_block_forward.3} parent=35 // pred_fallthru
          _
        %s267 = sand.u32 %s36, 1
        %s268 = scalar_lea.sflag [#allocation4], %s267
        %s269 = sand.u32 %s36, 1
        %s270 = smul.addr %s269, 256
        %s271 = scalar_lea.vmem [#allocation3], %s270
        %p272 = pneg %p49
        %p273 = pneg %p46
        %p274 = pneg %p70
        %p275 = pneg %p67
        %p276 = pneg %p91
        %p277 = pneg %p88
        %p278 = pneg %p112
        %p279 = pneg %p109
        %p280 = pneg %p138
        %p281 = pneg %p135
        %s282 = sand.u32 %s125, 1
        %s283 = scalar_lea.sflag [#allocation5], %s282
        %s284 = sand.u32 %s125, 1
        %s285 = smul.addr %s284, 256
        %s286 = scalar_lea.vmem [#allocation11], %s285
        %p287 = pneg %p164
        %p288 = pneg %p161
        %s289 = sand.u32 %s151, 1
        %s290 = scalar_lea.sflag [#allocation13], %s289
        %s291 = sand.u32 %s151, 1
        %s292 = smul.addr %s291, 2
        %s293 = scalar_lea.vmem [#allocation12], %s292
        %v294 = vld [vmem:[%s250] sm:$0xff]
        %v295 = vld [vmem:[%s250 + $0x8] sm:$0xff]
        %v296 = vld [vmem:[%s250 + $0x10] sm:$0xff]
        %v297 = vld [vmem:[%s250 + $0x18] sm:$0xff]
        %v298 = vld [vmem:[%s250 + $0x20] sm:$0xff]
        %v299 = vld [vmem:[%s250 + $0x28] sm:$0xff]
        %v300 = vld [vmem:[%s250 + $0x30] sm:$0xff]
        %v301 = vld [vmem:[%s250 + $0x38] sm:$0xff]
        %v302 = vld [vmem:[%s250 + $0x40] sm:$0xff]
        %v303 = vld [vmem:[%s250 + $0x48] sm:$0xff]
        %v304 = vld [vmem:[%s250 + $0x50] sm:$0xff]
        %v305 = vld [vmem:[%s250 + $0x58] sm:$0xff]
        %v306 = vld [vmem:[%s250 + $0x60] sm:$0xff]
        %v307 = vld [vmem:[%s250 + $0x68] sm:$0xff]
        %v308 = vld [vmem:[%s250 + $0x70] sm:$0xff]
        %v309 = vld [vmem:[%s250 + $0x78] sm:$0xff]
        %v310 = vld [vmem:[%s250 + $0x80] sm:$0xff]
        %v311 = vld [vmem:[%s250 + $0x88] sm:$0xff]
        %v312 = vld [vmem:[%s250 + $0x90] sm:$0xff]
        %v313 = vld [vmem:[%s250 + $0x98] sm:$0xff]
        %v314 = vld [vmem:[%s250 + $0xa0] sm:$0xff]
        %v315 = vld [vmem:[%s250 + $0xa8] sm:$0xff]
        %v316 = vld [vmem:[%s250 + $0xb0] sm:$0xff]
        %v317 = vld [vmem:[%s250 + $0xb8] sm:$0xff]
        %v318 = vld [vmem:[%s250 + $0xc0] sm:$0xff]
        %v319 = vld [vmem:[%s250 + $0xc8] sm:$0xff]
        %v320 = vld [vmem:[%s250 + $0xd0] sm:$0xff]
        %v321 = vld [vmem:[%s250 + $0xd8] sm:$0xff]
        %v322 = vld [vmem:[%s250 + $0xe0] sm:$0xff]
        %v323 = vld [vmem:[%s250 + $0xe8] sm:$0xff]
        %v324 = vld [vmem:[%s250 + $0xf0] sm:$0xff]
        %v325 = vld [vmem:[%s250 + $0xf8] sm:$0xff]
        %vm326 = vcmask 31744
        %327 = vst.msk [vmem:[#allocation2] sm:$0xff] %vm326, 0.0
        %328 = vst.msk [vmem:[#allocation2 + $0x8] sm:$0xff] %vm326, 0.0
        %vm329 = vcmask 25600
        %330 = vst.msk [vmem:[#allocation2 + $0x10] sm:$0x3] %vm329, 0.0
        %s331 = scalar_lea.vmem [#allocation2], 408
        %332 = vst.msk [vmem:[%s331] sm:$0xff] %vm326, 0.0
        %333 = vst.msk [vmem:[%s331 + $0x8] sm:$0xff] %vm326, 0.0
        %334 = vst.msk [vmem:[%s331 + $0x10] sm:$0x3] %vm329, 0.0
        %vm335 = vcmask 24576
        %336 = vst.msk [vmem:[#allocation2] sm:$0x1] %vm335, 0.0
        %337 = vst.msk [vmem:[#allocation2 + $0x18] sm:$0x1] %vm335, 0.0
        %338 = vst.msk [vmem:[#allocation2 + $0x30] sm:$0x1] %vm335, 0.0
        %339 = vst.msk [vmem:[#allocation2 + $0x48] sm:$0x1] %vm335, 0.0
        %340 = vst.msk [vmem:[#allocation2 + $0x60] sm:$0x1] %vm335, 0.0
        %341 = vst.msk [vmem:[#allocation2 + $0x78] sm:$0x1] %vm335, 0.0
        %342 = vst.msk [vmem:[#allocation2 + $0x90] sm:$0x1] %vm335, 0.0
        %343 = vst.msk [vmem:[#allocation2 + $0xa8] sm:$0x1] %vm335, 0.0
        %344 = vst.msk [vmem:[#allocation2 + $0xc0] sm:$0x1] %vm335, 0.0
        %345 = vst.msk [vmem:[#allocation2 + $0xd8] sm:$0x1] %vm335, 0.0
        %346 = vst.msk [vmem:[#allocation2 + $0xf0] sm:$0x1] %vm335, 0.0
        %347 = vst.msk [vmem:[#allocation2 + $0x108] sm:$0x1] %vm335, 0.0
        %348 = vst.msk [vmem:[#allocation2 + $0x120] sm:$0x1] %vm335, 0.0
        %349 = vst.msk [vmem:[#allocation2 + $0x138] sm:$0x1] %vm335, 0.0
        %350 = vst.msk [vmem:[#allocation2 + $0x150] sm:$0x1] %vm335, 0.0
        %351 = vst.msk [vmem:[#allocation2 + $0x168] sm:$0x1] %vm335, 0.0
        %352 = vst.msk [vmem:[#allocation2 + $0x180] sm:$0x1] %vm335, 0.0
        %353 = vst.msk [vmem:[#allocation2 + $0x198] sm:$0x1] %vm335, 0.0
        %354 = vst.msk [vmem:[#allocation2 + $0x11] sm:$0x1] %vm335, 0.0
        %355 = vst.msk [vmem:[#allocation2 + $0x29] sm:$0x1] %vm335, 0.0
        %356 = vst.msk [vmem:[#allocation2 + $0x41] sm:$0x1] %vm335, 0.0
        %357 = vst.msk [vmem:[#allocation2 + $0x59] sm:$0x1] %vm335, 0.0
        %358 = vst.msk [vmem:[#allocation2 + $0x71] sm:$0x1] %vm335, 0.0
        %359 = vst.msk [vmem:[#allocation2 + $0x89] sm:$0x1] %vm335, 0.0
        %360 = vst.msk [vmem:[#allocation2 + $0xa1] sm:$0x1] %vm335, 0.0
        %361 = vst.msk [vmem:[#allocation2 + $0xb9] sm:$0x1] %vm335, 0.0
        %362 = vst.msk [vmem:[#allocation2 + $0xd1] sm:$0x1] %vm335, 0.0
        %363 = vst.msk [vmem:[#allocation2 + $0xe9] sm:$0x1] %vm335, 0.0
        %364 = vst.msk [vmem:[#allocation2 + $0x101] sm:$0x1] %vm335, 0.0
        %365 = vst.msk [vmem:[#allocation2 + $0x119] sm:$0x1] %vm335, 0.0
        %366 = vst.msk [vmem:[#allocation2 + $0x131] sm:$0x1] %vm335, 0.0
        %367 = vst.msk [vmem:[#allocation2 + $0x149] sm:$0x1] %vm335, 0.0
        %368 = vst.msk [vmem:[#allocation2 + $0x161] sm:$0x1] %vm335, 0.0
        %369 = vst.msk [vmem:[#allocation2 + $0x179] sm:$0x1] %vm335, 0.0
        %370 = vst.msk [vmem:[#allocation2 + $0x191] sm:$0x1] %vm335, 0.0
        %371 = vst.msk [vmem:[#allocation2 + $0x1a9] sm:$0x1] %vm335, 0.0
        %s372 = scalar_lea.vmem [#allocation2], 24
        %373 = vst.msk [vmem:[%s372 + $0x1] sm:$0xff] %vm326, %v294
        %374 = vst.msk [vmem:[%s372 + $0x9] sm:$0xff] %vm326, %v295
        %375 = vst.msk [vmem:[%s372 + $0x19] sm:$0xff] %vm326, %v296
        %376 = vst.msk [vmem:[%s372 + $0x21] sm:$0xff] %vm326, %v297
        %377 = vst.msk [vmem:[%s372 + $0x31] sm:$0xff] %vm326, %v298
        %378 = vst.msk [vmem:[%s372 + $0x39] sm:$0xff] %vm326, %v299
        %379 = vst.msk [vmem:[%s372 + $0x49] sm:$0xff] %vm326, %v300
        %380 = vst.msk [vmem:[%s372 + $0x51] sm:$0xff] %vm326, %v301
        %381 = vst.msk [vmem:[%s372 + $0x61] sm:$0xff] %vm326, %v302
        %382 = vst.msk [vmem:[%s372 + $0x69] sm:$0xff] %vm326, %v303
        %383 = vst.msk [vmem:[%s372 + $0x79] sm:$0xff] %vm326, %v304
        %384 = vst.msk [vmem:[%s372 + $0x81] sm:$0xff] %vm326, %v305
        %385 = vst.msk [vmem:[%s372 + $0x91] sm:$0xff] %vm326, %v306
        %386 = vst.msk [vmem:[%s372 + $0x99] sm:$0xff] %vm326, %v307
        %387 = vst.msk [vmem:[%s372 + $0xa9] sm:$0xff] %vm326, %v308
        %388 = vst.msk [vmem:[%s372 + $0xb1] sm:$0xff] %vm326, %v309
        %389 = vst.msk [vmem:[%s372 + $0xc1] sm:$0xff] %vm326, %v310
        %390 = vst.msk [vmem:[%s372 + $0xc9] sm:$0xff] %vm326, %v311
        %391 = vst.msk [vmem:[%s372 + $0xd9] sm:$0xff] %vm326, %v312
        %392 = vst.msk [vmem:[%s372 + $0xe1] sm:$0xff] %vm326, %v313
        %393 = vst.msk [vmem:[%s372 + $0xf1] sm:$0xff] %vm326, %v314
        %394 = vst.msk [vmem:[%s372 + $0xf9] sm:$0xff] %vm326, %v315
        %395 = vst.msk [vmem:[%s372 + $0x109] sm:$0xff] %vm326, %v316
        %396 = vst.msk [vmem:[%s372 + $0x111] sm:$0xff] %vm326, %v317
        %397 = vst.msk [vmem:[%s372 + $0x121] sm:$0xff] %vm326, %v318
        %398 = vst.msk [vmem:[%s372 + $0x129] sm:$0xff] %vm326, %v319
        %399 = vst.msk [vmem:[%s372 + $0x139] sm:$0xff] %vm326, %v320
        %400 = vst.msk [vmem:[%s372 + $0x141] sm:$0xff] %vm326, %v321
        %401 = vst.msk [vmem:[%s372 + $0x151] sm:$0xff] %vm326, %v322
        %402 = vst.msk [vmem:[%s372 + $0x159] sm:$0xff] %vm326, %v323
        %403 = vst.msk [vmem:[%s372 + $0x169] sm:$0xff] %vm326, %v324
        %404 = vst.msk [vmem:[%s372 + $0x171] sm:$0xff] %vm326, %v325
        %v405 = vld [vmem:[#allocation2] sm:$0xff]
        %v406 = vld [vmem:[#allocation2 + $0x8] sm:$0xff]
        %v407 = vld [vmem:[#allocation2 + $0x18] sm:$0xff]
        %v408 = vld [vmem:[#allocation2 + $0x20] sm:$0xff]
        %v409 = vld [vmem:[#allocation2 + $0x30] sm:$0xff]
        %v410 = vld [vmem:[#allocation2 + $0x38] sm:$0xff]
        %v411 = vld [vmem:[#allocation2 + $0x48] sm:$0xff]
        %v412 = vld [vmem:[#allocation2 + $0x50] sm:$0xff]
        %v413 = vld [vmem:[#allocation2 + $0x60] sm:$0xff]
        %v414 = vld [vmem:[#allocation2 + $0x68] sm:$0xff]
        %v415 = vld [vmem:[#allocation2 + $0x78] sm:$0xff]
        %v416 = vld [vmem:[#allocation2 + $0x80] sm:$0xff]
        %v417 = vld [vmem:[#allocation2 + $0x90] sm:$0xff]
        %v418 = vld [vmem:[#allocation2 + $0x98] sm:$0xff]
        %v419 = vld [vmem:[#allocation2 + $0xa8] sm:$0xff]
        %v420 = vld [vmem:[#allocation2 + $0xb0] sm:$0xff]
        %v421 = vld [vmem:[#allocation2 + $0xc0] sm:$0xff]
        %v422 = vld [vmem:[#allocation2 + $0xc8] sm:$0xff]
        %v423 = vld [vmem:[#allocation2 + $0xd8] sm:$0xff]
        %v424 = vld [vmem:[#allocation2 + $0xe0] sm:$0xff]
        %v425 = vld [vmem:[#allocation2 + $0xf0] sm:$0xff]
        %v426 = vld [vmem:[#allocation2 + $0xf8] sm:$0xff]
        %v427 = vld [vmem:[#allocation2 + $0x108] sm:$0xff]
        %v428 = vld [vmem:[#allocation2 + $0x110] sm:$0xff]
        %v429 = vld [vmem:[#allocation2 + $0x120] sm:$0xff]
        %v430 = vld [vmem:[#allocation2 + $0x128] sm:$0xff]
        %v431 = vld [vmem:[#allocation2 + $0x138] sm:$0xff]
        %v432 = vld [vmem:[#allocation2 + $0x140] sm:$0xff]
        %v433 = vld [vmem:[#allocation2 + $0x150] sm:$0xff]
        %v434 = vld [vmem:[#allocation2 + $0x158] sm:$0xff]
        %v435 = vld [vmem:[#allocation2 + $0x168] sm:$0xff]
        %v436 = vld [vmem:[#allocation2 + $0x170] sm:$0xff]
        %v437 = vld [vmem:[#allocation6] sm:$0xf]
        %v438 = vld [vmem:[#allocation2 + $0x1] sm:$0xff]
        %v439 = vld [vmem:[#allocation2 + $0x9] sm:$0xff]
        %v440 = vld [vmem:[#allocation2 + $0x19] sm:$0xff]
        %v441 = vld [vmem:[#allocation2 + $0x21] sm:$0xff]
        %v442 = vld [vmem:[#allocation2 + $0x31] sm:$0xff]
        %v443 = vld [vmem:[#allocation2 + $0x39] sm:$0xff]
        %v444 = vld [vmem:[#allocation2 + $0x49] sm:$0xff]
        %v445 = vld [vmem:[#allocation2 + $0x51] sm:$0xff]
        %v446 = vld [vmem:[#allocation2 + $0x61] sm:$0xff]
        %v447 = vld [vmem:[#allocation2 + $0x69] sm:$0xff]
        %v448 = vld [vmem:[#allocation2 + $0x79] sm:$0xff]
        %v449 = vld [vmem:[#allocation2 + $0x81] sm:$0xff]
        %v450 = vld [vmem:[#allocation2 + $0x91] sm:$0xff]
        %v451 = vld [vmem:[#allocation2 + $0x99] sm:$0xff]
        %v452 = vld [vmem:[#allocation2 + $0xa9] sm:$0xff]
        %v453 = vld [vmem:[#allocation2 + $0xb1] sm:$0xff]
        %v454 = vld [vmem:[#allocation2 + $0xc1] sm:$0xff]
        %v455 = vld [vmem:[#allocation2 + $0xc9] sm:$0xff]
        %v456 = vld [vmem:[#allocation2 + $0xd9] sm:$0xff]
        %v457 = vld [vmem:[#allocation2 + $0xe1] sm:$0xff]
        %v458 = vld [vmem:[#allocation2 + $0xf1] sm:$0xff]
        %v459 = vld [vmem:[#allocation2 + $0xf9] sm:$0xff]
        %v460 = vld [vmem:[#allocation2 + $0x109] sm:$0xff]
        %v461 = vld [vmem:[#allocation2 + $0x111] sm:$0xff]
        %v462 = vld [vmem:[#allocation2 + $0x121] sm:$0xff]
        %v463 = vld [vmem:[#allocation2 + $0x129] sm:$0xff]
        %v464 = vld [vmem:[#allocation2 + $0x139] sm:$0xff]
        %v465 = vld [vmem:[#allocation2 + $0x141] sm:$0xff]
        %v466 = vld [vmem:[#allocation2 + $0x151] sm:$0xff]
        %v467 = vld [vmem:[#allocation2 + $0x159] sm:$0xff]
        %v468 = vld [vmem:[#allocation2 + $0x169] sm:$0xff]
        %v469 = vld [vmem:[#allocation2 + $0x171] sm:$0xff]
        %s470 = scalar_lea.vmem [#allocation6], 4
        %v471 = vld [vmem:[%s470] sm:$0xf]
        %v473 = vsel %vm326, %v438, 0
        %v476 = vsel %vm326, %v439, 0
        %v479 = vsel %vm326, %v440, 0
        %v482 = vsel %vm326, %v441, 0
        %v485 = vsel %vm326, %v442, 0
        %v488 = vsel %vm326, %v443, 0
        %v491 = vsel %vm326, %v444, 0
        %v494 = vsel %vm326, %v445, 0
        %v497 = vsel %vm326, %v446, 0
        %v500 = vsel %vm326, %v447, 0
        %v503 = vsel %vm326, %v448, 0
        %v506 = vsel %vm326, %v449, 0
        %v509 = vsel %vm326, %v450, 0
        %v512 = vsel %vm326, %v451, 0
        %v515 = vsel %vm326, %v452, 0
        %v518 = vsel %vm326, %v453, 0
        %v521 = vsel %vm326, %v454, 0
        %v524 = vsel %vm326, %v455, 0
        %v527 = vsel %vm326, %v456, 0
        %v530 = vsel %vm326, %v457, 0
        %v533 = vsel %vm326, %v458, 0
        %v536 = vsel %vm326, %v459, 0
        %v539 = vsel %vm326, %v460, 0
        %v542 = vsel %vm326, %v461, 0
        %v545 = vsel %vm326, %v462, 0
        %v548 = vsel %vm326, %v463, 0
        %v551 = vsel %vm326, %v464, 0
        %v554 = vsel %vm326, %v465, 0
        %v557 = vsel %vm326, %v466, 0
        %v560 = vsel %vm326, %v467, 0
        %v563 = vsel %vm326, %v468, 0
        %v566 = vsel %vm326, %v469, 0
        %vm568 = vcmask 1043456
        %v570 = vsel %vm568, %v471, 0
        %572 = vmatprep.subr.mxu0 0.0
        %573 = vmatpush1.msra.mxu0 %v570
        %574 = vmatprep.subr.mxu0 0.0
        %575 = vmatpush1.msra.mxu0 0.0
        %576 = vmatprep.subr.mxu0 0.0
        %577 = vmatpush1.msra.mxu0 0.0
        %578 = vmatprep.subr.mxu0 0.0
        %579 = vmatpush1.msra.mxu0 0.0
        %580 = vmatprep.subr.mxu0 0.0
        %581 = vmatpush1.msra.mxu0 0.0
        %582 = vmatprep.subr.mxu0 0.0
        %583 = vmatpush1.msra.mxu0 0.0
        %584 = vmatprep.subr.mxu0 0.0
        %585 = vmatpush1.msra.mxu0 0.0
        %586 = vmatprep.subr.mxu0 0.0
        %587 = vmatpush1.msra.mxu0 0.0
        %588 = vmatprep.subr.mxu0 0.0
        %589 = vmatpush1.msra.mxu0 0.0
        %590 = vmatprep.subr.mxu0 0.0
        %591 = vmatpush1.msra.mxu0 0.0
        %592 = vmatprep.subr.mxu0 0.0
        %593 = vmatpush1.msra.mxu0 0.0
        %594 = vmatprep.subr.mxu0 0.0
        %595 = vmatpush1.msra.mxu0 0.0
        %596 = vmatprep.subr.mxu0 0.0
        %597 = vmatpush1.msra.mxu0 0.0
        %598 = vmatprep.subr.mxu0 0.0
        %599 = vmatpush1.msra.mxu0 0.0
        %600 = vmatprep.subr.mxu0 0.0
        %601 = vmatpush1.msra.mxu0 0.0
        %602 = vmatprep.subr.mxu0 0.0
        %603 = vmatpush1.msra.mxu0 0.0
        %604 = vmatprep.subr.mxu0 0.0
        %605 = vmatpush1.msra.mxu0 0.0
        %606 = vmatprep.subr.mxu0 0.0
        %607 = vmatpush1.msra.mxu0 0.0
        %608 = vmatprep.subr.mxu0 0.0
        %609 = vmatpush1.msra.mxu0 0.0
        %610 = vmatprep.subr.mxu0 0.0
        %611 = vmatpush1.msra.mxu0 0.0
        %612 = vmatprep.subr.mxu0 0.0
        %613 = vmatpush1.msra.mxu0 0.0
        %614 = vmatprep.subr.mxu0 0.0
        %615 = vmatpush1.msra.mxu0 0.0
        %616 = vmatprep.subr.mxu0 0.0
        %617 = vmatpush1.msra.mxu0 0.0
        %618 = vmatprep.subr.mxu0 0.0
        %619 = vmatpush1.msra.mxu0 0.0
        %620 = vmatprep.subr.mxu0 0.0
        %621 = vmatpush1.msra.mxu0 0.0
        %622 = vmatprep.subr.mxu0 0.0
        %623 = vmatpush1.msra.mxu0 0.0
        %624 = vmatprep.subr.mxu0 0.0
        %625 = vmatpush1.msra.mxu0 0.0
        %626 = vmatprep.subr.mxu0 0.0
        %627 = vmatpush1.msra.mxu0 0.0
        %628 = vmatprep.subr.mxu0 0.0
        %629 = vmatpush1.msra.mxu0 0.0
        %630 = vmatprep.subr.mxu0 0.0
        %631 = vmatpush1.msra.mxu0 0.0
        %632 = vmatprep.subr.mxu0 0.0
        %633 = vmatpush1.msra.mxu0 0.0
        %634 = vmatprep.subr.mxu0 0.0
        %635 = vmatpush1.msra.mxu0 0.0
        %636 = vmatprep.mubr.f32.mxu0 0.0
        %637 = vmatmul.mubr.f32.gmra.mrb[0].mxu0 %v473
        %v638 = vpop.f32.mrb[0].mxu0
        %v639 = vadd.f32 0.0, %v638
        %v640 = vpop.f32.mrb[0].mxu0
        %641 = vmatprep.mubr.f32.mxu0 0.0
        %642 = vmatmul.mubr.f32.gmra.mrb[0].mxu0 %v476
        %v643 = vpop.f32.mrb[0].mxu0
        %v644 = vadd.f32 0.0, %v643
        %v645 = vpop.f32.mrb[0].mxu0
        %646 = vmatprep.mubr.f32.mxu0 0.0
        %647 = vmatmul.mubr.f32.gmra.mrb[0].mxu0 %v479
        %v648 = vpop.f32.mrb[0].mxu0
        %v649 = vadd.f32 0.0, %v648
        %v650 = vpop.f32.mrb[0].mxu0
        %651 = vmatprep.mubr.f32.mxu0 0.0
        %652 = vmatmul.mubr.f32.gmra.mrb[0].mxu0 %v482
        %v653 = vpop.f32.mrb[0].mxu0
        %v654 = vadd.f32 0.0, %v653
        %v655 = vpop.f32.mrb[0].mxu0
        %656 = vmatprep.mubr.f32.mxu0 0.0
        %657 = vmatmul.mubr.f32.gmra.mrb[0].mxu0 %v485
        %v658 = vpop.f32.mrb[0].mxu0
        %v659 = vadd.f32 0.0, %v658
        %v660 = vpop.f32.mrb[0].mxu0
        %661 = vmatprep.mubr.f32.mxu0 0.0
        %662 = vmatmul.mubr.f32.gmra.mrb[0].mxu0 %v488
        %v663 = vpop.f32.mrb[0].mxu0
        %v664 = vadd.f32 0.0, %v663
        %v665 = vpop.f32.mrb[0].mxu0
        %666 = vmatprep.mubr.f32.mxu0 0.0
        %667 = vmatmul.mubr.f32.gmra.mrb[0].mxu0 %v491
        %v668 = vpop.f32.mrb[0].mxu0
        %v669 = vadd.f32 0.0, %v668
        %v670 = vpop.f32.mrb[0].mxu0
        %671 = vmatprep.mubr.f32.mxu0 0.0
        %672 = vmatmul.mubr.f32.gmra.mrb[0].mxu0 %v494
        %v673 = vpop.f32.mrb[0].mxu0
        %v674 = vadd.f32 0.0, %v673
        %v675 = vpop.f32.mrb[0].mxu0
        %676 = vmatprep.mubr.f32.mxu0 0.0
        %677 = vmatmul.mubr.f32.gmra.mrb[0].mxu0 %v497
        %v678 = vpop.f32.mrb[0].mxu0
        %v679 = vadd.f32 0.0, %v678
        %v680 = vpop.f32.mrb[0].mxu0
        %681 = vmatprep.mubr.f32.mxu0 0.0
        %682 = vmatmul.mubr.f32.gmra.mrb[0].mxu0 %v500
        %v683 = vpop.f32.mrb[0].mxu0
        %v684 = vadd.f32 0.0, %v683
        %v685 = vpop.f32.mrb[0].mxu0
        %686 = vmatprep.mubr.f32.mxu0 0.0
        %687 = vmatmul.mubr.f32.gmra.mrb[0].mxu0 %v503
        %v688 = vpop.f32.mrb[0].mxu0
        %v689 = vadd.f32 0.0, %v688
        %v690 = vpop.f32.mrb[0].mxu0
        %691 = vmatprep.mubr.f32.mxu0 0.0
        %692 = vmatmul.mubr.f32.gmra.mrb[0].mxu0 %v506
        %v693 = vpop.f32.mrb[0].mxu0
        %v694 = vadd.f32 0.0, %v693
        %v695 = vpop.f32.mrb[0].mxu0
        %696 = vmatprep.mubr.f32.mxu0 0.0
        %697 = vmatmul.mubr.f32.gmra.mrb[0].mxu0 %v509
        %v698 = vpop.f32.mrb[0].mxu0
        %v699 = vadd.f32 0.0, %v698
        %v700 = vpop.f32.mrb[0].mxu0
        %701 = vmatprep.mubr.f32.mxu0 0.0
        %702 = vmatmul.mubr.f32.gmra.mrb[0].mxu0 %v512
        %v703 = vpop.f32.mrb[0].mxu0
        %v704 = vadd.f32 0.0, %v703
        %v705 = vpop.f32.mrb[0].mxu0
        %706 = vmatprep.mubr.f32.mxu0 0.0
        %707 = vmatmul.mubr.f32.gmra.mrb[0].mxu0 %v515
        %v708 = vpop.f32.mrb[0].mxu0
        %v709 = vadd.f32 0.0, %v708
        %v710 = vpop.f32.mrb[0].mxu0
        %711 = vmatprep.mubr.f32.mxu0 0.0
        %712 = vmatmul.mubr.f32.gmra.mrb[0].mxu0 %v518
        %v713 = vpop.f32.mrb[0].mxu0
        %v714 = vadd.f32 0.0, %v713
        %v715 = vpop.f32.mrb[0].mxu0
        %716 = vmatprep.mubr.f32.mxu0 0.0
        %717 = vmatmul.mubr.f32.gmra.mrb[0].mxu0 %v521
        %v718 = vpop.f32.mrb[0].mxu0
        %v719 = vadd.f32 0.0, %v718
        %v720 = vpop.f32.mrb[0].mxu0
        %721 = vmatprep.mubr.f32.mxu0 0.0
        %722 = vmatmul.mubr.f32.gmra.mrb[0].mxu0 %v524
        %v723 = vpop.f32.mrb[0].mxu0
        %v724 = vadd.f32 0.0, %v723
        %v725 = vpop.f32.mrb[0].mxu0
        %726 = vmatprep.mubr.f32.mxu0 0.0
        %727 = vmatmul.mubr.f32.gmra.mrb[0].mxu0 %v527
        %v728 = vpop.f32.mrb[0].mxu0
        %v729 = vadd.f32 0.0, %v728
        %v730 = vpop.f32.mrb[0].mxu0
        %731 = vmatprep.mubr.f32.mxu0 0.0
        %732 = vmatmul.mubr.f32.gmra.mrb[0].mxu0 %v530
        %v733 = vpop.f32.mrb[0].mxu0
        %v734 = vadd.f32 0.0, %v733
        %v735 = vpop.f32.mrb[0].mxu0
        %736 = vmatprep.mubr.f32.mxu0 0.0
        %737 = vmatmul.mubr.f32.gmra.mrb[0].mxu0 %v533
        %v738 = vpop.f32.mrb[0].mxu0
        %v739 = vadd.f32 0.0, %v738
        %v740 = vpop.f32.mrb[0].mxu0
        %741 = vmatprep.mubr.f32.mxu0 0.0
        %742 = vmatmul.mubr.f32.gmra.mrb[0].mxu0 %v536
        %v743 = vpop.f32.mrb[0].mxu0
        %v744 = vadd.f32 0.0, %v743
        %v745 = vpop.f32.mrb[0].mxu0
        %746 = vmatprep.mubr.f32.mxu0 0.0
        %747 = vmatmul.mubr.f32.gmra.mrb[0].mxu0 %v539
        %v748 = vpop.f32.mrb[0].mxu0
        %v749 = vadd.f32 0.0, %v748
        %v750 = vpop.f32.mrb[0].mxu0
        %751 = vmatprep.mubr.f32.mxu0 0.0
        %752 = vmatmul.mubr.f32.gmra.mrb[0].mxu0 %v542
        %v753 = vpop.f32.mrb[0].mxu0
        %v754 = vadd.f32 0.0, %v753
        %v755 = vpop.f32.mrb[0].mxu0
        %756 = vmatprep.mubr.f32.mxu0 0.0
        %757 = vmatmul.mubr.f32.gmra.mrb[0].mxu0 %v545
        %v758 = vpop.f32.mrb[0].mxu0
        %v759 = vadd.f32 0.0, %v758
        %v760 = vpop.f32.mrb[0].mxu0
        %761 = vmatprep.mubr.f32.mxu0 0.0
        %762 = vmatmul.mubr.f32.gmra.mrb[0].mxu0 %v548
        %v763 = vpop.f32.mrb[0].mxu0
        %v764 = vadd.f32 0.0, %v763
        %v765 = vpop.f32.mrb[0].mxu0
        %766 = vmatprep.mubr.f32.mxu0 0.0
        %767 = vmatmul.mubr.f32.gmra.mrb[0].mxu0 %v551
        %v768 = vpop.f32.mrb[0].mxu0
        %v769 = vadd.f32 0.0, %v768
        %v770 = vpop.f32.mrb[0].mxu0
        %771 = vmatprep.mubr.f32.mxu0 0.0
        %772 = vmatmul.mubr.f32.gmra.mrb[0].mxu0 %v554
        %v773 = vpop.f32.mrb[0].mxu0
        %v774 = vadd.f32 0.0, %v773
        %v775 = vpop.f32.mrb[0].mxu0
        %776 = vmatprep.mubr.f32.mxu0 0.0
        %777 = vmatmul.mubr.f32.gmra.mrb[0].mxu0 %v557
        %v778 = vpop.f32.mrb[0].mxu0
        %v779 = vadd.f32 0.0, %v778
        %v780 = vpop.f32.mrb[0].mxu0
        %781 = vmatprep.mubr.f32.mxu0 0.0
        %782 = vmatmul.mubr.f32.gmra.mrb[0].mxu0 %v560
        %v783 = vpop.f32.mrb[0].mxu0
        %v784 = vadd.f32 0.0, %v783
        %v785 = vpop.f32.mrb[0].mxu0
        %786 = vmatprep.mubr.f32.mxu0 0.0
        %787 = vmatmul.mubr.f32.gmra.mrb[0].mxu0 %v563
        %v788 = vpop.f32.mrb[0].mxu0
        %v789 = vadd.f32 0.0, %v788
        %v790 = vpop.f32.mrb[0].mxu0
        %791 = vmatprep.mubr.f32.mxu0 0.0
        %792 = vmatmul.mubr.f32.gmra.mrb[0].mxu0 %v566
        %v793 = vpop.f32.mrb[0].mxu0
        %v794 = vadd.f32 0.0, %v793
        %v795 = vpop.f32.mrb[0].mxu0
        %796 = vdwg.mxu0
        %v798 = vsel %vm326, %v405, 0
        %v801 = vsel %vm326, %v406, 0
        %v804 = vsel %vm326, %v407, 0
        %v807 = vsel %vm326, %v408, 0
        %v810 = vsel %vm326, %v409, 0
        %v813 = vsel %vm326, %v410, 0
        %v816 = vsel %vm326, %v411, 0
        %v819 = vsel %vm326, %v412, 0
        %v822 = vsel %vm326, %v413, 0
        %v825 = vsel %vm326, %v414, 0
        %v828 = vsel %vm326, %v415, 0
        %v831 = vsel %vm326, %v416, 0
        %v834 = vsel %vm326, %v417, 0
        %v837 = vsel %vm326, %v418, 0
        %v840 = vsel %vm326, %v419, 0
        %v843 = vsel %vm326, %v420, 0
        %v846 = vsel %vm326, %v421, 0
        %v849 = vsel %vm326, %v422, 0
        %v852 = vsel %vm326, %v423, 0
        %v855 = vsel %vm326, %v424, 0
        %v858 = vsel %vm326, %v425, 0
        %v861 = vsel %vm326, %v426, 0
        %v864 = vsel %vm326, %v427, 0
        %v867 = vsel %vm326, %v428, 0
        %v870 = vsel %vm326, %v429, 0
        %v873 = vsel %vm326, %v430, 0
        %v876 = vsel %vm326, %v431, 0
        %v879 = vsel %vm326, %v432, 0
        %v882 = vsel %vm326, %v433, 0
        %v885 = vsel %vm326, %v434, 0
        %v888 = vsel %vm326, %v435, 0
        %v891 = vsel %vm326, %v436, 0
        %v894 = vsel %vm568, %v437, 0
        %896 = vmatprep.subr.mxu0 0.0
        %897 = vmatpush1.msra.mxu0 %v894
        %898 = vmatprep.subr.mxu0 0.0
        %899 = vmatpush1.msra.mxu0 0.0
        %900 = vmatprep.subr.mxu0 0.0
        %901 = vmatpush1.msra.mxu0 0.0
        %902 = vmatprep.subr.mxu0 0.0
        %903 = vmatpush1.msra.mxu0 0.0
        %904 = vmatprep.subr.mxu0 0.0
        %905 = vmatpush1.msra.mxu0 0.0
        %906 = vmatprep.subr.mxu0 0.0
        %907 = vmatpush1.msra.mxu0 0.0
        %908 = vmatprep.subr.mxu0 0.0
        %909 = vmatpush1.msra.mxu0 0.0
        %910 = vmatprep.subr.mxu0 0.0
        %911 = vmatpush1.msra.mxu0 0.0
        %912 = vmatprep.subr.mxu0 0.0
        %913 = vmatpush1.msra.mxu0 0.0
        %914 = vmatprep.subr.mxu0 0.0
        %915 = vmatpush1.msra.mxu0 0.0
        %916 = vmatprep.subr.mxu0 0.0
        %917 = vmatpush1.msra.mxu0 0.0
        %918 = vmatprep.subr.mxu0 0.0
        %919 = vmatpush1.msra.mxu0 0.0
        %920 = vmatprep.subr.mxu0 0.0
        %921 = vmatpush1.msra.mxu0 0.0
        %922 = vmatprep.subr.mxu0 0.0
        %923 = vmatpush1.msra.mxu0 0.0
        %924 = vmatprep.subr.mxu0 0.0
        %925 = vmatpush1.msra.mxu0 0.0
        %926 = vmatprep.subr.mxu0 0.0
        %927 = vmatpush1.msra.mxu0 0.0
        %928 = vmatprep.subr.mxu0 0.0
        %929 = vmatpush1.msra.mxu0 0.0
        %930 = vmatprep.subr.mxu0 0.0
        %931 = vmatpush1.msra.mxu0 0.0
        %932 = vmatprep.subr.mxu0 0.0
        %933 = vmatpush1.msra.mxu0 0.0
        %934 = vmatprep.subr.mxu0 0.0
        %935 = vmatpush1.msra.mxu0 0.0
        %936 = vmatprep.subr.mxu0 0.0
        %937 = vmatpush1.msra.mxu0 0.0
        %938 = vmatprep.subr.mxu0 0.0
        %939 = vmatpush1.msra.mxu0 0.0
        %940 = vmatprep.subr.mxu0 0.0
        %941 = vmatpush1.msra.mxu0 0.0
        %942 = vmatprep.subr.mxu0 0.0
        %943 = vmatpush1.msra.mxu0 0.0
        %944 = vmatprep.subr.mxu0 0.0
        %945 = vmatpush1.msra.mxu0 0.0
        %946 = vmatprep.subr.mxu0 0.0
        %947 = vmatpush1.msra.mxu0 0.0
        %948 = vmatprep.subr.mxu0 0.0
        %949 = vmatpush1.msra.mxu0 0.0
        %950 = vmatprep.subr.mxu0 0.0
        %951 = vmatpush1.msra.mxu0 0.0
        %952 = vmatprep.subr.mxu0 0.0
        %953 = vmatpush1.msra.mxu0 0.0
        %954 = vmatprep.subr.mxu0 0.0
        %955 = vmatpush1.msra.mxu0 0.0
        %956 = vmatprep.subr.mxu0 0.0
        %957 = vmatpush1.msra.mxu0 0.0
        %958 = vmatprep.subr.mxu0 0.0
        %959 = vmatpush1.msra.mxu0 0.0
        %960 = vmatprep.mubr.f32.mxu0 0.0
        %961 = vmatmul.mubr.f32.gmra.mrb[0].mxu0 %v798
        %v962 = vpop.f32.mrb[0].mxu0
        %v963 = vadd.f32 %v639, %v962
        %v964 = vpop.f32.mrb[0].mxu0
        %965 = vmatprep.mubr.f32.mxu0 0.0
        %966 = vmatmul.mubr.f32.gmra.mrb[0].mxu0 %v801
        %v967 = vpop.f32.mrb[0].mxu0
        %v968 = vadd.f32 %v644, %v967
        %v969 = vpop.f32.mrb[0].mxu0
        %970 = vmatprep.mubr.f32.mxu0 0.0
        %971 = vmatmul.mubr.f32.gmra.mrb[0].mxu0 %v804
        %v972 = vpop.f32.mrb[0].mxu0
        %v973 = vadd.f32 %v649, %v972
        %v974 = vpop.f32.mrb[0].mxu0
        %975 = vmatprep.mubr.f32.mxu0 0.0
        %976 = vmatmul.mubr.f32.gmra.mrb[0].mxu0 %v807
        %v977 = vpop.f32.mrb[0].mxu0
        %v978 = vadd.f32 %v654, %v977
        %v979 = vpop.f32.mrb[0].mxu0
        %980 = vmatprep.mubr.f32.mxu0 0.0
        %981 = vmatmul.mubr.f32.gmra.mrb[0].mxu0 %v810
        %v982 = vpop.f32.mrb[0].mxu0
        %v983 = vadd.f32 %v659, %v982
        %v984 = vpop.f32.mrb[0].mxu0
        %985 = vmatprep.mubr.f32.mxu0 0.0
        %986 = vmatmul.mubr.f32.gmra.mrb[0].mxu0 %v813
        %v987 = vpop.f32.mrb[0].mxu0
        %v988 = vadd.f32 %v664, %v987
        %v989 = vpop.f32.mrb[0].mxu0
        %990 = vmatprep.mubr.f32.mxu0 0.0
        %991 = vmatmul.mubr.f32.gmra.mrb[0].mxu0 %v816
        %v992 = vpop.f32.mrb[0].mxu0
        %v993 = vadd.f32 %v669, %v992
        %v994 = vpop.f32.mrb[0].mxu0
        %995 = vmatprep.mubr.f32.mxu0 0.0
        %996 = vmatmul.mubr.f32.gmra.mrb[0].mxu0 %v819
        %v997 = vpop.f32.mrb[0].mxu0
        %v998 = vadd.f32 %v674, %v997
        %v999 = vpop.f32.mrb[0].mxu0
        %1000 = vmatprep.mubr.f32.mxu0 0.0
        %1001 = vmatmul.mubr.f32.gmra.mrb[0].mxu0 %v822
        %v1002 = vpop.f32.mrb[0].mxu0
        %v1003 = vadd.f32 %v679, %v1002
        %v1004 = vpop.f32.mrb[0].mxu0
        %1005 = vmatprep.mubr.f32.mxu0 0.0
        %1006 = vmatmul.mubr.f32.gmra.mrb[0].mxu0 %v825
        %v1007 = vpop.f32.mrb[0].mxu0
        %v1008 = vadd.f32 %v684, %v1007
        %v1009 = vpop.f32.mrb[0].mxu0
        %1010 = vmatprep.mubr.f32.mxu0 0.0
        %1011 = vmatmul.mubr.f32.gmra.mrb[0].mxu0 %v828
        %v1012 = vpop.f32.mrb[0].mxu0
        %v1013 = vadd.f32 %v689, %v1012
        %v1014 = vpop.f32.mrb[0].mxu0
        %1015 = vmatprep.mubr.f32.mxu0 0.0
        %1016 = vmatmul.mubr.f32.gmra.mrb[0].mxu0 %v831
        %v1017 = vpop.f32.mrb[0].mxu0
        %v1018 = vadd.f32 %v694, %v1017
        %v1019 = vpop.f32.mrb[0].mxu0
        %1020 = vmatprep.mubr.f32.mxu0 0.0
        %1021 = vmatmul.mubr.f32.gmra.mrb[0].mxu0 %v834
        %v1022 = vpop.f32.mrb[0].mxu0
        %v1023 = vadd.f32 %v699, %v1022
        %v1024 = vpop.f32.mrb[0].mxu0
        %1025 = vmatprep.mubr.f32.mxu0 0.0
        %1026 = vmatmul.mubr.f32.gmra.mrb[0].mxu0 %v837
        %v1027 = vpop.f32.mrb[0].mxu0
        %v1028 = vadd.f32 %v704, %v1027
        %v1029 = vpop.f32.mrb[0].mxu0
        %1030 = vmatprep.mubr.f32.mxu0 0.0
        %1031 = vmatmul.mubr.f32.gmra.mrb[0].mxu0 %v840
        %v1032 = vpop.f32.mrb[0].mxu0
        %v1033 = vadd.f32 %v709, %v1032
        %v1034 = vpop.f32.mrb[0].mxu0
        %1035 = vmatprep.mubr.f32.mxu0 0.0
        %1036 = vmatmul.mubr.f32.gmra.mrb[0].mxu0 %v843
        %v1037 = vpop.f32.mrb[0].mxu0
        %v1038 = vadd.f32 %v714, %v1037
        %v1039 = vpop.f32.mrb[0].mxu0
        %1040 = vmatprep.mubr.f32.mxu0 0.0
        %1041 = vmatmul.mubr.f32.gmra.mrb[0].mxu0 %v846
        %v1042 = vpop.f32.mrb[0].mxu0
        %v1043 = vadd.f32 %v719, %v1042
        %v1044 = vpop.f32.mrb[0].mxu0
        %1045 = vmatprep.mubr.f32.mxu0 0.0
        %1046 = vmatmul.mubr.f32.gmra.mrb[0].mxu0 %v849
        %v1047 = vpop.f32.mrb[0].mxu0
        %v1048 = vadd.f32 %v724, %v1047
        %v1049 = vpop.f32.mrb[0].mxu0
        %1050 = vmatprep.mubr.f32.mxu0 0.0
        %1051 = vmatmul.mubr.f32.gmra.mrb[0].mxu0 %v852
        %v1052 = vpop.f32.mrb[0].mxu0
        %v1053 = vadd.f32 %v729, %v1052
        %v1054 = vpop.f32.mrb[0].mxu0
        %1055 = vmatprep.mubr.f32.mxu0 0.0
        %1056 = vmatmul.mubr.f32.gmra.mrb[0].mxu0 %v855
        %v1057 = vpop.f32.mrb[0].mxu0
        %v1058 = vadd.f32 %v734, %v1057
        %v1059 = vpop.f32.mrb[0].mxu0
        %1060 = vmatprep.mubr.f32.mxu0 0.0
        %1061 = vmatmul.mubr.f32.gmra.mrb[0].mxu0 %v858
        %v1062 = vpop.f32.mrb[0].mxu0
        %v1063 = vadd.f32 %v739, %v1062
        %v1064 = vpop.f32.mrb[0].mxu0
        %1065 = vmatprep.mubr.f32.mxu0 0.0
        %1066 = vmatmul.mubr.f32.gmra.mrb[0].mxu0 %v861
        %v1067 = vpop.f32.mrb[0].mxu0
        %v1068 = vadd.f32 %v744, %v1067
        %v1069 = vpop.f32.mrb[0].mxu0
        %1070 = vmatprep.mubr.f32.mxu0 0.0
        %1071 = vmatmul.mubr.f32.gmra.mrb[0].mxu0 %v864
        %v1072 = vpop.f32.mrb[0].mxu0
        %v1073 = vadd.f32 %v749, %v1072
        %v1074 = vpop.f32.mrb[0].mxu0
        %1075 = vmatprep.mubr.f32.mxu0 0.0
        %1076 = vmatmul.mubr.f32.gmra.mrb[0].mxu0 %v867
        %v1077 = vpop.f32.mrb[0].mxu0
        %v1078 = vadd.f32 %v754, %v1077
        %v1079 = vpop.f32.mrb[0].mxu0
        %1080 = vmatprep.mubr.f32.mxu0 0.0
        %1081 = vmatmul.mubr.f32.gmra.mrb[0].mxu0 %v870
        %v1082 = vpop.f32.mrb[0].mxu0
        %v1083 = vadd.f32 %v759, %v1082
        %v1084 = vpop.f32.mrb[0].mxu0
        %1085 = vmatprep.mubr.f32.mxu0 0.0
        %1086 = vmatmul.mubr.f32.gmra.mrb[0].mxu0 %v873
        %v1087 = vpop.f32.mrb[0].mxu0
        %v1088 = vadd.f32 %v764, %v1087
        %v1089 = vpop.f32.mrb[0].mxu0
        %1090 = vmatprep.mubr.f32.mxu0 0.0
        %1091 = vmatmul.mubr.f32.gmra.mrb[0].mxu0 %v876
        %v1092 = vpop.f32.mrb[0].mxu0
        %v1093 = vadd.f32 %v769, %v1092
        %v1094 = vpop.f32.mrb[0].mxu0
        %1095 = vmatprep.mubr.f32.mxu0 0.0
        %1096 = vmatmul.mubr.f32.gmra.mrb[0].mxu0 %v879
        %v1097 = vpop.f32.mrb[0].mxu0
        %v1098 = vadd.f32 %v774, %v1097
        %v1099 = vpop.f32.mrb[0].mxu0
        %1100 = vmatprep.mubr.f32.mxu0 0.0
        %1101 = vmatmul.mubr.f32.gmra.mrb[0].mxu0 %v882
        %v1102 = vpop.f32.mrb[0].mxu0
        %v1103 = vadd.f32 %v779, %v1102
        %v1104 = vpop.f32.mrb[0].mxu0
        %1105 = vmatprep.mubr.f32.mxu0 0.0
        %1106 = vmatmul.mubr.f32.gmra.mrb[0].mxu0 %v885
        %v1107 = vpop.f32.mrb[0].mxu0
        %v1108 = vadd.f32 %v784, %v1107
        %v1109 = vpop.f32.mrb[0].mxu0
        %1110 = vmatprep.mubr.f32.mxu0 0.0
        %1111 = vmatmul.mubr.f32.gmra.mrb[0].mxu0 %v888
        %v1112 = vpop.f32.mrb[0].mxu0
        %v1113 = vadd.f32 %v789, %v1112
        %v1114 = vpop.f32.mrb[0].mxu0
        %1115 = vmatprep.mubr.f32.mxu0 0.0
        %1116 = vmatmul.mubr.f32.gmra.mrb[0].mxu0 %v891
        %v1117 = vpop.f32.mrb[0].mxu0
        %v1118 = vadd.f32 %v794, %v1117
        %v1119 = vpop.f32.mrb[0].mxu0
        %1120 = vdwg.mxu0
        %v1121 = vld [vmem:[#allocation2 + $0x2] sm:$0xff]
        %v1122 = vld [vmem:[#allocation2 + $0xa] sm:$0xff]
        %v1123 = vld [vmem:[#allocation2 + $0x1a] sm:$0xff]
        %v1124 = vld [vmem:[#allocation2 + $0x22] sm:$0xff]
        %v1125 = vld [vmem:[#allocation2 + $0x32] sm:$0xff]
        %v1126 = vld [vmem:[#allocation2 + $0x3a] sm:$0xff]
        %v1127 = vld [vmem:[#allocation2 + $0x4a] sm:$0xff]
        %v1128 = vld [vmem:[#allocation2 + $0x52] sm:$0xff]
        %v1129 = vld [vmem:[#allocation2 + $0x62] sm:$0xff]
        %v1130 = vld [vmem:[#allocation2 + $0x6a] sm:$0xff]
        %v1131 = vld [vmem:[#allocation2 + $0x7a] sm:$0xff]
        %v1132 = vld [vmem:[#allocation2 + $0x82] sm:$0xff]
        %v1133 = vld [vmem:[#allocation2 + $0x92] sm:$0xff]
        %v1134 = vld [vmem:[#allocation2 + $0x9a] sm:$0xff]
        %v1135 = vld [vmem:[#allocation2 + $0xaa] sm:$0xff]
        %v1136 = vld [vmem:[#allocation2 + $0xb2] sm:$0xff]
        %v1137 = vld [vmem:[#allocation2 + $0xc2] sm:$0xff]
        %v1138 = vld [vmem:[#allocation2 + $0xca] sm:$0xff]
        %v1139 = vld [vmem:[#allocation2 + $0xda] sm:$0xff]
        %v1140 = vld [vmem:[#allocation2 + $0xe2] sm:$0xff]
        %v1141 = vld [vmem:[#allocation2 + $0xf2] sm:$0xff]
        %v1142 = vld [vmem:[#allocation2 + $0xfa] sm:$0xff]
        %v1143 = vld [vmem:[#allocation2 + $0x10a] sm:$0xff]
        %v1144 = vld [vmem:[#allocation2 + $0x112] sm:$0xff]
        %v1145 = vld [vmem:[#allocation2 + $0x122] sm:$0xff]
        %v1146 = vld [vmem:[#allocation2 + $0x12a] sm:$0xff]
        %v1147 = vld [vmem:[#allocation2 + $0x13a] sm:$0xff]
        %v1148 = vld [vmem:[#allocation2 + $0x142] sm:$0xff]
        %v1149 = vld [vmem:[#allocation2 + $0x152] sm:$0xff]
        %v1150 = vld [vmem:[#allocation2 + $0x15a] sm:$0xff]
        %v1151 = vld [vmem:[#allocation2 + $0x16a] sm:$0xff]
        %v1152 = vld [vmem:[#allocation2 + $0x172] sm:$0xff]
        %s1153 = scalar_lea.vmem [#allocation6], 8
        %v1154 = vld [vmem:[%s1153] sm:$0xf]
        %v1156 = vsel %vm326, %v1121, 0
        %v1159 = vsel %vm326, %v1122, 0
        %v1162 = vsel %vm326, %v1123, 0
        %v1165 = vsel %vm326, %v1124, 0
        %v1168 = vsel %vm326, %v1125, 0
        %v1171 = vsel %vm326, %v1126, 0
        %v1174 = vsel %vm326, %v1127, 0
        %v1177 = vsel %vm326, %v1128, 0
        %v1180 = vsel %vm326, %v1129, 0
        %v1183 = vsel %vm326, %v1130, 0
        %v1186 = vsel %vm326, %v1131, 0
        %v1189 = vsel %vm326, %v1132, 0
        %v1192 = vsel %vm326, %v1133, 0
        %v1195 = vsel %vm326, %v1134, 0
        %v1198 = vsel %vm326, %v1135, 0
        %v1201 = vsel %vm326, %v1136, 0
        %v1204 = vsel %vm326, %v1137, 0
        %v1207 = vsel %vm326, %v1138, 0
        %v1210 = vsel %vm326, %v1139, 0
        %v1213 = vsel %vm326, %v1140, 0
        %v1216 = vsel %vm326, %v1141, 0
        %v1219 = vsel %vm326, %v1142, 0
        %v1222 = vsel %vm326, %v1143, 0
        %v1225 = vsel %vm326, %v1144, 0
        %v1228 = vsel %vm326, %v1145, 0
        %v1231 = vsel %vm326, %v1146, 0
        %v1234 = vsel %vm326, %v1147, 0
        %v1237 = vsel %vm326, %v1148, 0
        %v1240 = vsel %vm326, %v1149, 0
        %v1243 = vsel %vm326, %v1150, 0
        %v1246 = vsel %vm326, %v1151, 0
        %v1249 = vsel %vm326, %v1152, 0
        %v1252 = vsel %vm568, %v1154, 0
        %1254 = vmatprep.subr.mxu0 0.0
        %1255 = vmatpush1.msra.mxu0 %v1252
        %1256 = vmatprep.subr.mxu0 0.0
        %1257 = vmatpush1.msra.mxu0 0.0
        %1258 = vmatprep.subr.mxu0 0.0
        %1259 = vmatpush1.msra.mxu0 0.0
        %1260 = vmatprep.subr.mxu0 0.0
        %1261 = vmatpush1.msra.mxu0 0.0
        %1262 = vmatprep.subr.mxu0 0.0
        %1263 = vmatpush1.msra.mxu0 0.0
        %1264 = vmatprep.subr.mxu0 0.0
        %1265 = vmatpush1.msra.mxu0 0.0
        %1266 = vmatprep.subr.mxu0 0.0
        %1267 = vmatpush1.msra.mxu0 0.0
        %1268 = vmatprep.subr.mxu0 0.0
        %1269 = vmatpush1.msra.mxu0 0.0
        %1270 = vmatprep.subr.mxu0 0.0
        %1271 = vmatpush1.msra.mxu0 0.0
        %1272 = vmatprep.subr.mxu0 0.0
        %1273 = vmatpush1.msra.mxu0 0.0
        %1274 = vmatprep.subr.mxu0 0.0
        %1275 = vmatpush1.msra.mxu0 0.0
        %1276 = vmatprep.subr.mxu0 0.0
        %1277 = vmatpush1.msra.mxu0 0.0
        %1278 = vmatprep.subr.mxu0 0.0
        %1279 = vmatpush1.msra.mxu0 0.0
        %1280 = vmatprep.subr.mxu0 0.0
        %1281 = vmatpush1.msra.mxu0 0.0
        %1282 = vmatprep.subr.mxu0 0.0
        %1283 = vmatpush1.msra.mxu0 0.0
        %1284 = vmatprep.subr.mxu0 0.0
        %1285 = vmatpush1.msra.mxu0 0.0
        %1286 = vmatprep.subr.mxu0 0.0
        %1287 = vmatpush1.msra.mxu0 0.0
        %1288 = vmatprep.subr.mxu0 0.0
        %1289 = vmatpush1.msra.mxu0 0.0
        %1290 = vmatprep.subr.mxu0 0.0
        %1291 = vmatpush1.msra.mxu0 0.0
        %1292 = vmatprep.subr.mxu0 0.0
        %1293 = vmatpush1.msra.mxu0 0.0
        %1294 = vmatprep.subr.mxu0 0.0
        %1295 = vmatpush1.msra.mxu0 0.0
        %1296 = vmatprep.subr.mxu0 0.0
        %1297 = vmatpush1.msra.mxu0 0.0
        %1298 = vmatprep.subr.mxu0 0.0
        %1299 = vmatpush1.msra.mxu0 0.0
        %1300 = vmatprep.subr.mxu0 0.0
        %1301 = vmatpush1.msra.mxu0 0.0
        %1302 = vmatprep.subr.mxu0 0.0
        %1303 = vmatpush1.msra.mxu0 0.0
        %1304 = vmatprep.subr.mxu0 0.0
        %1305 = vmatpush1.msra.mxu0 0.0
        %1306 = vmatprep.subr.mxu0 0.0
        %1307 = vmatpush1.msra.mxu0 0.0
        %1308 = vmatprep.subr.mxu0 0.0
        %1309 = vmatpush1.msra.mxu0 0.0
        %1310 = vmatprep.subr.mxu0 0.0
        %1311 = vmatpush1.msra.mxu0 0.0
        %1312 = vmatprep.subr.mxu0 0.0
        %1313 = vmatpush1.msra.mxu0 0.0
        %1314 = vmatprep.subr.mxu0 0.0
        %1315 = vmatpush1.msra.mxu0 0.0
        %1316 = vmatprep.subr.mxu0 0.0
        %1317 = vmatpush1.msra.mxu0 0.0
        %1318 = vmatprep.mubr.f32.mxu0 0.0
        %1319 = vmatmul.mubr.f32.gmra.mrb[0].mxu0 %v1156
        %v1320 = vpop.f32.mrb[0].mxu0
        %v1321 = vadd.f32 0.0, %v1320
        %v1322 = vpop.f32.mrb[0].mxu0
        %1323 = vmatprep.mubr.f32.mxu0 0.0
        %1324 = vmatmul.mubr.f32.gmra.mrb[0].mxu0 %v1159
        %v1325 = vpop.f32.mrb[0].mxu0
        %v1326 = vadd.f32 0.0, %v1325
        %v1327 = vpop.f32.mrb[0].mxu0
        %1328 = vmatprep.mubr.f32.mxu0 0.0
        %1329 = vmatmul.mubr.f32.gmra.mrb[0].mxu0 %v1162
        %v1330 = vpop.f32.mrb[0].mxu0
        %v1331 = vadd.f32 0.0, %v1330
        %v1332 = vpop.f32.mrb[0].mxu0
        %1333 = vmatprep.mubr.f32.mxu0 0.0
        %1334 = vmatmul.mubr.f32.gmra.mrb[0].mxu0 %v1165
        %v1335 = vpop.f32.mrb[0].mxu0
        %v1336 = vadd.f32 0.0, %v1335
        %v1337 = vpop.f32.mrb[0].mxu0
        %1338 = vmatprep.mubr.f32.mxu0 0.0
        %1339 = vmatmul.mubr.f32.gmra.mrb[0].mxu0 %v1168
        %v1340 = vpop.f32.mrb[0].mxu0
        %v1341 = vadd.f32 0.0, %v1340
        %v1342 = vpop.f32.mrb[0].mxu0
        %1343 = vmatprep.mubr.f32.mxu0 0.0
        %1344 = vmatmul.mubr.f32.gmra.mrb[0].mxu0 %v1171
        %v1345 = vpop.f32.mrb[0].mxu0
        %v1346 = vadd.f32 0.0, %v1345
        %v1347 = vpop.f32.mrb[0].mxu0
        %1348 = vmatprep.mubr.f32.mxu0 0.0
        %1349 = vmatmul.mubr.f32.gmra.mrb[0].mxu0 %v1174
        %v1350 = vpop.f32.mrb[0].mxu0
        %v1351 = vadd.f32 0.0, %v1350
        %v1352 = vpop.f32.mrb[0].mxu0
        %1353 = vmatprep.mubr.f32.mxu0 0.0
        %1354 = vmatmul.mubr.f32.gmra.mrb[0].mxu0 %v1177
        %v1355 = vpop.f32.mrb[0].mxu0
        %v1356 = vadd.f32 0.0, %v1355
        %v1357 = vpop.f32.mrb[0].mxu0
        %1358 = vmatprep.mubr.f32.mxu0 0.0
        %1359 = vmatmul.mubr.f32.gmra.mrb[0].mxu0 %v1180
        %v1360 = vpop.f32.mrb[0].mxu0
        %v1361 = vadd.f32 0.0, %v1360
        %v1362 = vpop.f32.mrb[0].mxu0
        %1363 = vmatprep.mubr.f32.mxu0 0.0
        %1364 = vmatmul.mubr.f32.gmra.mrb[0].mxu0 %v1183
        %v1365 = vpop.f32.mrb[0].mxu0
        %v1366 = vadd.f32 0.0, %v1365
        %v1367 = vpop.f32.mrb[0].mxu0
        %1368 = vmatprep.mubr.f32.mxu0 0.0
        %1369 = vmatmul.mubr.f32.gmra.mrb[0].mxu0 %v1186
        %v1370 = vpop.f32.mrb[0].mxu0
        %v1371 = vadd.f32 0.0, %v1370
        %v1372 = vpop.f32.mrb[0].mxu0
        %1373 = vmatprep.mubr.f32.mxu0 0.0
        %1374 = vmatmul.mubr.f32.gmra.mrb[0].mxu0 %v1189
        %v1375 = vpop.f32.mrb[0].mxu0
        %v1376 = vadd.f32 0.0, %v1375
        %v1377 = vpop.f32.mrb[0].mxu0
        %1378 = vmatprep.mubr.f32.mxu0 0.0
        %1379 = vmatmul.mubr.f32.gmra.mrb[0].mxu0 %v1192
        %v1380 = vpop.f32.mrb[0].mxu0
        %v1381 = vadd.f32 0.0, %v1380
        %v1382 = vpop.f32.mrb[0].mxu0
        %1383 = vmatprep.mubr.f32.mxu0 0.0
        %1384 = vmatmul.mubr.f32.gmra.mrb[0].mxu0 %v1195
        %v1385 = vpop.f32.mrb[0].mxu0
        %v1386 = vadd.f32 0.0, %v1385
        %v1387 = vpop.f32.mrb[0].mxu0
        %1388 = vmatprep.mubr.f32.mxu0 0.0
        %1389 = vmatmul.mubr.f32.gmra.mrb[0].mxu0 %v1198
        %v1390 = vpop.f32.mrb[0].mxu0
        %v1391 = vadd.f32 0.0, %v1390
        %v1392 = vpop.f32.mrb[0].mxu0
        %1393 = vmatprep.mubr.f32.mxu0 0.0
        %1394 = vmatmul.mubr.f32.gmra.mrb[0].mxu0 %v1201
        %v1395 = vpop.f32.mrb[0].mxu0
        %v1396 = vadd.f32 0.0, %v1395
        %v1397 = vpop.f32.mrb[0].mxu0
        %1398 = vmatprep.mubr.f32.mxu0 0.0
        %1399 = vmatmul.mubr.f32.gmra.mrb[0].mxu0 %v1204
        %v1400 = vpop.f32.mrb[0].mxu0
        %v1401 = vadd.f32 0.0, %v1400
        %v1402 = vpop.f32.mrb[0].mxu0
        %1403 = vmatprep.mubr.f32.mxu0 0.0
        %1404 = vmatmul.mubr.f32.gmra.mrb[0].mxu0 %v1207
        %v1405 = vpop.f32.mrb[0].mxu0
        %v1406 = vadd.f32 0.0, %v1405
        %v1407 = vpop.f32.mrb[0].mxu0
        %1408 = vmatprep.mubr.f32.mxu0 0.0
        %1409 = vmatmul.mubr.f32.gmra.mrb[0].mxu0 %v1210
        %v1410 = vpop.f32.mrb[0].mxu0
        %v1411 = vadd.f32 0.0, %v1410
        %v1412 = vpop.f32.mrb[0].mxu0
        %1413 = vmatprep.mubr.f32.mxu0 0.0
        %1414 = vmatmul.mubr.f32.gmra.mrb[0].mxu0 %v1213
        %v1415 = vpop.f32.mrb[0].mxu0
        %v1416 = vadd.f32 0.0, %v1415
        %v1417 = vpop.f32.mrb[0].mxu0
        %1418 = vmatprep.mubr.f32.mxu0 0.0
        %1419 = vmatmul.mubr.f32.gmra.mrb[0].mxu0 %v1216
        %v1420 = vpop.f32.mrb[0].mxu0
        %v1421 = vadd.f32 0.0, %v1420
        %v1422 = vpop.f32.mrb[0].mxu0
        %1423 = vmatprep.mubr.f32.mxu0 0.0
        %1424 = vmatmul.mubr.f32.gmra.mrb[0].mxu0 %v1219
        %v1425 = vpop.f32.mrb[0].mxu0
        %v1426 = vadd.f32 0.0, %v1425
        %v1427 = vpop.f32.mrb[0].mxu0
        %1428 = vmatprep.mubr.f32.mxu0 0.0
        %1429 = vmatmul.mubr.f32.gmra.mrb[0].mxu0 %v1222
        %v1430 = vpop.f32.mrb[0].mxu0
        %v1431 = vadd.f32 0.0, %v1430
        %v1432 = vpop.f32.mrb[0].mxu0
        %1433 = vmatprep.mubr.f32.mxu0 0.0
        %1434 = vmatmul.mubr.f32.gmra.mrb[0].mxu0 %v1225
        %v1435 = vpop.f32.mrb[0].mxu0
        %v1436 = vadd.f32 0.0, %v1435
        %v1437 = vpop.f32.mrb[0].mxu0
        %1438 = vmatprep.mubr.f32.mxu0 0.0
        %1439 = vmatmul.mubr.f32.gmra.mrb[0].mxu0 %v1228
        %v1440 = vpop.f32.mrb[0].mxu0
        %v1441 = vadd.f32 0.0, %v1440
        %v1442 = vpop.f32.mrb[0].mxu0
        %1443 = vmatprep.mubr.f32.mxu0 0.0
        %1444 = vmatmul.mubr.f32.gmra.mrb[0].mxu0 %v1231
        %v1445 = vpop.f32.mrb[0].mxu0
        %v1446 = vadd.f32 0.0, %v1445
        %v1447 = vpop.f32.mrb[0].mxu0
        %1448 = vmatprep.mubr.f32.mxu0 0.0
        %1449 = vmatmul.mubr.f32.gmra.mrb[0].mxu0 %v1234
        %v1450 = vpop.f32.mrb[0].mxu0
        %v1451 = vadd.f32 0.0, %v1450
        %v1452 = vpop.f32.mrb[0].mxu0
        %1453 = vmatprep.mubr.f32.mxu0 0.0
        %1454 = vmatmul.mubr.f32.gmra.mrb[0].mxu0 %v1237
        %v1455 = vpop.f32.mrb[0].mxu0
        %v1456 = vadd.f32 0.0, %v1455
        %v1457 = vpop.f32.mrb[0].mxu0
        %1458 = vmatprep.mubr.f32.mxu0 0.0
        %1459 = vmatmul.mubr.f32.gmra.mrb[0].mxu0 %v1240
        %v1460 = vpop.f32.mrb[0].mxu0
        %v1461 = vadd.f32 0.0, %v1460
        %v1462 = vpop.f32.mrb[0].mxu0
        %1463 = vmatprep.mubr.f32.mxu0 0.0
        %1464 = vmatmul.mubr.f32.gmra.mrb[0].mxu0 %v1243
        %v1465 = vpop.f32.mrb[0].mxu0
        %v1466 = vadd.f32 0.0, %v1465
        %v1467 = vpop.f32.mrb[0].mxu0
        %1468 = vmatprep.mubr.f32.mxu0 0.0
        %1469 = vmatmul.mubr.f32.gmra.mrb[0].mxu0 %v1246
        %v1470 = vpop.f32.mrb[0].mxu0
        %v1471 = vadd.f32 0.0, %v1470
        %v1472 = vpop.f32.mrb[0].mxu0
        %1473 = vmatprep.mubr.f32.mxu0 0.0
        %1474 = vmatmul.mubr.f32.gmra.mrb[0].mxu0 %v1249
        %v1475 = vpop.f32.mrb[0].mxu0
        %v1476 = vadd.f32 0.0, %v1475
        %v1477 = vpop.f32.mrb[0].mxu0
        %1478 = vdwg.mxu0
        %v1479 = vadd.f32 %v963, %v1321
        %v1480 = vadd.f32 %v968, %v1326
        %v1481 = vadd.f32 %v973, %v1331
        %v1482 = vadd.f32 %v978, %v1336
        %v1483 = vadd.f32 %v983, %v1341
        %v1484 = vadd.f32 %v988, %v1346
        %v1485 = vadd.f32 %v993, %v1351
        %v1486 = vadd.f32 %v998, %v1356
        %v1487 = vadd.f32 %v1003, %v1361
        %v1488 = vadd.f32 %v1008, %v1366
        %v1489 = vadd.f32 %v1013, %v1371
        %v1490 = vadd.f32 %v1018, %v1376
        %v1491 = vadd.f32 %v1023, %v1381
        %v1492 = vadd.f32 %v1028, %v1386
        %v1493 = vadd.f32 %v1033, %v1391
        %v1494 = vadd.f32 %v1038, %v1396
        %v1495 = vadd.f32 %v1043, %v1401
        %v1496 = vadd.f32 %v1048, %v1406
        %v1497 = vadd.f32 %v1053, %v1411
        %v1498 = vadd.f32 %v1058, %v1416
        %v1499 = vadd.f32 %v1063, %v1421
        %v1500 = vadd.f32 %v1068, %v1426
        %v1501 = vadd.f32 %v1073, %v1431
        %v1502 = vadd.f32 %v1078, %v1436
        %v1503 = vadd.f32 %v1083, %v1441
        %v1504 = vadd.f32 %v1088, %v1446
        %v1505 = vadd.f32 %v1093, %v1451
        %v1506 = vadd.f32 %v1098, %v1456
        %v1507 = vadd.f32 %v1103, %v1461
        %v1508 = vadd.f32 %v1108, %v1466
        %v1509 = vadd.f32 %v1113, %v1471
        %v1510 = vadd.f32 %v1118, %v1476
        %v1511 = vld [vmem:[%s372] sm:$0xff]
        %v1512 = vld [vmem:[%s372 + $0x8] sm:$0xff]
        %v1513 = vld [vmem:[%s372 + $0x18] sm:$0xff]
        %v1514 = vld [vmem:[%s372 + $0x20] sm:$0xff]
        %v1515 = vld [vmem:[%s372 + $0x30] sm:$0xff]
        %v1516 = vld [vmem:[%s372 + $0x38] sm:$0xff]
        %v1517 = vld [vmem:[%s372 + $0x48] sm:$0xff]
        %v1518 = vld [vmem:[%s372 + $0x50] sm:$0xff]
        %v1519 = vld [vmem:[%s372 + $0x60] sm:$0xff]
        %v1520 = vld [vmem:[%s372 + $0x68] sm:$0xff]
        %v1521 = vld [vmem:[%s372 + $0x78] sm:$0xff]
        %v1522 = vld [vmem:[%s372 + $0x80] sm:$0xff]
        %v1523 = vld [vmem:[%s372 + $0x90] sm:$0xff]
        %v1524 = vld [vmem:[%s372 + $0x98] sm:$0xff]
        %v1525 = vld [vmem:[%s372 + $0xa8] sm:$0xff]
        %v1526 = vld [vmem:[%s372 + $0xb0] sm:$0xff]
        %v1527 = vld [vmem:[%s372 + $0xc0] sm:$0xff]
        %v1528 = vld [vmem:[%s372 + $0xc8] sm:$0xff]
        %v1529 = vld [vmem:[%s372 + $0xd8] sm:$0xff]
        %v1530 = vld [vmem:[%s372 + $0xe0] sm:$0xff]
        %v1531 = vld [vmem:[%s372 + $0xf0] sm:$0xff]
        %v1532 = vld [vmem:[%s372 + $0xf8] sm:$0xff]
        %v1533 = vld [vmem:[%s372 + $0x108] sm:$0xff]
        %v1534 = vld [vmem:[%s372 + $0x110] sm:$0xff]
        %v1535 = vld [vmem:[%s372 + $0x120] sm:$0xff]
        %v1536 = vld [vmem:[%s372 + $0x128] sm:$0xff]
        %v1537 = vld [vmem:[%s372 + $0x138] sm:$0xff]
        %v1538 = vld [vmem:[%s372 + $0x140] sm:$0xff]
        %v1539 = vld [vmem:[%s372 + $0x150] sm:$0xff]
        %v1540 = vld [vmem:[%s372 + $0x158] sm:$0xff]
        %v1541 = vld [vmem:[%s372 + $0x168] sm:$0xff]
        %v1542 = vld [vmem:[%s372 + $0x170] sm:$0xff]
        %s1543 = scalar_lea.vmem [#allocation6], 12
        %v1544 = vld [vmem:[%s1543] sm:$0xf]
        %v1546 = vsel %vm326, %v1511, 0
        %v1549 = vsel %vm326, %v1512, 0
        %v1552 = vsel %vm326, %v1513, 0
        %v1555 = vsel %vm326, %v1514, 0
        %v1558 = vsel %vm326, %v1515, 0
        %v1561 = vsel %vm326, %v1516, 0
        %v1564 = vsel %vm326, %v1517, 0
        %v1567 = vsel %vm326, %v1518, 0
        %v1570 = vsel %vm326, %v1519, 0
        %v1573 = vsel %vm326, %v1520, 0
        %v1576 = vsel %vm326, %v1521, 0
        %v1579 = vsel %vm326, %v1522, 0
        %v1582 = vsel %vm326, %v1523, 0
        %v1585 = vsel %vm326, %v1524, 0
        %v1588 = vsel %vm326, %v1525, 0
        %v1591 = vsel %vm326, %v1526, 0
        %v1594 = vsel %vm326, %v1527, 0
        %v1597 = vsel %vm326, %v1528, 0
        %v1600 = vsel %vm326, %v1529, 0
        %v1603 = vsel %vm326, %v1530, 0
        %v1606 = vsel %vm326, %v1531, 0
        %v1609 = vsel %vm326, %v1532, 0
        %v1612 = vsel %vm326, %v1533, 0
        %v1615 = vsel %vm326, %v1534, 0
        %v1618 = vsel %vm326, %v1535, 0
        %v1621 = vsel %vm326, %v1536, 0
        %v1624 = vsel %vm326, %v1537, 0
        %v1627 = vsel %vm326, %v1538, 0
        %v1630 = vsel %vm326, %v1539, 0
        %v1633 = vsel %vm326, %v1540, 0
        %v1636 = vsel %vm326, %v1541, 0
        %v1639 = vsel %vm326, %v1542, 0
        %v1642 = vsel %vm568, %v1544, 0
        %1644 = vmatprep.subr.mxu0 0.0
        %1645 = vmatpush1.msra.mxu0 %v1642
        %1646 = vmatprep.subr.mxu0 0.0
        %1647 = vmatpush1.msra.mxu0 0.0
        %1648 = vmatprep.subr.mxu0 0.0
        %1649 = vmatpush1.msra.mxu0 0.0
        %1650 = vmatprep.subr.mxu0 0.0
        %1651 = vmatpush1.msra.mxu0 0.0
        %1652 = vmatprep.subr.mxu0 0.0
        %1653 = vmatpush1.msra.mxu0 0.0
        %1654 = vmatprep.subr.mxu0 0.0
        %1655 = vmatpush1.msra.mxu0 0.0
        %1656 = vmatprep.subr.mxu0 0.0
        %1657 = vmatpush1.msra.mxu0 0.0
        %1658 = vmatprep.subr.mxu0 0.0
        %1659 = vmatpush1.msra.mxu0 0.0
        %1660 = vmatprep.subr.mxu0 0.0
        %1661 = vmatpush1.msra.mxu0 0.0
        %1662 = vmatprep.subr.mxu0 0.0
        %1663 = vmatpush1.msra.mxu0 0.0
        %1664 = vmatprep.subr.mxu0 0.0
        %1665 = vmatpush1.msra.mxu0 0.0
        %1666 = vmatprep.subr.mxu0 0.0
        %1667 = vmatpush1.msra.mxu0 0.0
        %1668 = vmatprep.subr.mxu0 0.0
        %1669 = vmatpush1.msra.mxu0 0.0
        %1670 = vmatprep.subr.mxu0 0.0
        %1671 = vmatpush1.msra.mxu0 0.0
        %1672 = vmatprep.subr.mxu0 0.0
        %1673 = vmatpush1.msra.mxu0 0.0
        %1674 = vmatprep.subr.mxu0 0.0
        %1675 = vmatpush1.msra.mxu0 0.0
        %1676 = vmatprep.subr.mxu0 0.0
        %1677 = vmatpush1.msra.mxu0 0.0
        %1678 = vmatprep.subr.mxu0 0.0
        %1679 = vmatpush1.msra.mxu0 0.0
        %1680 = vmatprep.subr.mxu0 0.0
        %1681 = vmatpush1.msra.mxu0 0.0
        %1682 = vmatprep.subr.mxu0 0.0
        %1683 = vmatpush1.msra.mxu0 0.0
        %1684 = vmatprep.subr.mxu0 0.0
        %1685 = vmatpush1.msra.mxu0 0.0
        %1686 = vmatprep.subr.mxu0 0.0
        %1687 = vmatpush1.msra.mxu0 0.0
        %1688 = vmatprep.subr.mxu0 0.0
        %1689 = vmatpush1.msra.mxu0 0.0
        %1690 = vmatprep.subr.mxu0 0.0
        %1691 = vmatpush1.msra.mxu0 0.0
        %1692 = vmatprep.subr.mxu0 0.0
        %1693 = vmatpush1.msra.mxu0 0.0
        %1694 = vmatprep.subr.mxu0 0.0
        %1695 = vmatpush1.msra.mxu0 0.0
        %1696 = vmatprep.subr.mxu0 0.0
        %1697 = vmatpush1.msra.mxu0 0.0
        %1698 = vmatprep.subr.mxu0 0.0
        %1699 = vmatpush1.msra.mxu0 0.0
        %1700 = vmatprep.subr.mxu0 0.0
        %1701 = vmatpush1.msra.mxu0 0.0
        %1702 = vmatprep.subr.mxu0 0.0
        %1703 = vmatpush1.msra.mxu0 0.0
        %1704 = vmatprep.subr.mxu0 0.0
        %1705 = vmatpush1.msra.mxu0 0.0
        %1706 = vmatprep.subr.mxu0 0.0
        %1707 = vmatpush1.msra.mxu0 0.0
        %1708 = vmatprep.mubr.f32.mxu0 0.0
        %1709 = vmatmul.mubr.f32.gmra.mrb[0].mxu0 %v1546
        %v1710 = vpop.f32.mrb[0].mxu0
        %v1711 = vadd.f32 0.0, %v1710
        %v1712 = vpop.f32.mrb[0].mxu0
        %1713 = vmatprep.mubr.f32.mxu0 0.0
        %1714 = vmatmul.mubr.f32.gmra.mrb[0].mxu0 %v1549
        %v1715 = vpop.f32.mrb[0].mxu0
        %v1716 = vadd.f32 0.0, %v1715
        %v1717 = vpop.f32.mrb[0].mxu0
        %1718 = vmatprep.mubr.f32.mxu0 0.0
        %1719 = vmatmul.mubr.f32.gmra.mrb[0].mxu0 %v1552
        %v1720 = vpop.f32.mrb[0].mxu0
        %v1721 = vadd.f32 0.0, %v1720
        %v1722 = vpop.f32.mrb[0].mxu0
        %1723 = vmatprep.mubr.f32.mxu0 0.0
        %1724 = vmatmul.mubr.f32.gmra.mrb[0].mxu0 %v1555
        %v1725 = vpop.f32.mrb[0].mxu0
        %v1726 = vadd.f32 0.0, %v1725
        %v1727 = vpop.f32.mrb[0].mxu0
        %1728 = vmatprep.mubr.f32.mxu0 0.0
        %1729 = vmatmul.mubr.f32.gmra.mrb[0].mxu0 %v1558
        %v1730 = vpop.f32.mrb[0].mxu0
        %v1731 = vadd.f32 0.0, %v1730
        %v1732 = vpop.f32.mrb[0].mxu0
        %1733 = vmatprep.mubr.f32.mxu0 0.0
        %1734 = vmatmul.mubr.f32.gmra.mrb[0].mxu0 %v1561
        %v1735 = vpop.f32.mrb[0].mxu0
        %v1736 = vadd.f32 0.0, %v1735
        %v1737 = vpop.f32.mrb[0].mxu0
        %1738 = vmatprep.mubr.f32.mxu0 0.0
        %1739 = vmatmul.mubr.f32.gmra.mrb[0].mxu0 %v1564
        %v1740 = vpop.f32.mrb[0].mxu0
        %v1741 = vadd.f32 0.0, %v1740
        %v1742 = vpop.f32.mrb[0].mxu0
        %1743 = vmatprep.mubr.f32.mxu0 0.0
        %1744 = vmatmul.mubr.f32.gmra.mrb[0].mxu0 %v1567
        %v1745 = vpop.f32.mrb[0].mxu0
        %v1746 = vadd.f32 0.0, %v1745
        %v1747 = vpop.f32.mrb[0].mxu0
        %1748 = vmatprep.mubr.f32.mxu0 0.0
        %1749 = vmatmul.mubr.f32.gmra.mrb[0].mxu0 %v1570
        %v1750 = vpop.f32.mrb[0].mxu0
        %v1751 = vadd.f32 0.0, %v1750
        %v1752 = vpop.f32.mrb[0].mxu0
        %1753 = vmatprep.mubr.f32.mxu0 0.0
        %1754 = vmatmul.mubr.f32.gmra.mrb[0].mxu0 %v1573
        %v1755 = vpop.f32.mrb[0].mxu0
        %v1756 = vadd.f32 0.0, %v1755
        %v1757 = vpop.f32.mrb[0].mxu0
        %1758 = vmatprep.mubr.f32.mxu0 0.0
        %1759 = vmatmul.mubr.f32.gmra.mrb[0].mxu0 %v1576
        %v1760 = vpop.f32.mrb[0].mxu0
        %v1761 = vadd.f32 0.0, %v1760
        %v1762 = vpop.f32.mrb[0].mxu0
        %1763 = vmatprep.mubr.f32.mxu0 0.0
        %1764 = vmatmul.mubr.f32.gmra.mrb[0].mxu0 %v1579
        %v1765 = vpop.f32.mrb[0].mxu0
        %v1766 = vadd.f32 0.0, %v1765
        %v1767 = vpop.f32.mrb[0].mxu0
        %1768 = vmatprep.mubr.f32.mxu0 0.0
        %1769 = vmatmul.mubr.f32.gmra.mrb[0].mxu0 %v1582
        %v1770 = vpop.f32.mrb[0].mxu0
        %v1771 = vadd.f32 0.0, %v1770
        %v1772 = vpop.f32.mrb[0].mxu0
        %1773 = vmatprep.mubr.f32.mxu0 0.0
        %1774 = vmatmul.mubr.f32.gmra.mrb[0].mxu0 %v1585
        %v1775 = vpop.f32.mrb[0].mxu0
        %v1776 = vadd.f32 0.0, %v1775
        %v1777 = vpop.f32.mrb[0].mxu0
        %1778 = vmatprep.mubr.f32.mxu0 0.0
        %1779 = vmatmul.mubr.f32.gmra.mrb[0].mxu0 %v1588
        %v1780 = vpop.f32.mrb[0].mxu0
        %v1781 = vadd.f32 0.0, %v1780
        %v1782 = vpop.f32.mrb[0].mxu0
        %1783 = vmatprep.mubr.f32.mxu0 0.0
        %1784 = vmatmul.mubr.f32.gmra.mrb[0].mxu0 %v1591
        %v1785 = vpop.f32.mrb[0].mxu0
        %v1786 = vadd.f32 0.0, %v1785
        %v1787 = vpop.f32.mrb[0].mxu0
        %1788 = vmatprep.mubr.f32.mxu0 0.0
        %1789 = vmatmul.mubr.f32.gmra.mrb[0].mxu0 %v1594
        %v1790 = vpop.f32.mrb[0].mxu0
        %v1791 = vadd.f32 0.0, %v1790
        %v1792 = vpop.f32.mrb[0].mxu0
        %1793 = vmatprep.mubr.f32.mxu0 0.0
        %1794 = vmatmul.mubr.f32.gmra.mrb[0].mxu0 %v1597
        %v1795 = vpop.f32.mrb[0].mxu0
        %v1796 = vadd.f32 0.0, %v1795
        %v1797 = vpop.f32.mrb[0].mxu0
        %1798 = vmatprep.mubr.f32.mxu0 0.0
        %1799 = vmatmul.mubr.f32.gmra.mrb[0].mxu0 %v1600
        %v1800 = vpop.f32.mrb[0].mxu0
        %v1801 = vadd.f32 0.0, %v1800
        %v1802 = vpop.f32.mrb[0].mxu0
        %1803 = vmatprep.mubr.f32.mxu0 0.0
        %1804 = vmatmul.mubr.f32.gmra.mrb[0].mxu0 %v1603
        %v1805 = vpop.f32.mrb[0].mxu0
        %v1806 = vadd.f32 0.0, %v1805
        %v1807 = vpop.f32.mrb[0].mxu0
        %1808 = vmatprep.mubr.f32.mxu0 0.0
        %1809 = vmatmul.mubr.f32.gmra.mrb[0].mxu0 %v1606
        %v1810 = vpop.f32.mrb[0].mxu0
        %v1811 = vadd.f32 0.0, %v1810
        %v1812 = vpop.f32.mrb[0].mxu0
        %1813 = vmatprep.mubr.f32.mxu0 0.0
        %1814 = vmatmul.mubr.f32.gmra.mrb[0].mxu0 %v1609
        %v1815 = vpop.f32.mrb[0].mxu0
        %v1816 = vadd.f32 0.0, %v1815
        %v1817 = vpop.f32.mrb[0].mxu0
        %1818 = vmatprep.mubr.f32.mxu0 0.0
        %1819 = vmatmul.mubr.f32.gmra.mrb[0].mxu0 %v1612
        %v1820 = vpop.f32.mrb[0].mxu0
        %v1821 = vadd.f32 0.0, %v1820
        %v1822 = vpop.f32.mrb[0].mxu0
        %1823 = vmatprep.mubr.f32.mxu0 0.0
        %1824 = vmatmul.mubr.f32.gmra.mrb[0].mxu0 %v1615
        %v1825 = vpop.f32.mrb[0].mxu0
        %v1826 = vadd.f32 0.0, %v1825
        %v1827 = vpop.f32.mrb[0].mxu0
        %1828 = vmatprep.mubr.f32.mxu0 0.0
        %1829 = vmatmul.mubr.f32.gmra.mrb[0].mxu0 %v1618
        %v1830 = vpop.f32.mrb[0].mxu0
        %v1831 = vadd.f32 0.0, %v1830
        %v1832 = vpop.f32.mrb[0].mxu0
        %1833 = vmatprep.mubr.f32.mxu0 0.0
        %1834 = vmatmul.mubr.f32.gmra.mrb[0].mxu0 %v1621
        %v1835 = vpop.f32.mrb[0].mxu0
        %v1836 = vadd.f32 0.0, %v1835
        %v1837 = vpop.f32.mrb[0].mxu0
        %1838 = vmatprep.mubr.f32.mxu0 0.0
        %1839 = vmatmul.mubr.f32.gmra.mrb[0].mxu0 %v1624
        %v1840 = vpop.f32.mrb[0].mxu0
        %v1841 = vadd.f32 0.0, %v1840
        %v1842 = vpop.f32.mrb[0].mxu0
        %1843 = vmatprep.mubr.f32.mxu0 0.0
        %1844 = vmatmul.mubr.f32.gmra.mrb[0].mxu0 %v1627
        %v1845 = vpop.f32.mrb[0].mxu0
        %v1846 = vadd.f32 0.0, %v1845
        %v1847 = vpop.f32.mrb[0].mxu0
        %1848 = vmatprep.mubr.f32.mxu0 0.0
        %1849 = vmatmul.mubr.f32.gmra.mrb[0].mxu0 %v1630
        %v1850 = vpop.f32.mrb[0].mxu0
        %v1851 = vadd.f32 0.0, %v1850
        %v1852 = vpop.f32.mrb[0].mxu0
        %1853 = vmatprep.mubr.f32.mxu0 0.0
        %1854 = vmatmul.mubr.f32.gmra.mrb[0].mxu0 %v1633
        %v1855 = vpop.f32.mrb[0].mxu0
        %v1856 = vadd.f32 0.0, %v1855
        %v1857 = vpop.f32.mrb[0].mxu0
        %1858 = vmatprep.mubr.f32.mxu0 0.0
        %1859 = vmatmul.mubr.f32.gmra.mrb[0].mxu0 %v1636
        %v1860 = vpop.f32.mrb[0].mxu0
        %v1861 = vadd.f32 0.0, %v1860
        %v1862 = vpop.f32.mrb[0].mxu0
        %1863 = vmatprep.mubr.f32.mxu0 0.0
        %1864 = vmatmul.mubr.f32.gmra.mrb[0].mxu0 %v1639
        %v1865 = vpop.f32.mrb[0].mxu0
        %v1866 = vadd.f32 0.0, %v1865
        %v1867 = vpop.f32.mrb[0].mxu0
        %1868 = vdwg.mxu0
        %v1869 = vadd.f32 %v1479, %v1711
        %v1870 = vadd.f32 %v1480, %v1716
        %v1871 = vadd.f32 %v1481, %v1721
        %v1872 = vadd.f32 %v1482, %v1726
        %v1873 = vadd.f32 %v1483, %v1731
        %v1874 = vadd.f32 %v1484, %v1736
        %v1875 = vadd.f32 %v1485, %v1741
        %v1876 = vadd.f32 %v1486, %v1746
        %v1877 = vadd.f32 %v1487, %v1751
        %v1878 = vadd.f32 %v1488, %v1756
        %v1879 = vadd.f32 %v1489, %v1761
        %v1880 = vadd.f32 %v1490, %v1766
        %v1881 = vadd.f32 %v1491, %v1771
        %v1882 = vadd.f32 %v1492, %v1776
        %v1883 = vadd.f32 %v1493, %v1781
        %v1884 = vadd.f32 %v1494, %v1786
        %v1885 = vadd.f32 %v1495, %v1791
        %v1886 = vadd.f32 %v1496, %v1796
        %v1887 = vadd.f32 %v1497, %v1801
        %v1888 = vadd.f32 %v1498, %v1806
        %v1889 = vadd.f32 %v1499, %v1811
        %v1890 = vadd.f32 %v1500, %v1816
        %v1891 = vadd.f32 %v1501, %v1821
        %v1892 = vadd.f32 %v1502, %v1826
        %v1893 = vadd.f32 %v1503, %v1831
        %v1894 = vadd.f32 %v1504, %v1836
        %v1895 = vadd.f32 %v1505, %v1841
        %v1896 = vadd.f32 %v1506, %v1846
        %v1897 = vadd.f32 %v1507, %v1851
        %v1898 = vadd.f32 %v1508, %v1856
        %v1899 = vadd.f32 %v1509, %v1861
        %v1900 = vadd.f32 %v1510, %v1866
        %v1901 = vld [vmem:[%s372 + $0x1] sm:$0xff]
        %v1902 = vld [vmem:[%s372 + $0x9] sm:$0xff]
        %v1903 = vld [vmem:[%s372 + $0x19] sm:$0xff]
        %v1904 = vld [vmem:[%s372 + $0x21] sm:$0xff]
        %v1905 = vld [vmem:[%s372 + $0x31] sm:$0xff]
        %v1906 = vld [vmem:[%s372 + $0x39] sm:$0xff]
        %v1907 = vld [vmem:[%s372 + $0x49] sm:$0xff]
        %v1908 = vld [vmem:[%s372 + $0x51] sm:$0xff]
        %v1909 = vld [vmem:[%s372 + $0x61] sm:$0xff]
        %v1910 = vld [vmem:[%s372 + $0x69] sm:$0xff]
        %v1911 = vld [vmem:[%s372 + $0x79] sm:$0xff]
        %v1912 = vld [vmem:[%s372 + $0x81] sm:$0xff]
        %v1913 = vld [vmem:[%s372 + $0x91] sm:$0xff]
        %v1914 = vld [vmem:[%s372 + $0x99] sm:$0xff]
        %v1915 = vld [vmem:[%s372 + $0xa9] sm:$0xff]
        %v1916 = vld [vmem:[%s372 + $0xb1] sm:$0xff]
        %v1917 = vld [vmem:[%s372 + $0xc1] sm:$0xff]
        %v1918 = vld [vmem:[%s372 + $0xc9] sm:$0xff]
        %v1919 = vld [vmem:[%s372 + $0xd9] sm:$0xff]
        %v1920 = vld [vmem:[%s372 + $0xe1] sm:$0xff]
        %v1921 = vld [vmem:[%s372 + $0xf1] sm:$0xff]
        %v1922 = vld [vmem:[%s372 + $0xf9] sm:$0xff]
        %v1923 = vld [vmem:[%s372 + $0x109] sm:$0xff]
        %v1924 = vld [vmem:[%s372 + $0x111] sm:$0xff]
        %v1925 = vld [vmem:[%s372 + $0x121] sm:$0xff]
        %v1926 = vld [vmem:[%s372 + $0x129] sm:$0xff]
        %v1927 = vld [vmem:[%s372 + $0x139] sm:$0xff]
        %v1928 = vld [vmem:[%s372 + $0x141] sm:$0xff]
        %v1929 = vld [vmem:[%s372 + $0x151] sm:$0xff]
        %v1930 = vld [vmem:[%s372 + $0x159] sm:$0xff]
        %v1931 = vld [vmem:[%s372 + $0x169] sm:$0xff]
        %v1932 = vld [vmem:[%s372 + $0x171] sm:$0xff]
        %s1933 = scalar_lea.vmem [#allocation6], 16
        %v1934 = vld [vmem:[%s1933] sm:$0xf]
        %v1936 = vsel %vm326, %v1901, 0
        %v1939 = vsel %vm326, %v1902, 0
        %v1942 = vsel %vm326, %v1903, 0
        %v1945 = vsel %vm326, %v1904, 0
        %v1948 = vsel %vm326, %v1905, 0
        %v1951 = vsel %vm326, %v1906, 0
        %v1954 = vsel %vm326, %v1907, 0
        %v1957 = vsel %vm326, %v1908, 0
        %v1960 = vsel %vm326, %v1909, 0
        %v1963 = vsel %vm326, %v1910, 0
        %v1966 = vsel %vm326, %v1911, 0
        %v1969 = vsel %vm326, %v1912, 0
        %v1972 = vsel %vm326, %v1913, 0
        %v1975 = vsel %vm326, %v1914, 0
        %v1978 = vsel %vm326, %v1915, 0
        %v1981 = vsel %vm326, %v1916, 0
        %v1984 = vsel %vm326, %v1917, 0
        %v1987 = vsel %vm326, %v1918, 0
        %v1990 = vsel %vm326, %v1919, 0
        %v1993 = vsel %vm326, %v1920, 0
        %v1996 = vsel %vm326, %v1921, 0
        %v1999 = vsel %vm326, %v1922, 0
        %v2002 = vsel %vm326, %v1923, 0
        %v2005 = vsel %vm326, %v1924, 0
        %v2008 = vsel %vm326, %v1925, 0
        %v2011 = vsel %vm326, %v1926, 0
        %v2014 = vsel %vm326, %v1927, 0
        %v2017 = vsel %vm326, %v1928, 0
        %v2020 = vsel %vm326, %v1929, 0
        %v2023 = vsel %vm326, %v1930, 0
        %v2026 = vsel %vm326, %v1931, 0
        %v2029 = vsel %vm326, %v1932, 0
        %v2032 = vsel %vm568, %v1934, 0
        %2034 = vmatprep.subr.mxu0 0.0
        %2035 = vmatpush1.msra.mxu0 %v2032
        %2036 = vmatprep.subr.mxu0 0.0
        %2037 = vmatpush1.msra.mxu0 0.0
        %2038 = vmatprep.subr.mxu0 0.0
        %2039 = vmatpush1.msra.mxu0 0.0
        %2040 = vmatprep.subr.mxu0 0.0
        %2041 = vmatpush1.msra.mxu0 0.0
        %2042 = vmatprep.subr.mxu0 0.0
        %2043 = vmatpush1.msra.mxu0 0.0
        %2044 = vmatprep.subr.mxu0 0.0
        %2045 = vmatpush1.msra.mxu0 0.0
        %2046 = vmatprep.subr.mxu0 0.0
        %2047 = vmatpush1.msra.mxu0 0.0
        %2048 = vmatprep.subr.mxu0 0.0
        %2049 = vmatpush1.msra.mxu0 0.0
        %2050 = vmatprep.subr.mxu0 0.0
        %2051 = vmatpush1.msra.mxu0 0.0
        %2052 = vmatprep.subr.mxu0 0.0
        %2053 = vmatpush1.msra.mxu0 0.0
        %2054 = vmatprep.subr.mxu0 0.0
        %2055 = vmatpush1.msra.mxu0 0.0
        %2056 = vmatprep.subr.mxu0 0.0
        %2057 = vmatpush1.msra.mxu0 0.0
        %2058 = vmatprep.subr.mxu0 0.0
        %2059 = vmatpush1.msra.mxu0 0.0
        %2060 = vmatprep.subr.mxu0 0.0
        %2061 = vmatpush1.msra.mxu0 0.0
        %2062 = vmatprep.subr.mxu0 0.0
        %2063 = vmatpush1.msra.mxu0 0.0
        %2064 = vmatprep.subr.mxu0 0.0
        %2065 = vmatpush1.msra.mxu0 0.0
        %2066 = vmatprep.subr.mxu0 0.0
        %2067 = vmatpush1.msra.mxu0 0.0
        %2068 = vmatprep.subr.mxu0 0.0
        %2069 = vmatpush1.msra.mxu0 0.0
        %2070 = vmatprep.subr.mxu0 0.0
        %2071 = vmatpush1.msra.mxu0 0.0
        %2072 = vmatprep.subr.mxu0 0.0
        %2073 = vmatpush1.msra.mxu0 0.0
        %2074 = vmatprep.subr.mxu0 0.0
        %2075 = vmatpush1.msra.mxu0 0.0
        %2076 = vmatprep.subr.mxu0 0.0
        %2077 = vmatpush1.msra.mxu0 0.0
        %2078 = vmatprep.subr.mxu0 0.0
        %2079 = vmatpush1.msra.mxu0 0.0
        %2080 = vmatprep.subr.mxu0 0.0
        %2081 = vmatpush1.msra.mxu0 0.0
        %2082 = vmatprep.subr.mxu0 0.0
        %2083 = vmatpush1.msra.mxu0 0.0
        %2084 = vmatprep.subr.mxu0 0.0
        %2085 = vmatpush1.msra.mxu0 0.0
        %2086 = vmatprep.subr.mxu0 0.0
        %2087 = vmatpush1.msra.mxu0 0.0
        %2088 = vmatprep.subr.mxu0 0.0
        %2089 = vmatpush1.msra.mxu0 0.0
        %2090 = vmatprep.subr.mxu0 0.0
        %2091 = vmatpush1.msra.mxu0 0.0
        %2092 = vmatprep.subr.mxu0 0.0
        %2093 = vmatpush1.msra.mxu0 0.0
        %2094 = vmatprep.subr.mxu0 0.0
        %2095 = vmatpush1.msra.mxu0 0.0
        %2096 = vmatprep.subr.mxu0 0.0
        %2097 = vmatpush1.msra.mxu0 0.0
        %2098 = vmatprep.mubr.f32.mxu0 0.0
        %2099 = vmatmul.mubr.f32.gmra.mrb[0].mxu0 %v1936
        %v2100 = vpop.f32.mrb[0].mxu0
        %v2101 = vadd.f32 0.0, %v2100
        %v2102 = vpop.f32.mrb[0].mxu0
        %2103 = vmatprep.mubr.f32.mxu0 0.0
        %2104 = vmatmul.mubr.f32.gmra.mrb[0].mxu0 %v1939
        %v2105 = vpop.f32.mrb[0].mxu0
        %v2106 = vadd.f32 0.0, %v2105
        %v2107 = vpop.f32.mrb[0].mxu0
        %2108 = vmatprep.mubr.f32.mxu0 0.0
        %2109 = vmatmul.mubr.f32.gmra.mrb[0].mxu0 %v1942
        %v2110 = vpop.f32.mrb[0].mxu0
        %v2111 = vadd.f32 0.0, %v2110
        %v2112 = vpop.f32.mrb[0].mxu0
        %2113 = vmatprep.mubr.f32.mxu0 0.0
        %2114 = vmatmul.mubr.f32.gmra.mrb[0].mxu0 %v1945
        %v2115 = vpop.f32.mrb[0].mxu0
        %v2116 = vadd.f32 0.0, %v2115
        %v2117 = vpop.f32.mrb[0].mxu0
        %2118 = vmatprep.mubr.f32.mxu0 0.0
        %2119 = vmatmul.mubr.f32.gmra.mrb[0].mxu0 %v1948
        %v2120 = vpop.f32.mrb[0].mxu0
        %v2121 = vadd.f32 0.0, %v2120
        %v2122 = vpop.f32.mrb[0].mxu0
        %2123 = vmatprep.mubr.f32.mxu0 0.0
        %2124 = vmatmul.mubr.f32.gmra.mrb[0].mxu0 %v1951
        %v2125 = vpop.f32.mrb[0].mxu0
        %v2126 = vadd.f32 0.0, %v2125
        %v2127 = vpop.f32.mrb[0].mxu0
        %2128 = vmatprep.mubr.f32.mxu0 0.0
        %2129 = vmatmul.mubr.f32.gmra.mrb[0].mxu0 %v1954
        %v2130 = vpop.f32.mrb[0].mxu0
        %v2131 = vadd.f32 0.0, %v2130
        %v2132 = vpop.f32.mrb[0].mxu0
        %2133 = vmatprep.mubr.f32.mxu0 0.0
        %2134 = vmatmul.mubr.f32.gmra.mrb[0].mxu0 %v1957
        %v2135 = vpop.f32.mrb[0].mxu0
        %v2136 = vadd.f32 0.0, %v2135
        %v2137 = vpop.f32.mrb[0].mxu0
        %2138 = vmatprep.mubr.f32.mxu0 0.0
        %2139 = vmatmul.mubr.f32.gmra.mrb[0].mxu0 %v1960
        %v2140 = vpop.f32.mrb[0].mxu0
        %v2141 = vadd.f32 0.0, %v2140
        %v2142 = vpop.f32.mrb[0].mxu0
        %2143 = vmatprep.mubr.f32.mxu0 0.0
        %2144 = vmatmul.mubr.f32.gmra.mrb[0].mxu0 %v1963
        %v2145 = vpop.f32.mrb[0].mxu0
        %v2146 = vadd.f32 0.0, %v2145
        %v2147 = vpop.f32.mrb[0].mxu0
        %2148 = vmatprep.mubr.f32.mxu0 0.0
        %2149 = vmatmul.mubr.f32.gmra.mrb[0].mxu0 %v1966
        %v2150 = vpop.f32.mrb[0].mxu0
        %v2151 = vadd.f32 0.0, %v2150
        %v2152 = vpop.f32.mrb[0].mxu0
        %2153 = vmatprep.mubr.f32.mxu0 0.0
        %2154 = vmatmul.mubr.f32.gmra.mrb[0].mxu0 %v1969
        %v2155 = vpop.f32.mrb[0].mxu0
        %v2156 = vadd.f32 0.0, %v2155
        %v2157 = vpop.f32.mrb[0].mxu0
        %2158 = vmatprep.mubr.f32.mxu0 0.0
        %2159 = vmatmul.mubr.f32.gmra.mrb[0].mxu0 %v1972
        %v2160 = vpop.f32.mrb[0].mxu0
        %v2161 = vadd.f32 0.0, %v2160
        %v2162 = vpop.f32.mrb[0].mxu0
        %2163 = vmatprep.mubr.f32.mxu0 0.0
        %2164 = vmatmul.mubr.f32.gmra.mrb[0].mxu0 %v1975
        %v2165 = vpop.f32.mrb[0].mxu0
        %v2166 = vadd.f32 0.0, %v2165
        %v2167 = vpop.f32.mrb[0].mxu0
        %2168 = vmatprep.mubr.f32.mxu0 0.0
        %2169 = vmatmul.mubr.f32.gmra.mrb[0].mxu0 %v1978
        %v2170 = vpop.f32.mrb[0].mxu0
        %v2171 = vadd.f32 0.0, %v2170
        %v2172 = vpop.f32.mrb[0].mxu0
        %2173 = vmatprep.mubr.f32.mxu0 0.0
        %2174 = vmatmul.mubr.f32.gmra.mrb[0].mxu0 %v1981
        %v2175 = vpop.f32.mrb[0].mxu0
        %v2176 = vadd.f32 0.0, %v2175
        %v2177 = vpop.f32.mrb[0].mxu0
        %2178 = vmatprep.mubr.f32.mxu0 0.0
        %2179 = vmatmul.mubr.f32.gmra.mrb[0].mxu0 %v1984
        %v2180 = vpop.f32.mrb[0].mxu0
        %v2181 = vadd.f32 0.0, %v2180
        %v2182 = vpop.f32.mrb[0].mxu0
        %2183 = vmatprep.mubr.f32.mxu0 0.0
        %2184 = vmatmul.mubr.f32.gmra.mrb[0].mxu0 %v1987
        %v2185 = vpop.f32.mrb[0].mxu0
        %v2186 = vadd.f32 0.0, %v2185
        %v2187 = vpop.f32.mrb[0].mxu0
        %2188 = vmatprep.mubr.f32.mxu0 0.0
        %2189 = vmatmul.mubr.f32.gmra.mrb[0].mxu0 %v1990
        %v2190 = vpop.f32.mrb[0].mxu0
        %v2191 = vadd.f32 0.0, %v2190
        %v2192 = vpop.f32.mrb[0].mxu0
        %2193 = vmatprep.mubr.f32.mxu0 0.0
        %2194 = vmatmul.mubr.f32.gmra.mrb[0].mxu0 %v1993
        %v2195 = vpop.f32.mrb[0].mxu0
        %v2196 = vadd.f32 0.0, %v2195
        %v2197 = vpop.f32.mrb[0].mxu0
        %2198 = vmatprep.mubr.f32.mxu0 0.0
        %2199 = vmatmul.mubr.f32.gmra.mrb[0].mxu0 %v1996
        %v2200 = vpop.f32.mrb[0].mxu0
        %v2201 = vadd.f32 0.0, %v2200
        %v2202 = vpop.f32.mrb[0].mxu0
        %2203 = vmatprep.mubr.f32.mxu0 0.0
        %2204 = vmatmul.mubr.f32.gmra.mrb[0].mxu0 %v1999
        %v2205 = vpop.f32.mrb[0].mxu0
        %v2206 = vadd.f32 0.0, %v2205
        %v2207 = vpop.f32.mrb[0].mxu0
        %2208 = vmatprep.mubr.f32.mxu0 0.0
        %2209 = vmatmul.mubr.f32.gmra.mrb[0].mxu0 %v2002
        %v2210 = vpop.f32.mrb[0].mxu0
        %v2211 = vadd.f32 0.0, %v2210
        %v2212 = vpop.f32.mrb[0].mxu0
        %2213 = vmatprep.mubr.f32.mxu0 0.0
        %2214 = vmatmul.mubr.f32.gmra.mrb[0].mxu0 %v2005
        %v2215 = vpop.f32.mrb[0].mxu0
        %v2216 = vadd.f32 0.0, %v2215
        %v2217 = vpop.f32.mrb[0].mxu0
        %2218 = vmatprep.mubr.f32.mxu0 0.0
        %2219 = vmatmul.mubr.f32.gmra.mrb[0].mxu0 %v2008
        %v2220 = vpop.f32.mrb[0].mxu0
        %v2221 = vadd.f32 0.0, %v2220
        %v2222 = vpop.f32.mrb[0].mxu0
        %2223 = vmatprep.mubr.f32.mxu0 0.0
        %2224 = vmatmul.mubr.f32.gmra.mrb[0].mxu0 %v2011
        %v2225 = vpop.f32.mrb[0].mxu0
        %v2226 = vadd.f32 0.0, %v2225
        %v2227 = vpop.f32.mrb[0].mxu0
        %2228 = vmatprep.mubr.f32.mxu0 0.0
        %2229 = vmatmul.mubr.f32.gmra.mrb[0].mxu0 %v2014
        %v2230 = vpop.f32.mrb[0].mxu0
        %v2231 = vadd.f32 0.0, %v2230
        %v2232 = vpop.f32.mrb[0].mxu0
        %2233 = vmatprep.mubr.f32.mxu0 0.0
        %2234 = vmatmul.mubr.f32.gmra.mrb[0].mxu0 %v2017
        %v2235 = vpop.f32.mrb[0].mxu0
        %v2236 = vadd.f32 0.0, %v2235
        %v2237 = vpop.f32.mrb[0].mxu0
        %2238 = vmatprep.mubr.f32.mxu0 0.0
        %2239 = vmatmul.mubr.f32.gmra.mrb[0].mxu0 %v2020
        %v2240 = vpop.f32.mrb[0].mxu0
        %v2241 = vadd.f32 0.0, %v2240
        %v2242 = vpop.f32.mrb[0].mxu0
        %2243 = vmatprep.mubr.f32.mxu0 0.0
        %2244 = vmatmul.mubr.f32.gmra.mrb[0].mxu0 %v2023
        %v2245 = vpop.f32.mrb[0].mxu0
        %v2246 = vadd.f32 0.0, %v2245
        %v2247 = vpop.f32.mrb[0].mxu0
        %2248 = vmatprep.mubr.f32.mxu0 0.0
        %2249 = vmatmul.mubr.f32.gmra.mrb[0].mxu0 %v2026
        %v2250 = vpop.f32.mrb[0].mxu0
        %v2251 = vadd.f32 0.0, %v2250
        %v2252 = vpop.f32.mrb[0].mxu0
        %2253 = vmatprep.mubr.f32.mxu0 0.0
        %2254 = vmatmul.mubr.f32.gmra.mrb[0].mxu0 %v2029
        %v2255 = vpop.f32.mrb[0].mxu0
        %v2256 = vadd.f32 0.0, %v2255
        %v2257 = vpop.f32.mrb[0].mxu0
        %2258 = vdwg.mxu0
        %v2259 = vadd.f32 %v1869, %v2101
        %v2260 = vadd.f32 %v1870, %v2106
        %v2261 = vadd.f32 %v1871, %v2111
        %v2262 = vadd.f32 %v1872, %v2116
        %v2263 = vadd.f32 %v1873, %v2121
        %v2264 = vadd.f32 %v1874, %v2126
        %v2265 = vadd.f32 %v1875, %v2131
        %v2266 = vadd.f32 %v1876, %v2136
        %v2267 = vadd.f32 %v1877, %v2141
        %v2268 = vadd.f32 %v1878, %v2146
        %v2269 = vadd.f32 %v1879, %v2151
        %v2270 = vadd.f32 %v1880, %v2156
        %v2271 = vadd.f32 %v1881, %v2161
        %v2272 = vadd.f32 %v1882, %v2166
        %v2273 = vadd.f32 %v1883, %v2171
        %v2274 = vadd.f32 %v1884, %v2176
        %v2275 = vadd.f32 %v1885, %v2181
        %v2276 = vadd.f32 %v1886, %v2186
        %v2277 = vadd.f32 %v1887, %v2191
        %v2278 = vadd.f32 %v1888, %v2196
        %v2279 = vadd.f32 %v1889, %v2201
        %v2280 = vadd.f32 %v1890, %v2206
        %v2281 = vadd.f32 %v1891, %v2211
        %v2282 = vadd.f32 %v1892, %v2216
        %v2283 = vadd.f32 %v1893, %v2221
        %v2284 = vadd.f32 %v1894, %v2226
        %v2285 = vadd.f32 %v1895, %v2231
        %v2286 = vadd.f32 %v1896, %v2236
        %v2287 = vadd.f32 %v1897, %v2241
        %v2288 = vadd.f32 %v1898, %v2246
        %v2289 = vadd.f32 %v1899, %v2251
        %v2290 = vadd.f32 %v1900, %v2256
        %v2291 = vld [vmem:[%s372 + $0x2] sm:$0xff]
        %v2292 = vld [vmem:[%s372 + $0xa] sm:$0xff]
        %v2293 = vld [vmem:[%s372 + $0x1a] sm:$0xff]
        %v2294 = vld [vmem:[%s372 + $0x22] sm:$0xff]
        %v2295 = vld [vmem:[%s372 + $0x32] sm:$0xff]
        %v2296 = vld [vmem:[%s372 + $0x3a] sm:$0xff]
        %v2297 = vld [vmem:[%s372 + $0x4a] sm:$0xff]
        %v2298 = vld [vmem:[%s372 + $0x52] sm:$0xff]
        %v2299 = vld [vmem:[%s372 + $0x62] sm:$0xff]
        %v2300 = vld [vmem:[%s372 + $0x6a] sm:$0xff]
        %v2301 = vld [vmem:[%s372 + $0x7a] sm:$0xff]
        %v2302 = vld [vmem:[%s372 + $0x82] sm:$0xff]
        %v2303 = vld [vmem:[%s372 + $0x92] sm:$0xff]
        %v2304 = vld [vmem:[%s372 + $0x9a] sm:$0xff]
        %v2305 = vld [vmem:[%s372 + $0xaa] sm:$0xff]
        %v2306 = vld [vmem:[%s372 + $0xb2] sm:$0xff]
        %v2307 = vld [vmem:[%s372 + $0xc2] sm:$0xff]
        %v2308 = vld [vmem:[%s372 + $0xca] sm:$0xff]
        %v2309 = vld [vmem:[%s372 + $0xda] sm:$0xff]
        %v2310 = vld [vmem:[%s372 + $0xe2] sm:$0xff]
        %v2311 = vld [vmem:[%s372 + $0xf2] sm:$0xff]
        %v2312 = vld [vmem:[%s372 + $0xfa] sm:$0xff]
        %v2313 = vld [vmem:[%s372 + $0x10a] sm:$0xff]
        %v2314 = vld [vmem:[%s372 + $0x112] sm:$0xff]
        %v2315 = vld [vmem:[%s372 + $0x122] sm:$0xff]
        %v2316 = vld [vmem:[%s372 + $0x12a] sm:$0xff]
        %v2317 = vld [vmem:[%s372 + $0x13a] sm:$0xff]
        %v2318 = vld [vmem:[%s372 + $0x142] sm:$0xff]
        %v2319 = vld [vmem:[%s372 + $0x152] sm:$0xff]
        %v2320 = vld [vmem:[%s372 + $0x15a] sm:$0xff]
        %v2321 = vld [vmem:[%s372 + $0x16a] sm:$0xff]
        %v2322 = vld [vmem:[%s372 + $0x172] sm:$0xff]
        %s2323 = scalar_lea.vmem [#allocation6], 20
        %v2324 = vld [vmem:[%s2323] sm:$0xf]
        %v2326 = vsel %vm326, %v2291, 0
        %v2329 = vsel %vm326, %v2292, 0
        %v2332 = vsel %vm326, %v2293, 0
        %v2335 = vsel %vm326, %v2294, 0
        %v2338 = vsel %vm326, %v2295, 0
        %v2341 = vsel %vm326, %v2296, 0
        %v2344 = vsel %vm326, %v2297, 0
        %v2347 = vsel %vm326, %v2298, 0
        %v2350 = vsel %vm326, %v2299, 0
        %v2353 = vsel %vm326, %v2300, 0
        %v2356 = vsel %vm326, %v2301, 0
        %v2359 = vsel %vm326, %v2302, 0
        %v2362 = vsel %vm326, %v2303, 0
        %v2365 = vsel %vm326, %v2304, 0
        %v2368 = vsel %vm326, %v2305, 0
        %v2371 = vsel %vm326, %v2306, 0
        %v2374 = vsel %vm326, %v2307, 0
        %v2377 = vsel %vm326, %v2308, 0
        %v2380 = vsel %vm326, %v2309, 0
        %v2383 = vsel %vm326, %v2310, 0
        %v2386 = vsel %vm326, %v2311, 0
        %v2389 = vsel %vm326, %v2312, 0
        %v2392 = vsel %vm326, %v2313, 0
        %v2395 = vsel %vm326, %v2314, 0
        %v2398 = vsel %vm326, %v2315, 0
        %v2401 = vsel %vm326, %v2316, 0
        %v2404 = vsel %vm326, %v2317, 0
        %v2407 = vsel %vm326, %v2318, 0
        %v2410 = vsel %vm326, %v2319, 0
        %v2413 = vsel %vm326, %v2320, 0
        %v2416 = vsel %vm326, %v2321, 0
        %v2419 = vsel %vm326, %v2322, 0
        %v2422 = vsel %vm568, %v2324, 0
        %2424 = vmatprep.subr.mxu0 0.0
        %2425 = vmatpush1.msra.mxu0 %v2422
        %2426 = vmatprep.subr.mxu0 0.0
        %2427 = vmatpush1.msra.mxu0 0.0
        %2428 = vmatprep.subr.mxu0 0.0
        %2429 = vmatpush1.msra.mxu0 0.0
        %2430 = vmatprep.subr.mxu0 0.0
        %2431 = vmatpush1.msra.mxu0 0.0
        %2432 = vmatprep.subr.mxu0 0.0
        %2433 = vmatpush1.msra.mxu0 0.0
        %2434 = vmatprep.subr.mxu0 0.0
        %2435 = vmatpush1.msra.mxu0 0.0
        %2436 = vmatprep.subr.mxu0 0.0
        %2437 = vmatpush1.msra.mxu0 0.0
        %2438 = vmatprep.subr.mxu0 0.0
        %2439 = vmatpush1.msra.mxu0 0.0
        %2440 = vmatprep.subr.mxu0 0.0
        %2441 = vmatpush1.msra.mxu0 0.0
        %2442 = vmatprep.subr.mxu0 0.0
        %2443 = vmatpush1.msra.mxu0 0.0
        %2444 = vmatprep.subr.mxu0 0.0
        %2445 = vmatpush1.msra.mxu0 0.0
        %2446 = vmatprep.subr.mxu0 0.0
        %2447 = vmatpush1.msra.mxu0 0.0
        %2448 = vmatprep.subr.mxu0 0.0
        %2449 = vmatpush1.msra.mxu0 0.0
        %2450 = vmatprep.subr.mxu0 0.0
        %2451 = vmatpush1.msra.mxu0 0.0
        %2452 = vmatprep.subr.mxu0 0.0
        %2453 = vmatpush1.msra.mxu0 0.0
        %2454 = vmatprep.subr.mxu0 0.0
        %2455 = vmatpush1.msra.mxu0 0.0
        %2456 = vmatprep.subr.mxu0 0.0
        %2457 = vmatpush1.msra.mxu0 0.0
        %2458 = vmatprep.subr.mxu0 0.0
        %2459 = vmatpush1.msra.mxu0 0.0
        %2460 = vmatprep.subr.mxu0 0.0
        %2461 = vmatpush1.msra.mxu0 0.0
        %2462 = vmatprep.subr.mxu0 0.0
        %2463 = vmatpush1.msra.mxu0 0.0
        %2464 = vmatprep.subr.mxu0 0.0
        %2465 = vmatpush1.msra.mxu0 0.0
        %2466 = vmatprep.subr.mxu0 0.0
        %2467 = vmatpush1.msra.mxu0 0.0
        %2468 = vmatprep.subr.mxu0 0.0
        %2469 = vmatpush1.msra.mxu0 0.0
        %2470 = vmatprep.subr.mxu0 0.0
        %2471 = vmatpush1.msra.mxu0 0.0
        %2472 = vmatprep.subr.mxu0 0.0
        %2473 = vmatpush1.msra.mxu0 0.0
        %2474 = vmatprep.subr.mxu0 0.0
        %2475 = vmatpush1.msra.mxu0 0.0
        %2476 = vmatprep.subr.mxu0 0.0
        %2477 = vmatpush1.msra.mxu0 0.0
        %2478 = vmatprep.subr.mxu0 0.0
        %2479 = vmatpush1.msra.mxu0 0.0
        %2480 = vmatprep.subr.mxu0 0.0
        %2481 = vmatpush1.msra.mxu0 0.0
        %2482 = vmatprep.subr.mxu0 0.0
        %2483 = vmatpush1.msra.mxu0 0.0
        %2484 = vmatprep.subr.mxu0 0.0
        %2485 = vmatpush1.msra.mxu0 0.0
        %2486 = vmatprep.subr.mxu0 0.0
        %2487 = vmatpush1.msra.mxu0 0.0
        %2488 = vmatprep.mubr.f32.mxu0 0.0
        %2489 = vmatmul.mubr.f32.gmra.mrb[0].mxu0 %v2326
        %v2490 = vpop.f32.mrb[0].mxu0
        %v2491 = vadd.f32 0.0, %v2490
        %v2492 = vpop.f32.mrb[0].mxu0
        %2493 = vmatprep.mubr.f32.mxu0 0.0
        %2494 = vmatmul.mubr.f32.gmra.mrb[0].mxu0 %v2329
        %v2495 = vpop.f32.mrb[0].mxu0
        %v2496 = vadd.f32 0.0, %v2495
        %v2497 = vpop.f32.mrb[0].mxu0
        %2498 = vmatprep.mubr.f32.mxu0 0.0
        %2499 = vmatmul.mubr.f32.gmra.mrb[0].mxu0 %v2332
        %v2500 = vpop.f32.mrb[0].mxu0
        %v2501 = vadd.f32 0.0, %v2500
        %v2502 = vpop.f32.mrb[0].mxu0
        %2503 = vmatprep.mubr.f32.mxu0 0.0
        %2504 = vmatmul.mubr.f32.gmra.mrb[0].mxu0 %v2335
        %v2505 = vpop.f32.mrb[0].mxu0
        %v2506 = vadd.f32 0.0, %v2505
        %v2507 = vpop.f32.mrb[0].mxu0
        %2508 = vmatprep.mubr.f32.mxu0 0.0
        %2509 = vmatmul.mubr.f32.gmra.mrb[0].mxu0 %v2338
        %v2510 = vpop.f32.mrb[0].mxu0
        %v2511 = vadd.f32 0.0, %v2510
        %v2512 = vpop.f32.mrb[0].mxu0
        %2513 = vmatprep.mubr.f32.mxu0 0.0
        %2514 = vmatmul.mubr.f32.gmra.mrb[0].mxu0 %v2341
        %v2515 = vpop.f32.mrb[0].mxu0
        %v2516 = vadd.f32 0.0, %v2515
        %v2517 = vpop.f32.mrb[0].mxu0
        %2518 = vmatprep.mubr.f32.mxu0 0.0
        %2519 = vmatmul.mubr.f32.gmra.mrb[0].mxu0 %v2344
        %v2520 = vpop.f32.mrb[0].mxu0
        %v2521 = vadd.f32 0.0, %v2520
        %v2522 = vpop.f32.mrb[0].mxu0
        %2523 = vmatprep.mubr.f32.mxu0 0.0
        %2524 = vmatmul.mubr.f32.gmra.mrb[0].mxu0 %v2347
        %v2525 = vpop.f32.mrb[0].mxu0
        %v2526 = vadd.f32 0.0, %v2525
        %v2527 = vpop.f32.mrb[0].mxu0
        %2528 = vmatprep.mubr.f32.mxu0 0.0
        %2529 = vmatmul.mubr.f32.gmra.mrb[0].mxu0 %v2350
        %v2530 = vpop.f32.mrb[0].mxu0
        %v2531 = vadd.f32 0.0, %v2530
        %v2532 = vpop.f32.mrb[0].mxu0
        %2533 = vmatprep.mubr.f32.mxu0 0.0
        %2534 = vmatmul.mubr.f32.gmra.mrb[0].mxu0 %v2353
        %v2535 = vpop.f32.mrb[0].mxu0
        %v2536 = vadd.f32 0.0, %v2535
        %v2537 = vpop.f32.mrb[0].mxu0
        %2538 = vmatprep.mubr.f32.mxu0 0.0
        %2539 = vmatmul.mubr.f32.gmra.mrb[0].mxu0 %v2356
        %v2540 = vpop.f32.mrb[0].mxu0
        %v2541 = vadd.f32 0.0, %v2540
        %v2542 = vpop.f32.mrb[0].mxu0
        %2543 = vmatprep.mubr.f32.mxu0 0.0
        %2544 = vmatmul.mubr.f32.gmra.mrb[0].mxu0 %v2359
        %v2545 = vpop.f32.mrb[0].mxu0
        %v2546 = vadd.f32 0.0, %v2545
        %v2547 = vpop.f32.mrb[0].mxu0
        %2548 = vmatprep.mubr.f32.mxu0 0.0
        %2549 = vmatmul.mubr.f32.gmra.mrb[0].mxu0 %v2362
        %v2550 = vpop.f32.mrb[0].mxu0
        %v2551 = vadd.f32 0.0, %v2550
        %v2552 = vpop.f32.mrb[0].mxu0
        %2553 = vmatprep.mubr.f32.mxu0 0.0
        %2554 = vmatmul.mubr.f32.gmra.mrb[0].mxu0 %v2365
        %v2555 = vpop.f32.mrb[0].mxu0
        %v2556 = vadd.f32 0.0, %v2555
        %v2557 = vpop.f32.mrb[0].mxu0
        %2558 = vmatprep.mubr.f32.mxu0 0.0
        %2559 = vmatmul.mubr.f32.gmra.mrb[0].mxu0 %v2368
        %v2560 = vpop.f32.mrb[0].mxu0
        %v2561 = vadd.f32 0.0, %v2560
        %v2562 = vpop.f32.mrb[0].mxu0
        %2563 = vmatprep.mubr.f32.mxu0 0.0
        %2564 = vmatmul.mubr.f32.gmra.mrb[0].mxu0 %v2371
        %v2565 = vpop.f32.mrb[0].mxu0
        %v2566 = vadd.f32 0.0, %v2565
        %v2567 = vpop.f32.mrb[0].mxu0
        %2568 = vmatprep.mubr.f32.mxu0 0.0
        %2569 = vmatmul.mubr.f32.gmra.mrb[0].mxu0 %v2374
        %v2570 = vpop.f32.mrb[0].mxu0
        %v2571 = vadd.f32 0.0, %v2570
        %v2572 = vpop.f32.mrb[0].mxu0
        %2573 = vmatprep.mubr.f32.mxu0 0.0
        %2574 = vmatmul.mubr.f32.gmra.mrb[0].mxu0 %v2377
        %v2575 = vpop.f32.mrb[0].mxu0
        %v2576 = vadd.f32 0.0, %v2575
        %v2577 = vpop.f32.mrb[0].mxu0
        %2578 = vmatprep.mubr.f32.mxu0 0.0
        %2579 = vmatmul.mubr.f32.gmra.mrb[0].mxu0 %v2380
        %v2580 = vpop.f32.mrb[0].mxu0
        %v2581 = vadd.f32 0.0, %v2580
        %v2582 = vpop.f32.mrb[0].mxu0
        %2583 = vmatprep.mubr.f32.mxu0 0.0
        %2584 = vmatmul.mubr.f32.gmra.mrb[0].mxu0 %v2383
        %v2585 = vpop.f32.mrb[0].mxu0
        %v2586 = vadd.f32 0.0, %v2585
        %v2587 = vpop.f32.mrb[0].mxu0
        %2588 = vmatprep.mubr.f32.mxu0 0.0
        %2589 = vmatmul.mubr.f32.gmra.mrb[0].mxu0 %v2386
        %v2590 = vpop.f32.mrb[0].mxu0
        %v2591 = vadd.f32 0.0, %v2590
        %v2592 = vpop.f32.mrb[0].mxu0
        %2593 = vmatprep.mubr.f32.mxu0 0.0
        %2594 = vmatmul.mubr.f32.gmra.mrb[0].mxu0 %v2389
        %v2595 = vpop.f32.mrb[0].mxu0
        %v2596 = vadd.f32 0.0, %v2595
        %v2597 = vpop.f32.mrb[0].mxu0
        %2598 = vmatprep.mubr.f32.mxu0 0.0
        %2599 = vmatmul.mubr.f32.gmra.mrb[0].mxu0 %v2392
        %v2600 = vpop.f32.mrb[0].mxu0
        %v2601 = vadd.f32 0.0, %v2600
        %v2602 = vpop.f32.mrb[0].mxu0
        %2603 = vmatprep.mubr.f32.mxu0 0.0
        %2604 = vmatmul.mubr.f32.gmra.mrb[0].mxu0 %v2395
        %v2605 = vpop.f32.mrb[0].mxu0
        %v2606 = vadd.f32 0.0, %v2605
        %v2607 = vpop.f32.mrb[0].mxu0
        %2608 = vmatprep.mubr.f32.mxu0 0.0
        %2609 = vmatmul.mubr.f32.gmra.mrb[0].mxu0 %v2398
        %v2610 = vpop.f32.mrb[0].mxu0
        %v2611 = vadd.f32 0.0, %v2610
        %v2612 = vpop.f32.mrb[0].mxu0
        %2613 = vmatprep.mubr.f32.mxu0 0.0
        %2614 = vmatmul.mubr.f32.gmra.mrb[0].mxu0 %v2401
        %v2615 = vpop.f32.mrb[0].mxu0
        %v2616 = vadd.f32 0.0, %v2615
        %v2617 = vpop.f32.mrb[0].mxu0
        %2618 = vmatprep.mubr.f32.mxu0 0.0
        %2619 = vmatmul.mubr.f32.gmra.mrb[0].mxu0 %v2404
        %v2620 = vpop.f32.mrb[0].mxu0
        %v2621 = vadd.f32 0.0, %v2620
        %v2622 = vpop.f32.mrb[0].mxu0
        %2623 = vmatprep.mubr.f32.mxu0 0.0
        %2624 = vmatmul.mubr.f32.gmra.mrb[0].mxu0 %v2407
        %v2625 = vpop.f32.mrb[0].mxu0
        %v2626 = vadd.f32 0.0, %v2625
        %v2627 = vpop.f32.mrb[0].mxu0
        %2628 = vmatprep.mubr.f32.mxu0 0.0
        %2629 = vmatmul.mubr.f32.gmra.mrb[0].mxu0 %v2410
        %v2630 = vpop.f32.mrb[0].mxu0
        %v2631 = vadd.f32 0.0, %v2630
        %v2632 = vpop.f32.mrb[0].mxu0
        %2633 = vmatprep.mubr.f32.mxu0 0.0
        %2634 = vmatmul.mubr.f32.gmra.mrb[0].mxu0 %v2413
        %v2635 = vpop.f32.mrb[0].mxu0
        %v2636 = vadd.f32 0.0, %v2635
        %v2637 = vpop.f32.mrb[0].mxu0
        %2638 = vmatprep.mubr.f32.mxu0 0.0
        %2639 = vmatmul.mubr.f32.gmra.mrb[0].mxu0 %v2416
        %v2640 = vpop.f32.mrb[0].mxu0
        %v2641 = vadd.f32 0.0, %v2640
        %v2642 = vpop.f32.mrb[0].mxu0
        %2643 = vmatprep.mubr.f32.mxu0 0.0
        %2644 = vmatmul.mubr.f32.gmra.mrb[0].mxu0 %v2419
        %v2645 = vpop.f32.mrb[0].mxu0
        %v2646 = vadd.f32 0.0, %v2645
        %v2647 = vpop.f32.mrb[0].mxu0
        %2648 = vdwg.mxu0
        %v2649 = vadd.f32 %v2259, %v2491
        %v2650 = vadd.f32 %v2260, %v2496
        %v2651 = vadd.f32 %v2261, %v2501
        %v2652 = vadd.f32 %v2262, %v2506
        %v2653 = vadd.f32 %v2263, %v2511
        %v2654 = vadd.f32 %v2264, %v2516
        %v2655 = vadd.f32 %v2265, %v2521
        %v2656 = vadd.f32 %v2266, %v2526
        %v2657 = vadd.f32 %v2267, %v2531
        %v2658 = vadd.f32 %v2268, %v2536
        %v2659 = vadd.f32 %v2269, %v2541
        %v2660 = vadd.f32 %v2270, %v2546
        %v2661 = vadd.f32 %v2271, %v2551
        %v2662 = vadd.f32 %v2272, %v2556
        %v2663 = vadd.f32 %v2273, %v2561
        %v2664 = vadd.f32 %v2274, %v2566
        %v2665 = vadd.f32 %v2275, %v2571
        %v2666 = vadd.f32 %v2276, %v2576
        %v2667 = vadd.f32 %v2277, %v2581
        %v2668 = vadd.f32 %v2278, %v2586
        %v2669 = vadd.f32 %v2279, %v2591
        %v2670 = vadd.f32 %v2280, %v2596
        %v2671 = vadd.f32 %v2281, %v2601
        %v2672 = vadd.f32 %v2282, %v2606
        %v2673 = vadd.f32 %v2283, %v2611
        %v2674 = vadd.f32 %v2284, %v2616
        %v2675 = vadd.f32 %v2285, %v2621
        %v2676 = vadd.f32 %v2286, %v2626
        %v2677 = vadd.f32 %v2287, %v2631
        %v2678 = vadd.f32 %v2288, %v2636
        %v2679 = vadd.f32 %v2289, %v2641
        %v2680 = vadd.f32 %v2290, %v2646
        %s2681 = scalar_lea.vmem [#allocation2], 48
        %v2682 = vld [vmem:[%s2681] sm:$0xff]
        %v2683 = vld [vmem:[%s2681 + $0x8] sm:$0xff]
        %v2684 = vld [vmem:[%s2681 + $0x18] sm:$0xff]
        %v2685 = vld [vmem:[%s2681 + $0x20] sm:$0xff]
        %v2686 = vld [vmem:[%s2681 + $0x30] sm:$0xff]
        %v2687 = vld [vmem:[%s2681 + $0x38] sm:$0xff]
        %v2688 = vld [vmem:[%s2681 + $0x48] sm:$0xff]
        %v2689 = vld [vmem:[%s2681 + $0x50] sm:$0xff]
        %v2690 = vld [vmem:[%s2681 + $0x60] sm:$0xff]
        %v2691 = vld [vmem:[%s2681 + $0x68] sm:$0xff]
        %v2692 = vld [vmem:[%s2681 + $0x78] sm:$0xff]
        %v2693 = vld [vmem:[%s2681 + $0x80] sm:$0xff]
        %v2694 = vld [vmem:[%s2681 + $0x90] sm:$0xff]
        %v2695 = vld [vmem:[%s2681 + $0x98] sm:$0xff]
        %v2696 = vld [vmem:[%s2681 + $0xa8] sm:$0xff]
        %v2697 = vld [vmem:[%s2681 + $0xb0] sm:$0xff]
        %v2698 = vld [vmem:[%s2681 + $0xc0] sm:$0xff]
        %v2699 = vld [vmem:[%s2681 + $0xc8] sm:$0xff]
        %v2700 = vld [vmem:[%s2681 + $0xd8] sm:$0xff]
        %v2701 = vld [vmem:[%s2681 + $0xe0] sm:$0xff]
        %v2702 = vld [vmem:[%s2681 + $0xf0] sm:$0xff]
        %v2703 = vld [vmem:[%s2681 + $0xf8] sm:$0xff]
        %v2704 = vld [vmem:[%s2681 + $0x108] sm:$0xff]
        %v2705 = vld [vmem:[%s2681 + $0x110] sm:$0xff]
        %v2706 = vld [vmem:[%s2681 + $0x120] sm:$0xff]
        %v2707 = vld [vmem:[%s2681 + $0x128] sm:$0xff]
        %v2708 = vld [vmem:[%s2681 + $0x138] sm:$0xff]
        %v2709 = vld [vmem:[%s2681 + $0x140] sm:$0xff]
        %v2710 = vld [vmem:[%s2681 + $0x150] sm:$0xff]
        %v2711 = vld [vmem:[%s2681 + $0x158] sm:$0xff]
        %v2712 = vld [vmem:[%s2681 + $0x168] sm:$0xff]
        %v2713 = vld [vmem:[%s2681 + $0x170] sm:$0xff]
        %s2714 = scalar_lea.vmem [#allocation6], 24
        %v2715 = vld [vmem:[%s2714] sm:$0xf]
        %v2717 = vsel %vm326, %v2682, 0
        %v2720 = vsel %vm326, %v2683, 0
        %v2723 = vsel %vm326, %v2684, 0
        %v2726 = vsel %vm326, %v2685, 0
        %v2729 = vsel %vm326, %v2686, 0
        %v2732 = vsel %vm326, %v2687, 0
        %v2735 = vsel %vm326, %v2688, 0
        %v2738 = vsel %vm326, %v2689, 0
        %v2741 = vsel %vm326, %v2690, 0
        %v2744 = vsel %vm326, %v2691, 0
        %v2747 = vsel %vm326, %v2692, 0
        %v2750 = vsel %vm326, %v2693, 0
        %v2753 = vsel %vm326, %v2694, 0
        %v2756 = vsel %vm326, %v2695, 0
        %v2759 = vsel %vm326, %v2696, 0
        %v2762 = vsel %vm326, %v2697, 0
        %v2765 = vsel %vm326, %v2698, 0
        %v2768 = vsel %vm326, %v2699, 0
        %v2771 = vsel %vm326, %v2700, 0
        %v2774 = vsel %vm326, %v2701, 0
        %v2777 = vsel %vm326, %v2702, 0
        %v2780 = vsel %vm326, %v2703, 0
        %v2783 = vsel %vm326, %v2704, 0
        %v2786 = vsel %vm326, %v2705, 0
        %v2789 = vsel %vm326, %v2706, 0
        %v2792 = vsel %vm326, %v2707, 0
        %v2795 = vsel %vm326, %v2708, 0
        %v2798 = vsel %vm326, %v2709, 0
        %v2801 = vsel %vm326, %v2710, 0
        %v2804 = vsel %vm326, %v2711, 0
        %v2807 = vsel %vm326, %v2712, 0
        %v2810 = vsel %vm326, %v2713, 0
        %v2813 = vsel %vm568, %v2715, 0
        %2815 = vmatprep.subr.mxu0 0.0
        %2816 = vmatpush1.msra.mxu0 %v2813
        %2817 = vmatprep.subr.mxu0 0.0
        %2818 = vmatpush1.msra.mxu0 0.0
        %2819 = vmatprep.subr.mxu0 0.0
        %2820 = vmatpush1.msra.mxu0 0.0
        %2821 = vmatprep.subr.mxu0 0.0
        %2822 = vmatpush1.msra.mxu0 0.0
        %2823 = vmatprep.subr.mxu0 0.0
        %2824 = vmatpush1.msra.mxu0 0.0
        %2825 = vmatprep.subr.mxu0 0.0
        %2826 = vmatpush1.msra.mxu0 0.0
        %2827 = vmatprep.subr.mxu0 0.0
        %2828 = vmatpush1.msra.mxu0 0.0
        %2829 = vmatprep.subr.mxu0 0.0
        %2830 = vmatpush1.msra.mxu0 0.0
        %2831 = vmatprep.subr.mxu0 0.0
        %2832 = vmatpush1.msra.mxu0 0.0
        %2833 = vmatprep.subr.mxu0 0.0
        %2834 = vmatpush1.msra.mxu0 0.0
        %2835 = vmatprep.subr.mxu0 0.0
        %2836 = vmatpush1.msra.mxu0 0.0
        %2837 = vmatprep.subr.mxu0 0.0
        %2838 = vmatpush1.msra.mxu0 0.0
        %2839 = vmatprep.subr.mxu0 0.0
        %2840 = vmatpush1.msra.mxu0 0.0
        %2841 = vmatprep.subr.mxu0 0.0
        %2842 = vmatpush1.msra.mxu0 0.0
        %2843 = vmatprep.subr.mxu0 0.0
        %2844 = vmatpush1.msra.mxu0 0.0
        %2845 = vmatprep.subr.mxu0 0.0
        %2846 = vmatpush1.msra.mxu0 0.0
        %2847 = vmatprep.subr.mxu0 0.0
        %2848 = vmatpush1.msra.mxu0 0.0
        %2849 = vmatprep.subr.mxu0 0.0
        %2850 = vmatpush1.msra.mxu0 0.0
        %2851 = vmatprep.subr.mxu0 0.0
        %2852 = vmatpush1.msra.mxu0 0.0
        %2853 = vmatprep.subr.mxu0 0.0
        %2854 = vmatpush1.msra.mxu0 0.0
        %2855 = vmatprep.subr.mxu0 0.0
        %2856 = vmatpush1.msra.mxu0 0.0
        %2857 = vmatprep.subr.mxu0 0.0
        %2858 = vmatpush1.msra.mxu0 0.0
        %2859 = vmatprep.subr.mxu0 0.0
        %2860 = vmatpush1.msra.mxu0 0.0
        %2861 = vmatprep.subr.mxu0 0.0
        %2862 = vmatpush1.msra.mxu0 0.0
        %2863 = vmatprep.subr.mxu0 0.0
        %2864 = vmatpush1.msra.mxu0 0.0
        %2865 = vmatprep.subr.mxu0 0.0
        %2866 = vmatpush1.msra.mxu0 0.0
        %2867 = vmatprep.subr.mxu0 0.0
        %2868 = vmatpush1.msra.mxu0 0.0
        %2869 = vmatprep.subr.mxu0 0.0
        %2870 = vmatpush1.msra.mxu0 0.0
        %2871 = vmatprep.subr.mxu0 0.0
        %2872 = vmatpush1.msra.mxu0 0.0
        %2873 = vmatprep.subr.mxu0 0.0
        %2874 = vmatpush1.msra.mxu0 0.0
        %2875 = vmatprep.subr.mxu0 0.0
        %2876 = vmatpush1.msra.mxu0 0.0
        %2877 = vmatprep.subr.mxu0 0.0
        %2878 = vmatpush1.msra.mxu0 0.0
        %2879 = vmatprep.mubr.f32.mxu0 0.0
        %2880 = vmatmul.mubr.f32.gmra.mrb[0].mxu0 %v2717
        %v2881 = vpop.f32.mrb[0].mxu0
        %v2882 = vadd.f32 0.0, %v2881
        %v2883 = vpop.f32.mrb[0].mxu0
        %2884 = vmatprep.mubr.f32.mxu0 0.0
        %2885 = vmatmul.mubr.f32.gmra.mrb[0].mxu0 %v2720
        %v2886 = vpop.f32.mrb[0].mxu0
        %v2887 = vadd.f32 0.0, %v2886
        %v2888 = vpop.f32.mrb[0].mxu0
        %2889 = vmatprep.mubr.f32.mxu0 0.0
        %2890 = vmatmul.mubr.f32.gmra.mrb[0].mxu0 %v2723
        %v2891 = vpop.f32.mrb[0].mxu0
        %v2892 = vadd.f32 0.0, %v2891
        %v2893 = vpop.f32.mrb[0].mxu0
        %2894 = vmatprep.mubr.f32.mxu0 0.0
        %2895 = vmatmul.mubr.f32.gmra.mrb[0].mxu0 %v2726
        %v2896 = vpop.f32.mrb[0].mxu0
        %v2897 = vadd.f32 0.0, %v2896
        %v2898 = vpop.f32.mrb[0].mxu0
        %2899 = vmatprep.mubr.f32.mxu0 0.0
        %2900 = vmatmul.mubr.f32.gmra.mrb[0].mxu0 %v2729
        %v2901 = vpop.f32.mrb[0].mxu0
        %v2902 = vadd.f32 0.0, %v2901
        %v2903 = vpop.f32.mrb[0].mxu0
        %2904 = vmatprep.mubr.f32.mxu0 0.0
        %2905 = vmatmul.mubr.f32.gmra.mrb[0].mxu0 %v2732
        %v2906 = vpop.f32.mrb[0].mxu0
        %v2907 = vadd.f32 0.0, %v2906
        %v2908 = vpop.f32.mrb[0].mxu0
        %2909 = vmatprep.mubr.f32.mxu0 0.0
        %2910 = vmatmul.mubr.f32.gmra.mrb[0].mxu0 %v2735
        %v2911 = vpop.f32.mrb[0].mxu0
        %v2912 = vadd.f32 0.0, %v2911
        %v2913 = vpop.f32.mrb[0].mxu0
        %2914 = vmatprep.mubr.f32.mxu0 0.0
        %2915 = vmatmul.mubr.f32.gmra.mrb[0].mxu0 %v2738
        %v2916 = vpop.f32.mrb[0].mxu0
        %v2917 = vadd.f32 0.0, %v2916
        %v2918 = vpop.f32.mrb[0].mxu0
        %2919 = vmatprep.mubr.f32.mxu0 0.0
        %2920 = vmatmul.mubr.f32.gmra.mrb[0].mxu0 %v2741
        %v2921 = vpop.f32.mrb[0].mxu0
        %v2922 = vadd.f32 0.0, %v2921
        %v2923 = vpop.f32.mrb[0].mxu0
        %2924 = vmatprep.mubr.f32.mxu0 0.0
        %2925 = vmatmul.mubr.f32.gmra.mrb[0].mxu0 %v2744
        %v2926 = vpop.f32.mrb[0].mxu0
        %v2927 = vadd.f32 0.0, %v2926
        %v2928 = vpop.f32.mrb[0].mxu0
        %2929 = vmatprep.mubr.f32.mxu0 0.0
        %2930 = vmatmul.mubr.f32.gmra.mrb[0].mxu0 %v2747
        %v2931 = vpop.f32.mrb[0].mxu0
        %v2932 = vadd.f32 0.0, %v2931
        %v2933 = vpop.f32.mrb[0].mxu0
        %2934 = vmatprep.mubr.f32.mxu0 0.0
        %2935 = vmatmul.mubr.f32.gmra.mrb[0].mxu0 %v2750
        %v2936 = vpop.f32.mrb[0].mxu0
        %v2937 = vadd.f32 0.0, %v2936
        %v2938 = vpop.f32.mrb[0].mxu0
        %2939 = vmatprep.mubr.f32.mxu0 0.0
        %2940 = vmatmul.mubr.f32.gmra.mrb[0].mxu0 %v2753
        %v2941 = vpop.f32.mrb[0].mxu0
        %v2942 = vadd.f32 0.0, %v2941
        %v2943 = vpop.f32.mrb[0].mxu0
        %2944 = vmatprep.mubr.f32.mxu0 0.0
        %2945 = vmatmul.mubr.f32.gmra.mrb[0].mxu0 %v2756
        %v2946 = vpop.f32.mrb[0].mxu0
        %v2947 = vadd.f32 0.0, %v2946
        %v2948 = vpop.f32.mrb[0].mxu0
        %2949 = vmatprep.mubr.f32.mxu0 0.0
        %2950 = vmatmul.mubr.f32.gmra.mrb[0].mxu0 %v2759
        %v2951 = vpop.f32.mrb[0].mxu0
        %v2952 = vadd.f32 0.0, %v2951
        %v2953 = vpop.f32.mrb[0].mxu0
        %2954 = vmatprep.mubr.f32.mxu0 0.0
        %2955 = vmatmul.mubr.f32.gmra.mrb[0].mxu0 %v2762
        %v2956 = vpop.f32.mrb[0].mxu0
        %v2957 = vadd.f32 0.0, %v2956
        %v2958 = vpop.f32.mrb[0].mxu0
        %2959 = vmatprep.mubr.f32.mxu0 0.0
        %2960 = vmatmul.mubr.f32.gmra.mrb[0].mxu0 %v2765
        %v2961 = vpop.f32.mrb[0].mxu0
        %v2962 = vadd.f32 0.0, %v2961
        %v2963 = vpop.f32.mrb[0].mxu0
        %2964 = vmatprep.mubr.f32.mxu0 0.0
        %2965 = vmatmul.mubr.f32.gmra.mrb[0].mxu0 %v2768
        %v2966 = vpop.f32.mrb[0].mxu0
        %v2967 = vadd.f32 0.0, %v2966
        %v2968 = vpop.f32.mrb[0].mxu0
        %2969 = vmatprep.mubr.f32.mxu0 0.0
        %2970 = vmatmul.mubr.f32.gmra.mrb[0].mxu0 %v2771
        %v2971 = vpop.f32.mrb[0].mxu0
        %v2972 = vadd.f32 0.0, %v2971
        %v2973 = vpop.f32.mrb[0].mxu0
        %2974 = vmatprep.mubr.f32.mxu0 0.0
        %2975 = vmatmul.mubr.f32.gmra.mrb[0].mxu0 %v2774
        %v2976 = vpop.f32.mrb[0].mxu0
        %v2977 = vadd.f32 0.0, %v2976
        %v2978 = vpop.f32.mrb[0].mxu0
        %2979 = vmatprep.mubr.f32.mxu0 0.0
        %2980 = vmatmul.mubr.f32.gmra.mrb[0].mxu0 %v2777
        %v2981 = vpop.f32.mrb[0].mxu0
        %v2982 = vadd.f32 0.0, %v2981
        %v2983 = vpop.f32.mrb[0].mxu0
        %2984 = vmatprep.mubr.f32.mxu0 0.0
        %2985 = vmatmul.mubr.f32.gmra.mrb[0].mxu0 %v2780
        %v2986 = vpop.f32.mrb[0].mxu0
        %v2987 = vadd.f32 0.0, %v2986
        %v2988 = vpop.f32.mrb[0].mxu0
        %2989 = vmatprep.mubr.f32.mxu0 0.0
        %2990 = vmatmul.mubr.f32.gmra.mrb[0].mxu0 %v2783
        %v2991 = vpop.f32.mrb[0].mxu0
        %v2992 = vadd.f32 0.0, %v2991
        %v2993 = vpop.f32.mrb[0].mxu0
        %2994 = vmatprep.mubr.f32.mxu0 0.0
        %2995 = vmatmul.mubr.f32.gmra.mrb[0].mxu0 %v2786
        %v2996 = vpop.f32.mrb[0].mxu0
        %v2997 = vadd.f32 0.0, %v2996
        %v2998 = vpop.f32.mrb[0].mxu0
        %2999 = vmatprep.mubr.f32.mxu0 0.0
        %3000 = vmatmul.mubr.f32.gmra.mrb[0].mxu0 %v2789
        %v3001 = vpop.f32.mrb[0].mxu0
        %v3002 = vadd.f32 0.0, %v3001
        %v3003 = vpop.f32.mrb[0].mxu0
        %3004 = vmatprep.mubr.f32.mxu0 0.0
        %3005 = vmatmul.mubr.f32.gmra.mrb[0].mxu0 %v2792
        %v3006 = vpop.f32.mrb[0].mxu0
        %v3007 = vadd.f32 0.0, %v3006
        %v3008 = vpop.f32.mrb[0].mxu0
        %3009 = vmatprep.mubr.f32.mxu0 0.0
        %3010 = vmatmul.mubr.f32.gmra.mrb[0].mxu0 %v2795
        %v3011 = vpop.f32.mrb[0].mxu0
        %v3012 = vadd.f32 0.0, %v3011
        %v3013 = vpop.f32.mrb[0].mxu0
        %3014 = vmatprep.mubr.f32.mxu0 0.0
        %3015 = vmatmul.mubr.f32.gmra.mrb[0].mxu0 %v2798
        %v3016 = vpop.f32.mrb[0].mxu0
        %v3017 = vadd.f32 0.0, %v3016
        %v3018 = vpop.f32.mrb[0].mxu0
        %3019 = vmatprep.mubr.f32.mxu0 0.0
        %3020 = vmatmul.mubr.f32.gmra.mrb[0].mxu0 %v2801
        %v3021 = vpop.f32.mrb[0].mxu0
        %v3022 = vadd.f32 0.0, %v3021
        %v3023 = vpop.f32.mrb[0].mxu0
        %3024 = vmatprep.mubr.f32.mxu0 0.0
        %3025 = vmatmul.mubr.f32.gmra.mrb[0].mxu0 %v2804
        %v3026 = vpop.f32.mrb[0].mxu0
        %v3027 = vadd.f32 0.0, %v3026
        %v3028 = vpop.f32.mrb[0].mxu0
        %3029 = vmatprep.mubr.f32.mxu0 0.0
        %3030 = vmatmul.mubr.f32.gmra.mrb[0].mxu0 %v2807
        %v3031 = vpop.f32.mrb[0].mxu0
        %v3032 = vadd.f32 0.0, %v3031
        %v3033 = vpop.f32.mrb[0].mxu0
        %3034 = vmatprep.mubr.f32.mxu0 0.0
        %3035 = vmatmul.mubr.f32.gmra.mrb[0].mxu0 %v2810
        %v3036 = vpop.f32.mrb[0].mxu0
        %v3037 = vadd.f32 0.0, %v3036
        %v3038 = vpop.f32.mrb[0].mxu0
        %3039 = vdwg.mxu0
        %v3040 = vadd.f32 %v2649, %v2882
        %v3041 = vadd.f32 %v2650, %v2887
        %v3042 = vadd.f32 %v2651, %v2892
        %v3043 = vadd.f32 %v2652, %v2897
        %v3044 = vadd.f32 %v2653, %v2902
        %v3045 = vadd.f32 %v2654, %v2907
        %v3046 = vadd.f32 %v2655, %v2912
        %v3047 = vadd.f32 %v2656, %v2917
        %v3048 = vadd.f32 %v2657, %v2922
        %v3049 = vadd.f32 %v2658, %v2927
        %v3050 = vadd.f32 %v2659, %v2932
        %v3051 = vadd.f32 %v2660, %v2937
        %v3052 = vadd.f32 %v2661, %v2942
        %v3053 = vadd.f32 %v2662, %v2947
        %v3054 = vadd.f32 %v2663, %v2952
        %v3055 = vadd.f32 %v2664, %v2957
        %v3056 = vadd.f32 %v2665, %v2962
        %v3057 = vadd.f32 %v2666, %v2967
        %v3058 = vadd.f32 %v2667, %v2972
        %v3059 = vadd.f32 %v2668, %v2977
        %v3060 = vadd.f32 %v2669, %v2982
        %v3061 = vadd.f32 %v2670, %v2987
        %v3062 = vadd.f32 %v2671, %v2992
        %v3063 = vadd.f32 %v2672, %v2997
        %v3064 = vadd.f32 %v2673, %v3002
        %v3065 = vadd.f32 %v2674, %v3007
        %v3066 = vadd.f32 %v2675, %v3012
        %v3067 = vadd.f32 %v2676, %v3017
        %v3068 = vadd.f32 %v2677, %v3022
        %v3069 = vadd.f32 %v2678, %v3027
        %v3070 = vadd.f32 %v2679, %v3032
        %v3071 = vadd.f32 %v2680, %v3037
        %v3072 = vld [vmem:[%s2681 + $0x1] sm:$0xff]
        %v3073 = vld [vmem:[%s2681 + $0x9] sm:$0xff]
        %v3074 = vld [vmem:[%s2681 + $0x19] sm:$0xff]
        %v3075 = vld [vmem:[%s2681 + $0x21] sm:$0xff]
        %v3076 = vld [vmem:[%s2681 + $0x31] sm:$0xff]
        %v3077 = vld [vmem:[%s2681 + $0x39] sm:$0xff]
        %v3078 = vld [vmem:[%s2681 + $0x49] sm:$0xff]
        %v3079 = vld [vmem:[%s2681 + $0x51] sm:$0xff]
        %v3080 = vld [vmem:[%s2681 + $0x61] sm:$0xff]
        %v3081 = vld [vmem:[%s2681 + $0x69] sm:$0xff]
        %v3082 = vld [vmem:[%s2681 + $0x79] sm:$0xff]
        %v3083 = vld [vmem:[%s2681 + $0x81] sm:$0xff]
        %v3084 = vld [vmem:[%s2681 + $0x91] sm:$0xff]
        %v3085 = vld [vmem:[%s2681 + $0x99] sm:$0xff]
        %v3086 = vld [vmem:[%s2681 + $0xa9] sm:$0xff]
        %v3087 = vld [vmem:[%s2681 + $0xb1] sm:$0xff]
        %v3088 = vld [vmem:[%s2681 + $0xc1] sm:$0xff]
        %v3089 = vld [vmem:[%s2681 + $0xc9] sm:$0xff]
        %v3090 = vld [vmem:[%s2681 + $0xd9] sm:$0xff]
        %v3091 = vld [vmem:[%s2681 + $0xe1] sm:$0xff]
        %v3092 = vld [vmem:[%s2681 + $0xf1] sm:$0xff]
        %v3093 = vld [vmem:[%s2681 + $0xf9] sm:$0xff]
        %v3094 = vld [vmem:[%s2681 + $0x109] sm:$0xff]
        %v3095 = vld [vmem:[%s2681 + $0x111] sm:$0xff]
        %v3096 = vld [vmem:[%s2681 + $0x121] sm:$0xff]
        %v3097 = vld [vmem:[%s2681 + $0x129] sm:$0xff]
        %v3098 = vld [vmem:[%s2681 + $0x139] sm:$0xff]
        %v3099 = vld [vmem:[%s2681 + $0x141] sm:$0xff]
        %v3100 = vld [vmem:[%s2681 + $0x151] sm:$0xff]
        %v3101 = vld [vmem:[%s2681 + $0x159] sm:$0xff]
        %v3102 = vld [vmem:[%s2681 + $0x169] sm:$0xff]
        %v3103 = vld [vmem:[%s2681 + $0x171] sm:$0xff]
        %s3104 = scalar_lea.vmem [#allocation6], 28
        %v3105 = vld [vmem:[%s3104] sm:$0xf]
        %v3107 = vsel %vm326, %v3072, 0
        %v3110 = vsel %vm326, %v3073, 0
        %v3113 = vsel %vm326, %v3074, 0
        %v3116 = vsel %vm326, %v3075, 0
        %v3119 = vsel %vm326, %v3076, 0
        %v3122 = vsel %vm326, %v3077, 0
        %v3125 = vsel %vm326, %v3078, 0
        %v3128 = vsel %vm326, %v3079, 0
        %v3131 = vsel %vm326, %v3080, 0
        %v3134 = vsel %vm326, %v3081, 0
        %v3137 = vsel %vm326, %v3082, 0
        %v3140 = vsel %vm326, %v3083, 0
        %v3143 = vsel %vm326, %v3084, 0
        %v3146 = vsel %vm326, %v3085, 0
        %v3149 = vsel %vm326, %v3086, 0
        %v3152 = vsel %vm326, %v3087, 0
        %v3155 = vsel %vm326, %v3088, 0
        %v3158 = vsel %vm326, %v3089, 0
        %v3161 = vsel %vm326, %v3090, 0
        %v3164 = vsel %vm326, %v3091, 0
        %v3167 = vsel %vm326, %v3092, 0
        %v3170 = vsel %vm326, %v3093, 0
        %v3173 = vsel %vm326, %v3094, 0
        %v3176 = vsel %vm326, %v3095, 0
        %v3179 = vsel %vm326, %v3096, 0
        %v3182 = vsel %vm326, %v3097, 0
        %v3185 = vsel %vm326, %v3098, 0
        %v3188 = vsel %vm326, %v3099, 0
        %v3191 = vsel %vm326, %v3100, 0
        %v3194 = vsel %vm326, %v3101, 0
        %v3197 = vsel %vm326, %v3102, 0
        %v3200 = vsel %vm326, %v3103, 0
        %v3203 = vsel %vm568, %v3105, 0
        %3205 = vmatprep.subr.mxu0 0.0
        %3206 = vmatpush1.msra.mxu0 %v3203
        %3207 = vmatprep.subr.mxu0 0.0
        %3208 = vmatpush1.msra.mxu0 0.0
        %3209 = vmatprep.subr.mxu0 0.0
        %3210 = vmatpush1.msra.mxu0 0.0
        %3211 = vmatprep.subr.mxu0 0.0
        %3212 = vmatpush1.msra.mxu0 0.0
        %3213 = vmatprep.subr.mxu0 0.0
        %3214 = vmatpush1.msra.mxu0 0.0
        %3215 = vmatprep.subr.mxu0 0.0
        %3216 = vmatpush1.msra.mxu0 0.0
        %3217 = vmatprep.subr.mxu0 0.0
        %3218 = vmatpush1.msra.mxu0 0.0
        %3219 = vmatprep.subr.mxu0 0.0
        %3220 = vmatpush1.msra.mxu0 0.0
        %3221 = vmatprep.subr.mxu0 0.0
        %3222 = vmatpush1.msra.mxu0 0.0
        %3223 = vmatprep.subr.mxu0 0.0
        %3224 = vmatpush1.msra.mxu0 0.0
        %3225 = vmatprep.subr.mxu0 0.0
        %3226 = vmatpush1.msra.mxu0 0.0
        %3227 = vmatprep.subr.mxu0 0.0
        %3228 = vmatpush1.msra.mxu0 0.0
        %3229 = vmatprep.subr.mxu0 0.0
        %3230 = vmatpush1.msra.mxu0 0.0
        %3231 = vmatprep.subr.mxu0 0.0
        %3232 = vmatpush1.msra.mxu0 0.0
        %3233 = vmatprep.subr.mxu0 0.0
        %3234 = vmatpush1.msra.mxu0 0.0
        %3235 = vmatprep.subr.mxu0 0.0
        %3236 = vmatpush1.msra.mxu0 0.0
        %3237 = vmatprep.subr.mxu0 0.0
        %3238 = vmatpush1.msra.mxu0 0.0
        %3239 = vmatprep.subr.mxu0 0.0
        %3240 = vmatpush1.msra.mxu0 0.0
        %3241 = vmatprep.subr.mxu0 0.0
        %3242 = vmatpush1.msra.mxu0 0.0
        %3243 = vmatprep.subr.mxu0 0.0
        %3244 = vmatpush1.msra.mxu0 0.0
        %3245 = vmatprep.subr.mxu0 0.0
        %3246 = vmatpush1.msra.mxu0 0.0
        %3247 = vmatprep.subr.mxu0 0.0
        %3248 = vmatpush1.msra.mxu0 0.0
        %3249 = vmatprep.subr.mxu0 0.0
        %3250 = vmatpush1.msra.mxu0 0.0
        %3251 = vmatprep.subr.mxu0 0.0
        %3252 = vmatpush1.msra.mxu0 0.0
        %3253 = vmatprep.subr.mxu0 0.0
        %3254 = vmatpush1.msra.mxu0 0.0
        %3255 = vmatprep.subr.mxu0 0.0
        %3256 = vmatpush1.msra.mxu0 0.0
        %3257 = vmatprep.subr.mxu0 0.0
        %3258 = vmatpush1.msra.mxu0 0.0
        %3259 = vmatprep.subr.mxu0 0.0
        %3260 = vmatpush1.msra.mxu0 0.0
        %3261 = vmatprep.subr.mxu0 0.0
        %3262 = vmatpush1.msra.mxu0 0.0
        %3263 = vmatprep.subr.mxu0 0.0
        %3264 = vmatpush1.msra.mxu0 0.0
        %3265 = vmatprep.subr.mxu0 0.0
        %3266 = vmatpush1.msra.mxu0 0.0
        %3267 = vmatprep.subr.mxu0 0.0
        %3268 = vmatpush1.msra.mxu0 0.0
        %3269 = vmatprep.mubr.f32.mxu0 0.0
        %3270 = vmatmul.mubr.f32.gmra.mrb[0].mxu0 %v3107
        %v3271 = vpop.f32.mrb[0].mxu0
        %v3272 = vadd.f32 0.0, %v3271
        %v3273 = vpop.f32.mrb[0].mxu0
        %3274 = vmatprep.mubr.f32.mxu0 0.0
        %3275 = vmatmul.mubr.f32.gmra.mrb[0].mxu0 %v3110
        %v3276 = vpop.f32.mrb[0].mxu0
        %v3277 = vadd.f32 0.0, %v3276
        %v3278 = vpop.f32.mrb[0].mxu0
        %3279 = vmatprep.mubr.f32.mxu0 0.0
        %3280 = vmatmul.mubr.f32.gmra.mrb[0].mxu0 %v3113
        %v3281 = vpop.f32.mrb[0].mxu0
        %v3282 = vadd.f32 0.0, %v3281
        %v3283 = vpop.f32.mrb[0].mxu0
        %3284 = vmatprep.mubr.f32.mxu0 0.0
        %3285 = vmatmul.mubr.f32.gmra.mrb[0].mxu0 %v3116
        %v3286 = vpop.f32.mrb[0].mxu0
        %v3287 = vadd.f32 0.0, %v3286
        %v3288 = vpop.f32.mrb[0].mxu0
        %3289 = vmatprep.mubr.f32.mxu0 0.0
        %3290 = vmatmul.mubr.f32.gmra.mrb[0].mxu0 %v3119
        %v3291 = vpop.f32.mrb[0].mxu0
        %v3292 = vadd.f32 0.0, %v3291
        %v3293 = vpop.f32.mrb[0].mxu0
        %3294 = vmatprep.mubr.f32.mxu0 0.0
        %3295 = vmatmul.mubr.f32.gmra.mrb[0].mxu0 %v3122
        %v3296 = vpop.f32.mrb[0].mxu0
        %v3297 = vadd.f32 0.0, %v3296
        %v3298 = vpop.f32.mrb[0].mxu0
        %3299 = vmatprep.mubr.f32.mxu0 0.0
        %3300 = vmatmul.mubr.f32.gmra.mrb[0].mxu0 %v3125
        %v3301 = vpop.f32.mrb[0].mxu0
        %v3302 = vadd.f32 0.0, %v3301
        %v3303 = vpop.f32.mrb[0].mxu0
        %3304 = vmatprep.mubr.f32.mxu0 0.0
        %3305 = vmatmul.mubr.f32.gmra.mrb[0].mxu0 %v3128
        %v3306 = vpop.f32.mrb[0].mxu0
        %v3307 = vadd.f32 0.0, %v3306
        %v3308 = vpop.f32.mrb[0].mxu0
        %3309 = vmatprep.mubr.f32.mxu0 0.0
        %3310 = vmatmul.mubr.f32.gmra.mrb[0].mxu0 %v3131
        %v3311 = vpop.f32.mrb[0].mxu0
        %v3312 = vadd.f32 0.0, %v3311
        %v3313 = vpop.f32.mrb[0].mxu0
        %3314 = vmatprep.mubr.f32.mxu0 0.0
        %3315 = vmatmul.mubr.f32.gmra.mrb[0].mxu0 %v3134
        %v3316 = vpop.f32.mrb[0].mxu0
        %v3317 = vadd.f32 0.0, %v3316
        %v3318 = vpop.f32.mrb[0].mxu0
        %3319 = vmatprep.mubr.f32.mxu0 0.0
        %3320 = vmatmul.mubr.f32.gmra.mrb[0].mxu0 %v3137
        %v3321 = vpop.f32.mrb[0].mxu0
        %v3322 = vadd.f32 0.0, %v3321
        %v3323 = vpop.f32.mrb[0].mxu0
        %3324 = vmatprep.mubr.f32.mxu0 0.0
        %3325 = vmatmul.mubr.f32.gmra.mrb[0].mxu0 %v3140
        %v3326 = vpop.f32.mrb[0].mxu0
        %v3327 = vadd.f32 0.0, %v3326
        %v3328 = vpop.f32.mrb[0].mxu0
        %3329 = vmatprep.mubr.f32.mxu0 0.0
        %3330 = vmatmul.mubr.f32.gmra.mrb[0].mxu0 %v3143
        %v3331 = vpop.f32.mrb[0].mxu0
        %v3332 = vadd.f32 0.0, %v3331
        %v3333 = vpop.f32.mrb[0].mxu0
        %3334 = vmatprep.mubr.f32.mxu0 0.0
        %3335 = vmatmul.mubr.f32.gmra.mrb[0].mxu0 %v3146
        %v3336 = vpop.f32.mrb[0].mxu0
        %v3337 = vadd.f32 0.0, %v3336
        %v3338 = vpop.f32.mrb[0].mxu0
        %3339 = vmatprep.mubr.f32.mxu0 0.0
        %3340 = vmatmul.mubr.f32.gmra.mrb[0].mxu0 %v3149
        %v3341 = vpop.f32.mrb[0].mxu0
        %v3342 = vadd.f32 0.0, %v3341
        %v3343 = vpop.f32.mrb[0].mxu0
        %3344 = vmatprep.mubr.f32.mxu0 0.0
        %3345 = vmatmul.mubr.f32.gmra.mrb[0].mxu0 %v3152
        %v3346 = vpop.f32.mrb[0].mxu0
        %v3347 = vadd.f32 0.0, %v3346
        %v3348 = vpop.f32.mrb[0].mxu0
        %3349 = vmatprep.mubr.f32.mxu0 0.0
        %3350 = vmatmul.mubr.f32.gmra.mrb[0].mxu0 %v3155
        %v3351 = vpop.f32.mrb[0].mxu0
        %v3352 = vadd.f32 0.0, %v3351
        %v3353 = vpop.f32.mrb[0].mxu0
        %3354 = vmatprep.mubr.f32.mxu0 0.0
        %3355 = vmatmul.mubr.f32.gmra.mrb[0].mxu0 %v3158
        %v3356 = vpop.f32.mrb[0].mxu0
        %v3357 = vadd.f32 0.0, %v3356
        %v3358 = vpop.f32.mrb[0].mxu0
        %3359 = vmatprep.mubr.f32.mxu0 0.0
        %3360 = vmatmul.mubr.f32.gmra.mrb[0].mxu0 %v3161
        %v3361 = vpop.f32.mrb[0].mxu0
        %v3362 = vadd.f32 0.0, %v3361
        %v3363 = vpop.f32.mrb[0].mxu0
        %3364 = vmatprep.mubr.f32.mxu0 0.0
        %3365 = vmatmul.mubr.f32.gmra.mrb[0].mxu0 %v3164
        %v3366 = vpop.f32.mrb[0].mxu0
        %v3367 = vadd.f32 0.0, %v3366
        %v3368 = vpop.f32.mrb[0].mxu0
        %3369 = vmatprep.mubr.f32.mxu0 0.0
        %3370 = vmatmul.mubr.f32.gmra.mrb[0].mxu0 %v3167
        %v3371 = vpop.f32.mrb[0].mxu0
        %v3372 = vadd.f32 0.0, %v3371
        %v3373 = vpop.f32.mrb[0].mxu0
        %3374 = vmatprep.mubr.f32.mxu0 0.0
        %3375 = vmatmul.mubr.f32.gmra.mrb[0].mxu0 %v3170
        %v3376 = vpop.f32.mrb[0].mxu0
        %v3377 = vadd.f32 0.0, %v3376
        %v3378 = vpop.f32.mrb[0].mxu0
        %3379 = vmatprep.mubr.f32.mxu0 0.0
        %3380 = vmatmul.mubr.f32.gmra.mrb[0].mxu0 %v3173
        %v3381 = vpop.f32.mrb[0].mxu0
        %v3382 = vadd.f32 0.0, %v3381
        %v3383 = vpop.f32.mrb[0].mxu0
        %3384 = vmatprep.mubr.f32.mxu0 0.0
        %3385 = vmatmul.mubr.f32.gmra.mrb[0].mxu0 %v3176
        %v3386 = vpop.f32.mrb[0].mxu0
        %v3387 = vadd.f32 0.0, %v3386
        %v3388 = vpop.f32.mrb[0].mxu0
        %3389 = vmatprep.mubr.f32.mxu0 0.0
        %3390 = vmatmul.mubr.f32.gmra.mrb[0].mxu0 %v3179
        %v3391 = vpop.f32.mrb[0].mxu0
        %v3392 = vadd.f32 0.0, %v3391
        %v3393 = vpop.f32.mrb[0].mxu0
        %3394 = vmatprep.mubr.f32.mxu0 0.0
        %3395 = vmatmul.mubr.f32.gmra.mrb[0].mxu0 %v3182
        %v3396 = vpop.f32.mrb[0].mxu0
        %v3397 = vadd.f32 0.0, %v3396
        %v3398 = vpop.f32.mrb[0].mxu0
        %3399 = vmatprep.mubr.f32.mxu0 0.0
        %3400 = vmatmul.mubr.f32.gmra.mrb[0].mxu0 %v3185
        %v3401 = vpop.f32.mrb[0].mxu0
        %v3402 = vadd.f32 0.0, %v3401
        %v3403 = vpop.f32.mrb[0].mxu0
        %3404 = vmatprep.mubr.f32.mxu0 0.0
        %3405 = vmatmul.mubr.f32.gmra.mrb[0].mxu0 %v3188
        %v3406 = vpop.f32.mrb[0].mxu0
        %v3407 = vadd.f32 0.0, %v3406
        %v3408 = vpop.f32.mrb[0].mxu0
        %3409 = vmatprep.mubr.f32.mxu0 0.0
        %3410 = vmatmul.mubr.f32.gmra.mrb[0].mxu0 %v3191
        %v3411 = vpop.f32.mrb[0].mxu0
        %v3412 = vadd.f32 0.0, %v3411
        %v3413 = vpop.f32.mrb[0].mxu0
        %3414 = vmatprep.mubr.f32.mxu0 0.0
        %3415 = vmatmul.mubr.f32.gmra.mrb[0].mxu0 %v3194
        %v3416 = vpop.f32.mrb[0].mxu0
        %v3417 = vadd.f32 0.0, %v3416
        %v3418 = vpop.f32.mrb[0].mxu0
        %3419 = vmatprep.mubr.f32.mxu0 0.0
        %3420 = vmatmul.mubr.f32.gmra.mrb[0].mxu0 %v3197
        %v3421 = vpop.f32.mrb[0].mxu0
        %v3422 = vadd.f32 0.0, %v3421
        %v3423 = vpop.f32.mrb[0].mxu0
        %3424 = vmatprep.mubr.f32.mxu0 0.0
        %3425 = vmatmul.mubr.f32.gmra.mrb[0].mxu0 %v3200
        %v3426 = vpop.f32.mrb[0].mxu0
        %v3427 = vadd.f32 0.0, %v3426
        %v3428 = vpop.f32.mrb[0].mxu0
        %3429 = vdwg.mxu0
        %v3430 = vadd.f32 %v3040, %v3272
        %v3431 = vadd.f32 %v3041, %v3277
        %v3432 = vadd.f32 %v3042, %v3282
        %v3433 = vadd.f32 %v3043, %v3287
        %v3434 = vadd.f32 %v3044, %v3292
        %v3435 = vadd.f32 %v3045, %v3297
        %v3436 = vadd.f32 %v3046, %v3302
        %v3437 = vadd.f32 %v3047, %v3307
        %v3438 = vadd.f32 %v3048, %v3312
        %v3439 = vadd.f32 %v3049, %v3317
        %v3440 = vadd.f32 %v3050, %v3322
        %v3441 = vadd.f32 %v3051, %v3327
        %v3442 = vadd.f32 %v3052, %v3332
        %v3443 = vadd.f32 %v3053, %v3337
        %v3444 = vadd.f32 %v3054, %v3342
        %v3445 = vadd.f32 %v3055, %v3347
        %v3446 = vadd.f32 %v3056, %v3352
        %v3447 = vadd.f32 %v3057, %v3357
        %v3448 = vadd.f32 %v3058, %v3362
        %v3449 = vadd.f32 %v3059, %v3367
        %v3450 = vadd.f32 %v3060, %v3372
        %v3451 = vadd.f32 %v3061, %v3377
        %v3452 = vadd.f32 %v3062, %v3382
        %v3453 = vadd.f32 %v3063, %v3387
        %v3454 = vadd.f32 %v3064, %v3392
        %v3455 = vadd.f32 %v3065, %v3397
        %v3456 = vadd.f32 %v3066, %v3402
        %v3457 = vadd.f32 %v3067, %v3407
        %v3458 = vadd.f32 %v3068, %v3412
        %v3459 = vadd.f32 %v3069, %v3417
        %v3460 = vadd.f32 %v3070, %v3422
        %v3461 = vadd.f32 %v3071, %v3427
        %v3462 = vld [vmem:[%s2681 + $0x2] sm:$0xff]
        %v3463 = vld [vmem:[%s2681 + $0xa] sm:$0xff]
        %v3464 = vld [vmem:[%s2681 + $0x1a] sm:$0xff]
        %v3465 = vld [vmem:[%s2681 + $0x22] sm:$0xff]
        %v3466 = vld [vmem:[%s2681 + $0x32] sm:$0xff]
        %v3467 = vld [vmem:[%s2681 + $0x3a] sm:$0xff]
        %v3468 = vld [vmem:[%s2681 + $0x4a] sm:$0xff]
        %v3469 = vld [vmem:[%s2681 + $0x52] sm:$0xff]
        %v3470 = vld [vmem:[%s2681 + $0x62] sm:$0xff]
        %v3471 = vld [vmem:[%s2681 + $0x6a] sm:$0xff]
        %v3472 = vld [vmem:[%s2681 + $0x7a] sm:$0xff]
        %v3473 = vld [vmem:[%s2681 + $0x82] sm:$0xff]
        %v3474 = vld [vmem:[%s2681 + $0x92] sm:$0xff]
        %v3475 = vld [vmem:[%s2681 + $0x9a] sm:$0xff]
        %v3476 = vld [vmem:[%s2681 + $0xaa] sm:$0xff]
        %v3477 = vld [vmem:[%s2681 + $0xb2] sm:$0xff]
        %v3478 = vld [vmem:[%s2681 + $0xc2] sm:$0xff]
        %v3479 = vld [vmem:[%s2681 + $0xca] sm:$0xff]
        %v3480 = vld [vmem:[%s2681 + $0xda] sm:$0xff]
        %v3481 = vld [vmem:[%s2681 + $0xe2] sm:$0xff]
        %v3482 = vld [vmem:[%s2681 + $0xf2] sm:$0xff]
        %v3483 = vld [vmem:[%s2681 + $0xfa] sm:$0xff]
        %v3484 = vld [vmem:[%s2681 + $0x10a] sm:$0xff]
        %v3485 = vld [vmem:[%s2681 + $0x112] sm:$0xff]
        %v3486 = vld [vmem:[%s2681 + $0x122] sm:$0xff]
        %v3487 = vld [vmem:[%s2681 + $0x12a] sm:$0xff]
        %v3488 = vld [vmem:[%s2681 + $0x13a] sm:$0xff]
        %v3489 = vld [vmem:[%s2681 + $0x142] sm:$0xff]
        %v3490 = vld [vmem:[%s2681 + $0x152] sm:$0xff]
        %v3491 = vld [vmem:[%s2681 + $0x15a] sm:$0xff]
        %v3492 = vld [vmem:[%s2681 + $0x16a] sm:$0xff]
        %v3493 = vld [vmem:[%s2681 + $0x172] sm:$0xff]
        %s3494 = scalar_lea.vmem [#allocation6], 32
        %v3495 = vld [vmem:[%s3494] sm:$0xf]
        %v3497 = vsel %vm326, %v3462, 0
        %v3500 = vsel %vm326, %v3463, 0
        %v3503 = vsel %vm326, %v3464, 0
        %v3506 = vsel %vm326, %v3465, 0
        %v3509 = vsel %vm326, %v3466, 0
        %v3512 = vsel %vm326, %v3467, 0
        %v3515 = vsel %vm326, %v3468, 0
        %v3518 = vsel %vm326, %v3469, 0
        %v3521 = vsel %vm326, %v3470, 0
        %v3524 = vsel %vm326, %v3471, 0
        %v3527 = vsel %vm326, %v3472, 0
        %v3530 = vsel %vm326, %v3473, 0
        %v3533 = vsel %vm326, %v3474, 0
        %v3536 = vsel %vm326, %v3475, 0
        %v3539 = vsel %vm326, %v3476, 0
        %v3542 = vsel %vm326, %v3477, 0
        %v3545 = vsel %vm326, %v3478, 0
        %v3548 = vsel %vm326, %v3479, 0
        %v3551 = vsel %vm326, %v3480, 0
        %v3554 = vsel %vm326, %v3481, 0
        %v3557 = vsel %vm326, %v3482, 0
        %v3560 = vsel %vm326, %v3483, 0
        %v3563 = vsel %vm326, %v3484, 0
        %v3566 = vsel %vm326, %v3485, 0
        %v3569 = vsel %vm326, %v3486, 0
        %v3572 = vsel %vm326, %v3487, 0
        %v3575 = vsel %vm326, %v3488, 0
        %v3578 = vsel %vm326, %v3489, 0
        %v3581 = vsel %vm326, %v3490, 0
        %v3584 = vsel %vm326, %v3491, 0
        %v3587 = vsel %vm326, %v3492, 0
        %v3590 = vsel %vm326, %v3493, 0
        %v3593 = vsel %vm568, %v3495, 0
        %3595 = vmatprep.subr.mxu0 0.0
        %3596 = vmatpush1.msra.mxu0 %v3593
        %3597 = vmatprep.subr.mxu0 0.0
        %3598 = vmatpush1.msra.mxu0 0.0
        %3599 = vmatprep.subr.mxu0 0.0
        %3600 = vmatpush1.msra.mxu0 0.0
        %3601 = vmatprep.subr.mxu0 0.0
        %3602 = vmatpush1.msra.mxu0 0.0
        %3603 = vmatprep.subr.mxu0 0.0
        %3604 = vmatpush1.msra.mxu0 0.0
        %3605 = vmatprep.subr.mxu0 0.0
        %3606 = vmatpush1.msra.mxu0 0.0
        %3607 = vmatprep.subr.mxu0 0.0
        %3608 = vmatpush1.msra.mxu0 0.0
        %3609 = vmatprep.subr.mxu0 0.0
        %3610 = vmatpush1.msra.mxu0 0.0
        %3611 = vmatprep.subr.mxu0 0.0
        %3612 = vmatpush1.msra.mxu0 0.0
        %3613 = vmatprep.subr.mxu0 0.0
        %3614 = vmatpush1.msra.mxu0 0.0
        %3615 = vmatprep.subr.mxu0 0.0
        %3616 = vmatpush1.msra.mxu0 0.0
        %3617 = vmatprep.subr.mxu0 0.0
        %3618 = vmatpush1.msra.mxu0 0.0
        %3619 = vmatprep.subr.mxu0 0.0
        %3620 = vmatpush1.msra.mxu0 0.0
        %3621 = vmatprep.subr.mxu0 0.0
        %3622 = vmatpush1.msra.mxu0 0.0
        %3623 = vmatprep.subr.mxu0 0.0
        %3624 = vmatpush1.msra.mxu0 0.0
        %3625 = vmatprep.subr.mxu0 0.0
        %3626 = vmatpush1.msra.mxu0 0.0
        %3627 = vmatprep.subr.mxu0 0.0
        %3628 = vmatpush1.msra.mxu0 0.0
        %3629 = vmatprep.subr.mxu0 0.0
        %3630 = vmatpush1.msra.mxu0 0.0
        %3631 = vmatprep.subr.mxu0 0.0
        %3632 = vmatpush1.msra.mxu0 0.0
        %3633 = vmatprep.subr.mxu0 0.0
        %3634 = vmatpush1.msra.mxu0 0.0
        %3635 = vmatprep.subr.mxu0 0.0
        %3636 = vmatpush1.msra.mxu0 0.0
        %3637 = vmatprep.subr.mxu0 0.0
        %3638 = vmatpush1.msra.mxu0 0.0
        %3639 = vmatprep.subr.mxu0 0.0
        %3640 = vmatpush1.msra.mxu0 0.0
        %3641 = vmatprep.subr.mxu0 0.0
        %3642 = vmatpush1.msra.mxu0 0.0
        %3643 = vmatprep.subr.mxu0 0.0
        %3644 = vmatpush1.msra.mxu0 0.0
        %3645 = vmatprep.subr.mxu0 0.0
        %3646 = vmatpush1.msra.mxu0 0.0
        %3647 = vmatprep.subr.mxu0 0.0
        %3648 = vmatpush1.msra.mxu0 0.0
        %3649 = vmatprep.subr.mxu0 0.0
        %3650 = vmatpush1.msra.mxu0 0.0
        %3651 = vmatprep.subr.mxu0 0.0
        %3652 = vmatpush1.msra.mxu0 0.0
        %3653 = vmatprep.subr.mxu0 0.0
        %3654 = vmatpush1.msra.mxu0 0.0
        %3655 = vmatprep.subr.mxu0 0.0
        %3656 = vmatpush1.msra.mxu0 0.0
        %3657 = vmatprep.subr.mxu0 0.0
        %3658 = vmatpush1.msra.mxu0 0.0
        %3659 = vmatprep.mubr.f32.mxu0 0.0
        %3660 = vmatmul.mubr.f32.gmra.mrb[0].mxu0 %v3497
        %v3661 = vpop.f32.mrb[0].mxu0
        %v3662 = vadd.f32 0.0, %v3661
        %v3663 = vpop.f32.mrb[0].mxu0
        %3664 = vmatprep.mubr.f32.mxu0 0.0
        %3665 = vmatmul.mubr.f32.gmra.mrb[0].mxu0 %v3500
        %v3666 = vpop.f32.mrb[0].mxu0
        %v3667 = vadd.f32 0.0, %v3666
        %v3668 = vpop.f32.mrb[0].mxu0
        %3669 = vmatprep.mubr.f32.mxu0 0.0
        %3670 = vmatmul.mubr.f32.gmra.mrb[0].mxu0 %v3503
        %v3671 = vpop.f32.mrb[0].mxu0
        %v3672 = vadd.f32 0.0, %v3671
        %v3673 = vpop.f32.mrb[0].mxu0
        %3674 = vmatprep.mubr.f32.mxu0 0.0
        %3675 = vmatmul.mubr.f32.gmra.mrb[0].mxu0 %v3506
        %v3676 = vpop.f32.mrb[0].mxu0
        %v3677 = vadd.f32 0.0, %v3676
        %v3678 = vpop.f32.mrb[0].mxu0
        %3679 = vmatprep.mubr.f32.mxu0 0.0
        %3680 = vmatmul.mubr.f32.gmra.mrb[0].mxu0 %v3509
        %v3681 = vpop.f32.mrb[0].mxu0
        %v3682 = vadd.f32 0.0, %v3681
        %v3683 = vpop.f32.mrb[0].mxu0
        %3684 = vmatprep.mubr.f32.mxu0 0.0
        %3685 = vmatmul.mubr.f32.gmra.mrb[0].mxu0 %v3512
        %v3686 = vpop.f32.mrb[0].mxu0
        %v3687 = vadd.f32 0.0, %v3686
        %v3688 = vpop.f32.mrb[0].mxu0
        %3689 = vmatprep.mubr.f32.mxu0 0.0
        %3690 = vmatmul.mubr.f32.gmra.mrb[0].mxu0 %v3515
        %v3691 = vpop.f32.mrb[0].mxu0
        %v3692 = vadd.f32 0.0, %v3691
        %v3693 = vpop.f32.mrb[0].mxu0
        %3694 = vmatprep.mubr.f32.mxu0 0.0
        %3695 = vmatmul.mubr.f32.gmra.mrb[0].mxu0 %v3518
        %v3696 = vpop.f32.mrb[0].mxu0
        %v3697 = vadd.f32 0.0, %v3696
        %v3698 = vpop.f32.mrb[0].mxu0
        %3699 = vmatprep.mubr.f32.mxu0 0.0
        %3700 = vmatmul.mubr.f32.gmra.mrb[0].mxu0 %v3521
        %v3701 = vpop.f32.mrb[0].mxu0
        %v3702 = vadd.f32 0.0, %v3701
        %v3703 = vpop.f32.mrb[0].mxu0
        %3704 = vmatprep.mubr.f32.mxu0 0.0
        %3705 = vmatmul.mubr.f32.gmra.mrb[0].mxu0 %v3524
        %v3706 = vpop.f32.mrb[0].mxu0
        %v3707 = vadd.f32 0.0, %v3706
        %v3708 = vpop.f32.mrb[0].mxu0
        %3709 = vmatprep.mubr.f32.mxu0 0.0
        %3710 = vmatmul.mubr.f32.gmra.mrb[0].mxu0 %v3527
        %v3711 = vpop.f32.mrb[0].mxu0
        %v3712 = vadd.f32 0.0, %v3711
        %v3713 = vpop.f32.mrb[0].mxu0
        %3714 = vmatprep.mubr.f32.mxu0 0.0
        %3715 = vmatmul.mubr.f32.gmra.mrb[0].mxu0 %v3530
        %v3716 = vpop.f32.mrb[0].mxu0
        %v3717 = vadd.f32 0.0, %v3716
        %v3718 = vpop.f32.mrb[0].mxu0
        %3719 = vmatprep.mubr.f32.mxu0 0.0
        %3720 = vmatmul.mubr.f32.gmra.mrb[0].mxu0 %v3533
        %v3721 = vpop.f32.mrb[0].mxu0
        %v3722 = vadd.f32 0.0, %v3721
        %v3723 = vpop.f32.mrb[0].mxu0
        %3724 = vmatprep.mubr.f32.mxu0 0.0
        %3725 = vmatmul.mubr.f32.gmra.mrb[0].mxu0 %v3536
        %v3726 = vpop.f32.mrb[0].mxu0
        %v3727 = vadd.f32 0.0, %v3726
        %v3728 = vpop.f32.mrb[0].mxu0
        %3729 = vmatprep.mubr.f32.mxu0 0.0
        %3730 = vmatmul.mubr.f32.gmra.mrb[0].mxu0 %v3539
        %v3731 = vpop.f32.mrb[0].mxu0
        %v3732 = vadd.f32 0.0, %v3731
        %v3733 = vpop.f32.mrb[0].mxu0
        %3734 = vmatprep.mubr.f32.mxu0 0.0
        %3735 = vmatmul.mubr.f32.gmra.mrb[0].mxu0 %v3542
        %v3736 = vpop.f32.mrb[0].mxu0
        %v3737 = vadd.f32 0.0, %v3736
        %v3738 = vpop.f32.mrb[0].mxu0
        %3739 = vmatprep.mubr.f32.mxu0 0.0
        %3740 = vmatmul.mubr.f32.gmra.mrb[0].mxu0 %v3545
        %v3741 = vpop.f32.mrb[0].mxu0
        %v3742 = vadd.f32 0.0, %v3741
        %v3743 = vpop.f32.mrb[0].mxu0
        %3744 = vmatprep.mubr.f32.mxu0 0.0
        %3745 = vmatmul.mubr.f32.gmra.mrb[0].mxu0 %v3548
        %v3746 = vpop.f32.mrb[0].mxu0
        %v3747 = vadd.f32 0.0, %v3746
        %v3748 = vpop.f32.mrb[0].mxu0
        %3749 = vmatprep.mubr.f32.mxu0 0.0
        %3750 = vmatmul.mubr.f32.gmra.mrb[0].mxu0 %v3551
        %v3751 = vpop.f32.mrb[0].mxu0
        %v3752 = vadd.f32 0.0, %v3751
        %v3753 = vpop.f32.mrb[0].mxu0
        %3754 = vmatprep.mubr.f32.mxu0 0.0
        %3755 = vmatmul.mubr.f32.gmra.mrb[0].mxu0 %v3554
        %v3756 = vpop.f32.mrb[0].mxu0
        %v3757 = vadd.f32 0.0, %v3756
        %v3758 = vpop.f32.mrb[0].mxu0
        %3759 = vmatprep.mubr.f32.mxu0 0.0
        %3760 = vmatmul.mubr.f32.gmra.mrb[0].mxu0 %v3557
        %v3761 = vpop.f32.mrb[0].mxu0
        %v3762 = vadd.f32 0.0, %v3761
        %v3763 = vpop.f32.mrb[0].mxu0
        %3764 = vmatprep.mubr.f32.mxu0 0.0
        %3765 = vmatmul.mubr.f32.gmra.mrb[0].mxu0 %v3560
        %v3766 = vpop.f32.mrb[0].mxu0
        %v3767 = vadd.f32 0.0, %v3766
        %v3768 = vpop.f32.mrb[0].mxu0
        %3769 = vmatprep.mubr.f32.mxu0 0.0
        %3770 = vmatmul.mubr.f32.gmra.mrb[0].mxu0 %v3563
        %v3771 = vpop.f32.mrb[0].mxu0
        %v3772 = vadd.f32 0.0, %v3771
        %v3773 = vpop.f32.mrb[0].mxu0
        %3774 = vmatprep.mubr.f32.mxu0 0.0
        %3775 = vmatmul.mubr.f32.gmra.mrb[0].mxu0 %v3566
        %v3776 = vpop.f32.mrb[0].mxu0
        %v3777 = vadd.f32 0.0, %v3776
        %v3778 = vpop.f32.mrb[0].mxu0
        %3779 = vmatprep.mubr.f32.mxu0 0.0
        %3780 = vmatmul.mubr.f32.gmra.mrb[0].mxu0 %v3569
        %v3781 = vpop.f32.mrb[0].mxu0
        %v3782 = vadd.f32 0.0, %v3781
        %v3783 = vpop.f32.mrb[0].mxu0
        %3784 = vmatprep.mubr.f32.mxu0 0.0
        %3785 = vmatmul.mubr.f32.gmra.mrb[0].mxu0 %v3572
        %v3786 = vpop.f32.mrb[0].mxu0
        %v3787 = vadd.f32 0.0, %v3786
        %v3788 = vpop.f32.mrb[0].mxu0
        %3789 = vmatprep.mubr.f32.mxu0 0.0
        %3790 = vmatmul.mubr.f32.gmra.mrb[0].mxu0 %v3575
        %v3791 = vpop.f32.mrb[0].mxu0
        %v3792 = vadd.f32 0.0, %v3791
        %v3793 = vpop.f32.mrb[0].mxu0
        %3794 = vmatprep.mubr.f32.mxu0 0.0
        %3795 = vmatmul.mubr.f32.gmra.mrb[0].mxu0 %v3578
        %v3796 = vpop.f32.mrb[0].mxu0
        %v3797 = vadd.f32 0.0, %v3796
        %v3798 = vpop.f32.mrb[0].mxu0
        %3799 = vmatprep.mubr.f32.mxu0 0.0
        %3800 = vmatmul.mubr.f32.gmra.mrb[0].mxu0 %v3581
        %v3801 = vpop.f32.mrb[0].mxu0
        %v3802 = vadd.f32 0.0, %v3801
        %v3803 = vpop.f32.mrb[0].mxu0
        %3804 = vmatprep.mubr.f32.mxu0 0.0
        %3805 = vmatmul.mubr.f32.gmra.mrb[0].mxu0 %v3584
        %v3806 = vpop.f32.mrb[0].mxu0
        %v3807 = vadd.f32 0.0, %v3806
        %v3808 = vpop.f32.mrb[0].mxu0
        %3809 = vmatprep.mubr.f32.mxu0 0.0
        %3810 = vmatmul.mubr.f32.gmra.mrb[0].mxu0 %v3587
        %v3811 = vpop.f32.mrb[0].mxu0
        %v3812 = vadd.f32 0.0, %v3811
        %v3813 = vpop.f32.mrb[0].mxu0
        %3814 = vmatprep.mubr.f32.mxu0 0.0
        %3815 = vmatmul.mubr.f32.gmra.mrb[0].mxu0 %v3590
        %v3816 = vpop.f32.mrb[0].mxu0
        %v3817 = vadd.f32 0.0, %v3816
        %v3818 = vpop.f32.mrb[0].mxu0
        %3819 = vdwg.mxu0
        %v3820 = vadd.f32 %v3430, %v3662
        %v3821 = vadd.f32 %v3431, %v3667
        %v3822 = vadd.f32 %v3432, %v3672
        %v3823 = vadd.f32 %v3433, %v3677
        %v3824 = vadd.f32 %v3434, %v3682
        %v3825 = vadd.f32 %v3435, %v3687
        %v3826 = vadd.f32 %v3436, %v3692
        %v3827 = vadd.f32 %v3437, %v3697
        %v3828 = vadd.f32 %v3438, %v3702
        %v3829 = vadd.f32 %v3439, %v3707
        %v3830 = vadd.f32 %v3440, %v3712
        %v3831 = vadd.f32 %v3441, %v3717
        %v3832 = vadd.f32 %v3442, %v3722
        %v3833 = vadd.f32 %v3443, %v3727
        %v3834 = vadd.f32 %v3444, %v3732
        %v3835 = vadd.f32 %v3445, %v3737
        %v3836 = vadd.f32 %v3446, %v3742
        %v3837 = vadd.f32 %v3447, %v3747
        %v3838 = vadd.f32 %v3448, %v3752
        %v3839 = vadd.f32 %v3449, %v3757
        %v3840 = vadd.f32 %v3450, %v3762
        %v3841 = vadd.f32 %v3451, %v3767
        %v3842 = vadd.f32 %v3452, %v3772
        %v3843 = vadd.f32 %v3453, %v3777
        %v3844 = vadd.f32 %v3454, %v3782
        %v3845 = vadd.f32 %v3455, %v3787
        %v3846 = vadd.f32 %v3456, %v3792
        %v3847 = vadd.f32 %v3457, %v3797
        %v3848 = vadd.f32 %v3458, %v3802
        %v3849 = vadd.f32 %v3459, %v3807
        %v3850 = vadd.f32 %v3460, %v3812
        %v3851 = vadd.f32 %v3461, %v3817
        %3852 = vst.msk [vmem:[%s286] sm:$0xff] %vm326, %v3820
        %3853 = vst.msk [vmem:[%s286 + $0x8] sm:$0xff] %vm326, %v3821
        %3854 = vst.msk [vmem:[%s286 + $0x10] sm:$0xff] %vm326, %v3822
        %3855 = vst.msk [vmem:[%s286 + $0x18] sm:$0xff] %vm326, %v3823
        %3856 = vst.msk [vmem:[%s286 + $0x20] sm:$0xff] %vm326, %v3824
        %3857 = vst.msk [vmem:[%s286 + $0x28] sm:$0xff] %vm326, %v3825
        %3858 = vst.msk [vmem:[%s286 + $0x30] sm:$0xff] %vm326, %v3826
        %3859 = vst.msk [vmem:[%s286 + $0x38] sm:$0xff] %vm326, %v3827
        %3860 = vst.msk [vmem:[%s286 + $0x40] sm:$0xff] %vm326, %v3828
        %3861 = vst.msk [vmem:[%s286 + $0x48] sm:$0xff] %vm326, %v3829
        %3862 = vst.msk [vmem:[%s286 + $0x50] sm:$0xff] %vm326, %v3830
        %3863 = vst.msk [vmem:[%s286 + $0x58] sm:$0xff] %vm326, %v3831
        %3864 = vst.msk [vmem:[%s286 + $0x60] sm:$0xff] %vm326, %v3832
        %3865 = vst.msk [vmem:[%s286 + $0x68] sm:$0xff] %vm326, %v3833
        %3866 = vst.msk [vmem:[%s286 + $0x70] sm:$0xff] %vm326, %v3834
        %3867 = vst.msk [vmem:[%s286 + $0x78] sm:$0xff] %vm326, %v3835
        %3868 = vst.msk [vmem:[%s286 + $0x80] sm:$0xff] %vm326, %v3836
        %3869 = vst.msk [vmem:[%s286 + $0x88] sm:$0xff] %vm326, %v3837
        %3870 = vst.msk [vmem:[%s286 + $0x90] sm:$0xff] %vm326, %v3838
        %3871 = vst.msk [vmem:[%s286 + $0x98] sm:$0xff] %vm326, %v3839
        %3872 = vst.msk [vmem:[%s286 + $0xa0] sm:$0xff] %vm326, %v3840
        %3873 = vst.msk [vmem:[%s286 + $0xa8] sm:$0xff] %vm326, %v3841
        %3874 = vst.msk [vmem:[%s286 + $0xb0] sm:$0xff] %vm326, %v3842
        %3875 = vst.msk [vmem:[%s286 + $0xb8] sm:$0xff] %vm326, %v3843
        %3876 = vst.msk [vmem:[%s286 + $0xc0] sm:$0xff] %vm326, %v3844
        %3877 = vst.msk [vmem:[%s286 + $0xc8] sm:$0xff] %vm326, %v3845
        %3878 = vst.msk [vmem:[%s286 + $0xd0] sm:$0xff] %vm326, %v3846
        %3879 = vst.msk [vmem:[%s286 + $0xd8] sm:$0xff] %vm326, %v3847
        %3880 = vst.msk [vmem:[%s286 + $0xe0] sm:$0xff] %vm326, %v3848
        %3881 = vst.msk [vmem:[%s286 + $0xe8] sm:$0xff] %vm326, %v3849
        %3882 = vst.msk [vmem:[%s286 + $0xf0] sm:$0xff] %vm326, %v3850
        %3883 = vst.msk [vmem:[%s286 + $0xf8] sm:$0xff] %vm326, %v3851
        %v3884 = vsel %vm326, %v3820, 0.0
        %v3885 = vsel %vm326, %v3821, 0.0
        %v3886 = vadd.f32 %v3884, %v3885
        %v3887 = vsel %vm326, %v3822, 0.0
        %v3888 = vadd.f32 %v3886, %v3887
        %v3889 = vsel %vm326, %v3823, 0.0
        %v3890 = vadd.f32 %v3888, %v3889
        %v3891 = vsel %vm326, %v3824, 0.0
        %v3892 = vadd.f32 %v3890, %v3891
        %v3893 = vsel %vm326, %v3825, 0.0
        %v3894 = vadd.f32 %v3892, %v3893
        %v3895 = vsel %vm326, %v3826, 0.0
        %v3896 = vadd.f32 %v3894, %v3895
        %v3897 = vsel %vm326, %v3827, 0.0
        %v3898 = vadd.f32 %v3896, %v3897
        %v3899 = vsel %vm326, %v3828, 0.0
        %v3900 = vadd.f32 %v3898, %v3899
        %v3901 = vsel %vm326, %v3829, 0.0
        %v3902 = vadd.f32 %v3900, %v3901
        %v3903 = vsel %vm326, %v3830, 0.0
        %v3904 = vadd.f32 %v3902, %v3903
        %v3905 = vsel %vm326, %v3831, 0.0
        %v3906 = vadd.f32 %v3904, %v3905
        %v3907 = vsel %vm326, %v3832, 0.0
        %v3908 = vadd.f32 %v3906, %v3907
        %v3909 = vsel %vm326, %v3833, 0.0
        %v3910 = vadd.f32 %v3908, %v3909
        %v3911 = vsel %vm326, %v3834, 0.0
        %v3912 = vadd.f32 %v3910, %v3911
        %v3913 = vsel %vm326, %v3835, 0.0
        %v3914 = vadd.f32 %v3912, %v3913
        %v3915 = vsel %vm326, %v3836, 0.0
        %v3916 = vadd.f32 %v3914, %v3915
        %v3917 = vsel %vm326, %v3837, 0.0
        %v3918 = vadd.f32 %v3916, %v3917
        %v3919 = vsel %vm326, %v3838, 0.0
        %v3920 = vadd.f32 %v3918, %v3919
        %v3921 = vsel %vm326, %v3839, 0.0
        %v3922 = vadd.f32 %v3920, %v3921
        %v3923 = vsel %vm326, %v3840, 0.0
        %v3924 = vadd.f32 %v3922, %v3923
        %v3925 = vsel %vm326, %v3841, 0.0
        %v3926 = vadd.f32 %v3924, %v3925
        %v3927 = vsel %vm326, %v3842, 0.0
        %v3928 = vadd.f32 %v3926, %v3927
        %v3929 = vsel %vm326, %v3843, 0.0
        %v3930 = vadd.f32 %v3928, %v3929
        %v3931 = vsel %vm326, %v3844, 0.0
        %v3932 = vadd.f32 %v3930, %v3931
        %v3933 = vsel %vm326, %v3845, 0.0
        %v3934 = vadd.f32 %v3932, %v3933
        %v3935 = vsel %vm326, %v3846, 0.0
        %v3936 = vadd.f32 %v3934, %v3935
        %v3937 = vsel %vm326, %v3847, 0.0
        %v3938 = vadd.f32 %v3936, %v3937
        %v3939 = vsel %vm326, %v3848, 0.0
        %v3940 = vadd.f32 %v3938, %v3939
        %v3941 = vsel %vm326, %v3849, 0.0
        %v3942 = vadd.f32 %v3940, %v3941
        %v3943 = vsel %vm326, %v3850, 0.0
        %v3944 = vadd.f32 %v3942, %v3943
        %v3945 = vsel %vm326, %v3851, 0.0
        %v3946 = vadd.f32 %v3944, %v3945
        %v3947 = vrot.slane %v3946, 4
        %v3948 = vadd.f32 %v3946, %v3947
        %v3949 = vrot.slane %v3948, 2
        %v3950 = vadd.f32 %v3948, %v3949
        %v3951 = vrot.slane %v3950, 1
        %v3952 = vadd.f32 %v3950, %v3951
        %3953 = vst.msk [vmem:[%s293] sm:$0x1] %vm335, %v3952
        %v3954 = vmul.f32 %v3820, %v3820
        %v3955 = vmul.f32 %v3821, %v3821
        %v3956 = vmul.f32 %v3822, %v3822
        %v3957 = vmul.f32 %v3823, %v3823
        %v3958 = vmul.f32 %v3824, %v3824
        %v3959 = vmul.f32 %v3825, %v3825
        %v3960 = vmul.f32 %v3826, %v3826
        %v3961 = vmul.f32 %v3827, %v3827
        %v3962 = vmul.f32 %v3828, %v3828
        %v3963 = vmul.f32 %v3829, %v3829
        %v3964 = vmul.f32 %v3830, %v3830
        %v3965 = vmul.f32 %v3831, %v3831
        %v3966 = vmul.f32 %v3832, %v3832
        %v3967 = vmul.f32 %v3833, %v3833
        %v3968 = vmul.f32 %v3834, %v3834
        %v3969 = vmul.f32 %v3835, %v3835
        %v3970 = vmul.f32 %v3836, %v3836
        %v3971 = vmul.f32 %v3837, %v3837
        %v3972 = vmul.f32 %v3838, %v3838
        %v3973 = vmul.f32 %v3839, %v3839
        %v3974 = vmul.f32 %v3840, %v3840
        %v3975 = vmul.f32 %v3841, %v3841
        %v3976 = vmul.f32 %v3842, %v3842
        %v3977 = vmul.f32 %v3843, %v3843
        %v3978 = vmul.f32 %v3844, %v3844
        %v3979 = vmul.f32 %v3845, %v3845
        %v3980 = vmul.f32 %v3846, %v3846
        %v3981 = vmul.f32 %v3847, %v3847
        %v3982 = vmul.f32 %v3848, %v3848
        %v3983 = vmul.f32 %v3849, %v3849
        %v3984 = vmul.f32 %v3850, %v3850
        %v3985 = vmul.f32 %v3851, %v3851
        %v3986 = vsel %vm326, %v3954, 0.0
        %v3987 = vsel %vm326, %v3955, 0.0
        %v3988 = vadd.f32 %v3986, %v3987
        %v3989 = vsel %vm326, %v3956, 0.0
        %v3990 = vadd.f32 %v3988, %v3989
        %v3991 = vsel %vm326, %v3957, 0.0
        %v3992 = vadd.f32 %v3990, %v3991
        %v3993 = vsel %vm326, %v3958, 0.0
        %v3994 = vadd.f32 %v3992, %v3993
        %v3995 = vsel %vm326, %v3959, 0.0
        %v3996 = vadd.f32 %v3994, %v3995
        %v3997 = vsel %vm326, %v3960, 0.0
        %v3998 = vadd.f32 %v3996, %v3997
        %v3999 = vsel %vm326, %v3961, 0.0
        %v4000 = vadd.f32 %v3998, %v3999
        %v4001 = vsel %vm326, %v3962, 0.0
        %v4002 = vadd.f32 %v4000, %v4001
        %v4003 = vsel %vm326, %v3963, 0.0
        %v4004 = vadd.f32 %v4002, %v4003
        %v4005 = vsel %vm326, %v3964, 0.0
        %v4006 = vadd.f32 %v4004, %v4005
        %v4007 = vsel %vm326, %v3965, 0.0
        %v4008 = vadd.f32 %v4006, %v4007
        %v4009 = vsel %vm326, %v3966, 0.0
        %v4010 = vadd.f32 %v4008, %v4009
        %v4011 = vsel %vm326, %v3967, 0.0
        %v4012 = vadd.f32 %v4010, %v4011
        %v4013 = vsel %vm326, %v3968, 0.0
        %v4014 = vadd.f32 %v4012, %v4013
        %v4015 = vsel %vm326, %v3969, 0.0
        %v4016 = vadd.f32 %v4014, %v4015
        %v4017 = vsel %vm326, %v3970, 0.0
        %v4018 = vadd.f32 %v4016, %v4017
        %v4019 = vsel %vm326, %v3971, 0.0
        %v4020 = vadd.f32 %v4018, %v4019
        %v4021 = vsel %vm326, %v3972, 0.0
        %v4022 = vadd.f32 %v4020, %v4021
        %v4023 = vsel %vm326, %v3973, 0.0
        %v4024 = vadd.f32 %v4022, %v4023
        %v4025 = vsel %vm326, %v3974, 0.0
        %v4026 = vadd.f32 %v4024, %v4025
        %v4027 = vsel %vm326, %v3975, 0.0
        %v4028 = vadd.f32 %v4026, %v4027
        %v4029 = vsel %vm326, %v3976, 0.0
        %v4030 = vadd.f32 %v4028, %v4029
        %v4031 = vsel %vm326, %v3977, 0.0
        %v4032 = vadd.f32 %v4030, %v4031
        %v4033 = vsel %vm326, %v3978, 0.0
        %v4034 = vadd.f32 %v4032, %v4033
        %v4035 = vsel %vm326, %v3979, 0.0
        %v4036 = vadd.f32 %v4034, %v4035
        %v4037 = vsel %vm326, %v3980, 0.0
        %v4038 = vadd.f32 %v4036, %v4037
        %v4039 = vsel %vm326, %v3981, 0.0
        %v4040 = vadd.f32 %v4038, %v4039
        %v4041 = vsel %vm326, %v3982, 0.0
        %v4042 = vadd.f32 %v4040, %v4041
        %v4043 = vsel %vm326, %v3983, 0.0
        %v4044 = vadd.f32 %v4042, %v4043
        %v4045 = vsel %vm326, %v3984, 0.0
        %v4046 = vadd.f32 %v4044, %v4045
        %v4047 = vsel %vm326, %v3985, 0.0
        %v4048 = vadd.f32 %v4046, %v4047
        %v4049 = vrot.slane %v4048, 4
        %v4050 = vadd.f32 %v4048, %v4049
        %v4051 = vrot.slane %v4050, 2
        %v4052 = vadd.f32 %v4050, %v4051
        %v4053 = vrot.slane %v4052, 1
        %v4054 = vadd.f32 %v4052, %v4053
        %4055 = vst.msk [vmem:[%s293 + $0x1] sm:$0x1] %vm335, %v4054
        %s4056 = sand.u32 %s125, 1
        %s4057 = scalar_lea.sflag [#allocation5], %s4056
        %s4058 = sand.u32 %s125, 1
        %s4059 = smul.addr %s4058, 256
        %s4060 = scalar_lea.vmem [#allocation11], %s4059
        %s4061 = sand.u32 %s151, 1
        %s4062 = scalar_lea.sflag [#allocation13], %s4061
        %s4063 = sand.u32 %s151, 1
        %s4064 = smul.addr %s4063, 2
        %s4065 = scalar_lea.vmem [#allocation12], %s4064
        // Predicated region
        $region53: #{basic_block_forward.3} parent=35 // pred_check
          %p4066 = pneg %p135
        $region54: #{basic_block_forward.3} parent=35 // pred_check_branch
          %4068 = sbr.rel (%p4066) target = $region56
        $region55: #{basic_block_forward.3} parent=35 // pred_region
          %s4070 = ssub.s32 4096, 4096
          %4071 = vsyncadd %s4057, %s4070
          %s4072 = smul.addr %s28, 32
          %s4073 = smul.addr %s4072, 128
          %s4074 = scalar_lea.hbm %s4, %s4073
          %s4075 = sshll.u32 %s4060, 4
          %s4076 = int_to_ptr.vmem [resolvable:$true] %s4075
          %4081 = dma.vmem_to_hbm [thread:$0]  %s4076, 4096, %s4074, %s4057, 128, 128, 8
        $region56: #{basic_block_forward.3} parent=35 // pred_fallthru
          _
        // Predicated region
        $region57: #{basic_block_forward.3} parent=35 // pred_check
          %p4082 = pneg %p161
        $region58: #{basic_block_forward.3} parent=35 // pred_check_branch
          %4084 = sbr.rel (%p4082) target = $region60
        $region59: #{basic_block_forward.3} parent=35 // pred_region
          %s4086 = ssub.s32 32, 32
          %4087 = vsyncadd %s4062, %s4086
          %s4088 = smul.addr %s28, 32
          %s4089 = scalar_lea.hbm %s5, %s4088
          %s4091 = sshll.u32 %s4065, 4
          %s4092 = int_to_ptr.vmem [resolvable:$true] %s4091
          %4094 = dma.vmem_to_hbm [thread:$0]  %s4092, 32, %s4089, %s4062
        $region60: #{basic_block_forward.3} parent=35 // pred_fallthru
          _
      $region36: #{basic_block_forward.3} parent=5 // pred_fallthru
        _
      %p4095 = scmp.le.s32.totalorder 2, %s23
      // Predicated region
      $region61: #{basic_block_forward.3} parent=5 // pred_check
        %p4096 = pneg %p4095
      $region62: #{basic_block_forward.3} parent=5 // pred_check_branch
        %4098 = sbr.rel (%p4096) target = $region64
      $region63: #{basic_block_forward.3} parent=5 // pred_region
        %s4099 = ssub.s32 %s23, 2
        // Predicated region
        $region65: #{basic_block_forward.3} parent=63 // pred_check
          %p4100 = pneg %p141
        $region66: #{basic_block_forward.3} parent=63 // pred_check_branch
          %4102 = sbr.rel (%p4100) target = $region68
        $region67: #{basic_block_forward.3} parent=63 // pred_region
          %s4103 = sand.u32 %s126, 1
          %s4104 = scalar_lea.sflag [#allocation5], %s4103
          %s4105 = sand.u32 %s126, 1
          %s4106 = smul.addr %s4105, 256
          %s4107 = scalar_lea.vmem [#allocation11], %s4106
          %4108 = dma.done %s4104, 4096
        $region68: #{basic_block_forward.3} parent=63 // pred_fallthru
          _
        // Predicated region
        $region69: #{basic_block_forward.3} parent=63 // pred_check
          %p4109 = pneg %p167
        $region70: #{basic_block_forward.3} parent=63 // pred_check_branch
          %4111 = sbr.rel (%p4109) target = $region72
        $region71: #{basic_block_forward.3} parent=63 // pred_region
          %s4112 = sand.u32 %s152, 1
          %s4113 = scalar_lea.sflag [#allocation13], %s4112
          %s4114 = sand.u32 %s152, 1
          %s4115 = smul.addr %s4114, 2
          %s4116 = scalar_lea.vmem [#allocation12], %s4115
          %4117 = dma.done %s4113, 32
        $region72: #{basic_block_forward.3} parent=63 // pred_fallthru
          _
      $region64: #{basic_block_forward.3} parent=5 // pred_fallthru
        _
    $region6: #{basic_block_forward.3} parent=1 // loop_footer
      %s27 = sadd.s32 1, %s23
    $region7: #{basic_block_forward.3} parent=1 // loop_footer_branch
      %22 = sbr.rel target = $region3
    $region8: #{basic_block_forward.3} parent=1 // loop_exit
      _
    %4118 = vsyncpa [#allocation4], 1
    %s4119 = scalar_lea.sflag [#allocation4], 1
    %4120 = vsyncpa %s4119, 1
    %4121 = vsyncpa [#allocation7], 1
    %4122 = vsyncpa [#allocation10], 1
    %4123 = vsyncpa [#allocation5], 1
    %s4124 = scalar_lea.sflag [#allocation5], 1
    %4125 = vsyncpa %s4124, 1
    %4126 = vsyncpa [#allocation13], 1
    %s4127 = scalar_lea.sflag [#allocation13], 1
    %4128 = vsyncpa %s4127, 1

</llo_original>
